<compile_context>
chip_gen: v6e
topology: v6e:2x2x1
jax: 0.10.0
libtpu: 0.0.40
codegen_flags: <defaults>
</compile_context>

<pallas_src>
import jax
import jax.numpy as jnp
from jax.experimental import pallas as pl
from jax.experimental.pallas import tpu as pltpu

# ------------------------- config (small shapes) -------------------------
IMG = 16            # height = width
PATCH = 4
CH = 4              # channels
EMBED = 32
HEADS = 4
HEAD_DIM = EMBED // HEADS
MLP_HIDDEN = 4 * EMBED
LAYERS = 3
NUM_CLASSES = 10
N_PATCHES = (IMG // PATCH) ** 2          # 16
PATCH_DIM = PATCH * PATCH * CH           # 64
SEQ = N_PATCHES + 1                      # 17 (class token + patches)
SEQ_PAD = 24                             # padded to a multiple of 8 sublanes
LN_EPS = 1e-5


# ------------------------------ kernel ------------------------------------
def _layernorm(x, g, b):
    mu = jnp.mean(x, axis=-1, keepdims=True)
    var = jnp.mean((x - mu) ** 2, axis=-1, keepdims=True)
    return (x - mu) * jax.lax.rsqrt(var + LN_EPS) * g + b


def vit_kernel(patches_ref, patch_w_ref, base_ref,
               ln1g_ref, ln1b_ref, wqkv_ref, bqkv_ref, wo3_ref, bo_ref,
               ln2g_ref, ln2b_ref, w1_ref, b1_ref, w2_ref, b2_ref,
               clsw_ref, clsb_ref, out_ref):
    """Whole ViT forward for one batch element (grid axis = batch)."""
    # ---- patch embedding (conv-as-matmul) + class token + pos. embedding ----
    # patches rows: [0]=zeros (class-token slot), [1..16]=patches, [17..23]=pad.
    # base rows:    [0]=cls_tok+pos[0], [1..16]=pos[i]+patch_b, [17..23]=0.
    p = patches_ref[0].astype(jnp.float32)                       # (S_PAD, P_DIM)
    z = jnp.dot(p, patch_w_ref[...],
                preferred_element_type=jnp.float32) + base_ref[...]   # (S_PAD, E)

    # additive key mask for the padded columns (constant across layers)
    col = jax.lax.broadcasted_iota(jnp.int32, (SEQ_PAD, SEQ_PAD), 1)
    mask_bias = jnp.where(col < SEQ, 0.0, -1e30).astype(jnp.float32)
    mask_bias3 = jnp.broadcast_to(mask_bias[None], (HEADS, SEQ_PAD, SEQ_PAD))

    scale = 1.0 / (HEAD_DIM ** 0.5)

    # ---- transformer encoder layers (unrolled; weights stacked on axis 0) ----
    for l in range(LAYERS):
        # --- multi-head self-attention (pre-LN) ---
        h = _layernorm(z, ln1g_ref[l], ln1b_ref[l])
        qkv = jnp.dot(h, wqkv_ref[l],
                      preferred_element_type=jnp.float32) + bqkv_ref[l]   # (S_PAD, 3E)
        # split into head-major (3*H, S_PAD, D); slices are static, concat is
        # along a new leading (major) axis -> no lane-axis concatenates.
        heads = jnp.stack(
            [qkv[:, i * HEAD_DIM:(i + 1) * HEAD_DIM] for i in range(3 * HEADS)],
            axis=0)
        qh = heads[:HEADS] * scale                                 # (H, S, D)
        kh = heads[HEADS:2 * HEADS]                                # (H, S, D)
        vh = heads[2 * HEADS:]                                     # (H, S, D)

        s = jnp.einsum('hqd,hkd->hqk', qh, kh,
                       preferred_element_type=jnp.float32) + mask_bias3
        m = jnp.max(s, axis=-1, keepdims=True)
        e = jnp.exp(s - m)
        denom = jnp.sum(e, axis=-1, keepdims=True)
        prob = e * pl.reciprocal(denom, approx=True)               # (H, S, S)

        o = jnp.einsum('hqk,hkd->hqd', prob, vh,
                       preferred_element_type=jnp.float32)         # (H, S, D)
        # output projection: wo stored per-head as (H, D, E); summing the
        # per-head batched matmul over heads == concat(heads) @ wo.
        attn = jnp.sum(jnp.einsum('hqd,hde->hqe', o, wo3_ref[l],
                                  preferred_element_type=jnp.float32),
                       axis=0) + bo_ref[l]                         # (S_PAD, E)
        z = z + attn

        # --- MLP (pre-LN) ---
        h2 = _layernorm(z, ln2g_ref[l], ln2b_ref[l])
        m1 = jnp.dot(h2, w1_ref[l], preferred_element_type=jnp.float32) + b1_ref[l]
        # TODO(synk): tanh GELU; PyTorch nn.GELU default is exact (erf) GELU.
        m1 = jax.nn.gelu(m1, approximate=True)
        m2 = jnp.dot(m1, w2_ref[l], preferred_element_type=jnp.float32) + b2_ref[l]
        z = z + m2

    # ---- classifier on the class token (row 0) ----
    cls = z[0:1, :]                                                # (1, E)
    logits = jnp.dot(cls, clsw_ref[...],
                     preferred_element_type=jnp.float32) + clsb_ref[...]
    out_ref[0] = logits.astype(out_ref.dtype)


# ------------------------------ wrappers ----------------------------------
def _const_spec(shape):
    """Full-array block broadcast to every grid step."""
    zeros = (0,) * len(shape)
    return pl.BlockSpec(shape, lambda i, _z=zeros: _z)


def extract_patches(x):
    """NCHW image -> (B, num_patches, C*p*p); matches Conv2d(k=p, stride=p)
    followed by reshape(b, E, -1).transpose(1, 2)."""
    B, C, H, W = x.shape
    gh, gw = H // PATCH, W // PATCH
    x = x.reshape(B, C, gh, PATCH, gw, PATCH)
    x = x.transpose(0, 2, 4, 1, 3, 5)            # (B, gh, gw, C, p, p)
    return x.reshape(B, gh * gw, C * PATCH * PATCH)


@jax.jit
def vit_forward(x, params):
    B = x.shape[0]
    # host-side glue: patch extraction + zero padding to SEQ_PAD rows
    patches = extract_patches(x)                                       # (B, N, PD)
    patches = jnp.pad(patches, ((0, 0), (1, SEQ_PAD - SEQ), (0, 0)))   # (B, S_PAD, PD)
    # parameter-only "base": row 0 = cls_tok + pos[0], rows 1..16 = pos + patch_b
    base = jnp.concatenate([
        params["cls_tok"] + params["pos_emb"][0:1, :],
        params["pos_emb"][1:, :] + params["patch_b"],
        jnp.zeros((SEQ_PAD - SEQ, EMBED), jnp.float32)], axis=0)       # (S_PAD, E)

    args = [patches, params["patch_w"], base,
            params["ln1_g"], params["ln1_b"], params["w_qkv"], params["b_qkv"],
            params["wo3"], params["bo"], params["ln2_g"], params["ln2_b"],
            params["w1"], params["b1"], params["w2"], params["b2"],
            params["cls_w"], params["cls_b"]]

    in_specs = ([pl.BlockSpec((1, SEQ_PAD, PATCH_DIM), lambda i: (i, 0, 0))]
                + [_const_spec(a.shape) for a in args[1:]])

    out = pl.pallas_call(
        vit_kernel,
        out_shape=jax.ShapeDtypeStruct((B, 1, NUM_CLASSES), jnp.float32),
        grid=(B,),
        in_specs=in_specs,
        out_specs=pl.BlockSpec((1, 1, NUM_CLASSES), lambda i: (i, 0, 0)),
        compiler_params=pltpu.CompilerParams(dimension_semantics=("parallel",)),
    )(*args)
    return out[:, 0, :]                                                # (B, C)


# ------------------------------ parameters --------------------------------
def init_params(key):
    keys = jax.random.split(key, 12)
    p = {}
    # ImagePatcher conv, flattened as (C*p*p, E) matmul weight (+ bias)
    p["patch_w"] = 0.05 * jax.random.normal(keys[0], (PATCH_DIM, EMBED), jnp.float32)
    p["patch_b"] = 0.05 * jax.random.normal(keys[1], (1, EMBED), jnp.float32)
    p["cls_tok"] = jax.random.normal(keys[2], (1, EMBED), jnp.float32)
    p["pos_emb"] = jax.random.normal(keys[3], (SEQ, EMBED), jnp.float32)
    p["cls_w"] = 0.05 * jax.random.normal(keys[4], (EMBED, NUM_CLASSES), jnp.float32)
    p["cls_b"] = 0.05 * jax.random.normal(keys[5], (1, NUM_CLASSES), jnp.float32)

    # encoder params stacked along a leading LAYERS axis
    p["ln1_g"] = jnp.ones((LAYERS, 1, EMBED), jnp.float32)
    p["ln1_b"] = jnp.zeros((LAYERS, 1, EMBED), jnp.float32)
    # fused QKV weight: columns [q heads | k heads | v heads]
    p["w_qkv"] = 0.05 * jax.random.normal(keys[6], (LAYERS, EMBED, 3 * EMBED), jnp.float32)
    p["b_qkv"] = 0.05 * jax.random.normal(keys[7], (LAYERS, 1, 3 * EMBED), jnp.float32)
    # output projection stored per-head: (H, D, E) == wo.reshape(H, D, E)
    p["wo3"] = 0.05 * jax.random.normal(keys[8], (LAYERS, HEADS, HEAD_DIM, EMBED), jnp.float32)
    p["bo"] = 0.05 * jax.random.normal(keys[9], (LAYERS, 1, EMBED), jnp.float32)
    p["ln2_g"] = jnp.ones((LAYERS, 1, EMBED), jnp.float32)
    p["ln2_b"] = jnp.zeros((LAYERS, 1, EMBED), jnp.float32)
    p["w1"] = 0.05 * jax.random.normal(keys[10], (LAYERS, EMBED, MLP_HIDDEN), jnp.float32)
    p["b1"] = jnp.zeros((LAYERS, 1, MLP_HIDDEN), jnp.float32)
    p["w2"] = 0.05 * jax.random.normal(keys[11], (LAYERS, MLP_HIDDEN, EMBED), jnp.float32)
    p["b2"] = jnp.zeros((LAYERS, 1, EMBED), jnp.float32)
    return p


if __name__ == "__main__":
    key = jax.random.PRNGKey(0)
    pkey, xkey = jax.random.split(key)
    params = init_params(pkey)
    x = jax.random.normal(xkey, (2, CH, IMG, IMG), jnp.float32)       # NCHW

    logits = vit_forward(x, params)
    logits = jax.block_until_ready(logits)

    assert logits.shape == (2, NUM_CLASSES)
    assert bool(jnp.all(jnp.isfinite(logits)))
    print("KERNEL_OK")
</pallas_src>

<mosaic_0001>
module attributes {stable_mosaic.version = 11 : i64} {
  func.func @vit_kernel(%arg0: i32, %arg1: memref<1x24x64xf32, #tpu.memory_space<vmem>>, %arg2: memref<64x32xf32, #tpu.memory_space<vmem>>, %arg3: memref<24x32xf32, #tpu.memory_space<vmem>>, %arg4: memref<3x1x32xf32, #tpu.memory_space<vmem>>, %arg5: memref<3x1x32xf32, #tpu.memory_space<vmem>>, %arg6: memref<3x32x96xf32, #tpu.memory_space<vmem>>, %arg7: memref<3x1x96xf32, #tpu.memory_space<vmem>>, %arg8: memref<3x4x8x32xf32, #tpu.memory_space<vmem>>, %arg9: memref<3x1x32xf32, #tpu.memory_space<vmem>>, %arg10: memref<3x1x32xf32, #tpu.memory_space<vmem>>, %arg11: memref<3x1x32xf32, #tpu.memory_space<vmem>>, %arg12: memref<3x32x128xf32, #tpu.memory_space<vmem>>, %arg13: memref<3x1x128xf32, #tpu.memory_space<vmem>>, %arg14: memref<3x128x32xf32, #tpu.memory_space<vmem>>, %arg15: memref<3x1x32xf32, #tpu.memory_space<vmem>>, %arg16: memref<32x10xf32, #tpu.memory_space<vmem>>, %arg17: memref<1x10xf32, #tpu.memory_space<vmem>>, %arg18: memref<1x1x10xf32, #tpu.memory_space<vmem>>) attributes {dimension_semantics = [#tpu.dimension_semantics<parallel>], iteration_bounds = array<i64: 2>, scalar_prefetch = 0 : i64, scratch_operands = 0 : i64, tpu.core_type = #tpu.core_type<tc>, window_params = [{transform_indices = @transform_0, window_bounds = array<i64: 1, 24, 64>}, {pipeline_mode = #tpu.pipeline_mode<synchronous>, transform_indices = @transform_1, window_bounds = array<i64: 64, 32>}, {pipeline_mode = #tpu.pipeline_mode<synchronous>, transform_indices = @transform_2, window_bounds = array<i64: 24, 32>}, {pipeline_mode = #tpu.pipeline_mode<synchronous>, transform_indices = @transform_3, window_bounds = array<i64: 3, 1, 32>}, {pipeline_mode = #tpu.pipeline_mode<synchronous>, transform_indices = @transform_4, window_bounds = array<i64: 3, 1, 32>}, {pipeline_mode = #tpu.pipeline_mode<synchronous>, transform_indices = @transform_5, window_bounds = array<i64: 3, 32, 96>}, {pipeline_mode = #tpu.pipeline_mode<synchronous>, transform_indices = @transform_6, window_bounds = array<i64: 3, 1, 96>}, {pipeline_mode = #tpu.pipeline_mode<synchronous>, transform_indices = @transform_7, window_bounds = array<i64: 3, 4, 8, 32>}, {pipeline_mode = #tpu.pipeline_mode<synchronous>, transform_indices = @transform_8, window_bounds = array<i64: 3, 1, 32>}, {pipeline_mode = #tpu.pipeline_mode<synchronous>, transform_indices = @transform_9, window_bounds = array<i64: 3, 1, 32>}, {pipeline_mode = #tpu.pipeline_mode<synchronous>, transform_indices = @transform_10, window_bounds = array<i64: 3, 1, 32>}, {pipeline_mode = #tpu.pipeline_mode<synchronous>, transform_indices = @transform_11, window_bounds = array<i64: 3, 32, 128>}, {pipeline_mode = #tpu.pipeline_mode<synchronous>, transform_indices = @transform_12, window_bounds = array<i64: 3, 1, 128>}, {pipeline_mode = #tpu.pipeline_mode<synchronous>, transform_indices = @transform_13, window_bounds = array<i64: 3, 128, 32>}, {pipeline_mode = #tpu.pipeline_mode<synchronous>, transform_indices = @transform_14, window_bounds = array<i64: 3, 1, 32>}, {pipeline_mode = #tpu.pipeline_mode<synchronous>, transform_indices = @transform_15, window_bounds = array<i64: 32, 10>}, {pipeline_mode = #tpu.pipeline_mode<synchronous>, transform_indices = @transform_16, window_bounds = array<i64: 1, 10>}, {transform_indices = @transform_17, window_bounds = array<i64: 1, 1, 10>}]} {
    %c0 = arith.constant 0 : index
    %c0_0 = arith.constant 0 : index
    %c0_1 = arith.constant 0 : index
    %0 = vector.load %arg1[%c0, %c0_0, %c0_1] : memref<1x24x64xf32, #tpu.memory_space<vmem>>, vector<1x24x64xf32>
    %1 = vector.shape_cast %0 : vector<1x24x64xf32> to vector<24x64xf32>
    %c0_2 = arith.constant 0 : index
    %c0_3 = arith.constant 0 : index
    %2 = vector.load %arg2[%c0_2, %c0_3] : memref<64x32xf32, #tpu.memory_space<vmem>>, vector<64x32xf32>
    %cst = arith.constant dense<0.000000e+00> : vector<24x32xf32>
    %3 = tpu.matmul %1, %2, %cst {dimension_numbers = #tpu.dot_dimension_numbers<[1], [0], [0], [1], [0, 0, 1, 1], [], []>} : vector<24x64xf32>, vector<64x32xf32>, vector<24x32xf32> -> vector<24x32xf32>
    %c0_4 = arith.constant 0 : index
    %c0_5 = arith.constant 0 : index
    %4 = vector.load %arg3[%c0_4, %c0_5] : memref<24x32xf32, #tpu.memory_space<vmem>>, vector<24x32xf32>
    %5 = arith.addf %3, %4 : vector<24x32xf32>
    %6 = tpu.iota {dimensions = array<i32: 1>} : vector<24x24xi32>
    %c17_i32 = arith.constant 17 : i32
    %7 = vector.broadcast %c17_i32 : i32 to vector<24x24xi32>
    %8 = arith.cmpi slt, %6, %7 : vector<24x24xi32>
    %cst_6 = arith.constant 0.000000e+00 : f32
    %cst_7 = arith.constant -1.000000e+30 : f32
    %9 = vector.broadcast %cst_6 : f32 to vector<24x24xf32>
    %10 = vector.broadcast %cst_7 : f32 to vector<24x24xf32>
    %11 = arith.select %8, %9, %10 : vector<24x24xi1>, vector<24x24xf32>
    %12 = vector.shape_cast %11 : vector<24x24xf32> to vector<1x24x24xf32>
    %13 = vector.shape_cast %12 : vector<1x24x24xf32> to vector<1x24x24xf32>
    %14 = vector.broadcast %13 : vector<1x24x24xf32> to vector<4x24x24xf32>
    %c0_8 = arith.constant 0 : index
    %c0_9 = arith.constant 0 : index
    %c0_10 = arith.constant 0 : index
    %15 = vector.load %arg4[%c0_8, %c0_9, %c0_10] : memref<3x1x32xf32, #tpu.memory_space<vmem>>, vector<1x1x32xf32>
    %16 = vector.shape_cast %15 : vector<1x1x32xf32> to vector<1x32xf32>
    %c0_11 = arith.constant 0 : index
    %c0_12 = arith.constant 0 : index
    %c0_13 = arith.constant 0 : index
    %17 = vector.load %arg5[%c0_11, %c0_12, %c0_13] : memref<3x1x32xf32, #tpu.memory_space<vmem>>, vector<1x1x32xf32>
    %18 = vector.shape_cast %17 : vector<1x1x32xf32> to vector<1x32xf32>
    %cst_14 = arith.constant dense<0.000000e+00> : vector<24xf32>
    %19 = vector.multi_reduction <add>, %5, %cst_14 [1] : vector<24x32xf32> to vector<24xf32>
    %20 = vector.shape_cast %19 : vector<24xf32> to vector<24x1xf32>
    %cst_15 = arith.constant 3.200000e+01 : f32
    %21 = vector.broadcast %cst_15 : f32 to vector<24x1xf32>
    %22 = arith.divf %20, %21 : vector<24x1xf32>
    %23 = vector.broadcast %22 : vector<24x1xf32> to vector<24x32xf32>
    %24 = arith.subf %5, %23 : vector<24x32xf32>
    %25 = arith.mulf %24, %24 : vector<24x32xf32>
    %cst_16 = arith.constant dense<0.000000e+00> : vector<24xf32>
    %26 = vector.multi_reduction <add>, %25, %cst_16 [1] : vector<24x32xf32> to vector<24xf32>
    %27 = vector.shape_cast %26 : vector<24xf32> to vector<24x1xf32>
    %cst_17 = arith.constant 3.200000e+01 : f32
    %28 = vector.broadcast %cst_17 : f32 to vector<24x1xf32>
    %29 = arith.divf %27, %28 : vector<24x1xf32>
    %30 = vector.broadcast %22 : vector<24x1xf32> to vector<24x32xf32>
    %31 = arith.subf %5, %30 : vector<24x32xf32>
    %cst_18 = arith.constant 9.99999974E-6 : f32
    %32 = vector.broadcast %cst_18 : f32 to vector<24x1xf32>
    %33 = arith.addf %29, %32 : vector<24x1xf32>
    %34 = math.rsqrt %33 : vector<24x1xf32>
    %35 = vector.broadcast %34 : vector<24x1xf32> to vector<24x32xf32>
    %36 = arith.mulf %31, %35 : vector<24x32xf32>
    %37 = vector.broadcast %16 : vector<1x32xf32> to vector<24x32xf32>
    %38 = arith.mulf %36, %37 : vector<24x32xf32>
    %39 = vector.broadcast %18 : vector<1x32xf32> to vector<24x32xf32>
    %40 = arith.addf %38, %39 : vector<24x32xf32>
    %c0_19 = arith.constant 0 : index
    %c0_20 = arith.constant 0 : index
    %c0_21 = arith.constant 0 : index
    %41 = vector.load %arg6[%c0_19, %c0_20, %c0_21] : memref<3x32x96xf32, #tpu.memory_space<vmem>>, vector<1x32x96xf32>
    %42 = vector.shape_cast %41 : vector<1x32x96xf32> to vector<32x96xf32>
    %cst_22 = arith.constant dense<0.000000e+00> : vector<24x96xf32>
    %43 = tpu.matmul %40, %42, %cst_22 {dimension_numbers = #tpu.dot_dimension_numbers<[1], [0], [0], [1], [0, 0, 1, 1], [], []>} : vector<24x32xf32>, vector<32x96xf32>, vector<24x96xf32> -> vector<24x96xf32>
    %c0_23 = arith.constant 0 : index
    %c0_24 = arith.constant 0 : index
    %c0_25 = arith.constant 0 : index
    %44 = vector.load %arg7[%c0_23, %c0_24, %c0_25] : memref<3x1x96xf32, #tpu.memory_space<vmem>>, vector<1x1x96xf32>
    %45 = vector.shape_cast %44 : vector<1x1x96xf32> to vector<1x96xf32>
    %46 = vector.broadcast %45 : vector<1x96xf32> to vector<24x96xf32>
    %47 = arith.addf %43, %46 : vector<24x96xf32>
    %48 = vector.extract_strided_slice %47 {offsets = [0, 0], sizes = [24, 8], strides = [1, 1]} : vector<24x96xf32> to vector<24x8xf32>
    %49 = vector.extract_strided_slice %47 {offsets = [0, 8], sizes = [24, 8], strides = [1, 1]} : vector<24x96xf32> to vector<24x8xf32>
    %50 = vector.extract_strided_slice %47 {offsets = [0, 16], sizes = [24, 8], strides = [1, 1]} : vector<24x96xf32> to vector<24x8xf32>
    %51 = vector.extract_strided_slice %47 {offsets = [0, 24], sizes = [24, 8], strides = [1, 1]} : vector<24x96xf32> to vector<24x8xf32>
    %52 = vector.extract_strided_slice %47 {offsets = [0, 32], sizes = [24, 8], strides = [1, 1]} : vector<24x96xf32> to vector<24x8xf32>
    %53 = vector.extract_strided_slice %47 {offsets = [0, 40], sizes = [24, 8], strides = [1, 1]} : vector<24x96xf32> to vector<24x8xf32>
    %54 = vector.extract_strided_slice %47 {offsets = [0, 48], sizes = [24, 8], strides = [1, 1]} : vector<24x96xf32> to vector<24x8xf32>
    %55 = vector.extract_strided_slice %47 {offsets = [0, 56], sizes = [24, 8], strides = [1, 1]} : vector<24x96xf32> to vector<24x8xf32>
    %56 = vector.extract_strided_slice %47 {offsets = [0, 64], sizes = [24, 8], strides = [1, 1]} : vector<24x96xf32> to vector<24x8xf32>
    %57 = vector.extract_strided_slice %47 {offsets = [0, 72], sizes = [24, 8], strides = [1, 1]} : vector<24x96xf32> to vector<24x8xf32>
    %58 = vector.extract_strided_slice %47 {offsets = [0, 80], sizes = [24, 8], strides = [1, 1]} : vector<24x96xf32> to vector<24x8xf32>
    %59 = vector.extract_strided_slice %47 {offsets = [0, 88], sizes = [24, 8], strides = [1, 1]} : vector<24x96xf32> to vector<24x8xf32>
    %60 = vector.shape_cast %48 : vector<24x8xf32> to vector<1x24x8xf32>
    %61 = vector.shape_cast %49 : vector<24x8xf32> to vector<1x24x8xf32>
    %62 = vector.shape_cast %50 : vector<24x8xf32> to vector<1x24x8xf32>
    %63 = vector.shape_cast %51 : vector<24x8xf32> to vector<1x24x8xf32>
    %64 = vector.shape_cast %52 : vector<24x8xf32> to vector<1x24x8xf32>
    %65 = vector.shape_cast %53 : vector<24x8xf32> to vector<1x24x8xf32>
    %66 = vector.shape_cast %54 : vector<24x8xf32> to vector<1x24x8xf32>
    %67 = vector.shape_cast %55 : vector<24x8xf32> to vector<1x24x8xf32>
    %68 = vector.shape_cast %56 : vector<24x8xf32> to vector<1x24x8xf32>
    %69 = vector.shape_cast %57 : vector<24x8xf32> to vector<1x24x8xf32>
    %70 = vector.shape_cast %58 : vector<24x8xf32> to vector<1x24x8xf32>
    %71 = vector.shape_cast %59 : vector<24x8xf32> to vector<1x24x8xf32>
    %72 = tpu.concatenate %60, %61, %62, %63, %64, %65, %66, %67, %68, %69, %70, %71 in 0 : vector<1x24x8xf32>, vector<1x24x8xf32>, vector<1x24x8xf32>, vector<1x24x8xf32>, vector<1x24x8xf32>, vector<1x24x8xf32>, vector<1x24x8xf32>, vector<1x24x8xf32>, vector<1x24x8xf32>, vector<1x24x8xf32>, vector<1x24x8xf32>, vector<1x24x8xf32> -> vector<12x24x8xf32>
    %73 = vector.extract_strided_slice %72 {offsets = [0, 0, 0], sizes = [4, 24, 8], strides = [1, 1, 1]} : vector<12x24x8xf32> to vector<4x24x8xf32>
    %cst_26 = arith.constant 0.353553385 : f32
    %74 = vector.broadcast %cst_26 : f32 to vector<4x24x8xf32>
    %75 = arith.mulf %73, %74 : vector<4x24x8xf32>
    %76 = vector.extract_strided_slice %72 {offsets = [4, 0, 0], sizes = [4, 24, 8], strides = [1, 1, 1]} : vector<12x24x8xf32> to vector<4x24x8xf32>
    %77 = vector.extract_strided_slice %72 {offsets = [8, 0, 0], sizes = [4, 24, 8], strides = [1, 1, 1]} : vector<12x24x8xf32> to vector<4x24x8xf32>
    "tpu.trace_start"() <{level = 10 : i32, message = "hqd,hkd->hqk"}> : () -> ()
    %cst_27 = arith.constant dense<0.000000e+00> : vector<4x24x24xf32>
    %78 = tpu.matmul %75, %76, %cst_27 {dimension_numbers = #tpu.dot_dimension_numbers<[2], [2], [1], [1], [0, 0, 0, 1, 1, 1], [0], [0]>} : vector<4x24x8xf32>, vector<4x24x8xf32>, vector<4x24x24xf32> -> vector<4x24x24xf32>
    "tpu.trace_stop"() : () -> ()
    %79 = arith.addf %78, %14 : vector<4x24x24xf32>
    %cst_28 = arith.constant dense<0xFF800000> : vector<4x24xf32>
    %80 = vector.multi_reduction <maximumf>, %79, %cst_28 [2] : vector<4x24x24xf32> to vector<4x24xf32>
    %81 = vector.shape_cast %80 : vector<4x24xf32> to vector<4x24x1xf32>
    %82 = vector.broadcast %81 : vector<4x24x1xf32> to vector<4x24x24xf32>
    %83 = arith.subf %79, %82 : vector<4x24x24xf32>
    %84 = math.exp %83 : vector<4x24x24xf32>
    %cst_29 = arith.constant dense<0.000000e+00> : vector<4x24xf32>
    %85 = vector.multi_reduction <add>, %84, %cst_29 [2] : vector<4x24x24xf32> to vector<4x24xf32>
    %86 = vector.shape_cast %85 : vector<4x24xf32> to vector<4x24x1xf32>
    %87 = tpu.reciprocal %86 {approx = true} : vector<4x24x1xf32> -> vector<4x24x1xf32>
    %88 = vector.broadcast %87 : vector<4x24x1xf32> to vector<4x24x24xf32>
    %89 = arith.mulf %84, %88 : vector<4x24x24xf32>
    "tpu.trace_start"() <{level = 10 : i32, message = "hqk,hkd->hqd"}> : () -> ()
    %cst_30 = arith.constant dense<0.000000e+00> : vector<4x24x8xf32>
    %90 = tpu.matmul %89, %77, %cst_30 {dimension_numbers = #tpu.dot_dimension_numbers<[2], [1], [1], [2], [0, 0, 0, 1, 1, 2], [0], [0]>} : vector<4x24x24xf32>, vector<4x24x8xf32>, vector<4x24x8xf32> -> vector<4x24x8xf32>
    "tpu.trace_stop"() : () -> ()
    %c0_31 = arith.constant 0 : index
    %c0_32 = arith.constant 0 : index
    %c0_33 = arith.constant 0 : index
    %c0_34 = arith.constant 0 : index
    %91 = vector.load %arg8[%c0_31, %c0_32, %c0_33, %c0_34] : memref<3x4x8x32xf32, #tpu.memory_space<vmem>>, vector<1x4x8x32xf32>
    %92 = vector.shape_cast %91 : vector<1x4x8x32xf32> to vector<4x8x32xf32>
    "tpu.trace_start"() <{level = 10 : i32, message = "hqd,hde->hqe"}> : () -> ()
    %cst_35 = arith.constant dense<0.000000e+00> : vector<4x24x32xf32>
    %93 = tpu.matmul %90, %92, %cst_35 {dimension_numbers = #tpu.dot_dimension_numbers<[2], [1], [1], [2], [0, 0, 0, 1, 1, 2], [0], [0]>} : vector<4x24x8xf32>, vector<4x8x32xf32>, vector<4x24x32xf32> -> vector<4x24x32xf32>
    "tpu.trace_stop"() : () -> ()
    %cst_36 = arith.constant dense<0.000000e+00> : vector<24x32xf32>
    %94 = vector.multi_reduction <add>, %93, %cst_36 [0] : vector<4x24x32xf32> to vector<24x32xf32>
    %c0_37 = arith.constant 0 : index
    %c0_38 = arith.constant 0 : index
    %c0_39 = arith.constant 0 : index
    %95 = vector.load %arg9[%c0_37, %c0_38, %c0_39] : memref<3x1x32xf32, #tpu.memory_space<vmem>>, vector<1x1x32xf32>
    %96 = vector.shape_cast %95 : vector<1x1x32xf32> to vector<1x32xf32>
    %97 = vector.broadcast %96 : vector<1x32xf32> to vector<24x32xf32>
    %98 = arith.addf %94, %97 : vector<24x32xf32>
    %99 = arith.addf %5, %98 : vector<24x32xf32>
    %c0_40 = arith.constant 0 : index
    %c0_41 = arith.constant 0 : index
    %c0_42 = arith.constant 0 : index
    %100 = vector.load %arg10[%c0_40, %c0_41, %c0_42] : memref<3x1x32xf32, #tpu.memory_space<vmem>>, vector<1x1x32xf32>
    %101 = vector.shape_cast %100 : vector<1x1x32xf32> to vector<1x32xf32>
    %c0_43 = arith.constant 0 : index
    %c0_44 = arith.constant 0 : index
    %c0_45 = arith.constant 0 : index
    %102 = vector.load %arg11[%c0_43, %c0_44, %c0_45] : memref<3x1x32xf32, #tpu.memory_space<vmem>>, vector<1x1x32xf32>
    %103 = vector.shape_cast %102 : vector<1x1x32xf32> to vector<1x32xf32>
    %cst_46 = arith.constant dense<0.000000e+00> : vector<24xf32>
    %104 = vector.multi_reduction <add>, %99, %cst_46 [1] : vector<24x32xf32> to vector<24xf32>
    %105 = vector.shape_cast %104 : vector<24xf32> to vector<24x1xf32>
    %cst_47 = arith.constant 3.200000e+01 : f32
    %106 = vector.broadcast %cst_47 : f32 to vector<24x1xf32>
    %107 = arith.divf %105, %106 : vector<24x1xf32>
    %108 = vector.broadcast %107 : vector<24x1xf32> to vector<24x32xf32>
    %109 = arith.subf %99, %108 : vector<24x32xf32>
    %110 = arith.mulf %109, %109 : vector<24x32xf32>
    %cst_48 = arith.constant dense<0.000000e+00> : vector<24xf32>
    %111 = vector.multi_reduction <add>, %110, %cst_48 [1] : vector<24x32xf32> to vector<24xf32>
    %112 = vector.shape_cast %111 : vector<24xf32> to vector<24x1xf32>
    %cst_49 = arith.constant 3.200000e+01 : f32
    %113 = vector.broadcast %cst_49 : f32 to vector<24x1xf32>
    %114 = arith.divf %112, %113 : vector<24x1xf32>
    %115 = vector.broadcast %107 : vector<24x1xf32> to vector<24x32xf32>
    %116 = arith.subf %99, %115 : vector<24x32xf32>
    %cst_50 = arith.constant 9.99999974E-6 : f32
    %117 = vector.broadcast %cst_50 : f32 to vector<24x1xf32>
    %118 = arith.addf %114, %117 : vector<24x1xf32>
    %119 = math.rsqrt %118 : vector<24x1xf32>
    %120 = vector.broadcast %119 : vector<24x1xf32> to vector<24x32xf32>
    %121 = arith.mulf %116, %120 : vector<24x32xf32>
    %122 = vector.broadcast %101 : vector<1x32xf32> to vector<24x32xf32>
    %123 = arith.mulf %121, %122 : vector<24x32xf32>
    %124 = vector.broadcast %103 : vector<1x32xf32> to vector<24x32xf32>
    %125 = arith.addf %123, %124 : vector<24x32xf32>
    %c0_51 = arith.constant 0 : index
    %c0_52 = arith.constant 0 : index
    %c0_53 = arith.constant 0 : index
    %126 = vector.load %arg12[%c0_51, %c0_52, %c0_53] : memref<3x32x128xf32, #tpu.memory_space<vmem>>, vector<1x32x128xf32>
    %127 = vector.shape_cast %126 : vector<1x32x128xf32> to vector<32x128xf32>
    %cst_54 = arith.constant dense<0.000000e+00> : vector<24x128xf32>
    %128 = tpu.matmul %125, %127, %cst_54 {dimension_numbers = #tpu.dot_dimension_numbers<[1], [0], [0], [1], [0, 0, 1, 1], [], []>} : vector<24x32xf32>, vector<32x128xf32>, vector<24x128xf32> -> vector<24x128xf32>
    %c0_55 = arith.constant 0 : index
    %c0_56 = arith.constant 0 : index
    %c0_57 = arith.constant 0 : index
    %129 = vector.load %arg13[%c0_55, %c0_56, %c0_57] : memref<3x1x128xf32, #tpu.memory_space<vmem>>, vector<1x1x128xf32>
    %130 = vector.shape_cast %129 : vector<1x1x128xf32> to vector<1x128xf32>
    %131 = vector.broadcast %130 : vector<1x128xf32> to vector<24x128xf32>
    %132 = arith.addf %128, %131 : vector<24x128xf32>
    %133 = arith.mulf %132, %132 : vector<24x128xf32>
    %134 = arith.mulf %132, %133 : vector<24x128xf32>
    %cst_58 = arith.constant 4.471500e-02 : f32
    %135 = vector.broadcast %cst_58 : f32 to vector<24x128xf32>
    %136 = arith.mulf %135, %134 : vector<24x128xf32>
    %137 = arith.addf %132, %136 : vector<24x128xf32>
    %cst_59 = arith.constant 0.797884583 : f32
    %138 = vector.broadcast %cst_59 : f32 to vector<24x128xf32>
    %139 = arith.mulf %138, %137 : vector<24x128xf32>
    %140 = math.tanh %139 : vector<24x128xf32>
    %cst_60 = arith.constant 1.000000e+00 : f32
    %141 = vector.broadcast %cst_60 : f32 to vector<24x128xf32>
    %142 = arith.addf %141, %140 : vector<24x128xf32>
    %cst_61 = arith.constant 5.000000e-01 : f32
    %143 = vector.broadcast %cst_61 : f32 to vector<24x128xf32>
    %144 = arith.mulf %143, %142 : vector<24x128xf32>
    %145 = arith.mulf %132, %144 : vector<24x128xf32>
    %c0_62 = arith.constant 0 : index
    %c0_63 = arith.constant 0 : index
    %c0_64 = arith.constant 0 : index
    %146 = vector.load %arg14[%c0_62, %c0_63, %c0_64] : memref<3x128x32xf32, #tpu.memory_space<vmem>>, vector<1x128x32xf32>
    %147 = vector.shape_cast %146 : vector<1x128x32xf32> to vector<128x32xf32>
    %cst_65 = arith.constant dense<0.000000e+00> : vector<24x32xf32>
    %148 = tpu.matmul %145, %147, %cst_65 {dimension_numbers = #tpu.dot_dimension_numbers<[1], [0], [0], [1], [0, 0, 1, 1], [], []>} : vector<24x128xf32>, vector<128x32xf32>, vector<24x32xf32> -> vector<24x32xf32>
    %c0_66 = arith.constant 0 : index
    %c0_67 = arith.constant 0 : index
    %c0_68 = arith.constant 0 : index
    %149 = vector.load %arg15[%c0_66, %c0_67, %c0_68] : memref<3x1x32xf32, #tpu.memory_space<vmem>>, vector<1x1x32xf32>
    %150 = vector.shape_cast %149 : vector<1x1x32xf32> to vector<1x32xf32>
    %151 = vector.broadcast %150 : vector<1x32xf32> to vector<24x32xf32>
    %152 = arith.addf %148, %151 : vector<24x32xf32>
    %153 = arith.addf %99, %152 : vector<24x32xf32>
    %c1 = arith.constant 1 : index
    %c0_69 = arith.constant 0 : index
    %c0_70 = arith.constant 0 : index
    %154 = vector.load %arg4[%c1, %c0_69, %c0_70] : memref<3x1x32xf32, #tpu.memory_space<vmem>>, vector<1x1x32xf32>
    %155 = vector.shape_cast %154 : vector<1x1x32xf32> to vector<1x32xf32>
    %c1_71 = arith.constant 1 : index
    %c0_72 = arith.constant 0 : index
    %c0_73 = arith.constant 0 : index
    %156 = vector.load %arg5[%c1_71, %c0_72, %c0_73] : memref<3x1x32xf32, #tpu.memory_space<vmem>>, vector<1x1x32xf32>
    %157 = vector.shape_cast %156 : vector<1x1x32xf32> to vector<1x32xf32>
    %cst_74 = arith.constant dense<0.000000e+00> : vector<24xf32>
    %158 = vector.multi_reduction <add>, %153, %cst_74 [1] : vector<24x32xf32> to vector<24xf32>
    %159 = vector.shape_cast %158 : vector<24xf32> to vector<24x1xf32>
    %cst_75 = arith.constant 3.200000e+01 : f32
    %160 = vector.broadcast %cst_75 : f32 to vector<24x1xf32>
    %161 = arith.divf %159, %160 : vector<24x1xf32>
    %162 = vector.broadcast %161 : vector<24x1xf32> to vector<24x32xf32>
    %163 = arith.subf %153, %162 : vector<24x32xf32>
    %164 = arith.mulf %163, %163 : vector<24x32xf32>
    %cst_76 = arith.constant dense<0.000000e+00> : vector<24xf32>
    %165 = vector.multi_reduction <add>, %164, %cst_76 [1] : vector<24x32xf32> to vector<24xf32>
    %166 = vector.shape_cast %165 : vector<24xf32> to vector<24x1xf32>
    %cst_77 = arith.constant 3.200000e+01 : f32
    %167 = vector.broadcast %cst_77 : f32 to vector<24x1xf32>
    %168 = arith.divf %166, %167 : vector<24x1xf32>
    %169 = vector.broadcast %161 : vector<24x1xf32> to vector<24x32xf32>
    %170 = arith.subf %153, %169 : vector<24x32xf32>
    %cst_78 = arith.constant 9.99999974E-6 : f32
    %171 = vector.broadcast %cst_78 : f32 to vector<24x1xf32>
    %172 = arith.addf %168, %171 : vector<24x1xf32>
    %173 = math.rsqrt %172 : vector<24x1xf32>
    %174 = vector.broadcast %173 : vector<24x1xf32> to vector<24x32xf32>
    %175 = arith.mulf %170, %174 : vector<24x32xf32>
    %176 = vector.broadcast %155 : vector<1x32xf32> to vector<24x32xf32>
    %177 = arith.mulf %175, %176 : vector<24x32xf32>
    %178 = vector.broadcast %157 : vector<1x32xf32> to vector<24x32xf32>
    %179 = arith.addf %177, %178 : vector<24x32xf32>
    %c1_79 = arith.constant 1 : index
    %c0_80 = arith.constant 0 : index
    %c0_81 = arith.constant 0 : index
    %180 = vector.load %arg6[%c1_79, %c0_80, %c0_81] : memref<3x32x96xf32, #tpu.memory_space<vmem>>, vector<1x32x96xf32>
    %181 = vector.shape_cast %180 : vector<1x32x96xf32> to vector<32x96xf32>
    %cst_82 = arith.constant dense<0.000000e+00> : vector<24x96xf32>
    %182 = tpu.matmul %179, %181, %cst_82 {dimension_numbers = #tpu.dot_dimension_numbers<[1], [0], [0], [1], [0, 0, 1, 1], [], []>} : vector<24x32xf32>, vector<32x96xf32>, vector<24x96xf32> -> vector<24x96xf32>
    %c1_83 = arith.constant 1 : index
    %c0_84 = arith.constant 0 : index
    %c0_85 = arith.constant 0 : index
    %183 = vector.load %arg7[%c1_83, %c0_84, %c0_85] : memref<3x1x96xf32, #tpu.memory_space<vmem>>, vector<1x1x96xf32>
    %184 = vector.shape_cast %183 : vector<1x1x96xf32> to vector<1x96xf32>
    %185 = vector.broadcast %184 : vector<1x96xf32> to vector<24x96xf32>
    %186 = arith.addf %182, %185 : vector<24x96xf32>
    %187 = vector.extract_strided_slice %186 {offsets = [0, 0], sizes = [24, 8], strides = [1, 1]} : vector<24x96xf32> to vector<24x8xf32>
    %188 = vector.extract_strided_slice %186 {offsets = [0, 8], sizes = [24, 8], strides = [1, 1]} : vector<24x96xf32> to vector<24x8xf32>
    %189 = vector.extract_strided_slice %186 {offsets = [0, 16], sizes = [24, 8], strides = [1, 1]} : vector<24x96xf32> to vector<24x8xf32>
    %190 = vector.extract_strided_slice %186 {offsets = [0, 24], sizes = [24, 8], strides = [1, 1]} : vector<24x96xf32> to vector<24x8xf32>
    %191 = vector.extract_strided_slice %186 {offsets = [0, 32], sizes = [24, 8], strides = [1, 1]} : vector<24x96xf32> to vector<24x8xf32>
    %192 = vector.extract_strided_slice %186 {offsets = [0, 40], sizes = [24, 8], strides = [1, 1]} : vector<24x96xf32> to vector<24x8xf32>
    %193 = vector.extract_strided_slice %186 {offsets = [0, 48], sizes = [24, 8], strides = [1, 1]} : vector<24x96xf32> to vector<24x8xf32>
    %194 = vector.extract_strided_slice %186 {offsets = [0, 56], sizes = [24, 8], strides = [1, 1]} : vector<24x96xf32> to vector<24x8xf32>
    %195 = vector.extract_strided_slice %186 {offsets = [0, 64], sizes = [24, 8], strides = [1, 1]} : vector<24x96xf32> to vector<24x8xf32>
    %196 = vector.extract_strided_slice %186 {offsets = [0, 72], sizes = [24, 8], strides = [1, 1]} : vector<24x96xf32> to vector<24x8xf32>
    %197 = vector.extract_strided_slice %186 {offsets = [0, 80], sizes = [24, 8], strides = [1, 1]} : vector<24x96xf32> to vector<24x8xf32>
    %198 = vector.extract_strided_slice %186 {offsets = [0, 88], sizes = [24, 8], strides = [1, 1]} : vector<24x96xf32> to vector<24x8xf32>
    %199 = vector.shape_cast %187 : vector<24x8xf32> to vector<1x24x8xf32>
    %200 = vector.shape_cast %188 : vector<24x8xf32> to vector<1x24x8xf32>
    %201 = vector.shape_cast %189 : vector<24x8xf32> to vector<1x24x8xf32>
    %202 = vector.shape_cast %190 : vector<24x8xf32> to vector<1x24x8xf32>
    %203 = vector.shape_cast %191 : vector<24x8xf32> to vector<1x24x8xf32>
    %204 = vector.shape_cast %192 : vector<24x8xf32> to vector<1x24x8xf32>
    %205 = vector.shape_cast %193 : vector<24x8xf32> to vector<1x24x8xf32>
    %206 = vector.shape_cast %194 : vector<24x8xf32> to vector<1x24x8xf32>
    %207 = vector.shape_cast %195 : vector<24x8xf32> to vector<1x24x8xf32>
    %208 = vector.shape_cast %196 : vector<24x8xf32> to vector<1x24x8xf32>
    %209 = vector.shape_cast %197 : vector<24x8xf32> to vector<1x24x8xf32>
    %210 = vector.shape_cast %198 : vector<24x8xf32> to vector<1x24x8xf32>
    %211 = tpu.concatenate %199, %200, %201, %202, %203, %204, %205, %206, %207, %208, %209, %210 in 0 : vector<1x24x8xf32>, vector<1x24x8xf32>, vector<1x24x8xf32>, vector<1x24x8xf32>, vector<1x24x8xf32>, vector<1x24x8xf32>, vector<1x24x8xf32>, vector<1x24x8xf32>, vector<1x24x8xf32>, vector<1x24x8xf32>, vector<1x24x8xf32>, vector<1x24x8xf32> -> vector<12x24x8xf32>
    %212 = vector.extract_strided_slice %211 {offsets = [0, 0, 0], sizes = [4, 24, 8], strides = [1, 1, 1]} : vector<12x24x8xf32> to vector<4x24x8xf32>
    %cst_86 = arith.constant 0.353553385 : f32
    %213 = vector.broadcast %cst_86 : f32 to vector<4x24x8xf32>
    %214 = arith.mulf %212, %213 : vector<4x24x8xf32>
    %215 = vector.extract_strided_slice %211 {offsets = [4, 0, 0], sizes = [4, 24, 8], strides = [1, 1, 1]} : vector<12x24x8xf32> to vector<4x24x8xf32>
    %216 = vector.extract_strided_slice %211 {offsets = [8, 0, 0], sizes = [4, 24, 8], strides = [1, 1, 1]} : vector<12x24x8xf32> to vector<4x24x8xf32>
    "tpu.trace_start"() <{level = 10 : i32, message = "hqd,hkd->hqk"}> : () -> ()
    %cst_87 = arith.constant dense<0.000000e+00> : vector<4x24x24xf32>
    %217 = tpu.matmul %214, %215, %cst_87 {dimension_numbers = #tpu.dot_dimension_numbers<[2], [2], [1], [1], [0, 0, 0, 1, 1, 1], [0], [0]>} : vector<4x24x8xf32>, vector<4x24x8xf32>, vector<4x24x24xf32> -> vector<4x24x24xf32>
    "tpu.trace_stop"() : () -> ()
    %218 = arith.addf %217, %14 : vector<4x24x24xf32>
    %cst_88 = arith.constant dense<0xFF800000> : vector<4x24xf32>
    %219 = vector.multi_reduction <maximumf>, %218, %cst_88 [2] : vector<4x24x24xf32> to vector<4x24xf32>
    %220 = vector.shape_cast %219 : vector<4x24xf32> to vector<4x24x1xf32>
    %221 = vector.broadcast %220 : vector<4x24x1xf32> to vector<4x24x24xf32>
    %222 = arith.subf %218, %221 : vector<4x24x24xf32>
    %223 = math.exp %222 : vector<4x24x24xf32>
    %cst_89 = arith.constant dense<0.000000e+00> : vector<4x24xf32>
    %224 = vector.multi_reduction <add>, %223, %cst_89 [2] : vector<4x24x24xf32> to vector<4x24xf32>
    %225 = vector.shape_cast %224 : vector<4x24xf32> to vector<4x24x1xf32>
    %226 = tpu.reciprocal %225 {approx = true} : vector<4x24x1xf32> -> vector<4x24x1xf32>
    %227 = vector.broadcast %226 : vector<4x24x1xf32> to vector<4x24x24xf32>
    %228 = arith.mulf %223, %227 : vector<4x24x24xf32>
    "tpu.trace_start"() <{level = 10 : i32, message = "hqk,hkd->hqd"}> : () -> ()
    %cst_90 = arith.constant dense<0.000000e+00> : vector<4x24x8xf32>
    %229 = tpu.matmul %228, %216, %cst_90 {dimension_numbers = #tpu.dot_dimension_numbers<[2], [1], [1], [2], [0, 0, 0, 1, 1, 2], [0], [0]>} : vector<4x24x24xf32>, vector<4x24x8xf32>, vector<4x24x8xf32> -> vector<4x24x8xf32>
    "tpu.trace_stop"() : () -> ()
    %c1_91 = arith.constant 1 : index
    %c0_92 = arith.constant 0 : index
    %c0_93 = arith.constant 0 : index
    %c0_94 = arith.constant 0 : index
    %230 = vector.load %arg8[%c1_91, %c0_92, %c0_93, %c0_94] : memref<3x4x8x32xf32, #tpu.memory_space<vmem>>, vector<1x4x8x32xf32>
    %231 = vector.shape_cast %230 : vector<1x4x8x32xf32> to vector<4x8x32xf32>
    "tpu.trace_start"() <{level = 10 : i32, message = "hqd,hde->hqe"}> : () -> ()
    %cst_95 = arith.constant dense<0.000000e+00> : vector<4x24x32xf32>
    %232 = tpu.matmul %229, %231, %cst_95 {dimension_numbers = #tpu.dot_dimension_numbers<[2], [1], [1], [2], [0, 0, 0, 1, 1, 2], [0], [0]>} : vector<4x24x8xf32>, vector<4x8x32xf32>, vector<4x24x32xf32> -> vector<4x24x32xf32>
    "tpu.trace_stop"() : () -> ()
    %cst_96 = arith.constant dense<0.000000e+00> : vector<24x32xf32>
    %233 = vector.multi_reduction <add>, %232, %cst_96 [0] : vector<4x24x32xf32> to vector<24x32xf32>
    %c1_97 = arith.constant 1 : index
    %c0_98 = arith.constant 0 : index
    %c0_99 = arith.constant 0 : index
    %234 = vector.load %arg9[%c1_97, %c0_98, %c0_99] : memref<3x1x32xf32, #tpu.memory_space<vmem>>, vector<1x1x32xf32>
    %235 = vector.shape_cast %234 : vector<1x1x32xf32> to vector<1x32xf32>
    %236 = vector.broadcast %235 : vector<1x32xf32> to vector<24x32xf32>
    %237 = arith.addf %233, %236 : vector<24x32xf32>
    %238 = arith.addf %153, %237 : vector<24x32xf32>
    %c1_100 = arith.constant 1 : index
    %c0_101 = arith.constant 0 : index
    %c0_102 = arith.constant 0 : index
    %239 = vector.load %arg10[%c1_100, %c0_101, %c0_102] : memref<3x1x32xf32, #tpu.memory_space<vmem>>, vector<1x1x32xf32>
    %240 = vector.shape_cast %239 : vector<1x1x32xf32> to vector<1x32xf32>
    %c1_103 = arith.constant 1 : index
    %c0_104 = arith.constant 0 : index
    %c0_105 = arith.constant 0 : index
    %241 = vector.load %arg11[%c1_103, %c0_104, %c0_105] : memref<3x1x32xf32, #tpu.memory_space<vmem>>, vector<1x1x32xf32>
    %242 = vector.shape_cast %241 : vector<1x1x32xf32> to vector<1x32xf32>
    %cst_106 = arith.constant dense<0.000000e+00> : vector<24xf32>
    %243 = vector.multi_reduction <add>, %238, %cst_106 [1] : vector<24x32xf32> to vector<24xf32>
    %244 = vector.shape_cast %243 : vector<24xf32> to vector<24x1xf32>
    %cst_107 = arith.constant 3.200000e+01 : f32
    %245 = vector.broadcast %cst_107 : f32 to vector<24x1xf32>
    %246 = arith.divf %244, %245 : vector<24x1xf32>
    %247 = vector.broadcast %246 : vector<24x1xf32> to vector<24x32xf32>
    %248 = arith.subf %238, %247 : vector<24x32xf32>
    %249 = arith.mulf %248, %248 : vector<24x32xf32>
    %cst_108 = arith.constant dense<0.000000e+00> : vector<24xf32>
    %250 = vector.multi_reduction <add>, %249, %cst_108 [1] : vector<24x32xf32> to vector<24xf32>
    %251 = vector.shape_cast %250 : vector<24xf32> to vector<24x1xf32>
    %cst_109 = arith.constant 3.200000e+01 : f32
    %252 = vector.broadcast %cst_109 : f32 to vector<24x1xf32>
    %253 = arith.divf %251, %252 : vector<24x1xf32>
    %254 = vector.broadcast %246 : vector<24x1xf32> to vector<24x32xf32>
    %255 = arith.subf %238, %254 : vector<24x32xf32>
    %cst_110 = arith.constant 9.99999974E-6 : f32
    %256 = vector.broadcast %cst_110 : f32 to vector<24x1xf32>
    %257 = arith.addf %253, %256 : vector<24x1xf32>
    %258 = math.rsqrt %257 : vector<24x1xf32>
    %259 = vector.broadcast %258 : vector<24x1xf32> to vector<24x32xf32>
    %260 = arith.mulf %255, %259 : vector<24x32xf32>
    %261 = vector.broadcast %240 : vector<1x32xf32> to vector<24x32xf32>
    %262 = arith.mulf %260, %261 : vector<24x32xf32>
    %263 = vector.broadcast %242 : vector<1x32xf32> to vector<24x32xf32>
    %264 = arith.addf %262, %263 : vector<24x32xf32>
    %c1_111 = arith.constant 1 : index
    %c0_112 = arith.constant 0 : index
    %c0_113 = arith.constant 0 : index
    %265 = vector.load %arg12[%c1_111, %c0_112, %c0_113] : memref<3x32x128xf32, #tpu.memory_space<vmem>>, vector<1x32x128xf32>
    %266 = vector.shape_cast %265 : vector<1x32x128xf32> to vector<32x128xf32>
    %cst_114 = arith.constant dense<0.000000e+00> : vector<24x128xf32>
    %267 = tpu.matmul %264, %266, %cst_114 {dimension_numbers = #tpu.dot_dimension_numbers<[1], [0], [0], [1], [0, 0, 1, 1], [], []>} : vector<24x32xf32>, vector<32x128xf32>, vector<24x128xf32> -> vector<24x128xf32>
    %c1_115 = arith.constant 1 : index
    %c0_116 = arith.constant 0 : index
    %c0_117 = arith.constant 0 : index
    %268 = vector.load %arg13[%c1_115, %c0_116, %c0_117] : memref<3x1x128xf32, #tpu.memory_space<vmem>>, vector<1x1x128xf32>
    %269 = vector.shape_cast %268 : vector<1x1x128xf32> to vector<1x128xf32>
    %270 = vector.broadcast %269 : vector<1x128xf32> to vector<24x128xf32>
    %271 = arith.addf %267, %270 : vector<24x128xf32>
    %272 = arith.mulf %271, %271 : vector<24x128xf32>
    %273 = arith.mulf %271, %272 : vector<24x128xf32>
    %cst_118 = arith.constant 4.471500e-02 : f32
    %274 = vector.broadcast %cst_118 : f32 to vector<24x128xf32>
    %275 = arith.mulf %274, %273 : vector<24x128xf32>
    %276 = arith.addf %271, %275 : vector<24x128xf32>
    %cst_119 = arith.constant 0.797884583 : f32
    %277 = vector.broadcast %cst_119 : f32 to vector<24x128xf32>
    %278 = arith.mulf %277, %276 : vector<24x128xf32>
    %279 = math.tanh %278 : vector<24x128xf32>
    %cst_120 = arith.constant 1.000000e+00 : f32
    %280 = vector.broadcast %cst_120 : f32 to vector<24x128xf32>
    %281 = arith.addf %280, %279 : vector<24x128xf32>
    %cst_121 = arith.constant 5.000000e-01 : f32
    %282 = vector.broadcast %cst_121 : f32 to vector<24x128xf32>
    %283 = arith.mulf %282, %281 : vector<24x128xf32>
    %284 = arith.mulf %271, %283 : vector<24x128xf32>
    %c1_122 = arith.constant 1 : index
    %c0_123 = arith.constant 0 : index
    %c0_124 = arith.constant 0 : index
    %285 = vector.load %arg14[%c1_122, %c0_123, %c0_124] : memref<3x128x32xf32, #tpu.memory_space<vmem>>, vector<1x128x32xf32>
    %286 = vector.shape_cast %285 : vector<1x128x32xf32> to vector<128x32xf32>
    %cst_125 = arith.constant dense<0.000000e+00> : vector<24x32xf32>
    %287 = tpu.matmul %284, %286, %cst_125 {dimension_numbers = #tpu.dot_dimension_numbers<[1], [0], [0], [1], [0, 0, 1, 1], [], []>} : vector<24x128xf32>, vector<128x32xf32>, vector<24x32xf32> -> vector<24x32xf32>
    %c1_126 = arith.constant 1 : index
    %c0_127 = arith.constant 0 : index
    %c0_128 = arith.constant 0 : index
    %288 = vector.load %arg15[%c1_126, %c0_127, %c0_128] : memref<3x1x32xf32, #tpu.memory_space<vmem>>, vector<1x1x32xf32>
    %289 = vector.shape_cast %288 : vector<1x1x32xf32> to vector<1x32xf32>
    %290 = vector.broadcast %289 : vector<1x32xf32> to vector<24x32xf32>
    %291 = arith.addf %287, %290 : vector<24x32xf32>
    %292 = arith.addf %238, %291 : vector<24x32xf32>
    %c2 = arith.constant 2 : index
    %c0_129 = arith.constant 0 : index
    %c0_130 = arith.constant 0 : index
    %293 = vector.load %arg4[%c2, %c0_129, %c0_130] : memref<3x1x32xf32, #tpu.memory_space<vmem>>, vector<1x1x32xf32>
    %294 = vector.shape_cast %293 : vector<1x1x32xf32> to vector<1x32xf32>
    %c2_131 = arith.constant 2 : index
    %c0_132 = arith.constant 0 : index
    %c0_133 = arith.constant 0 : index
    %295 = vector.load %arg5[%c2_131, %c0_132, %c0_133] : memref<3x1x32xf32, #tpu.memory_space<vmem>>, vector<1x1x32xf32>
    %296 = vector.shape_cast %295 : vector<1x1x32xf32> to vector<1x32xf32>
    %cst_134 = arith.constant dense<0.000000e+00> : vector<24xf32>
    %297 = vector.multi_reduction <add>, %292, %cst_134 [1] : vector<24x32xf32> to vector<24xf32>
    %298 = vector.shape_cast %297 : vector<24xf32> to vector<24x1xf32>
    %cst_135 = arith.constant 3.200000e+01 : f32
    %299 = vector.broadcast %cst_135 : f32 to vector<24x1xf32>
    %300 = arith.divf %298, %299 : vector<24x1xf32>
    %301 = vector.broadcast %300 : vector<24x1xf32> to vector<24x32xf32>
    %302 = arith.subf %292, %301 : vector<24x32xf32>
    %303 = arith.mulf %302, %302 : vector<24x32xf32>
    %cst_136 = arith.constant dense<0.000000e+00> : vector<24xf32>
    %304 = vector.multi_reduction <add>, %303, %cst_136 [1] : vector<24x32xf32> to vector<24xf32>
    %305 = vector.shape_cast %304 : vector<24xf32> to vector<24x1xf32>
    %cst_137 = arith.constant 3.200000e+01 : f32
    %306 = vector.broadcast %cst_137 : f32 to vector<24x1xf32>
    %307 = arith.divf %305, %306 : vector<24x1xf32>
    %308 = vector.broadcast %300 : vector<24x1xf32> to vector<24x32xf32>
    %309 = arith.subf %292, %308 : vector<24x32xf32>
    %cst_138 = arith.constant 9.99999974E-6 : f32
    %310 = vector.broadcast %cst_138 : f32 to vector<24x1xf32>
    %311 = arith.addf %307, %310 : vector<24x1xf32>
    %312 = math.rsqrt %311 : vector<24x1xf32>
    %313 = vector.broadcast %312 : vector<24x1xf32> to vector<24x32xf32>
    %314 = arith.mulf %309, %313 : vector<24x32xf32>
    %315 = vector.broadcast %294 : vector<1x32xf32> to vector<24x32xf32>
    %316 = arith.mulf %314, %315 : vector<24x32xf32>
    %317 = vector.broadcast %296 : vector<1x32xf32> to vector<24x32xf32>
    %318 = arith.addf %316, %317 : vector<24x32xf32>
    %c2_139 = arith.constant 2 : index
    %c0_140 = arith.constant 0 : index
    %c0_141 = arith.constant 0 : index
    %319 = vector.load %arg6[%c2_139, %c0_140, %c0_141] : memref<3x32x96xf32, #tpu.memory_space<vmem>>, vector<1x32x96xf32>
    %320 = vector.shape_cast %319 : vector<1x32x96xf32> to vector<32x96xf32>
    %cst_142 = arith.constant dense<0.000000e+00> : vector<24x96xf32>
    %321 = tpu.matmul %318, %320, %cst_142 {dimension_numbers = #tpu.dot_dimension_numbers<[1], [0], [0], [1], [0, 0, 1, 1], [], []>} : vector<24x32xf32>, vector<32x96xf32>, vector<24x96xf32> -> vector<24x96xf32>
    %c2_143 = arith.constant 2 : index
    %c0_144 = arith.constant 0 : index
    %c0_145 = arith.constant 0 : index
    %322 = vector.load %arg7[%c2_143, %c0_144, %c0_145] : memref<3x1x96xf32, #tpu.memory_space<vmem>>, vector<1x1x96xf32>
    %323 = vector.shape_cast %322 : vector<1x1x96xf32> to vector<1x96xf32>
    %324 = vector.broadcast %323 : vector<1x96xf32> to vector<24x96xf32>
    %325 = arith.addf %321, %324 : vector<24x96xf32>
    %326 = vector.extract_strided_slice %325 {offsets = [0, 0], sizes = [24, 8], strides = [1, 1]} : vector<24x96xf32> to vector<24x8xf32>
    %327 = vector.extract_strided_slice %325 {offsets = [0, 8], sizes = [24, 8], strides = [1, 1]} : vector<24x96xf32> to vector<24x8xf32>
    %328 = vector.extract_strided_slice %325 {offsets = [0, 16], sizes = [24, 8], strides = [1, 1]} : vector<24x96xf32> to vector<24x8xf32>
    %329 = vector.extract_strided_slice %325 {offsets = [0, 24], sizes = [24, 8], strides = [1, 1]} : vector<24x96xf32> to vector<24x8xf32>
    %330 = vector.extract_strided_slice %325 {offsets = [0, 32], sizes = [24, 8], strides = [1, 1]} : vector<24x96xf32> to vector<24x8xf32>
    %331 = vector.extract_strided_slice %325 {offsets = [0, 40], sizes = [24, 8], strides = [1, 1]} : vector<24x96xf32> to vector<24x8xf32>
    %332 = vector.extract_strided_slice %325 {offsets = [0, 48], sizes = [24, 8], strides = [1, 1]} : vector<24x96xf32> to vector<24x8xf32>
    %333 = vector.extract_strided_slice %325 {offsets = [0, 56], sizes = [24, 8], strides = [1, 1]} : vector<24x96xf32> to vector<24x8xf32>
    %334 = vector.extract_strided_slice %325 {offsets = [0, 64], sizes = [24, 8], strides = [1, 1]} : vector<24x96xf32> to vector<24x8xf32>
    %335 = vector.extract_strided_slice %325 {offsets = [0, 72], sizes = [24, 8], strides = [1, 1]} : vector<24x96xf32> to vector<24x8xf32>
    %336 = vector.extract_strided_slice %325 {offsets = [0, 80], sizes = [24, 8], strides = [1, 1]} : vector<24x96xf32> to vector<24x8xf32>
    %337 = vector.extract_strided_slice %325 {offsets = [0, 88], sizes = [24, 8], strides = [1, 1]} : vector<24x96xf32> to vector<24x8xf32>
    %338 = vector.shape_cast %326 : vector<24x8xf32> to vector<1x24x8xf32>
    %339 = vector.shape_cast %327 : vector<24x8xf32> to vector<1x24x8xf32>
    %340 = vector.shape_cast %328 : vector<24x8xf32> to vector<1x24x8xf32>
    %341 = vector.shape_cast %329 : vector<24x8xf32> to vector<1x24x8xf32>
    %342 = vector.shape_cast %330 : vector<24x8xf32> to vector<1x24x8xf32>
    %343 = vector.shape_cast %331 : vector<24x8xf32> to vector<1x24x8xf32>
    %344 = vector.shape_cast %332 : vector<24x8xf32> to vector<1x24x8xf32>
    %345 = vector.shape_cast %333 : vector<24x8xf32> to vector<1x24x8xf32>
    %346 = vector.shape_cast %334 : vector<24x8xf32> to vector<1x24x8xf32>
    %347 = vector.shape_cast %335 : vector<24x8xf32> to vector<1x24x8xf32>
    %348 = vector.shape_cast %336 : vector<24x8xf32> to vector<1x24x8xf32>
    %349 = vector.shape_cast %337 : vector<24x8xf32> to vector<1x24x8xf32>
    %350 = tpu.concatenate %338, %339, %340, %341, %342, %343, %344, %345, %346, %347, %348, %349 in 0 : vector<1x24x8xf32>, vector<1x24x8xf32>, vector<1x24x8xf32>, vector<1x24x8xf32>, vector<1x24x8xf32>, vector<1x24x8xf32>, vector<1x24x8xf32>, vector<1x24x8xf32>, vector<1x24x8xf32>, vector<1x24x8xf32>, vector<1x24x8xf32>, vector<1x24x8xf32> -> vector<12x24x8xf32>
    %351 = vector.extract_strided_slice %350 {offsets = [0, 0, 0], sizes = [4, 24, 8], strides = [1, 1, 1]} : vector<12x24x8xf32> to vector<4x24x8xf32>
    %cst_146 = arith.constant 0.353553385 : f32
    %352 = vector.broadcast %cst_146 : f32 to vector<4x24x8xf32>
    %353 = arith.mulf %351, %352 : vector<4x24x8xf32>
    %354 = vector.extract_strided_slice %350 {offsets = [4, 0, 0], sizes = [4, 24, 8], strides = [1, 1, 1]} : vector<12x24x8xf32> to vector<4x24x8xf32>
    %355 = vector.extract_strided_slice %350 {offsets = [8, 0, 0], sizes = [4, 24, 8], strides = [1, 1, 1]} : vector<12x24x8xf32> to vector<4x24x8xf32>
    "tpu.trace_start"() <{level = 10 : i32, message = "hqd,hkd->hqk"}> : () -> ()
    %cst_147 = arith.constant dense<0.000000e+00> : vector<4x24x24xf32>
    %356 = tpu.matmul %353, %354, %cst_147 {dimension_numbers = #tpu.dot_dimension_numbers<[2], [2], [1], [1], [0, 0, 0, 1, 1, 1], [0], [0]>} : vector<4x24x8xf32>, vector<4x24x8xf32>, vector<4x24x24xf32> -> vector<4x24x24xf32>
    "tpu.trace_stop"() : () -> ()
    %357 = arith.addf %356, %14 : vector<4x24x24xf32>
    %cst_148 = arith.constant dense<0xFF800000> : vector<4x24xf32>
    %358 = vector.multi_reduction <maximumf>, %357, %cst_148 [2] : vector<4x24x24xf32> to vector<4x24xf32>
    %359 = vector.shape_cast %358 : vector<4x24xf32> to vector<4x24x1xf32>
    %360 = vector.broadcast %359 : vector<4x24x1xf32> to vector<4x24x24xf32>
    %361 = arith.subf %357, %360 : vector<4x24x24xf32>
    %362 = math.exp %361 : vector<4x24x24xf32>
    %cst_149 = arith.constant dense<0.000000e+00> : vector<4x24xf32>
    %363 = vector.multi_reduction <add>, %362, %cst_149 [2] : vector<4x24x24xf32> to vector<4x24xf32>
    %364 = vector.shape_cast %363 : vector<4x24xf32> to vector<4x24x1xf32>
    %365 = tpu.reciprocal %364 {approx = true} : vector<4x24x1xf32> -> vector<4x24x1xf32>
    %366 = vector.broadcast %365 : vector<4x24x1xf32> to vector<4x24x24xf32>
    %367 = arith.mulf %362, %366 : vector<4x24x24xf32>
    "tpu.trace_start"() <{level = 10 : i32, message = "hqk,hkd->hqd"}> : () -> ()
    %cst_150 = arith.constant dense<0.000000e+00> : vector<4x24x8xf32>
    %368 = tpu.matmul %367, %355, %cst_150 {dimension_numbers = #tpu.dot_dimension_numbers<[2], [1], [1], [2], [0, 0, 0, 1, 1, 2], [0], [0]>} : vector<4x24x24xf32>, vector<4x24x8xf32>, vector<4x24x8xf32> -> vector<4x24x8xf32>
    "tpu.trace_stop"() : () -> ()
    %c2_151 = arith.constant 2 : index
    %c0_152 = arith.constant 0 : index
    %c0_153 = arith.constant 0 : index
    %c0_154 = arith.constant 0 : index
    %369 = vector.load %arg8[%c2_151, %c0_152, %c0_153, %c0_154] : memref<3x4x8x32xf32, #tpu.memory_space<vmem>>, vector<1x4x8x32xf32>
    %370 = vector.shape_cast %369 : vector<1x4x8x32xf32> to vector<4x8x32xf32>
    "tpu.trace_start"() <{level = 10 : i32, message = "hqd,hde->hqe"}> : () -> ()
    %cst_155 = arith.constant dense<0.000000e+00> : vector<4x24x32xf32>
    %371 = tpu.matmul %368, %370, %cst_155 {dimension_numbers = #tpu.dot_dimension_numbers<[2], [1], [1], [2], [0, 0, 0, 1, 1, 2], [0], [0]>} : vector<4x24x8xf32>, vector<4x8x32xf32>, vector<4x24x32xf32> -> vector<4x24x32xf32>
    "tpu.trace_stop"() : () -> ()
    %cst_156 = arith.constant dense<0.000000e+00> : vector<24x32xf32>
    %372 = vector.multi_reduction <add>, %371, %cst_156 [0] : vector<4x24x32xf32> to vector<24x32xf32>
    %c2_157 = arith.constant 2 : index
    %c0_158 = arith.constant 0 : index
    %c0_159 = arith.constant 0 : index
    %373 = vector.load %arg9[%c2_157, %c0_158, %c0_159] : memref<3x1x32xf32, #tpu.memory_space<vmem>>, vector<1x1x32xf32>
    %374 = vector.shape_cast %373 : vector<1x1x32xf32> to vector<1x32xf32>
    %375 = vector.broadcast %374 : vector<1x32xf32> to vector<24x32xf32>
    %376 = arith.addf %372, %375 : vector<24x32xf32>
    %377 = arith.addf %292, %376 : vector<24x32xf32>
    %c2_160 = arith.constant 2 : index
    %c0_161 = arith.constant 0 : index
    %c0_162 = arith.constant 0 : index
    %378 = vector.load %arg10[%c2_160, %c0_161, %c0_162] : memref<3x1x32xf32, #tpu.memory_space<vmem>>, vector<1x1x32xf32>
    %379 = vector.shape_cast %378 : vector<1x1x32xf32> to vector<1x32xf32>
    %c2_163 = arith.constant 2 : index
    %c0_164 = arith.constant 0 : index
    %c0_165 = arith.constant 0 : index
    %380 = vector.load %arg11[%c2_163, %c0_164, %c0_165] : memref<3x1x32xf32, #tpu.memory_space<vmem>>, vector<1x1x32xf32>
    %381 = vector.shape_cast %380 : vector<1x1x32xf32> to vector<1x32xf32>
    %cst_166 = arith.constant dense<0.000000e+00> : vector<24xf32>
    %382 = vector.multi_reduction <add>, %377, %cst_166 [1] : vector<24x32xf32> to vector<24xf32>
    %383 = vector.shape_cast %382 : vector<24xf32> to vector<24x1xf32>
    %cst_167 = arith.constant 3.200000e+01 : f32
    %384 = vector.broadcast %cst_167 : f32 to vector<24x1xf32>
    %385 = arith.divf %383, %384 : vector<24x1xf32>
    %386 = vector.broadcast %385 : vector<24x1xf32> to vector<24x32xf32>
    %387 = arith.subf %377, %386 : vector<24x32xf32>
    %388 = arith.mulf %387, %387 : vector<24x32xf32>
    %cst_168 = arith.constant dense<0.000000e+00> : vector<24xf32>
    %389 = vector.multi_reduction <add>, %388, %cst_168 [1] : vector<24x32xf32> to vector<24xf32>
    %390 = vector.shape_cast %389 : vector<24xf32> to vector<24x1xf32>
    %cst_169 = arith.constant 3.200000e+01 : f32
    %391 = vector.broadcast %cst_169 : f32 to vector<24x1xf32>
    %392 = arith.divf %390, %391 : vector<24x1xf32>
    %393 = vector.broadcast %385 : vector<24x1xf32> to vector<24x32xf32>
    %394 = arith.subf %377, %393 : vector<24x32xf32>
    %cst_170 = arith.constant 9.99999974E-6 : f32
    %395 = vector.broadcast %cst_170 : f32 to vector<24x1xf32>
    %396 = arith.addf %392, %395 : vector<24x1xf32>
    %397 = math.rsqrt %396 : vector<24x1xf32>
    %398 = vector.broadcast %397 : vector<24x1xf32> to vector<24x32xf32>
    %399 = arith.mulf %394, %398 : vector<24x32xf32>
    %400 = vector.broadcast %379 : vector<1x32xf32> to vector<24x32xf32>
    %401 = arith.mulf %399, %400 : vector<24x32xf32>
    %402 = vector.broadcast %381 : vector<1x32xf32> to vector<24x32xf32>
    %403 = arith.addf %401, %402 : vector<24x32xf32>
    %c2_171 = arith.constant 2 : index
    %c0_172 = arith.constant 0 : index
    %c0_173 = arith.constant 0 : index
    %404 = vector.load %arg12[%c2_171, %c0_172, %c0_173] : memref<3x32x128xf32, #tpu.memory_space<vmem>>, vector<1x32x128xf32>
    %405 = vector.shape_cast %404 : vector<1x32x128xf32> to vector<32x128xf32>
    %cst_174 = arith.constant dense<0.000000e+00> : vector<24x128xf32>
    %406 = tpu.matmul %403, %405, %cst_174 {dimension_numbers = #tpu.dot_dimension_numbers<[1], [0], [0], [1], [0, 0, 1, 1], [], []>} : vector<24x32xf32>, vector<32x128xf32>, vector<24x128xf32> -> vector<24x128xf32>
    %c2_175 = arith.constant 2 : index
    %c0_176 = arith.constant 0 : index
    %c0_177 = arith.constant 0 : index
    %407 = vector.load %arg13[%c2_175, %c0_176, %c0_177] : memref<3x1x128xf32, #tpu.memory_space<vmem>>, vector<1x1x128xf32>
    %408 = vector.shape_cast %407 : vector<1x1x128xf32> to vector<1x128xf32>
    %409 = vector.broadcast %408 : vector<1x128xf32> to vector<24x128xf32>
    %410 = arith.addf %406, %409 : vector<24x128xf32>
    %411 = arith.mulf %410, %410 : vector<24x128xf32>
    %412 = arith.mulf %410, %411 : vector<24x128xf32>
    %cst_178 = arith.constant 4.471500e-02 : f32
    %413 = vector.broadcast %cst_178 : f32 to vector<24x128xf32>
    %414 = arith.mulf %413, %412 : vector<24x128xf32>
    %415 = arith.addf %410, %414 : vector<24x128xf32>
    %cst_179 = arith.constant 0.797884583 : f32
    %416 = vector.broadcast %cst_179 : f32 to vector<24x128xf32>
    %417 = arith.mulf %416, %415 : vector<24x128xf32>
    %418 = math.tanh %417 : vector<24x128xf32>
    %cst_180 = arith.constant 1.000000e+00 : f32
    %419 = vector.broadcast %cst_180 : f32 to vector<24x128xf32>
    %420 = arith.addf %419, %418 : vector<24x128xf32>
    %cst_181 = arith.constant 5.000000e-01 : f32
    %421 = vector.broadcast %cst_181 : f32 to vector<24x128xf32>
    %422 = arith.mulf %421, %420 : vector<24x128xf32>
    %423 = arith.mulf %410, %422 : vector<24x128xf32>
    %c2_182 = arith.constant 2 : index
    %c0_183 = arith.constant 0 : index
    %c0_184 = arith.constant 0 : index
    %424 = vector.load %arg14[%c2_182, %c0_183, %c0_184] : memref<3x128x32xf32, #tpu.memory_space<vmem>>, vector<1x128x32xf32>
    %425 = vector.shape_cast %424 : vector<1x128x32xf32> to vector<128x32xf32>
    %cst_185 = arith.constant dense<0.000000e+00> : vector<24x32xf32>
    %426 = tpu.matmul %423, %425, %cst_185 {dimension_numbers = #tpu.dot_dimension_numbers<[1], [0], [0], [1], [0, 0, 1, 1], [], []>} : vector<24x128xf32>, vector<128x32xf32>, vector<24x32xf32> -> vector<24x32xf32>
    %c2_186 = arith.constant 2 : index
    %c0_187 = arith.constant 0 : index
    %c0_188 = arith.constant 0 : index
    %427 = vector.load %arg15[%c2_186, %c0_187, %c0_188] : memref<3x1x32xf32, #tpu.memory_space<vmem>>, vector<1x1x32xf32>
    %428 = vector.shape_cast %427 : vector<1x1x32xf32> to vector<1x32xf32>
    %429 = vector.broadcast %428 : vector<1x32xf32> to vector<24x32xf32>
    %430 = arith.addf %426, %429 : vector<24x32xf32>
    %431 = arith.addf %377, %430 : vector<24x32xf32>
    %432 = vector.extract_strided_slice %431 {offsets = [0, 0], sizes = [1, 32], strides = [1, 1]} : vector<24x32xf32> to vector<1x32xf32>
    %c0_189 = arith.constant 0 : index
    %c0_190 = arith.constant 0 : index
    %433 = vector.load %arg16[%c0_189, %c0_190] : memref<32x10xf32, #tpu.memory_space<vmem>>, vector<32x10xf32>
    %cst_191 = arith.constant dense<0.000000e+00> : vector<1x10xf32>
    %434 = tpu.matmul %432, %433, %cst_191 {dimension_numbers = #tpu.dot_dimension_numbers<[1], [0], [0], [1], [0, 0, 1, 1], [], []>} : vector<1x32xf32>, vector<32x10xf32>, vector<1x10xf32> -> vector<1x10xf32>
    %c0_192 = arith.constant 0 : index
    %c0_193 = arith.constant 0 : index
    %435 = vector.load %arg17[%c0_192, %c0_193] : memref<1x10xf32, #tpu.memory_space<vmem>>, vector<1x10xf32>
    %436 = arith.addf %434, %435 : vector<1x10xf32>
    %c0_194 = arith.constant 0 : index
    %c0_195 = arith.constant 0 : index
    %c0_196 = arith.constant 0 : index
    %437 = vector.load %arg18[%c0_194, %c0_195, %c0_196] : memref<1x1x10xf32, #tpu.memory_space<vmem>>, vector<1x1x10xf32>
    %438 = vector.shape_cast %437 : vector<1x1x10xf32> to vector<1x10xf32>
    %439 = vector.shape_cast %436 : vector<1x10xf32> to vector<1x1x10xf32>
    tpu.vector_store %arg18[%c0_194, %c0_195, %c0_196], %439 {strides = array<i32>} : memref<1x1x10xf32, #tpu.memory_space<vmem>>, vector<1x1x10xf32>,
    return
  }
  func.func @transform_0(%arg0: i32) -> (i32, i32, i32) {
    %c0_i32 = arith.constant 0 : i32
    %c0_i32_0 = arith.constant 0 : i32
    %c0_i32_1 = arith.constant 0 : i32
    return %arg0, %c0_i32, %c0_i32_0 : i32, i32, i32
  }
  func.func @transform_1(%arg0: i32) -> (i32, i32) {
    %c0_i32 = arith.constant 0 : i32
    %c0_i32_0 = arith.constant 0 : i32
    %c0_i32_1 = arith.constant 0 : i32
    return %c0_i32, %c0_i32_0 : i32, i32
  }
  func.func @transform_2(%arg0: i32) -> (i32, i32) {
    %c0_i32 = arith.constant 0 : i32
    %c0_i32_0 = arith.constant 0 : i32
    %c0_i32_1 = arith.constant 0 : i32
    return %c0_i32, %c0_i32_0 : i32, i32
  }
  func.func @transform_3(%arg0: i32) -> (i32, i32, i32) {
    %c0_i32 = arith.constant 0 : i32
    %c0_i32_0 = arith.constant 0 : i32
    %c0_i32_1 = arith.constant 0 : i32
    %c0_i32_2 = arith.constant 0 : i32
    return %c0_i32, %c0_i32_0, %c0_i32_1 : i32, i32, i32
  }
  func.func @transform_4(%arg0: i32) -> (i32, i32, i32) {
    %c0_i32 = arith.constant 0 : i32
    %c0_i32_0 = arith.constant 0 : i32
    %c0_i32_1 = arith.constant 0 : i32
    %c0_i32_2 = arith.constant 0 : i32
    return %c0_i32, %c0_i32_0, %c0_i32_1 : i32, i32, i32
  }
  func.func @transform_5(%arg0: i32) -> (i32, i32, i32) {
    %c0_i32 = arith.constant 0 : i32
    %c0_i32_0 = arith.constant 0 : i32
    %c0_i32_1 = arith.constant 0 : i32
    %c0_i32_2 = arith.constant 0 : i32
    return %c0_i32, %c0_i32_0, %c0_i32_1 : i32, i32, i32
  }
  func.func @transform_6(%arg0: i32) -> (i32, i32, i32) {
    %c0_i32 = arith.constant 0 : i32
    %c0_i32_0 = arith.constant 0 : i32
    %c0_i32_1 = arith.constant 0 : i32
    %c0_i32_2 = arith.constant 0 : i32
    return %c0_i32, %c0_i32_0, %c0_i32_1 : i32, i32, i32
  }
  func.func @transform_7(%arg0: i32) -> (i32, i32, i32, i32) {
    %c0_i32 = arith.constant 0 : i32
    %c0_i32_0 = arith.constant 0 : i32
    %c0_i32_1 = arith.constant 0 : i32
    %c0_i32_2 = arith.constant 0 : i32
    %c0_i32_3 = arith.constant 0 : i32
    return %c0_i32, %c0_i32_0, %c0_i32_1, %c0_i32_2 : i32, i32, i32, i32
  }
  func.func @transform_8(%arg0: i32) -> (i32, i32, i32) {
    %c0_i32 = arith.constant 0 : i32
    %c0_i32_0 = arith.constant 0 : i32
    %c0_i32_1 = arith.constant 0 : i32
    %c0_i32_2 = arith.constant 0 : i32
    return %c0_i32, %c0_i32_0, %c0_i32_1 : i32, i32, i32
  }
  func.func @transform_9(%arg0: i32) -> (i32, i32, i32) {
    %c0_i32 = arith.constant 0 : i32
    %c0_i32_0 = arith.constant 0 : i32
    %c0_i32_1 = arith.constant 0 : i32
    %c0_i32_2 = arith.constant 0 : i32
    return %c0_i32, %c0_i32_0, %c0_i32_1 : i32, i32, i32
  }
  func.func @transform_10(%arg0: i32) -> (i32, i32, i32) {
    %c0_i32 = arith.constant 0 : i32
    %c0_i32_0 = arith.constant 0 : i32
    %c0_i32_1 = arith.constant 0 : i32
    %c0_i32_2 = arith.constant 0 : i32
    return %c0_i32, %c0_i32_0, %c0_i32_1 : i32, i32, i32
  }
  func.func @transform_11(%arg0: i32) -> (i32, i32, i32) {
    %c0_i32 = arith.constant 0 : i32
    %c0_i32_0 = arith.constant 0 : i32
    %c0_i32_1 = arith.constant 0 : i32
    %c0_i32_2 = arith.constant 0 : i32
    return %c0_i32, %c0_i32_0, %c0_i32_1 : i32, i32, i32
  }
  func.func @transform_12(%arg0: i32) -> (i32, i32, i32) {
    %c0_i32 = arith.constant 0 : i32
    %c0_i32_0 = arith.constant 0 : i32
    %c0_i32_1 = arith.constant 0 : i32
    %c0_i32_2 = arith.constant 0 : i32
    return %c0_i32, %c0_i32_0, %c0_i32_1 : i32, i32, i32
  }
  func.func @transform_13(%arg0: i32) -> (i32, i32, i32) {
    %c0_i32 = arith.constant 0 : i32
    %c0_i32_0 = arith.constant 0 : i32
    %c0_i32_1 = arith.constant 0 : i32
    %c0_i32_2 = arith.constant 0 : i32
    return %c0_i32, %c0_i32_0, %c0_i32_1 : i32, i32, i32
  }
  func.func @transform_14(%arg0: i32) -> (i32, i32, i32) {
    %c0_i32 = arith.constant 0 : i32
    %c0_i32_0 = arith.constant 0 : i32
    %c0_i32_1 = arith.constant 0 : i32
    %c0_i32_2 = arith.constant 0 : i32
    return %c0_i32, %c0_i32_0, %c0_i32_1 : i32, i32, i32
  }
  func.func @transform_15(%arg0: i32) -> (i32, i32) {
    %c0_i32 = arith.constant 0 : i32
    %c0_i32_0 = arith.constant 0 : i32
    %c0_i32_1 = arith.constant 0 : i32
    return %c0_i32, %c0_i32_0 : i32, i32
  }
  func.func @transform_16(%arg0: i32) -> (i32, i32) {
    %c0_i32 = arith.constant 0 : i32
    %c0_i32_0 = arith.constant 0 : i32
    %c0_i32_1 = arith.constant 0 : i32
    return %c0_i32, %c0_i32_0 : i32, i32
  }
  func.func @transform_17(%arg0: i32) -> (i32, i32, i32) {
    %c0_i32 = arith.constant 0 : i32
    %c0_i32_0 = arith.constant 0 : i32
    %c0_i32_1 = arith.constant 0 : i32
    return %arg0, %c0_i32, %c0_i32_0 : i32, i32, i32
  }
}

</mosaic_0001>

<llo_original>
// kernel: vit_forward.1
$region0: #{vit_forward.1}
  #allocation0 [shape = 'u32[]', space=smem, size = 0x4, offset = 0x4, fixed_abs, tag = 'smem constant byte address 0x4 - core index']
  #allocation1 [shape = 'u32[144,128]{1,0:T(1,128)}', space=vmem, size = 0x12000, scoped, tag = 'internal scratch']
  %s0 = inlined_call_operand.vmem [shape: f32[2,24,64], index: 0, kind: input, shape index: {}]
  %s1 = inlined_call_operand.vmem [shape: f32[64,32], index: 1, kind: input, shape index: {}]
  %s2 = inlined_call_operand.vmem [shape: f32[24,32], index: 2, kind: input, shape index: {}]
  %s3 = inlined_call_operand.vmem [shape: f32[3,1,32], index: 3, kind: input, shape index: {}]
  %s4 = inlined_call_operand.vmem [shape: f32[3,1,32], index: 4, kind: input, shape index: {}]
  %s5 = inlined_call_operand.vmem [shape: f32[3,32,96], index: 5, kind: input, shape index: {}]
  %s6 = inlined_call_operand.vmem [shape: f32[3,1,96], index: 6, kind: input, shape index: {}]
  %s7 = inlined_call_operand.vmem [shape: f32[3,4,8,32], index: 7, kind: input, shape index: {}]
  %s8 = inlined_call_operand.vmem [shape: f32[3,1,32], index: 8, kind: input, shape index: {}]
  %s9 = inlined_call_operand.vmem [shape: f32[3,1,32], index: 9, kind: input, shape index: {}]
  %s10 = inlined_call_operand.vmem [shape: f32[3,1,32], index: 10, kind: input, shape index: {}]
  %s11 = inlined_call_operand.vmem [shape: f32[3,32,128], index: 11, kind: input, shape index: {}]
  %s12 = inlined_call_operand.vmem [shape: f32[3,1,128], index: 12, kind: input, shape index: {}]
  %s13 = inlined_call_operand.vmem [shape: f32[3,128,32], index: 13, kind: input, shape index: {}]
  %s14 = inlined_call_operand.vmem [shape: f32[3,1,32], index: 14, kind: input, shape index: {}]
  %s15 = inlined_call_operand.vmem [shape: f32[32,10], index: 15, kind: input, shape index: {}]
  %s16 = inlined_call_operand.vmem [shape: f32[1,10], index: 16, kind: input, shape index: {}]
  %s17 = inlined_call_operand.hbm [shape: f32[2,1,10], index: 17, kind: output, shape index: {}]
  %s18 = sld [smem:[#allocation0]]
  $region101: #{vit_forward.1} parent=0
    _
  %s20 = ssub.s32 1, %s18
  %s21 = scalar_select 0, %s20, %s18
  $region1: #{vit_forward.1} parent=0
    #allocation2 [shape = 'u8[1024]{0}', space=vmem, size = 0x400, scoped, tag = 'output window, operand 0']
    #allocation3 [shape = 's32[2]{0}', space=sflag, size = 0x8, scoped, tag = 'scoped memory for vit_forward.1']
    %22 = vsyncpa [#allocation3], 0
    %s23 = scalar_lea.sflag [#allocation3], 1
    %24 = vsyncpa %s23, 0
    loop: start=0, step=1, limit=4
    $region2: #{vit_forward.1} parent=1 // loop_pre_header
      _
    $region3: #{vit_forward.1} parent=1 // loop_header
      %s26 = sphi 0, %s30
      %p27 = scmp.ge.s32.totalorder %s26, 4
      %s36 = sphi 0, %s38
      %s39 = sphi 0, %s36
      %s40 = sphi 0, %s39
      %s56 = sphi 0, %s40
      %s60 = sphi 0, %s60
      %s62 = sphi 0, %s60
      %s63 = sphi 0, %s62
      %s77 = sphi 0, %s63
      %s81 = sphi 0, %s81
      %s83 = sphi 0, %s81
      %s84 = sphi 0, %s83
      %s98 = sphi 0, %s84
      %s102 = sphi 0, %s102
      %s104 = sphi 0, %s102
      %s105 = sphi 0, %s104
      %s119 = sphi 0, %s105
      %s123 = sphi 0, %s123
      %s125 = sphi 0, %s123
      %s126 = sphi 0, %s125
      %s140 = sphi 0, %s126
      %s144 = sphi 0, %s144
      %s146 = sphi 0, %s144
      %s147 = sphi 0, %s146
      %s161 = sphi 0, %s147
      %s165 = sphi 0, %s165
      %s167 = sphi 0, %s165
      %s168 = sphi 0, %s167
      %s182 = sphi 0, %s168
      %s186 = sphi 0, %s186
      %s188 = sphi 0, %s186
      %s189 = sphi 0, %s188
      %s203 = sphi 0, %s189
      %s207 = sphi 0, %s207
      %s209 = sphi 0, %s207
      %s210 = sphi 0, %s209
      %s224 = sphi 0, %s210
      %s228 = sphi 0, %s228
      %s230 = sphi 0, %s228
      %s231 = sphi 0, %s230
      %s245 = sphi 0, %s231
      %s249 = sphi 0, %s249
      %s251 = sphi 0, %s249
      %s252 = sphi 0, %s251
      %s266 = sphi 0, %s252
      %s270 = sphi 0, %s270
      %s272 = sphi 0, %s270
      %s273 = sphi 0, %s272
      %s287 = sphi 0, %s273
      %s291 = sphi 0, %s291
      %s293 = sphi 0, %s291
      %s294 = sphi 0, %s293
      %s308 = sphi 0, %s294
      %s312 = sphi 0, %s312
      %s314 = sphi 0, %s312
      %s315 = sphi 0, %s314
      %s329 = sphi 0, %s315
      %s333 = sphi 0, %s333
      %s335 = sphi 0, %s333
      %s336 = sphi 0, %s335
      %s350 = sphi 0, %s336
      %s354 = sphi 0, %s354
      %s356 = sphi 0, %s354
      %s357 = sphi 0, %s356
      %s371 = sphi 0, %s357
      %s375 = sphi 0, %s375
      %s377 = sphi 0, %s375
      %s378 = sphi 0, %s377
      %s392 = sphi 0, %s378
      %s398 = sphi 0, %s400
      %s401 = sphi 0, %s398
      %s402 = sphi 0, %s401
      %s418 = sphi 0, %s402
    $region4: #{vit_forward.1} parent=1 // loop_header_branch
      %29 = sbr.rel (%p27) target = $region8
    $region5: #{vit_forward.1} parent=1 // loop_body
      %s31 = ssub.s32 %s26, 1
      %s32 = ssub.s32 %s26, 2
      %s33 = sadd.s32 %s26, 1
      %s34 = ssub.s32 %s26, %s33
      %p35 = scmp.eq.s32.totalorder %s34, 0
      %s37 = sadd.s32 %s36, 1
      %s38 = scalar_select %p35, %s36, %s37
      %p41 = pneg %p35
      %p42 = scmp.eq.s32.totalorder %s26, 1
      %p43 = por %p41, %p42
      %p44 = scmp.ne.s32.totalorder %s36, %s39
      %p45 = scmp.eq.s32.totalorder %s26, 0
      %p46 = por %p44, %p45
      %p47 = scmp.ne.s32.totalorder %s36, %s39
      %p48 = scmp.eq.s32.totalorder %s31, 1
      %p49 = por %p47, %p48
      %p50 = scmp.ne.s32.totalorder %s39, %s40
      %p51 = scmp.eq.s32.totalorder %s31, 0
      %p52 = por %p50, %p51
      %p53 = scmp.ne.s32.totalorder %s39, %s40
      %p54 = scmp.eq.s32.totalorder %s32, 1
      %p55 = por %p53, %p54
      %p57 = scmp.ne.s32.totalorder %s40, %s56
      %p58 = scmp.eq.s32.totalorder %s32, 0
      %p59 = por %p57, %p58
      %s61 = sadd.s32 %s60, 1
      %p64 = scmp.eq.s32.totalorder %s26, 1
      %p65 = scmp.ne.s32.totalorder %s60, %s62
      %p66 = scmp.eq.s32.totalorder %s26, 0
      %p67 = por %p65, %p66
      %p68 = scmp.ne.s32.totalorder %s60, %s62
      %p69 = scmp.eq.s32.totalorder %s31, 1
      %p70 = por %p68, %p69
      %p71 = scmp.ne.s32.totalorder %s62, %s63
      %p72 = scmp.eq.s32.totalorder %s31, 0
      %p73 = por %p71, %p72
      %p74 = scmp.ne.s32.totalorder %s62, %s63
      %p75 = scmp.eq.s32.totalorder %s32, 1
      %p76 = por %p74, %p75
      %p78 = scmp.ne.s32.totalorder %s63, %s77
      %p79 = scmp.eq.s32.totalorder %s32, 0
      %p80 = por %p78, %p79
      %s82 = sadd.s32 %s81, 1
      %p85 = scmp.eq.s32.totalorder %s26, 1
      %p86 = scmp.ne.s32.totalorder %s81, %s83
      %p87 = scmp.eq.s32.totalorder %s26, 0
      %p88 = por %p86, %p87
      %p89 = scmp.ne.s32.totalorder %s81, %s83
      %p90 = scmp.eq.s32.totalorder %s31, 1
      %p91 = por %p89, %p90
      %p92 = scmp.ne.s32.totalorder %s83, %s84
      %p93 = scmp.eq.s32.totalorder %s31, 0
      %p94 = por %p92, %p93
      %p95 = scmp.ne.s32.totalorder %s83, %s84
      %p96 = scmp.eq.s32.totalorder %s32, 1
      %p97 = por %p95, %p96
      %p99 = scmp.ne.s32.totalorder %s84, %s98
      %p100 = scmp.eq.s32.totalorder %s32, 0
      %p101 = por %p99, %p100
      %s103 = sadd.s32 %s102, 1
      %p106 = scmp.eq.s32.totalorder %s26, 1
      %p107 = scmp.ne.s32.totalorder %s102, %s104
      %p108 = scmp.eq.s32.totalorder %s26, 0
      %p109 = por %p107, %p108
      %p110 = scmp.ne.s32.totalorder %s102, %s104
      %p111 = scmp.eq.s32.totalorder %s31, 1
      %p112 = por %p110, %p111
      %p113 = scmp.ne.s32.totalorder %s104, %s105
      %p114 = scmp.eq.s32.totalorder %s31, 0
      %p115 = por %p113, %p114
      %p116 = scmp.ne.s32.totalorder %s104, %s105
      %p117 = scmp.eq.s32.totalorder %s32, 1
      %p118 = por %p116, %p117
      %p120 = scmp.ne.s32.totalorder %s105, %s119
      %p121 = scmp.eq.s32.totalorder %s32, 0
      %p122 = por %p120, %p121
      %s124 = sadd.s32 %s123, 1
      %p127 = scmp.eq.s32.totalorder %s26, 1
      %p128 = scmp.ne.s32.totalorder %s123, %s125
      %p129 = scmp.eq.s32.totalorder %s26, 0
      %p130 = por %p128, %p129
      %p131 = scmp.ne.s32.totalorder %s123, %s125
      %p132 = scmp.eq.s32.totalorder %s31, 1
      %p133 = por %p131, %p132
      %p134 = scmp.ne.s32.totalorder %s125, %s126
      %p135 = scmp.eq.s32.totalorder %s31, 0
      %p136 = por %p134, %p135
      %p137 = scmp.ne.s32.totalorder %s125, %s126
      %p138 = scmp.eq.s32.totalorder %s32, 1
      %p139 = por %p137, %p138
      %p141 = scmp.ne.s32.totalorder %s126, %s140
      %p142 = scmp.eq.s32.totalorder %s32, 0
      %p143 = por %p141, %p142
      %s145 = sadd.s32 %s144, 1
      %p148 = scmp.eq.s32.totalorder %s26, 1
      %p149 = scmp.ne.s32.totalorder %s144, %s146
      %p150 = scmp.eq.s32.totalorder %s26, 0
      %p151 = por %p149, %p150
      %p152 = scmp.ne.s32.totalorder %s144, %s146
      %p153 = scmp.eq.s32.totalorder %s31, 1
      %p154 = por %p152, %p153
      %p155 = scmp.ne.s32.totalorder %s146, %s147
      %p156 = scmp.eq.s32.totalorder %s31, 0
      %p157 = por %p155, %p156
      %p158 = scmp.ne.s32.totalorder %s146, %s147
      %p159 = scmp.eq.s32.totalorder %s32, 1
      %p160 = por %p158, %p159
      %p162 = scmp.ne.s32.totalorder %s147, %s161
      %p163 = scmp.eq.s32.totalorder %s32, 0
      %p164 = por %p162, %p163
      %s166 = sadd.s32 %s165, 1
      %p169 = scmp.eq.s32.totalorder %s26, 1
      %p170 = scmp.ne.s32.totalorder %s165, %s167
      %p171 = scmp.eq.s32.totalorder %s26, 0
      %p172 = por %p170, %p171
      %p173 = scmp.ne.s32.totalorder %s165, %s167
      %p174 = scmp.eq.s32.totalorder %s31, 1
      %p175 = por %p173, %p174
      %p176 = scmp.ne.s32.totalorder %s167, %s168
      %p177 = scmp.eq.s32.totalorder %s31, 0
      %p178 = por %p176, %p177
      %p179 = scmp.ne.s32.totalorder %s167, %s168
      %p180 = scmp.eq.s32.totalorder %s32, 1
      %p181 = por %p179, %p180
      %p183 = scmp.ne.s32.totalorder %s168, %s182
      %p184 = scmp.eq.s32.totalorder %s32, 0
      %p185 = por %p183, %p184
      %s187 = sadd.s32 %s186, 1
      %p190 = scmp.eq.s32.totalorder %s26, 1
      %p191 = scmp.ne.s32.totalorder %s186, %s188
      %p192 = scmp.eq.s32.totalorder %s26, 0
      %p193 = por %p191, %p192
      %p194 = scmp.ne.s32.totalorder %s186, %s188
      %p195 = scmp.eq.s32.totalorder %s31, 1
      %p196 = por %p194, %p195
      %p197 = scmp.ne.s32.totalorder %s188, %s189
      %p198 = scmp.eq.s32.totalorder %s31, 0
      %p199 = por %p197, %p198
      %p200 = scmp.ne.s32.totalorder %s188, %s189
      %p201 = scmp.eq.s32.totalorder %s32, 1
      %p202 = por %p200, %p201
      %p204 = scmp.ne.s32.totalorder %s189, %s203
      %p205 = scmp.eq.s32.totalorder %s32, 0
      %p206 = por %p204, %p205
      %s208 = sadd.s32 %s207, 1
      %p211 = scmp.eq.s32.totalorder %s26, 1
      %p212 = scmp.ne.s32.totalorder %s207, %s209
      %p213 = scmp.eq.s32.totalorder %s26, 0
      %p214 = por %p212, %p213
      %p215 = scmp.ne.s32.totalorder %s207, %s209
      %p216 = scmp.eq.s32.totalorder %s31, 1
      %p217 = por %p215, %p216
      %p218 = scmp.ne.s32.totalorder %s209, %s210
      %p219 = scmp.eq.s32.totalorder %s31, 0
      %p220 = por %p218, %p219
      %p221 = scmp.ne.s32.totalorder %s209, %s210
      %p222 = scmp.eq.s32.totalorder %s32, 1
      %p223 = por %p221, %p222
      %p225 = scmp.ne.s32.totalorder %s210, %s224
      %p226 = scmp.eq.s32.totalorder %s32, 0
      %p227 = por %p225, %p226
      %s229 = sadd.s32 %s228, 1
      %p232 = scmp.eq.s32.totalorder %s26, 1
      %p233 = scmp.ne.s32.totalorder %s228, %s230
      %p234 = scmp.eq.s32.totalorder %s26, 0
      %p235 = por %p233, %p234
      %p236 = scmp.ne.s32.totalorder %s228, %s230
      %p237 = scmp.eq.s32.totalorder %s31, 1
      %p238 = por %p236, %p237
      %p239 = scmp.ne.s32.totalorder %s230, %s231
      %p240 = scmp.eq.s32.totalorder %s31, 0
      %p241 = por %p239, %p240
      %p242 = scmp.ne.s32.totalorder %s230, %s231
      %p243 = scmp.eq.s32.totalorder %s32, 1
      %p244 = por %p242, %p243
      %p246 = scmp.ne.s32.totalorder %s231, %s245
      %p247 = scmp.eq.s32.totalorder %s32, 0
      %p248 = por %p246, %p247
      %s250 = sadd.s32 %s249, 1
      %p253 = scmp.eq.s32.totalorder %s26, 1
      %p254 = scmp.ne.s32.totalorder %s249, %s251
      %p255 = scmp.eq.s32.totalorder %s26, 0
      %p256 = por %p254, %p255
      %p257 = scmp.ne.s32.totalorder %s249, %s251
      %p258 = scmp.eq.s32.totalorder %s31, 1
      %p259 = por %p257, %p258
      %p260 = scmp.ne.s32.totalorder %s251, %s252
      %p261 = scmp.eq.s32.totalorder %s31, 0
      %p262 = por %p260, %p261
      %p263 = scmp.ne.s32.totalorder %s251, %s252
      %p264 = scmp.eq.s32.totalorder %s32, 1
      %p265 = por %p263, %p264
      %p267 = scmp.ne.s32.totalorder %s252, %s266
      %p268 = scmp.eq.s32.totalorder %s32, 0
      %p269 = por %p267, %p268
      %s271 = sadd.s32 %s270, 1
      %p274 = scmp.eq.s32.totalorder %s26, 1
      %p275 = scmp.ne.s32.totalorder %s270, %s272
      %p276 = scmp.eq.s32.totalorder %s26, 0
      %p277 = por %p275, %p276
      %p278 = scmp.ne.s32.totalorder %s270, %s272
      %p279 = scmp.eq.s32.totalorder %s31, 1
      %p280 = por %p278, %p279
      %p281 = scmp.ne.s32.totalorder %s272, %s273
      %p282 = scmp.eq.s32.totalorder %s31, 0
      %p283 = por %p281, %p282
      %p284 = scmp.ne.s32.totalorder %s272, %s273
      %p285 = scmp.eq.s32.totalorder %s32, 1
      %p286 = por %p284, %p285
      %p288 = scmp.ne.s32.totalorder %s273, %s287
      %p289 = scmp.eq.s32.totalorder %s32, 0
      %p290 = por %p288, %p289
      %s292 = sadd.s32 %s291, 1
      %p295 = scmp.eq.s32.totalorder %s26, 1
      %p296 = scmp.ne.s32.totalorder %s291, %s293
      %p297 = scmp.eq.s32.totalorder %s26, 0
      %p298 = por %p296, %p297
      %p299 = scmp.ne.s32.totalorder %s291, %s293
      %p300 = scmp.eq.s32.totalorder %s31, 1
      %p301 = por %p299, %p300
      %p302 = scmp.ne.s32.totalorder %s293, %s294
      %p303 = scmp.eq.s32.totalorder %s31, 0
      %p304 = por %p302, %p303
      %p305 = scmp.ne.s32.totalorder %s293, %s294
      %p306 = scmp.eq.s32.totalorder %s32, 1
      %p307 = por %p305, %p306
      %p309 = scmp.ne.s32.totalorder %s294, %s308
      %p310 = scmp.eq.s32.totalorder %s32, 0
      %p311 = por %p309, %p310
      %s313 = sadd.s32 %s312, 1
      %p316 = scmp.eq.s32.totalorder %s26, 1
      %p317 = scmp.ne.s32.totalorder %s312, %s314
      %p318 = scmp.eq.s32.totalorder %s26, 0
      %p319 = por %p317, %p318
      %p320 = scmp.ne.s32.totalorder %s312, %s314
      %p321 = scmp.eq.s32.totalorder %s31, 1
      %p322 = por %p320, %p321
      %p323 = scmp.ne.s32.totalorder %s314, %s315
      %p324 = scmp.eq.s32.totalorder %s31, 0
      %p325 = por %p323, %p324
      %p326 = scmp.ne.s32.totalorder %s314, %s315
      %p327 = scmp.eq.s32.totalorder %s32, 1
      %p328 = por %p326, %p327
      %p330 = scmp.ne.s32.totalorder %s315, %s329
      %p331 = scmp.eq.s32.totalorder %s32, 0
      %p332 = por %p330, %p331
      %s334 = sadd.s32 %s333, 1
      %p337 = scmp.eq.s32.totalorder %s26, 1
      %p338 = scmp.ne.s32.totalorder %s333, %s335
      %p339 = scmp.eq.s32.totalorder %s26, 0
      %p340 = por %p338, %p339
      %p341 = scmp.ne.s32.totalorder %s333, %s335
      %p342 = scmp.eq.s32.totalorder %s31, 1
      %p343 = por %p341, %p342
      %p344 = scmp.ne.s32.totalorder %s335, %s336
      %p345 = scmp.eq.s32.totalorder %s31, 0
      %p346 = por %p344, %p345
      %p347 = scmp.ne.s32.totalorder %s335, %s336
      %p348 = scmp.eq.s32.totalorder %s32, 1
      %p349 = por %p347, %p348
      %p351 = scmp.ne.s32.totalorder %s336, %s350
      %p352 = scmp.eq.s32.totalorder %s32, 0
      %p353 = por %p351, %p352
      %s355 = sadd.s32 %s354, 1
      %p358 = scmp.eq.s32.totalorder %s26, 1
      %p359 = scmp.ne.s32.totalorder %s354, %s356
      %p360 = scmp.eq.s32.totalorder %s26, 0
      %p361 = por %p359, %p360
      %p362 = scmp.ne.s32.totalorder %s354, %s356
      %p363 = scmp.eq.s32.totalorder %s31, 1
      %p364 = por %p362, %p363
      %p365 = scmp.ne.s32.totalorder %s356, %s357
      %p366 = scmp.eq.s32.totalorder %s31, 0
      %p367 = por %p365, %p366
      %p368 = scmp.ne.s32.totalorder %s356, %s357
      %p369 = scmp.eq.s32.totalorder %s32, 1
      %p370 = por %p368, %p369
      %p372 = scmp.ne.s32.totalorder %s357, %s371
      %p373 = scmp.eq.s32.totalorder %s32, 0
      %p374 = por %p372, %p373
      %s376 = sadd.s32 %s375, 1
      %p379 = scmp.eq.s32.totalorder %s26, 1
      %p380 = scmp.ne.s32.totalorder %s375, %s377
      %p381 = scmp.eq.s32.totalorder %s26, 0
      %p382 = por %p380, %p381
      %p383 = scmp.ne.s32.totalorder %s375, %s377
      %p384 = scmp.eq.s32.totalorder %s31, 1
      %p385 = por %p383, %p384
      %p386 = scmp.ne.s32.totalorder %s377, %s378
      %p387 = scmp.eq.s32.totalorder %s31, 0
      %p388 = por %p386, %p387
      %p389 = scmp.ne.s32.totalorder %s377, %s378
      %p390 = scmp.eq.s32.totalorder %s32, 1
      %p391 = por %p389, %p390
      %p393 = scmp.ne.s32.totalorder %s378, %s392
      %p394 = scmp.eq.s32.totalorder %s32, 0
      %p395 = por %p393, %p394
      %s396 = ssub.s32 %s26, %s33
      %p397 = scmp.eq.s32.totalorder %s396, 0
      %s399 = sadd.s32 %s398, 1
      %s400 = scalar_select %p397, %s398, %s399
      %p403 = pneg %p397
      %p404 = scmp.eq.s32.totalorder %s26, 1
      %p405 = por %p403, %p404
      %p406 = scmp.ne.s32.totalorder %s398, %s401
      %p407 = scmp.eq.s32.totalorder %s26, 0
      %p408 = por %p406, %p407
      %p409 = scmp.ne.s32.totalorder %s398, %s401
      %p410 = scmp.eq.s32.totalorder %s31, 1
      %p411 = por %p409, %p410
      %p412 = scmp.ne.s32.totalorder %s401, %s402
      %p413 = scmp.eq.s32.totalorder %s31, 0
      %p414 = por %p412, %p413
      %p415 = scmp.ne.s32.totalorder %s401, %s402
      %p416 = scmp.eq.s32.totalorder %s32, 1
      %p417 = por %p415, %p416
      %p419 = scmp.ne.s32.totalorder %s402, %s418
      %p420 = scmp.eq.s32.totalorder %s32, 0
      %p421 = por %p419, %p420
      %p422 = scmp.le.s32.totalorder 1, %s26
      %p423 = scmp.lt.s32.totalorder %s26, 3
      %p424 = pnand %p422, %p423
      %p425 = pneg %p424
      // Predicated region
      $region9: #{vit_forward.1} parent=5 // pred_check
        _
      $region10: #{vit_forward.1} parent=5 // pred_check_branch
        %427 = sbr.rel (%p424) target = $region12
      $region11: #{vit_forward.1} parent=5 // pred_region
        %s428 = ssub.s32 %s26, 1
        // Predicated region
        $region13: #{vit_forward.1} parent=11 // pred_check
          %p429 = pneg %p73
        $region14: #{vit_forward.1} parent=11 // pred_check_branch
          %431 = sbr.rel (%p429) target = $region16
        $region15: #{vit_forward.1} parent=11 // pred_region
          _
        $region16: #{vit_forward.1} parent=11 // pred_fallthru
          _
        // Predicated region
        $region17: #{vit_forward.1} parent=11 // pred_check
          %p432 = pneg %p94
        $region18: #{vit_forward.1} parent=11 // pred_check_branch
          %434 = sbr.rel (%p432) target = $region20
        $region19: #{vit_forward.1} parent=11 // pred_region
          _
        $region20: #{vit_forward.1} parent=11 // pred_fallthru
          _
        // Predicated region
        $region21: #{vit_forward.1} parent=11 // pred_check
          %p435 = pneg %p115
        $region22: #{vit_forward.1} parent=11 // pred_check_branch
          %437 = sbr.rel (%p435) target = $region24
        $region23: #{vit_forward.1} parent=11 // pred_region
          _
        $region24: #{vit_forward.1} parent=11 // pred_fallthru
          _
        // Predicated region
        $region25: #{vit_forward.1} parent=11 // pred_check
          %p438 = pneg %p136
        $region26: #{vit_forward.1} parent=11 // pred_check_branch
          %440 = sbr.rel (%p438) target = $region28
        $region27: #{vit_forward.1} parent=11 // pred_region
          _
        $region28: #{vit_forward.1} parent=11 // pred_fallthru
          _
        // Predicated region
        $region29: #{vit_forward.1} parent=11 // pred_check
          %p441 = pneg %p157
        $region30: #{vit_forward.1} parent=11 // pred_check_branch
          %443 = sbr.rel (%p441) target = $region32
        $region31: #{vit_forward.1} parent=11 // pred_region
          _
        $region32: #{vit_forward.1} parent=11 // pred_fallthru
          _
        // Predicated region
        $region33: #{vit_forward.1} parent=11 // pred_check
          %p444 = pneg %p178
        $region34: #{vit_forward.1} parent=11 // pred_check_branch
          %446 = sbr.rel (%p444) target = $region36
        $region35: #{vit_forward.1} parent=11 // pred_region
          _
        $region36: #{vit_forward.1} parent=11 // pred_fallthru
          _
        // Predicated region
        $region37: #{vit_forward.1} parent=11 // pred_check
          %p447 = pneg %p199
        $region38: #{vit_forward.1} parent=11 // pred_check_branch
          %449 = sbr.rel (%p447) target = $region40
        $region39: #{vit_forward.1} parent=11 // pred_region
          _
        $region40: #{vit_forward.1} parent=11 // pred_fallthru
          _
        // Predicated region
        $region41: #{vit_forward.1} parent=11 // pred_check
          %p450 = pneg %p220
        $region42: #{vit_forward.1} parent=11 // pred_check_branch
          %452 = sbr.rel (%p450) target = $region44
        $region43: #{vit_forward.1} parent=11 // pred_region
          _
        $region44: #{vit_forward.1} parent=11 // pred_fallthru
          _
        // Predicated region
        $region45: #{vit_forward.1} parent=11 // pred_check
          %p453 = pneg %p241
        $region46: #{vit_forward.1} parent=11 // pred_check_branch
          %455 = sbr.rel (%p453) target = $region48
        $region47: #{vit_forward.1} parent=11 // pred_region
          _
        $region48: #{vit_forward.1} parent=11 // pred_fallthru
          _
        // Predicated region
        $region49: #{vit_forward.1} parent=11 // pred_check
          %p456 = pneg %p262
        $region50: #{vit_forward.1} parent=11 // pred_check_branch
          %458 = sbr.rel (%p456) target = $region52
        $region51: #{vit_forward.1} parent=11 // pred_region
          _
        $region52: #{vit_forward.1} parent=11 // pred_fallthru
          _
        // Predicated region
        $region53: #{vit_forward.1} parent=11 // pred_check
          %p459 = pneg %p283
        $region54: #{vit_forward.1} parent=11 // pred_check_branch
          %461 = sbr.rel (%p459) target = $region56
        $region55: #{vit_forward.1} parent=11 // pred_region
          _
        $region56: #{vit_forward.1} parent=11 // pred_fallthru
          _
        // Predicated region
        $region57: #{vit_forward.1} parent=11 // pred_check
          %p462 = pneg %p304
        $region58: #{vit_forward.1} parent=11 // pred_check_branch
          %464 = sbr.rel (%p462) target = $region60
        $region59: #{vit_forward.1} parent=11 // pred_region
          _
        $region60: #{vit_forward.1} parent=11 // pred_fallthru
          _
        // Predicated region
        $region61: #{vit_forward.1} parent=11 // pred_check
          %p465 = pneg %p325
        $region62: #{vit_forward.1} parent=11 // pred_check_branch
          %467 = sbr.rel (%p465) target = $region64
        $region63: #{vit_forward.1} parent=11 // pred_region
          _
        $region64: #{vit_forward.1} parent=11 // pred_fallthru
          _
        // Predicated region
        $region65: #{vit_forward.1} parent=11 // pred_check
          %p468 = pneg %p346
        $region66: #{vit_forward.1} parent=11 // pred_check_branch
          %470 = sbr.rel (%p468) target = $region68
        $region67: #{vit_forward.1} parent=11 // pred_region
          _
        $region68: #{vit_forward.1} parent=11 // pred_fallthru
          _
        // Predicated region
        $region69: #{vit_forward.1} parent=11 // pred_check
          %p471 = pneg %p367
        $region70: #{vit_forward.1} parent=11 // pred_check_branch
          %473 = sbr.rel (%p471) target = $region72
        $region71: #{vit_forward.1} parent=11 // pred_region
          _
        $region72: #{vit_forward.1} parent=11 // pred_fallthru
          _
        // Predicated region
        $region73: #{vit_forward.1} parent=11 // pred_check
          %p474 = pneg %p388
        $region74: #{vit_forward.1} parent=11 // pred_check_branch
          %476 = sbr.rel (%p474) target = $region76
        $region75: #{vit_forward.1} parent=11 // pred_region
          _
        $region76: #{vit_forward.1} parent=11 // pred_fallthru
          _
      $region12: #{vit_forward.1} parent=5 // pred_fallthru
        _
      %p477 = scmp.lt.s32.totalorder %s26, 2
      // Predicated region
      $region77: #{vit_forward.1} parent=5 // pred_check
        %p478 = pneg %p477
      $region78: #{vit_forward.1} parent=5 // pred_check_branch
        %480 = sbr.rel (%p478) target = $region80
      $region79: #{vit_forward.1} parent=5 // pred_region
        // Predicated region
        $region81: #{vit_forward.1} parent=79 // pred_check
          %p481 = pneg %p46
        $region82: #{vit_forward.1} parent=79 // pred_check_branch
          %483 = sbr.rel (%p481) target = $region84
        $region83: #{vit_forward.1} parent=79 // pred_region
          %p484 = scmp.lt.s32.totalorder %s26, 1
          %s485 = scalar_select %p484, %s26, 1
          %s486 = smul.addr %s485, 3
          %s487 = smul.addr %s486, 8
          %s488 = scalar_lea.vmem %s0, %s487
        $region84: #{vit_forward.1} parent=79 // pred_fallthru
          _
      $region80: #{vit_forward.1} parent=5 // pred_fallthru
        _
      %p489 = scmp.le.s32.totalorder 1, %s26
      %p490 = scmp.lt.s32.totalorder %s26, 3
      %p491 = pnand %p489, %p490
      %p492 = pneg %p491
      // Predicated region
      $region85: #{vit_forward.1} parent=5 // pred_check
        _
      $region86: #{vit_forward.1} parent=5 // pred_check_branch
        %494 = sbr.rel (%p491) target = $region88
      $region87: #{vit_forward.1} parent=5 // pred_region
        %s495 = ssub.s32 %s26, 1
        %p496 = scmp.lt.s32.totalorder %s31, 1
        %s497 = scalar_select %p496, %s31, 1
        %s498 = smul.addr %s497, 3
        %s499 = smul.addr %s498, 8
        %s500 = scalar_lea.vmem %s0, %s499
        %p501 = pneg %p52
        %p502 = pneg %p49
        %p503 = pneg %p73
        %p504 = pneg %p70
        %p505 = pneg %p94
        %p506 = pneg %p91
        %p507 = pneg %p115
        %p508 = pneg %p112
        %p509 = pneg %p136
        %p510 = pneg %p133
        %p511 = pneg %p157
        %p512 = pneg %p154
        %p513 = pneg %p178
        %p514 = pneg %p175
        %p515 = pneg %p199
        %p516 = pneg %p196
        %p517 = pneg %p220
        %p518 = pneg %p217
        %p519 = pneg %p241
        %p520 = pneg %p238
        %p521 = pneg %p262
        %p522 = pneg %p259
        %p523 = pneg %p283
        %p524 = pneg %p280
        %p525 = pneg %p304
        %p526 = pneg %p301
        %p527 = pneg %p325
        %p528 = pneg %p322
        %p529 = pneg %p346
        %p530 = pneg %p343
        %p531 = pneg %p367
        %p532 = pneg %p364
        %p533 = pneg %p388
        %p534 = pneg %p385
        %p535 = pneg %p414
        %p536 = pneg %p411
        %s537 = sand.u32 %s401, 1
        %s538 = scalar_lea.sflag [#allocation3], %s537
        %s539 = sand.u32 %s401, 1
        %s540 = scalar_lea.vmem [#allocation2], %s539
        %p541 = scmp.lt.s32.totalorder %s31, 1
        %s542 = scalar_select %p541, %s31, 1
        %s543 = smul.addr %s542, 3
        %s544 = smul.addr %s543, 8
        %s545 = scalar_lea.vmem %s0, %s544
        %v546 = vld [vmem:[%s545] sm:$0xff]
        %v547 = vld [vmem:[%s545 + $0x8] sm:$0xff]
        %v548 = vld [vmem:[%s545 + $0x10] sm:$0xff]
        %v549 = vld [vmem:[%s1] sm:$0xff]
        %v550 = vld [vmem:[%s1 + $0x8] sm:$0xff]
        %v551 = vld [vmem:[%s1 + $0x10] sm:$0xff]
        %v552 = vld [vmem:[%s1 + $0x18] sm:$0xff]
        %v553 = vld [vmem:[%s1 + $0x20] sm:$0xff]
        %v554 = vld [vmem:[%s1 + $0x28] sm:$0xff]
        %v555 = vld [vmem:[%s1 + $0x30] sm:$0xff]
        %v556 = vld [vmem:[%s1 + $0x38] sm:$0xff]
        %v557 = vld [vmem:[%s2] sm:$0xff]
        %v558 = vld [vmem:[%s2 + $0x8] sm:$0xff]
        %v559 = vld [vmem:[%s2 + $0x10] sm:$0xff]
        %vm560 = vcmask 523264
        %v562 = vsel %vm560, %v546, 0
        %v565 = vsel %vm560, %v547, 0
        %v568 = vsel %vm560, %v548, 0
        %570 = vmatprep.subr.mxu0 0.0
        %571 = vmatpush1.msra.mxu0 0.0
        %572 = vmatprep.subr.mxu0 0.0
        %573 = vmatpush1.msra.mxu0 0.0
        %574 = vmatprep.subr.mxu0 0.0
        %575 = vmatpush1.msra.mxu0 0.0
        %576 = vmatprep.subr.mxu0 0.0
        %577 = vmatpush1.msra.mxu0 0.0
        %578 = vmatprep.subr.mxu0 0.0
        %579 = vmatpush1.msra.mxu0 0.0
        %580 = vmatprep.subr.mxu0 0.0
        %581 = vmatpush1.msra.mxu0 0.0
        %582 = vmatprep.subr.mxu0 0.0
        %583 = vmatpush1.msra.mxu0 0.0
        %584 = vmatprep.subr.mxu0 0.0
        %585 = vmatpush1.msra.mxu0 0.0
        %586 = vmatprep.subr.mxu0 0.0
        %587 = vmatpush1.msra.mxu0 %v556
        %588 = vmatprep.subr.mxu0 0.0
        %589 = vmatpush1.msra.mxu0 %v555
        %590 = vmatprep.subr.mxu0 0.0
        %591 = vmatpush1.msra.mxu0 %v554
        %592 = vmatprep.subr.mxu0 0.0
        %593 = vmatpush1.msra.mxu0 %v553
        %594 = vmatprep.subr.mxu0 0.0
        %595 = vmatpush1.msra.mxu0 %v552
        %596 = vmatprep.subr.mxu0 0.0
        %597 = vmatpush1.msra.mxu0 %v551
        %598 = vmatprep.subr.mxu0 0.0
        %599 = vmatpush1.msra.mxu0 %v550
        %600 = vmatprep.subr.mxu0 0.0
        %601 = vmatpush1.msra.mxu0 %v549
        %602 = vmatprep.subr.mxu0 0.0
        %603 = vmatpush2.msra.mxu0 0.0
        %604 = vmatprep.subr.mxu0 0.0
        %605 = vmatpush2.msra.mxu0 0.0
        %606 = vmatprep.subr.mxu0 0.0
        %607 = vmatpush2.msra.mxu0 0.0
        %608 = vmatprep.subr.mxu0 0.0
        %609 = vmatpush2.msra.mxu0 0.0
        %610 = vmatprep.subr.mxu0 0.0
        %611 = vmatpush2.msra.mxu0 0.0
        %612 = vmatprep.subr.mxu0 0.0
        %613 = vmatpush2.msra.mxu0 0.0
        %614 = vmatprep.subr.mxu0 0.0
        %615 = vmatpush2.msra.mxu0 0.0
        %616 = vmatprep.subr.mxu0 0.0
        %617 = vmatpush2.msra.mxu0 0.0
        %618 = vmatprep.subr.mxu0 0.0
        %619 = vmatpush2.msra.mxu0 0.0
        %620 = vmatprep.subr.mxu0 0.0
        %621 = vmatpush2.msra.mxu0 0.0
        %622 = vmatprep.subr.mxu0 0.0
        %623 = vmatpush2.msra.mxu0 0.0
        %624 = vmatprep.subr.mxu0 0.0
        %625 = vmatpush2.msra.mxu0 0.0
        %626 = vmatprep.subr.mxu0 0.0
        %627 = vmatpush2.msra.mxu0 0.0
        %628 = vmatprep.subr.mxu0 0.0
        %629 = vmatpush2.msra.mxu0 0.0
        %630 = vmatprep.subr.mxu0 0.0
        %631 = vmatpush2.msra.mxu0 0.0
        %632 = vmatprep.subr.mxu0 0.0
        %633 = vmatpush2.msra.mxu0 0.0
        %634 = vmatprep.mubr.f32.mxu0 0.0
        %635 = vmatmul.mubr.f32.gmra.mxu0 %v562
        %v636 = vpop.f32.mrf.mxu0
        %v637 = vadd.f32 %v557, %v636
        %v638 = vpop.f32.mrf.mxu0
        %639 = vmatprep.mubr.f32.mxu0 0.0
        %640 = vmatmul.mubr.f32.gmra.mxu0 %v565
        %v641 = vpop.f32.mrf.mxu0
        %v642 = vadd.f32 %v558, %v641
        %v643 = vpop.f32.mrf.mxu0
        %644 = vmatprep.mubr.f32.mxu0 0.0
        %645 = vmatmul.mubr.f32.gmra.mxu0 %v568
        %v646 = vpop.f32.mrf.mxu0
        %v647 = vadd.f32 %v559, %v646
        %v648 = vpop.f32.mrf.mxu0
        %649 = vdwg.mxu0
        %v650 = vlaneseq
        %v651 = vand.u32 %v650, 127
        %vm652 = vcmp.lt.s32.totalorder %v651, 17
        %v653 = vsel %vm652, 0.0, -1e+30
        %v654 = vld [vmem:[%s3] sm:$0x1]
        %v655 = vld [vmem:[%s4] sm:$0x1]
        %vm656 = vcmask 261120
        %v657 = vsel %vm656, %v637, 0.0
        %658 = vadd.xlane.f32.xlu0 %v657
        %v659 = vpop.xlane.xlu0 %658
        %v660 = vsel %vm656, %v642, 0.0
        %661 = vadd.xlane.f32.xlu0 %v660
        %v662 = vpop.xlane.xlu0 %661
        %v663 = vsel %vm656, %v647, 0.0
        %664 = vadd.xlane.f32.xlu0 %v663
        %v665 = vpop.xlane.xlu0 %664
        %v666 = vrcp.pop 32.0
        %v667 = vmul.f32 %v659, %v666
        %v668 = vmul.f32 %v662, %v666
        %v669 = vmul.f32 %v665, %v666
        %v670 = vsub.f32 %v637, %v667
        %v671 = vsub.f32 %v642, %v668
        %v672 = vsub.f32 %v647, %v669
        %v673 = vmul.f32 %v670, %v670
        %v674 = vmul.f32 %v671, %v671
        %v675 = vmul.f32 %v672, %v672
        %v676 = vsel %vm656, %v673, 0.0
        %677 = vadd.xlane.f32.xlu0 %v676
        %v678 = vpop.xlane.xlu0 %677
        %v679 = vsel %vm656, %v674, 0.0
        %680 = vadd.xlane.f32.xlu0 %v679
        %v681 = vpop.xlane.xlu0 %680
        %v682 = vsel %vm656, %v675, 0.0
        %683 = vadd.xlane.f32.xlu0 %v682
        %v684 = vpop.xlane.xlu0 %683
        %v685 = vmul.f32 %v678, %v666
        %v686 = vmul.f32 %v681, %v666
        %v687 = vmul.f32 %v684, %v666
        %v688 = vadd.f32 %v685, 1e-05
        %v689 = vadd.f32 %v686, 1e-05
        %v690 = vadd.f32 %v687, 1e-05
        %v691 = vrsqrt.pop %v688
        %v692 = vrsqrt.pop %v689
        %v693 = vrsqrt.pop %v690
        %v694 = vmul.f32 %v670, %v691
        %v695 = vmul.f32 %v671, %v692
        %v696 = vmul.f32 %v672, %v693
        %v698 = vlaneseq
        %v699 = vshrl.u32 %v698, 7
        %v700 = vsub.s32 0, %v699
        %v701 = vrot.slane %v654, %v700
        %v703 = vmul.f32 %v694, %v701
        %v704 = vmul.f32 %v695, %v701
        %v705 = vmul.f32 %v696, %v701
        %v707 = vlaneseq
        %v708 = vshrl.u32 %v707, 7
        %v709 = vsub.s32 0, %v708
        %v710 = vrot.slane %v655, %v709
        %v712 = vadd.f32 %v703, %v710
        %v713 = vadd.f32 %v704, %v710
        %v714 = vadd.f32 %v705, %v710
        %v715 = vld [vmem:[%s5] sm:$0xff]
        %v716 = vld [vmem:[%s5 + $0x8] sm:$0xff]
        %v717 = vld [vmem:[%s5 + $0x10] sm:$0xff]
        %v718 = vld [vmem:[%s5 + $0x18] sm:$0xff]
        %v719 = vld [vmem:[%s6] sm:$0x1]
        %v721 = vlaneseq
        %v722 = vshrl.u32 %v721, 7
        %v723 = vsub.s32 0, %v722
        %v724 = vrot.slane %v719, %v723
        %v727 = vsel %vm656, %v712, 0
        %v730 = vsel %vm656, %v713, 0
        %v733 = vsel %vm656, %v714, 0
        %735 = vmatprep.subr.mxu0 0.0
        %736 = vmatpush1.msra.mxu0 0.0
        %737 = vmatprep.subr.mxu0 0.0
        %738 = vmatpush1.msra.mxu0 0.0
        %739 = vmatprep.subr.mxu0 0.0
        %740 = vmatpush1.msra.mxu0 0.0
        %741 = vmatprep.subr.mxu0 0.0
        %742 = vmatpush1.msra.mxu0 0.0
        %743 = vmatprep.subr.mxu0 0.0
        %744 = vmatpush1.msra.mxu0 0.0
        %745 = vmatprep.subr.mxu0 0.0
        %746 = vmatpush1.msra.mxu0 0.0
        %747 = vmatprep.subr.mxu0 0.0
        %748 = vmatpush1.msra.mxu0 0.0
        %749 = vmatprep.subr.mxu0 0.0
        %750 = vmatpush1.msra.mxu0 0.0
        %751 = vmatprep.subr.mxu0 0.0
        %752 = vmatpush1.msra.mxu0 0.0
        %753 = vmatprep.subr.mxu0 0.0
        %754 = vmatpush1.msra.mxu0 0.0
        %755 = vmatprep.subr.mxu0 0.0
        %756 = vmatpush1.msra.mxu0 0.0
        %757 = vmatprep.subr.mxu0 0.0
        %758 = vmatpush1.msra.mxu0 0.0
        %759 = vmatprep.subr.mxu0 0.0
        %760 = vmatpush1.msra.mxu0 %v718
        %761 = vmatprep.subr.mxu0 0.0
        %762 = vmatpush1.msra.mxu0 %v717
        %763 = vmatprep.subr.mxu0 0.0
        %764 = vmatpush1.msra.mxu0 %v716
        %765 = vmatprep.subr.mxu0 0.0
        %766 = vmatpush1.msra.mxu0 %v715
        %767 = vmatprep.subr.mxu0 0.0
        %768 = vmatpush2.msra.mxu0 0.0
        %769 = vmatprep.subr.mxu0 0.0
        %770 = vmatpush2.msra.mxu0 0.0
        %771 = vmatprep.subr.mxu0 0.0
        %772 = vmatpush2.msra.mxu0 0.0
        %773 = vmatprep.subr.mxu0 0.0
        %774 = vmatpush2.msra.mxu0 0.0
        %775 = vmatprep.subr.mxu0 0.0
        %776 = vmatpush2.msra.mxu0 0.0
        %777 = vmatprep.subr.mxu0 0.0
        %778 = vmatpush2.msra.mxu0 0.0
        %779 = vmatprep.subr.mxu0 0.0
        %780 = vmatpush2.msra.mxu0 0.0
        %781 = vmatprep.subr.mxu0 0.0
        %782 = vmatpush2.msra.mxu0 0.0
        %783 = vmatprep.subr.mxu0 0.0
        %784 = vmatpush2.msra.mxu0 0.0
        %785 = vmatprep.subr.mxu0 0.0
        %786 = vmatpush2.msra.mxu0 0.0
        %787 = vmatprep.subr.mxu0 0.0
        %788 = vmatpush2.msra.mxu0 0.0
        %789 = vmatprep.subr.mxu0 0.0
        %790 = vmatpush2.msra.mxu0 0.0
        %791 = vmatprep.subr.mxu0 0.0
        %792 = vmatpush2.msra.mxu0 0.0
        %793 = vmatprep.subr.mxu0 0.0
        %794 = vmatpush2.msra.mxu0 0.0
        %795 = vmatprep.subr.mxu0 0.0
        %796 = vmatpush2.msra.mxu0 0.0
        %797 = vmatprep.subr.mxu0 0.0
        %798 = vmatpush2.msra.mxu0 0.0
        %799 = vmatprep.mubr.f32.mxu0 0.0
        %800 = vmatmul.mubr.f32.gmra.mxu0 %v727
        %v801 = vpop.f32.mrf.mxu0
        %v802 = vadd.f32 %v724, %v801
        %v803 = vpop.f32.mrf.mxu0
        %804 = vmatprep.mubr.f32.mxu0 0.0
        %805 = vmatmul.mubr.f32.gmra.mxu0 %v730
        %v806 = vpop.f32.mrf.mxu0
        %v807 = vadd.f32 %v724, %v806
        %v808 = vpop.f32.mrf.mxu0
        %809 = vmatprep.mubr.f32.mxu0 0.0
        %810 = vmatmul.mubr.f32.gmra.mxu0 %v733
        %v811 = vpop.f32.mrf.mxu0
        %v812 = vadd.f32 %v724, %v811
        %v813 = vpop.f32.mrf.mxu0
        %814 = vdwg.mxu0
        %818 = vrot.lane.b32.xlu0 %v802, 120
        %v819 = vpop.permute.xlu0 %818
        %820 = vrot.lane.b32.xlu0 %v807, 120
        %v821 = vpop.permute.xlu0 %820
        %822 = vrot.lane.b32.xlu0 %v812, 120
        %v823 = vpop.permute.xlu0 %822
        %827 = vrot.lane.b32.xlu0 %v802, 112
        %v828 = vpop.permute.xlu0 %827
        %829 = vrot.lane.b32.xlu0 %v807, 112
        %v830 = vpop.permute.xlu0 %829
        %831 = vrot.lane.b32.xlu0 %v812, 112
        %v832 = vpop.permute.xlu0 %831
        %836 = vrot.lane.b32.xlu0 %v802, 104
        %v837 = vpop.permute.xlu0 %836
        %838 = vrot.lane.b32.xlu0 %v807, 104
        %v839 = vpop.permute.xlu0 %838
        %840 = vrot.lane.b32.xlu0 %v812, 104
        %v841 = vpop.permute.xlu0 %840
        %845 = vrot.lane.b32.xlu0 %v802, 96
        %v846 = vpop.permute.xlu0 %845
        %847 = vrot.lane.b32.xlu0 %v807, 96
        %v848 = vpop.permute.xlu0 %847
        %849 = vrot.lane.b32.xlu0 %v812, 96
        %v850 = vpop.permute.xlu0 %849
        %851 = vrot.lane.b32.xlu0 %v802, 88
        %v852 = vpop.permute.xlu0 %851
        %853 = vrot.lane.b32.xlu0 %v807, 88
        %v854 = vpop.permute.xlu0 %853
        %855 = vrot.lane.b32.xlu0 %v812, 88
        %v856 = vpop.permute.xlu0 %855
        %857 = vrot.lane.b32.xlu0 %v802, 80
        %v858 = vpop.permute.xlu0 %857
        %859 = vrot.lane.b32.xlu0 %v807, 80
        %v860 = vpop.permute.xlu0 %859
        %861 = vrot.lane.b32.xlu0 %v812, 80
        %v862 = vpop.permute.xlu0 %861
        %863 = vrot.lane.b32.xlu0 %v802, 72
        %v864 = vpop.permute.xlu0 %863
        %865 = vrot.lane.b32.xlu0 %v807, 72
        %v866 = vpop.permute.xlu0 %865
        %867 = vrot.lane.b32.xlu0 %v812, 72
        %v868 = vpop.permute.xlu0 %867
        %869 = vrot.lane.b32.xlu0 %v802, 64
        %v870 = vpop.permute.xlu0 %869
        %871 = vrot.lane.b32.xlu0 %v807, 64
        %v872 = vpop.permute.xlu0 %871
        %873 = vrot.lane.b32.xlu0 %v812, 64
        %v874 = vpop.permute.xlu0 %873
        %878 = vrot.lane.b32.xlu0 %v802, 56
        %v879 = vpop.permute.xlu0 %878
        %880 = vrot.lane.b32.xlu0 %v807, 56
        %v881 = vpop.permute.xlu0 %880
        %882 = vrot.lane.b32.xlu0 %v812, 56
        %v883 = vpop.permute.xlu0 %882
        %887 = vrot.lane.b32.xlu0 %v802, 48
        %v888 = vpop.permute.xlu0 %887
        %889 = vrot.lane.b32.xlu0 %v807, 48
        %v890 = vpop.permute.xlu0 %889
        %891 = vrot.lane.b32.xlu0 %v812, 48
        %v892 = vpop.permute.xlu0 %891
        %896 = vrot.lane.b32.xlu0 %v802, 40
        %v897 = vpop.permute.xlu0 %896
        %898 = vrot.lane.b32.xlu0 %v807, 40
        %v899 = vpop.permute.xlu0 %898
        %900 = vrot.lane.b32.xlu0 %v812, 40
        %v901 = vpop.permute.xlu0 %900
        %v905 = vmul.f32 %v802, 0.35355338
        %v906 = vmul.f32 %v807, 0.35355338
        %v907 = vmul.f32 %v812, 0.35355338
        %v908 = vmul.f32 %v819, 0.35355338
        %v909 = vmul.f32 %v821, 0.35355338
        %v910 = vmul.f32 %v823, 0.35355338
        %v911 = vmul.f32 %v828, 0.35355338
        %v912 = vmul.f32 %v830, 0.35355338
        %v913 = vmul.f32 %v832, 0.35355338
        %v914 = vmul.f32 %v837, 0.35355338
        %v915 = vmul.f32 %v839, 0.35355338
        %v916 = vmul.f32 %v841, 0.35355338
        %vm917 = vcmask 64512
        %v919 = vsel %vm917, %v905, 0
        %v922 = vsel %vm917, %v906, 0
        %v925 = vsel %vm917, %v907, 0
        %v927 = vsel %vm917, %v846, 0
        %v929 = vsel %vm917, %v848, 0
        %v931 = vsel %vm917, %v850, 0
        %933 = vmatprep.subr.mxu0 0.0
        %934 = vmatpush1.xpose.msra.mxu0 0.0
        %935 = vmatprep.subr.mxu0 0.0
        %936 = vmatpush1.xpose.msra.mxu0 0.0
        %937 = vmatprep.subr.mxu0 0.0
        %938 = vmatpush1.xpose.msra.mxu0 0.0
        %939 = vmatprep.subr.mxu0 0.0
        %940 = vmatpush1.xpose.msra.mxu0 0.0
        %941 = vmatprep.subr.mxu0 0.0
        %942 = vmatpush1.xpose.msra.mxu0 0.0
        %943 = vmatprep.subr.mxu0 0.0
        %944 = vmatpush1.xpose.msra.mxu0 0.0
        %945 = vmatprep.subr.mxu0 0.0
        %946 = vmatpush1.xpose.msra.mxu0 0.0
        %947 = vmatprep.subr.mxu0 0.0
        %948 = vmatpush1.xpose.msra.mxu0 0.0
        %949 = vmatprep.subr.mxu0 0.0
        %950 = vmatpush1.xpose.msra.mxu0 0.0
        %951 = vmatprep.subr.mxu0 0.0
        %952 = vmatpush1.xpose.msra.mxu0 0.0
        %953 = vmatprep.subr.mxu0 0.0
        %954 = vmatpush1.xpose.msra.mxu0 0.0
        %955 = vmatprep.subr.mxu0 0.0
        %956 = vmatpush1.xpose.msra.mxu0 0.0
        %957 = vmatprep.subr.mxu0 0.0
        %958 = vmatpush1.xpose.msra.mxu0 0.0
        %959 = vmatprep.subr.mxu0 0.0
        %960 = vmatpush1.xpose.msra.mxu0 %v931
        %961 = vmatprep.subr.mxu0 0.0
        %962 = vmatpush1.xpose.msra.mxu0 %v929
        %963 = vmatprep.subr.mxu0 0.0
        %964 = vmatpush1.xpose.msra.mxu0 %v927
        %965 = vmatprep.subr.mxu0 0.0
        %966 = vmatpush2.xpose.msra.mxu0 0.0
        %967 = vmatprep.subr.mxu0 0.0
        %968 = vmatpush2.xpose.msra.mxu0 0.0
        %969 = vmatprep.subr.mxu0 0.0
        %970 = vmatpush2.xpose.msra.mxu0 0.0
        %971 = vmatprep.subr.mxu0 0.0
        %972 = vmatpush2.xpose.msra.mxu0 0.0
        %973 = vmatprep.subr.mxu0 0.0
        %974 = vmatpush2.xpose.msra.mxu0 0.0
        %975 = vmatprep.subr.mxu0 0.0
        %976 = vmatpush2.xpose.msra.mxu0 0.0
        %977 = vmatprep.subr.mxu0 0.0
        %978 = vmatpush2.xpose.msra.mxu0 0.0
        %979 = vmatprep.subr.mxu0 0.0
        %980 = vmatpush2.xpose.msra.mxu0 0.0
        %981 = vmatprep.subr.mxu0 0.0
        %982 = vmatpush2.xpose.msra.mxu0 0.0
        %983 = vmatprep.subr.mxu0 0.0
        %984 = vmatpush2.xpose.msra.mxu0 0.0
        %985 = vmatprep.subr.mxu0 0.0
        %986 = vmatpush2.xpose.msra.mxu0 0.0
        %987 = vmatprep.subr.mxu0 0.0
        %988 = vmatpush2.xpose.msra.mxu0 0.0
        %989 = vmatprep.subr.mxu0 0.0
        %990 = vmatpush2.xpose.msra.mxu0 0.0
        %991 = vmatprep.subr.mxu0 0.0
        %992 = vmatpush2.xpose.msra.mxu0 0.0
        %993 = vmatprep.subr.mxu0 0.0
        %994 = vmatpush2.xpose.msra.mxu0 0.0
        %995 = vmatprep.subr.mxu0 0.0
        %996 = vmatpush2.xpose.msra.mxu0 0.0
        %997 = vmatprep.mubr.f32.mxu0 0.0
        %998 = vmatmul.mubr.f32.gmra.mxu0 %v919
        %v999 = vpop.f32.mrf.mxu0
        %v1000 = vadd.f32 %v653, %v999
        %v1001 = vpop.f32.mrf.mxu0
        %1002 = vmatprep.mubr.f32.mxu0 0.0
        %1003 = vmatmul.mubr.f32.gmra.mxu0 %v922
        %v1004 = vpop.f32.mrf.mxu0
        %v1005 = vadd.f32 %v653, %v1004
        %v1006 = vpop.f32.mrf.mxu0
        %1007 = vmatprep.mubr.f32.mxu0 0.0
        %1008 = vmatmul.mubr.f32.gmra.mxu0 %v925
        %v1009 = vpop.f32.mrf.mxu0
        %v1010 = vadd.f32 %v653, %v1009
        %v1011 = vpop.f32.mrf.mxu0
        %1012 = vdwg.mxu0
        %v1014 = vsel %vm917, %v908, 0
        %v1017 = vsel %vm917, %v909, 0
        %v1020 = vsel %vm917, %v910, 0
        %v1022 = vsel %vm917, %v852, 0
        %v1024 = vsel %vm917, %v854, 0
        %v1026 = vsel %vm917, %v856, 0
        %1028 = vmatprep.subr.mxu0 0.0
        %1029 = vmatpush1.xpose.msra.mxu0 0.0
        %1030 = vmatprep.subr.mxu0 0.0
        %1031 = vmatpush1.xpose.msra.mxu0 0.0
        %1032 = vmatprep.subr.mxu0 0.0
        %1033 = vmatpush1.xpose.msra.mxu0 0.0
        %1034 = vmatprep.subr.mxu0 0.0
        %1035 = vmatpush1.xpose.msra.mxu0 0.0
        %1036 = vmatprep.subr.mxu0 0.0
        %1037 = vmatpush1.xpose.msra.mxu0 0.0
        %1038 = vmatprep.subr.mxu0 0.0
        %1039 = vmatpush1.xpose.msra.mxu0 0.0
        %1040 = vmatprep.subr.mxu0 0.0
        %1041 = vmatpush1.xpose.msra.mxu0 0.0
        %1042 = vmatprep.subr.mxu0 0.0
        %1043 = vmatpush1.xpose.msra.mxu0 0.0
        %1044 = vmatprep.subr.mxu0 0.0
        %1045 = vmatpush1.xpose.msra.mxu0 0.0
        %1046 = vmatprep.subr.mxu0 0.0
        %1047 = vmatpush1.xpose.msra.mxu0 0.0
        %1048 = vmatprep.subr.mxu0 0.0
        %1049 = vmatpush1.xpose.msra.mxu0 0.0
        %1050 = vmatprep.subr.mxu0 0.0
        %1051 = vmatpush1.xpose.msra.mxu0 0.0
        %1052 = vmatprep.subr.mxu0 0.0
        %1053 = vmatpush1.xpose.msra.mxu0 0.0
        %1054 = vmatprep.subr.mxu0 0.0
        %1055 = vmatpush1.xpose.msra.mxu0 %v1026
        %1056 = vmatprep.subr.mxu0 0.0
        %1057 = vmatpush1.xpose.msra.mxu0 %v1024
        %1058 = vmatprep.subr.mxu0 0.0
        %1059 = vmatpush1.xpose.msra.mxu0 %v1022
        %1060 = vmatprep.subr.mxu0 0.0
        %1061 = vmatpush2.xpose.msra.mxu0 0.0
        %1062 = vmatprep.subr.mxu0 0.0
        %1063 = vmatpush2.xpose.msra.mxu0 0.0
        %1064 = vmatprep.subr.mxu0 0.0
        %1065 = vmatpush2.xpose.msra.mxu0 0.0
        %1066 = vmatprep.subr.mxu0 0.0
        %1067 = vmatpush2.xpose.msra.mxu0 0.0
        %1068 = vmatprep.subr.mxu0 0.0
        %1069 = vmatpush2.xpose.msra.mxu0 0.0
        %1070 = vmatprep.subr.mxu0 0.0
        %1071 = vmatpush2.xpose.msra.mxu0 0.0
        %1072 = vmatprep.subr.mxu0 0.0
        %1073 = vmatpush2.xpose.msra.mxu0 0.0
        %1074 = vmatprep.subr.mxu0 0.0
        %1075 = vmatpush2.xpose.msra.mxu0 0.0
        %1076 = vmatprep.subr.mxu0 0.0
        %1077 = vmatpush2.xpose.msra.mxu0 0.0
        %1078 = vmatprep.subr.mxu0 0.0
        %1079 = vmatpush2.xpose.msra.mxu0 0.0
        %1080 = vmatprep.subr.mxu0 0.0
        %1081 = vmatpush2.xpose.msra.mxu0 0.0
        %1082 = vmatprep.subr.mxu0 0.0
        %1083 = vmatpush2.xpose.msra.mxu0 0.0
        %1084 = vmatprep.subr.mxu0 0.0
        %1085 = vmatpush2.xpose.msra.mxu0 0.0
        %1086 = vmatprep.subr.mxu0 0.0
        %1087 = vmatpush2.xpose.msra.mxu0 0.0
        %1088 = vmatprep.subr.mxu0 0.0
        %1089 = vmatpush2.xpose.msra.mxu0 0.0
        %1090 = vmatprep.subr.mxu0 0.0
        %1091 = vmatpush2.xpose.msra.mxu0 0.0
        %1092 = vmatprep.mubr.f32.mxu0 0.0
        %1093 = vmatmul.mubr.f32.gmra.mxu0 %v1014
        %v1094 = vpop.f32.mrf.mxu0
        %v1095 = vadd.f32 %v653, %v1094
        %v1096 = vpop.f32.mrf.mxu0
        %1097 = vmatprep.mubr.f32.mxu0 0.0
        %1098 = vmatmul.mubr.f32.gmra.mxu0 %v1017
        %v1099 = vpop.f32.mrf.mxu0
        %v1100 = vadd.f32 %v653, %v1099
        %v1101 = vpop.f32.mrf.mxu0
        %1102 = vmatprep.mubr.f32.mxu0 0.0
        %1103 = vmatmul.mubr.f32.gmra.mxu0 %v1020
        %v1104 = vpop.f32.mrf.mxu0
        %v1105 = vadd.f32 %v653, %v1104
        %v1106 = vpop.f32.mrf.mxu0
        %1107 = vdwg.mxu0
        %v1109 = vsel %vm917, %v911, 0
        %v1112 = vsel %vm917, %v912, 0
        %v1115 = vsel %vm917, %v913, 0
        %v1117 = vsel %vm917, %v858, 0
        %v1119 = vsel %vm917, %v860, 0
        %v1121 = vsel %vm917, %v862, 0
        %1123 = vmatprep.subr.mxu0 0.0
        %1124 = vmatpush1.xpose.msra.mxu0 0.0
        %1125 = vmatprep.subr.mxu0 0.0
        %1126 = vmatpush1.xpose.msra.mxu0 0.0
        %1127 = vmatprep.subr.mxu0 0.0
        %1128 = vmatpush1.xpose.msra.mxu0 0.0
        %1129 = vmatprep.subr.mxu0 0.0
        %1130 = vmatpush1.xpose.msra.mxu0 0.0
        %1131 = vmatprep.subr.mxu0 0.0
        %1132 = vmatpush1.xpose.msra.mxu0 0.0
        %1133 = vmatprep.subr.mxu0 0.0
        %1134 = vmatpush1.xpose.msra.mxu0 0.0
        %1135 = vmatprep.subr.mxu0 0.0
        %1136 = vmatpush1.xpose.msra.mxu0 0.0
        %1137 = vmatprep.subr.mxu0 0.0
        %1138 = vmatpush1.xpose.msra.mxu0 0.0
        %1139 = vmatprep.subr.mxu0 0.0
        %1140 = vmatpush1.xpose.msra.mxu0 0.0
        %1141 = vmatprep.subr.mxu0 0.0
        %1142 = vmatpush1.xpose.msra.mxu0 0.0
        %1143 = vmatprep.subr.mxu0 0.0
        %1144 = vmatpush1.xpose.msra.mxu0 0.0
        %1145 = vmatprep.subr.mxu0 0.0
        %1146 = vmatpush1.xpose.msra.mxu0 0.0
        %1147 = vmatprep.subr.mxu0 0.0
        %1148 = vmatpush1.xpose.msra.mxu0 0.0
        %1149 = vmatprep.subr.mxu0 0.0
        %1150 = vmatpush1.xpose.msra.mxu0 %v1121
        %1151 = vmatprep.subr.mxu0 0.0
        %1152 = vmatpush1.xpose.msra.mxu0 %v1119
        %1153 = vmatprep.subr.mxu0 0.0
        %1154 = vmatpush1.xpose.msra.mxu0 %v1117
        %1155 = vmatprep.subr.mxu0 0.0
        %1156 = vmatpush2.xpose.msra.mxu0 0.0
        %1157 = vmatprep.subr.mxu0 0.0
        %1158 = vmatpush2.xpose.msra.mxu0 0.0
        %1159 = vmatprep.subr.mxu0 0.0
        %1160 = vmatpush2.xpose.msra.mxu0 0.0
        %1161 = vmatprep.subr.mxu0 0.0
        %1162 = vmatpush2.xpose.msra.mxu0 0.0
        %1163 = vmatprep.subr.mxu0 0.0
        %1164 = vmatpush2.xpose.msra.mxu0 0.0
        %1165 = vmatprep.subr.mxu0 0.0
        %1166 = vmatpush2.xpose.msra.mxu0 0.0
        %1167 = vmatprep.subr.mxu0 0.0
        %1168 = vmatpush2.xpose.msra.mxu0 0.0
        %1169 = vmatprep.subr.mxu0 0.0
        %1170 = vmatpush2.xpose.msra.mxu0 0.0
        %1171 = vmatprep.subr.mxu0 0.0
        %1172 = vmatpush2.xpose.msra.mxu0 0.0
        %1173 = vmatprep.subr.mxu0 0.0
        %1174 = vmatpush2.xpose.msra.mxu0 0.0
        %1175 = vmatprep.subr.mxu0 0.0
        %1176 = vmatpush2.xpose.msra.mxu0 0.0
        %1177 = vmatprep.subr.mxu0 0.0
        %1178 = vmatpush2.xpose.msra.mxu0 0.0
        %1179 = vmatprep.subr.mxu0 0.0
        %1180 = vmatpush2.xpose.msra.mxu0 0.0
        %1181 = vmatprep.subr.mxu0 0.0
        %1182 = vmatpush2.xpose.msra.mxu0 0.0
        %1183 = vmatprep.subr.mxu0 0.0
        %1184 = vmatpush2.xpose.msra.mxu0 0.0
        %1185 = vmatprep.subr.mxu0 0.0
        %1186 = vmatpush2.xpose.msra.mxu0 0.0
        %1187 = vmatprep.mubr.f32.mxu0 0.0
        %1188 = vmatmul.mubr.f32.gmra.mxu0 %v1109
        %v1189 = vpop.f32.mrf.mxu0
        %v1190 = vadd.f32 %v653, %v1189
        %v1191 = vpop.f32.mrf.mxu0
        %1192 = vmatprep.mubr.f32.mxu0 0.0
        %1193 = vmatmul.mubr.f32.gmra.mxu0 %v1112
        %v1194 = vpop.f32.mrf.mxu0
        %v1195 = vadd.f32 %v653, %v1194
        %v1196 = vpop.f32.mrf.mxu0
        %1197 = vmatprep.mubr.f32.mxu0 0.0
        %1198 = vmatmul.mubr.f32.gmra.mxu0 %v1115
        %v1199 = vpop.f32.mrf.mxu0
        %v1200 = vadd.f32 %v653, %v1199
        %v1201 = vpop.f32.mrf.mxu0
        %1202 = vdwg.mxu0
        %v1204 = vsel %vm917, %v914, 0
        %v1207 = vsel %vm917, %v915, 0
        %v1210 = vsel %vm917, %v916, 0
        %v1212 = vsel %vm917, %v864, 0
        %v1214 = vsel %vm917, %v866, 0
        %v1216 = vsel %vm917, %v868, 0
        %1218 = vmatprep.subr.mxu0 0.0
        %1219 = vmatpush1.xpose.msra.mxu0 0.0
        %1220 = vmatprep.subr.mxu0 0.0
        %1221 = vmatpush1.xpose.msra.mxu0 0.0
        %1222 = vmatprep.subr.mxu0 0.0
        %1223 = vmatpush1.xpose.msra.mxu0 0.0
        %1224 = vmatprep.subr.mxu0 0.0
        %1225 = vmatpush1.xpose.msra.mxu0 0.0
        %1226 = vmatprep.subr.mxu0 0.0
        %1227 = vmatpush1.xpose.msra.mxu0 0.0
        %1228 = vmatprep.subr.mxu0 0.0
        %1229 = vmatpush1.xpose.msra.mxu0 0.0
        %1230 = vmatprep.subr.mxu0 0.0
        %1231 = vmatpush1.xpose.msra.mxu0 0.0
        %1232 = vmatprep.subr.mxu0 0.0
        %1233 = vmatpush1.xpose.msra.mxu0 0.0
        %1234 = vmatprep.subr.mxu0 0.0
        %1235 = vmatpush1.xpose.msra.mxu0 0.0
        %1236 = vmatprep.subr.mxu0 0.0
        %1237 = vmatpush1.xpose.msra.mxu0 0.0
        %1238 = vmatprep.subr.mxu0 0.0
        %1239 = vmatpush1.xpose.msra.mxu0 0.0
        %1240 = vmatprep.subr.mxu0 0.0
        %1241 = vmatpush1.xpose.msra.mxu0 0.0
        %1242 = vmatprep.subr.mxu0 0.0
        %1243 = vmatpush1.xpose.msra.mxu0 0.0
        %1244 = vmatprep.subr.mxu0 0.0
        %1245 = vmatpush1.xpose.msra.mxu0 %v1216
        %1246 = vmatprep.subr.mxu0 0.0
        %1247 = vmatpush1.xpose.msra.mxu0 %v1214
        %1248 = vmatprep.subr.mxu0 0.0
        %1249 = vmatpush1.xpose.msra.mxu0 %v1212
        %1250 = vmatprep.subr.mxu0 0.0
        %1251 = vmatpush2.xpose.msra.mxu0 0.0
        %1252 = vmatprep.subr.mxu0 0.0
        %1253 = vmatpush2.xpose.msra.mxu0 0.0
        %1254 = vmatprep.subr.mxu0 0.0
        %1255 = vmatpush2.xpose.msra.mxu0 0.0
        %1256 = vmatprep.subr.mxu0 0.0
        %1257 = vmatpush2.xpose.msra.mxu0 0.0
        %1258 = vmatprep.subr.mxu0 0.0
        %1259 = vmatpush2.xpose.msra.mxu0 0.0
        %1260 = vmatprep.subr.mxu0 0.0
        %1261 = vmatpush2.xpose.msra.mxu0 0.0
        %1262 = vmatprep.subr.mxu0 0.0
        %1263 = vmatpush2.xpose.msra.mxu0 0.0
        %1264 = vmatprep.subr.mxu0 0.0
        %1265 = vmatpush2.xpose.msra.mxu0 0.0
        %1266 = vmatprep.subr.mxu0 0.0
        %1267 = vmatpush2.xpose.msra.mxu0 0.0
        %1268 = vmatprep.subr.mxu0 0.0
        %1269 = vmatpush2.xpose.msra.mxu0 0.0
        %1270 = vmatprep.subr.mxu0 0.0
        %1271 = vmatpush2.xpose.msra.mxu0 0.0
        %1272 = vmatprep.subr.mxu0 0.0
        %1273 = vmatpush2.xpose.msra.mxu0 0.0
        %1274 = vmatprep.subr.mxu0 0.0
        %1275 = vmatpush2.xpose.msra.mxu0 0.0
        %1276 = vmatprep.subr.mxu0 0.0
        %1277 = vmatpush2.xpose.msra.mxu0 0.0
        %1278 = vmatprep.subr.mxu0 0.0
        %1279 = vmatpush2.xpose.msra.mxu0 0.0
        %1280 = vmatprep.subr.mxu0 0.0
        %1281 = vmatpush2.xpose.msra.mxu0 0.0
        %1282 = vmatprep.mubr.f32.mxu0 0.0
        %1283 = vmatmul.mubr.f32.gmra.mxu0 %v1204
        %v1284 = vpop.f32.mrf.mxu0
        %v1285 = vadd.f32 %v653, %v1284
        %v1286 = vpop.f32.mrf.mxu0
        %1287 = vmatprep.mubr.f32.mxu0 0.0
        %1288 = vmatmul.mubr.f32.gmra.mxu0 %v1207
        %v1289 = vpop.f32.mrf.mxu0
        %v1290 = vadd.f32 %v653, %v1289
        %v1291 = vpop.f32.mrf.mxu0
        %1292 = vmatprep.mubr.f32.mxu0 0.0
        %1293 = vmatmul.mubr.f32.gmra.mxu0 %v1210
        %v1294 = vpop.f32.mrf.mxu0
        %v1295 = vadd.f32 %v653, %v1294
        %v1296 = vpop.f32.mrf.mxu0
        %1297 = vdwg.mxu0
        %vm1298 = vcmask 195584
        %v1299 = vsel %vm1298, %v1000, -inf
        %1300 = vmax.xlane.f32.xlu0 %v1299
        %v1301 = vpop.xlane.xlu0 %1300
        %v1302 = vsel %vm1298, %v1005, -inf
        %1303 = vmax.xlane.f32.xlu0 %v1302
        %v1304 = vpop.xlane.xlu0 %1303
        %v1305 = vsel %vm1298, %v1010, -inf
        %1306 = vmax.xlane.f32.xlu0 %v1305
        %v1307 = vpop.xlane.xlu0 %1306
        %v1308 = vsel %vm1298, %v1095, -inf
        %1309 = vmax.xlane.f32.xlu0 %v1308
        %v1310 = vpop.xlane.xlu0 %1309
        %v1311 = vsel %vm1298, %v1100, -inf
        %1312 = vmax.xlane.f32.xlu0 %v1311
        %v1313 = vpop.xlane.xlu0 %1312
        %v1314 = vsel %vm1298, %v1105, -inf
        %1315 = vmax.xlane.f32.xlu0 %v1314
        %v1316 = vpop.xlane.xlu0 %1315
        %v1317 = vsel %vm1298, %v1190, -inf
        %1318 = vmax.xlane.f32.xlu0 %v1317
        %v1319 = vpop.xlane.xlu0 %1318
        %v1320 = vsel %vm1298, %v1195, -inf
        %1321 = vmax.xlane.f32.xlu0 %v1320
        %v1322 = vpop.xlane.xlu0 %1321
        %v1323 = vsel %vm1298, %v1200, -inf
        %1324 = vmax.xlane.f32.xlu0 %v1323
        %v1325 = vpop.xlane.xlu0 %1324
        %v1326 = vsel %vm1298, %v1285, -inf
        %1327 = vmax.xlane.f32.xlu0 %v1326
        %v1328 = vpop.xlane.xlu0 %1327
        %v1329 = vsel %vm1298, %v1290, -inf
        %1330 = vmax.xlane.f32.xlu0 %v1329
        %v1331 = vpop.xlane.xlu0 %1330
        %v1332 = vsel %vm1298, %v1295, -inf
        %1333 = vmax.xlane.f32.xlu0 %v1332
        %v1334 = vpop.xlane.xlu0 %1333
        %v1335 = vsub.f32 %v1000, %v1301
        %v1336 = vsub.f32 %v1005, %v1304
        %v1337 = vsub.f32 %v1010, %v1307
        %v1338 = vsub.f32 %v1095, %v1310
        %v1339 = vsub.f32 %v1100, %v1313
        %v1340 = vsub.f32 %v1105, %v1316
        %v1341 = vsub.f32 %v1190, %v1319
        %v1342 = vsub.f32 %v1195, %v1322
        %v1343 = vsub.f32 %v1200, %v1325
        %v1344 = vsub.f32 %v1285, %v1328
        %v1345 = vsub.f32 %v1290, %v1331
        %v1346 = vsub.f32 %v1295, %v1334
        %v1347 = vmul.f32 %v1335, 1.442695
        %v1348 = vpow.pop %v1347
        %v1349 = vmul.f32 %v1336, 1.442695
        %v1350 = vpow.pop %v1349
        %v1351 = vmul.f32 %v1337, 1.442695
        %v1352 = vpow.pop %v1351
        %v1353 = vmul.f32 %v1338, 1.442695
        %v1354 = vpow.pop %v1353
        %v1355 = vmul.f32 %v1339, 1.442695
        %v1356 = vpow.pop %v1355
        %v1357 = vmul.f32 %v1340, 1.442695
        %v1358 = vpow.pop %v1357
        %v1359 = vmul.f32 %v1341, 1.442695
        %v1360 = vpow.pop %v1359
        %v1361 = vmul.f32 %v1342, 1.442695
        %v1362 = vpow.pop %v1361
        %v1363 = vmul.f32 %v1343, 1.442695
        %v1364 = vpow.pop %v1363
        %v1365 = vmul.f32 %v1344, 1.442695
        %v1366 = vpow.pop %v1365
        %v1367 = vmul.f32 %v1345, 1.442695
        %v1368 = vpow.pop %v1367
        %v1369 = vmul.f32 %v1346, 1.442695
        %v1370 = vpow.pop %v1369
        %v1371 = vsel %vm1298, %v1348, 0.0
        %1372 = vadd.xlane.f32.xlu0 %v1371
        %v1373 = vpop.xlane.xlu0 %1372
        %v1374 = vsel %vm1298, %v1350, 0.0
        %1375 = vadd.xlane.f32.xlu0 %v1374
        %v1376 = vpop.xlane.xlu0 %1375
        %v1377 = vsel %vm1298, %v1352, 0.0
        %1378 = vadd.xlane.f32.xlu0 %v1377
        %v1379 = vpop.xlane.xlu0 %1378
        %v1380 = vsel %vm1298, %v1354, 0.0
        %1381 = vadd.xlane.f32.xlu0 %v1380
        %v1382 = vpop.xlane.xlu0 %1381
        %v1383 = vsel %vm1298, %v1356, 0.0
        %1384 = vadd.xlane.f32.xlu0 %v1383
        %v1385 = vpop.xlane.xlu0 %1384
        %v1386 = vsel %vm1298, %v1358, 0.0
        %1387 = vadd.xlane.f32.xlu0 %v1386
        %v1388 = vpop.xlane.xlu0 %1387
        %v1389 = vsel %vm1298, %v1360, 0.0
        %1390 = vadd.xlane.f32.xlu0 %v1389
        %v1391 = vpop.xlane.xlu0 %1390
        %v1392 = vsel %vm1298, %v1362, 0.0
        %1393 = vadd.xlane.f32.xlu0 %v1392
        %v1394 = vpop.xlane.xlu0 %1393
        %v1395 = vsel %vm1298, %v1364, 0.0
        %1396 = vadd.xlane.f32.xlu0 %v1395
        %v1397 = vpop.xlane.xlu0 %1396
        %v1398 = vsel %vm1298, %v1366, 0.0
        %1399 = vadd.xlane.f32.xlu0 %v1398
        %v1400 = vpop.xlane.xlu0 %1399
        %v1401 = vsel %vm1298, %v1368, 0.0
        %1402 = vadd.xlane.f32.xlu0 %v1401
        %v1403 = vpop.xlane.xlu0 %1402
        %v1404 = vsel %vm1298, %v1370, 0.0
        %1405 = vadd.xlane.f32.xlu0 %v1404
        %v1406 = vpop.xlane.xlu0 %1405
        %v1407 = vrcp.pop %v1373
        %v1408 = vrcp.pop %v1376
        %v1409 = vrcp.pop %v1379
        %v1410 = vrcp.pop %v1382
        %v1411 = vrcp.pop %v1385
        %v1412 = vrcp.pop %v1388
        %v1413 = vrcp.pop %v1391
        %v1414 = vrcp.pop %v1394
        %v1415 = vrcp.pop %v1397
        %v1416 = vrcp.pop %v1400
        %v1417 = vrcp.pop %v1403
        %v1418 = vrcp.pop %v1406
        %v1419 = vmul.f32 %v1348, %v1407
        %v1420 = vmul.f32 %v1350, %v1408
        %v1421 = vmul.f32 %v1352, %v1409
        %v1422 = vmul.f32 %v1354, %v1410
        %v1423 = vmul.f32 %v1356, %v1411
        %v1424 = vmul.f32 %v1358, %v1412
        %v1425 = vmul.f32 %v1360, %v1413
        %v1426 = vmul.f32 %v1362, %v1414
        %v1427 = vmul.f32 %v1364, %v1415
        %v1428 = vmul.f32 %v1366, %v1416
        %v1429 = vmul.f32 %v1368, %v1417
        %v1430 = vmul.f32 %v1370, %v1418
        %v1432 = vsel %vm1298, %v1419, 0
        %v1435 = vsel %vm1298, %v1420, 0
        %v1438 = vsel %vm1298, %v1421, 0
        %1440 = vmatprep.subr.mxu0 0.0
        %1441 = vmatpush1.msra.mxu0 0.0
        %1442 = vmatprep.subr.mxu0 0.0
        %1443 = vmatpush1.msra.mxu0 0.0
        %1444 = vmatprep.subr.mxu0 0.0
        %1445 = vmatpush1.msra.mxu0 0.0
        %1446 = vmatprep.subr.mxu0 0.0
        %1447 = vmatpush1.msra.mxu0 0.0
        %1448 = vmatprep.subr.mxu0 0.0
        %1449 = vmatpush1.msra.mxu0 0.0
        %1450 = vmatprep.subr.mxu0 0.0
        %1451 = vmatpush1.msra.mxu0 0.0
        %1452 = vmatprep.subr.mxu0 0.0
        %1453 = vmatpush1.msra.mxu0 0.0
        %1454 = vmatprep.subr.mxu0 0.0
        %1455 = vmatpush1.msra.mxu0 0.0
        %1456 = vmatprep.subr.mxu0 0.0
        %1457 = vmatpush1.msra.mxu0 0.0
        %1458 = vmatprep.subr.mxu0 0.0
        %1459 = vmatpush1.msra.mxu0 0.0
        %1460 = vmatprep.subr.mxu0 0.0
        %1461 = vmatpush1.msra.mxu0 0.0
        %1462 = vmatprep.subr.mxu0 0.0
        %1463 = vmatpush1.msra.mxu0 0.0
        %1464 = vmatprep.subr.mxu0 0.0
        %1465 = vmatpush1.msra.mxu0 0.0
        %1466 = vmatprep.subr.mxu0 0.0
        %1467 = vmatpush1.msra.mxu0 %v874
        %1468 = vmatprep.subr.mxu0 0.0
        %1469 = vmatpush1.msra.mxu0 %v872
        %1470 = vmatprep.subr.mxu0 0.0
        %1471 = vmatpush1.msra.mxu0 %v870
        %1472 = vmatprep.subr.mxu0 0.0
        %1473 = vmatpush2.msra.mxu0 0.0
        %1474 = vmatprep.subr.mxu0 0.0
        %1475 = vmatpush2.msra.mxu0 0.0
        %1476 = vmatprep.subr.mxu0 0.0
        %1477 = vmatpush2.msra.mxu0 0.0
        %1478 = vmatprep.subr.mxu0 0.0
        %1479 = vmatpush2.msra.mxu0 0.0
        %1480 = vmatprep.subr.mxu0 0.0
        %1481 = vmatpush2.msra.mxu0 0.0
        %1482 = vmatprep.subr.mxu0 0.0
        %1483 = vmatpush2.msra.mxu0 0.0
        %1484 = vmatprep.subr.mxu0 0.0
        %1485 = vmatpush2.msra.mxu0 0.0
        %1486 = vmatprep.subr.mxu0 0.0
        %1487 = vmatpush2.msra.mxu0 0.0
        %1488 = vmatprep.subr.mxu0 0.0
        %1489 = vmatpush2.msra.mxu0 0.0
        %1490 = vmatprep.subr.mxu0 0.0
        %1491 = vmatpush2.msra.mxu0 0.0
        %1492 = vmatprep.subr.mxu0 0.0
        %1493 = vmatpush2.msra.mxu0 0.0
        %1494 = vmatprep.subr.mxu0 0.0
        %1495 = vmatpush2.msra.mxu0 0.0
        %1496 = vmatprep.subr.mxu0 0.0
        %1497 = vmatpush2.msra.mxu0 0.0
        %1498 = vmatprep.subr.mxu0 0.0
        %1499 = vmatpush2.msra.mxu0 0.0
        %1500 = vmatprep.subr.mxu0 0.0
        %1501 = vmatpush2.msra.mxu0 0.0
        %1502 = vmatprep.subr.mxu0 0.0
        %1503 = vmatpush2.msra.mxu0 0.0
        %1504 = vmatprep.mubr.f32.mxu0 0.0
        %1505 = vmatmul.mubr.f32.gmra.mxu0 %v1432
        %v1506 = vpop.f32.mrf.mxu0
        %v1507 = vadd.f32 0.0, %v1506
        %v1508 = vpop.f32.mrf.mxu0
        %1509 = vmatprep.mubr.f32.mxu0 0.0
        %1510 = vmatmul.mubr.f32.gmra.mxu0 %v1435
        %v1511 = vpop.f32.mrf.mxu0
        %v1512 = vadd.f32 0.0, %v1511
        %v1513 = vpop.f32.mrf.mxu0
        %1514 = vmatprep.mubr.f32.mxu0 0.0
        %1515 = vmatmul.mubr.f32.gmra.mxu0 %v1438
        %v1516 = vpop.f32.mrf.mxu0
        %v1517 = vadd.f32 0.0, %v1516
        %v1518 = vpop.f32.mrf.mxu0
        %1519 = vdwg.mxu0
        %v1521 = vsel %vm1298, %v1422, 0
        %v1524 = vsel %vm1298, %v1423, 0
        %v1527 = vsel %vm1298, %v1424, 0
        %1529 = vmatprep.subr.mxu0 0.0
        %1530 = vmatpush1.msra.mxu0 0.0
        %1531 = vmatprep.subr.mxu0 0.0
        %1532 = vmatpush1.msra.mxu0 0.0
        %1533 = vmatprep.subr.mxu0 0.0
        %1534 = vmatpush1.msra.mxu0 0.0
        %1535 = vmatprep.subr.mxu0 0.0
        %1536 = vmatpush1.msra.mxu0 0.0
        %1537 = vmatprep.subr.mxu0 0.0
        %1538 = vmatpush1.msra.mxu0 0.0
        %1539 = vmatprep.subr.mxu0 0.0
        %1540 = vmatpush1.msra.mxu0 0.0
        %1541 = vmatprep.subr.mxu0 0.0
        %1542 = vmatpush1.msra.mxu0 0.0
        %1543 = vmatprep.subr.mxu0 0.0
        %1544 = vmatpush1.msra.mxu0 0.0
        %1545 = vmatprep.subr.mxu0 0.0
        %1546 = vmatpush1.msra.mxu0 0.0
        %1547 = vmatprep.subr.mxu0 0.0
        %1548 = vmatpush1.msra.mxu0 0.0
        %1549 = vmatprep.subr.mxu0 0.0
        %1550 = vmatpush1.msra.mxu0 0.0
        %1551 = vmatprep.subr.mxu0 0.0
        %1552 = vmatpush1.msra.mxu0 0.0
        %1553 = vmatprep.subr.mxu0 0.0
        %1554 = vmatpush1.msra.mxu0 0.0
        %1555 = vmatprep.subr.mxu0 0.0
        %1556 = vmatpush1.msra.mxu0 %v883
        %1557 = vmatprep.subr.mxu0 0.0
        %1558 = vmatpush1.msra.mxu0 %v881
        %1559 = vmatprep.subr.mxu0 0.0
        %1560 = vmatpush1.msra.mxu0 %v879
        %1561 = vmatprep.subr.mxu0 0.0
        %1562 = vmatpush2.msra.mxu0 0.0
        %1563 = vmatprep.subr.mxu0 0.0
        %1564 = vmatpush2.msra.mxu0 0.0
        %1565 = vmatprep.subr.mxu0 0.0
        %1566 = vmatpush2.msra.mxu0 0.0
        %1567 = vmatprep.subr.mxu0 0.0
        %1568 = vmatpush2.msra.mxu0 0.0
        %1569 = vmatprep.subr.mxu0 0.0
        %1570 = vmatpush2.msra.mxu0 0.0
        %1571 = vmatprep.subr.mxu0 0.0
        %1572 = vmatpush2.msra.mxu0 0.0
        %1573 = vmatprep.subr.mxu0 0.0
        %1574 = vmatpush2.msra.mxu0 0.0
        %1575 = vmatprep.subr.mxu0 0.0
        %1576 = vmatpush2.msra.mxu0 0.0
        %1577 = vmatprep.subr.mxu0 0.0
        %1578 = vmatpush2.msra.mxu0 0.0
        %1579 = vmatprep.subr.mxu0 0.0
        %1580 = vmatpush2.msra.mxu0 0.0
        %1581 = vmatprep.subr.mxu0 0.0
        %1582 = vmatpush2.msra.mxu0 0.0
        %1583 = vmatprep.subr.mxu0 0.0
        %1584 = vmatpush2.msra.mxu0 0.0
        %1585 = vmatprep.subr.mxu0 0.0
        %1586 = vmatpush2.msra.mxu0 0.0
        %1587 = vmatprep.subr.mxu0 0.0
        %1588 = vmatpush2.msra.mxu0 0.0
        %1589 = vmatprep.subr.mxu0 0.0
        %1590 = vmatpush2.msra.mxu0 0.0
        %1591 = vmatprep.subr.mxu0 0.0
        %1592 = vmatpush2.msra.mxu0 0.0
        %1593 = vmatprep.mubr.f32.mxu0 0.0
        %1594 = vmatmul.mubr.f32.gmra.mxu0 %v1521
        %v1595 = vpop.f32.mrf.mxu0
        %v1596 = vadd.f32 0.0, %v1595
        %v1597 = vpop.f32.mrf.mxu0
        %1598 = vmatprep.mubr.f32.mxu0 0.0
        %1599 = vmatmul.mubr.f32.gmra.mxu0 %v1524
        %v1600 = vpop.f32.mrf.mxu0
        %v1601 = vadd.f32 0.0, %v1600
        %v1602 = vpop.f32.mrf.mxu0
        %1603 = vmatprep.mubr.f32.mxu0 0.0
        %1604 = vmatmul.mubr.f32.gmra.mxu0 %v1527
        %v1605 = vpop.f32.mrf.mxu0
        %v1606 = vadd.f32 0.0, %v1605
        %v1607 = vpop.f32.mrf.mxu0
        %1608 = vdwg.mxu0
        %v1610 = vsel %vm1298, %v1425, 0
        %v1613 = vsel %vm1298, %v1426, 0
        %v1616 = vsel %vm1298, %v1427, 0
        %1618 = vmatprep.subr.mxu0 0.0
        %1619 = vmatpush1.msra.mxu0 0.0
        %1620 = vmatprep.subr.mxu0 0.0
        %1621 = vmatpush1.msra.mxu0 0.0
        %1622 = vmatprep.subr.mxu0 0.0
        %1623 = vmatpush1.msra.mxu0 0.0
        %1624 = vmatprep.subr.mxu0 0.0
        %1625 = vmatpush1.msra.mxu0 0.0
        %1626 = vmatprep.subr.mxu0 0.0
        %1627 = vmatpush1.msra.mxu0 0.0
        %1628 = vmatprep.subr.mxu0 0.0
        %1629 = vmatpush1.msra.mxu0 0.0
        %1630 = vmatprep.subr.mxu0 0.0
        %1631 = vmatpush1.msra.mxu0 0.0
        %1632 = vmatprep.subr.mxu0 0.0
        %1633 = vmatpush1.msra.mxu0 0.0
        %1634 = vmatprep.subr.mxu0 0.0
        %1635 = vmatpush1.msra.mxu0 0.0
        %1636 = vmatprep.subr.mxu0 0.0
        %1637 = vmatpush1.msra.mxu0 0.0
        %1638 = vmatprep.subr.mxu0 0.0
        %1639 = vmatpush1.msra.mxu0 0.0
        %1640 = vmatprep.subr.mxu0 0.0
        %1641 = vmatpush1.msra.mxu0 0.0
        %1642 = vmatprep.subr.mxu0 0.0
        %1643 = vmatpush1.msra.mxu0 0.0
        %1644 = vmatprep.subr.mxu0 0.0
        %1645 = vmatpush1.msra.mxu0 %v892
        %1646 = vmatprep.subr.mxu0 0.0
        %1647 = vmatpush1.msra.mxu0 %v890
        %1648 = vmatprep.subr.mxu0 0.0
        %1649 = vmatpush1.msra.mxu0 %v888
        %1650 = vmatprep.subr.mxu0 0.0
        %1651 = vmatpush2.msra.mxu0 0.0
        %1652 = vmatprep.subr.mxu0 0.0
        %1653 = vmatpush2.msra.mxu0 0.0
        %1654 = vmatprep.subr.mxu0 0.0
        %1655 = vmatpush2.msra.mxu0 0.0
        %1656 = vmatprep.subr.mxu0 0.0
        %1657 = vmatpush2.msra.mxu0 0.0
        %1658 = vmatprep.subr.mxu0 0.0
        %1659 = vmatpush2.msra.mxu0 0.0
        %1660 = vmatprep.subr.mxu0 0.0
        %1661 = vmatpush2.msra.mxu0 0.0
        %1662 = vmatprep.subr.mxu0 0.0
        %1663 = vmatpush2.msra.mxu0 0.0
        %1664 = vmatprep.subr.mxu0 0.0
        %1665 = vmatpush2.msra.mxu0 0.0
        %1666 = vmatprep.subr.mxu0 0.0
        %1667 = vmatpush2.msra.mxu0 0.0
        %1668 = vmatprep.subr.mxu0 0.0
        %1669 = vmatpush2.msra.mxu0 0.0
        %1670 = vmatprep.subr.mxu0 0.0
        %1671 = vmatpush2.msra.mxu0 0.0
        %1672 = vmatprep.subr.mxu0 0.0
        %1673 = vmatpush2.msra.mxu0 0.0
        %1674 = vmatprep.subr.mxu0 0.0
        %1675 = vmatpush2.msra.mxu0 0.0
        %1676 = vmatprep.subr.mxu0 0.0
        %1677 = vmatpush2.msra.mxu0 0.0
        %1678 = vmatprep.subr.mxu0 0.0
        %1679 = vmatpush2.msra.mxu0 0.0
        %1680 = vmatprep.subr.mxu0 0.0
        %1681 = vmatpush2.msra.mxu0 0.0
        %1682 = vmatprep.mubr.f32.mxu0 0.0
        %1683 = vmatmul.mubr.f32.gmra.mxu0 %v1610
        %v1684 = vpop.f32.mrf.mxu0
        %v1685 = vadd.f32 0.0, %v1684
        %v1686 = vpop.f32.mrf.mxu0
        %1687 = vmatprep.mubr.f32.mxu0 0.0
        %1688 = vmatmul.mubr.f32.gmra.mxu0 %v1613
        %v1689 = vpop.f32.mrf.mxu0
        %v1690 = vadd.f32 0.0, %v1689
        %v1691 = vpop.f32.mrf.mxu0
        %1692 = vmatprep.mubr.f32.mxu0 0.0
        %1693 = vmatmul.mubr.f32.gmra.mxu0 %v1616
        %v1694 = vpop.f32.mrf.mxu0
        %v1695 = vadd.f32 0.0, %v1694
        %v1696 = vpop.f32.mrf.mxu0
        %1697 = vdwg.mxu0
        %v1699 = vsel %vm1298, %v1428, 0
        %v1702 = vsel %vm1298, %v1429, 0
        %v1705 = vsel %vm1298, %v1430, 0
        %1707 = vmatprep.subr.mxu0 0.0
        %1708 = vmatpush1.msra.mxu0 0.0
        %1709 = vmatprep.subr.mxu0 0.0
        %1710 = vmatpush1.msra.mxu0 0.0
        %1711 = vmatprep.subr.mxu0 0.0
        %1712 = vmatpush1.msra.mxu0 0.0
        %1713 = vmatprep.subr.mxu0 0.0
        %1714 = vmatpush1.msra.mxu0 0.0
        %1715 = vmatprep.subr.mxu0 0.0
        %1716 = vmatpush1.msra.mxu0 0.0
        %1717 = vmatprep.subr.mxu0 0.0
        %1718 = vmatpush1.msra.mxu0 0.0
        %1719 = vmatprep.subr.mxu0 0.0
        %1720 = vmatpush1.msra.mxu0 0.0
        %1721 = vmatprep.subr.mxu0 0.0
        %1722 = vmatpush1.msra.mxu0 0.0
        %1723 = vmatprep.subr.mxu0 0.0
        %1724 = vmatpush1.msra.mxu0 0.0
        %1725 = vmatprep.subr.mxu0 0.0
        %1726 = vmatpush1.msra.mxu0 0.0
        %1727 = vmatprep.subr.mxu0 0.0
        %1728 = vmatpush1.msra.mxu0 0.0
        %1729 = vmatprep.subr.mxu0 0.0
        %1730 = vmatpush1.msra.mxu0 0.0
        %1731 = vmatprep.subr.mxu0 0.0
        %1732 = vmatpush1.msra.mxu0 0.0
        %1733 = vmatprep.subr.mxu0 0.0
        %1734 = vmatpush1.msra.mxu0 %v901
        %1735 = vmatprep.subr.mxu0 0.0
        %1736 = vmatpush1.msra.mxu0 %v899
        %1737 = vmatprep.subr.mxu0 0.0
        %1738 = vmatpush1.msra.mxu0 %v897
        %1739 = vmatprep.subr.mxu0 0.0
        %1740 = vmatpush2.msra.mxu0 0.0
        %1741 = vmatprep.subr.mxu0 0.0
        %1742 = vmatpush2.msra.mxu0 0.0
        %1743 = vmatprep.subr.mxu0 0.0
        %1744 = vmatpush2.msra.mxu0 0.0
        %1745 = vmatprep.subr.mxu0 0.0
        %1746 = vmatpush2.msra.mxu0 0.0
        %1747 = vmatprep.subr.mxu0 0.0
        %1748 = vmatpush2.msra.mxu0 0.0
        %1749 = vmatprep.subr.mxu0 0.0
        %1750 = vmatpush2.msra.mxu0 0.0
        %1751 = vmatprep.subr.mxu0 0.0
        %1752 = vmatpush2.msra.mxu0 0.0
        %1753 = vmatprep.subr.mxu0 0.0
        %1754 = vmatpush2.msra.mxu0 0.0
        %1755 = vmatprep.subr.mxu0 0.0
        %1756 = vmatpush2.msra.mxu0 0.0
        %1757 = vmatprep.subr.mxu0 0.0
        %1758 = vmatpush2.msra.mxu0 0.0
        %1759 = vmatprep.subr.mxu0 0.0
        %1760 = vmatpush2.msra.mxu0 0.0
        %1761 = vmatprep.subr.mxu0 0.0
        %1762 = vmatpush2.msra.mxu0 0.0
        %1763 = vmatprep.subr.mxu0 0.0
        %1764 = vmatpush2.msra.mxu0 0.0
        %1765 = vmatprep.subr.mxu0 0.0
        %1766 = vmatpush2.msra.mxu0 0.0
        %1767 = vmatprep.subr.mxu0 0.0
        %1768 = vmatpush2.msra.mxu0 0.0
        %1769 = vmatprep.subr.mxu0 0.0
        %1770 = vmatpush2.msra.mxu0 0.0
        %1771 = vmatprep.mubr.f32.mxu0 0.0
        %1772 = vmatmul.mubr.f32.gmra.mxu0 %v1699
        %v1773 = vpop.f32.mrf.mxu0
        %v1774 = vadd.f32 0.0, %v1773
        %v1775 = vpop.f32.mrf.mxu0
        %1776 = vmatprep.mubr.f32.mxu0 0.0
        %1777 = vmatmul.mubr.f32.gmra.mxu0 %v1702
        %v1778 = vpop.f32.mrf.mxu0
        %v1779 = vadd.f32 0.0, %v1778
        %v1780 = vpop.f32.mrf.mxu0
        %1781 = vmatprep.mubr.f32.mxu0 0.0
        %1782 = vmatmul.mubr.f32.gmra.mxu0 %v1705
        %v1783 = vpop.f32.mrf.mxu0
        %v1784 = vadd.f32 0.0, %v1783
        %v1785 = vpop.f32.mrf.mxu0
        %1786 = vdwg.mxu0
        %v1787 = vld [vmem:[%s7] sm:$0xff]
        %v1788 = vld [vmem:[%s7 + $0x8] sm:$0xff]
        %v1789 = vld [vmem:[%s7 + $0x10] sm:$0xff]
        %v1790 = vld [vmem:[%s7 + $0x18] sm:$0xff]
        %v1792 = vsel %vm917, %v1507, 0
        %v1795 = vsel %vm917, %v1512, 0
        %v1798 = vsel %vm917, %v1517, 0
        %1800 = vmatprep.subr.mxu0 0.0
        %1801 = vmatpush1.msra.mxu0 0.0
        %1802 = vmatprep.subr.mxu0 0.0
        %1803 = vmatpush1.msra.mxu0 0.0
        %1804 = vmatprep.subr.mxu0 0.0
        %1805 = vmatpush1.msra.mxu0 0.0
        %1806 = vmatprep.subr.mxu0 0.0
        %1807 = vmatpush1.msra.mxu0 0.0
        %1808 = vmatprep.subr.mxu0 0.0
        %1809 = vmatpush1.msra.mxu0 0.0
        %1810 = vmatprep.subr.mxu0 0.0
        %1811 = vmatpush1.msra.mxu0 0.0
        %1812 = vmatprep.subr.mxu0 0.0
        %1813 = vmatpush1.msra.mxu0 0.0
        %1814 = vmatprep.subr.mxu0 0.0
        %1815 = vmatpush1.msra.mxu0 0.0
        %1816 = vmatprep.subr.mxu0 0.0
        %1817 = vmatpush1.msra.mxu0 0.0
        %1818 = vmatprep.subr.mxu0 0.0
        %1819 = vmatpush1.msra.mxu0 0.0
        %1820 = vmatprep.subr.mxu0 0.0
        %1821 = vmatpush1.msra.mxu0 0.0
        %1822 = vmatprep.subr.mxu0 0.0
        %1823 = vmatpush1.msra.mxu0 0.0
        %1824 = vmatprep.subr.mxu0 0.0
        %1825 = vmatpush1.msra.mxu0 0.0
        %1826 = vmatprep.subr.mxu0 0.0
        %1827 = vmatpush1.msra.mxu0 0.0
        %1828 = vmatprep.subr.mxu0 0.0
        %1829 = vmatpush1.msra.mxu0 0.0
        %1830 = vmatprep.subr.mxu0 0.0
        %1831 = vmatpush1.msra.mxu0 %v1787
        %1832 = vmatprep.subr.mxu0 0.0
        %1833 = vmatpush2.msra.mxu0 0.0
        %1834 = vmatprep.subr.mxu0 0.0
        %1835 = vmatpush2.msra.mxu0 0.0
        %1836 = vmatprep.subr.mxu0 0.0
        %1837 = vmatpush2.msra.mxu0 0.0
        %1838 = vmatprep.subr.mxu0 0.0
        %1839 = vmatpush2.msra.mxu0 0.0
        %1840 = vmatprep.subr.mxu0 0.0
        %1841 = vmatpush2.msra.mxu0 0.0
        %1842 = vmatprep.subr.mxu0 0.0
        %1843 = vmatpush2.msra.mxu0 0.0
        %1844 = vmatprep.subr.mxu0 0.0
        %1845 = vmatpush2.msra.mxu0 0.0
        %1846 = vmatprep.subr.mxu0 0.0
        %1847 = vmatpush2.msra.mxu0 0.0
        %1848 = vmatprep.subr.mxu0 0.0
        %1849 = vmatpush2.msra.mxu0 0.0
        %1850 = vmatprep.subr.mxu0 0.0
        %1851 = vmatpush2.msra.mxu0 0.0
        %1852 = vmatprep.subr.mxu0 0.0
        %1853 = vmatpush2.msra.mxu0 0.0
        %1854 = vmatprep.subr.mxu0 0.0
        %1855 = vmatpush2.msra.mxu0 0.0
        %1856 = vmatprep.subr.mxu0 0.0
        %1857 = vmatpush2.msra.mxu0 0.0
        %1858 = vmatprep.subr.mxu0 0.0
        %1859 = vmatpush2.msra.mxu0 0.0
        %1860 = vmatprep.subr.mxu0 0.0
        %1861 = vmatpush2.msra.mxu0 0.0
        %1862 = vmatprep.subr.mxu0 0.0
        %1863 = vmatpush2.msra.mxu0 0.0
        %1864 = vmatprep.mubr.f32.mxu0 0.0
        %1865 = vmatmul.mubr.f32.gmra.mxu0 %v1792
        %v1866 = vpop.f32.mrf.mxu0
        %v1867 = vadd.f32 0.0, %v1866
        %v1868 = vpop.f32.mrf.mxu0
        %1869 = vmatprep.mubr.f32.mxu0 0.0
        %1870 = vmatmul.mubr.f32.gmra.mxu0 %v1795
        %v1871 = vpop.f32.mrf.mxu0
        %v1872 = vadd.f32 0.0, %v1871
        %v1873 = vpop.f32.mrf.mxu0
        %1874 = vmatprep.mubr.f32.mxu0 0.0
        %1875 = vmatmul.mubr.f32.gmra.mxu0 %v1798
        %v1876 = vpop.f32.mrf.mxu0
        %v1877 = vadd.f32 0.0, %v1876
        %v1878 = vpop.f32.mrf.mxu0
        %1879 = vdwg.mxu0
        %v1881 = vsel %vm917, %v1596, 0
        %v1884 = vsel %vm917, %v1601, 0
        %v1887 = vsel %vm917, %v1606, 0
        %1889 = vmatprep.subr.mxu0 0.0
        %1890 = vmatpush1.msra.mxu0 0.0
        %1891 = vmatprep.subr.mxu0 0.0
        %1892 = vmatpush1.msra.mxu0 0.0
        %1893 = vmatprep.subr.mxu0 0.0
        %1894 = vmatpush1.msra.mxu0 0.0
        %1895 = vmatprep.subr.mxu0 0.0
        %1896 = vmatpush1.msra.mxu0 0.0
        %1897 = vmatprep.subr.mxu0 0.0
        %1898 = vmatpush1.msra.mxu0 0.0
        %1899 = vmatprep.subr.mxu0 0.0
        %1900 = vmatpush1.msra.mxu0 0.0
        %1901 = vmatprep.subr.mxu0 0.0
        %1902 = vmatpush1.msra.mxu0 0.0
        %1903 = vmatprep.subr.mxu0 0.0
        %1904 = vmatpush1.msra.mxu0 0.0
        %1905 = vmatprep.subr.mxu0 0.0
        %1906 = vmatpush1.msra.mxu0 0.0
        %1907 = vmatprep.subr.mxu0 0.0
        %1908 = vmatpush1.msra.mxu0 0.0
        %1909 = vmatprep.subr.mxu0 0.0
        %1910 = vmatpush1.msra.mxu0 0.0
        %1911 = vmatprep.subr.mxu0 0.0
        %1912 = vmatpush1.msra.mxu0 0.0
        %1913 = vmatprep.subr.mxu0 0.0
        %1914 = vmatpush1.msra.mxu0 0.0
        %1915 = vmatprep.subr.mxu0 0.0
        %1916 = vmatpush1.msra.mxu0 0.0
        %1917 = vmatprep.subr.mxu0 0.0
        %1918 = vmatpush1.msra.mxu0 0.0
        %1919 = vmatprep.subr.mxu0 0.0
        %1920 = vmatpush1.msra.mxu0 %v1788
        %1921 = vmatprep.subr.mxu0 0.0
        %1922 = vmatpush2.msra.mxu0 0.0
        %1923 = vmatprep.subr.mxu0 0.0
        %1924 = vmatpush2.msra.mxu0 0.0
        %1925 = vmatprep.subr.mxu0 0.0
        %1926 = vmatpush2.msra.mxu0 0.0
        %1927 = vmatprep.subr.mxu0 0.0
        %1928 = vmatpush2.msra.mxu0 0.0
        %1929 = vmatprep.subr.mxu0 0.0
        %1930 = vmatpush2.msra.mxu0 0.0
        %1931 = vmatprep.subr.mxu0 0.0
        %1932 = vmatpush2.msra.mxu0 0.0
        %1933 = vmatprep.subr.mxu0 0.0
        %1934 = vmatpush2.msra.mxu0 0.0
        %1935 = vmatprep.subr.mxu0 0.0
        %1936 = vmatpush2.msra.mxu0 0.0
        %1937 = vmatprep.subr.mxu0 0.0
        %1938 = vmatpush2.msra.mxu0 0.0
        %1939 = vmatprep.subr.mxu0 0.0
        %1940 = vmatpush2.msra.mxu0 0.0
        %1941 = vmatprep.subr.mxu0 0.0
        %1942 = vmatpush2.msra.mxu0 0.0
        %1943 = vmatprep.subr.mxu0 0.0
        %1944 = vmatpush2.msra.mxu0 0.0
        %1945 = vmatprep.subr.mxu0 0.0
        %1946 = vmatpush2.msra.mxu0 0.0
        %1947 = vmatprep.subr.mxu0 0.0
        %1948 = vmatpush2.msra.mxu0 0.0
        %1949 = vmatprep.subr.mxu0 0.0
        %1950 = vmatpush2.msra.mxu0 0.0
        %1951 = vmatprep.subr.mxu0 0.0
        %1952 = vmatpush2.msra.mxu0 0.0
        %1953 = vmatprep.mubr.f32.mxu0 0.0
        %1954 = vmatmul.mubr.f32.gmra.mxu0 %v1881
        %v1955 = vpop.f32.mrf.mxu0
        %v1956 = vadd.f32 0.0, %v1955
        %v1957 = vpop.f32.mrf.mxu0
        %1958 = vmatprep.mubr.f32.mxu0 0.0
        %1959 = vmatmul.mubr.f32.gmra.mxu0 %v1884
        %v1960 = vpop.f32.mrf.mxu0
        %v1961 = vadd.f32 0.0, %v1960
        %v1962 = vpop.f32.mrf.mxu0
        %1963 = vmatprep.mubr.f32.mxu0 0.0
        %1964 = vmatmul.mubr.f32.gmra.mxu0 %v1887
        %v1965 = vpop.f32.mrf.mxu0
        %v1966 = vadd.f32 0.0, %v1965
        %v1967 = vpop.f32.mrf.mxu0
        %1968 = vdwg.mxu0
        %v1970 = vsel %vm917, %v1685, 0
        %v1973 = vsel %vm917, %v1690, 0
        %v1976 = vsel %vm917, %v1695, 0
        %1978 = vmatprep.subr.mxu0 0.0
        %1979 = vmatpush1.msra.mxu0 0.0
        %1980 = vmatprep.subr.mxu0 0.0
        %1981 = vmatpush1.msra.mxu0 0.0
        %1982 = vmatprep.subr.mxu0 0.0
        %1983 = vmatpush1.msra.mxu0 0.0
        %1984 = vmatprep.subr.mxu0 0.0
        %1985 = vmatpush1.msra.mxu0 0.0
        %1986 = vmatprep.subr.mxu0 0.0
        %1987 = vmatpush1.msra.mxu0 0.0
        %1988 = vmatprep.subr.mxu0 0.0
        %1989 = vmatpush1.msra.mxu0 0.0
        %1990 = vmatprep.subr.mxu0 0.0
        %1991 = vmatpush1.msra.mxu0 0.0
        %1992 = vmatprep.subr.mxu0 0.0
        %1993 = vmatpush1.msra.mxu0 0.0
        %1994 = vmatprep.subr.mxu0 0.0
        %1995 = vmatpush1.msra.mxu0 0.0
        %1996 = vmatprep.subr.mxu0 0.0
        %1997 = vmatpush1.msra.mxu0 0.0
        %1998 = vmatprep.subr.mxu0 0.0
        %1999 = vmatpush1.msra.mxu0 0.0
        %2000 = vmatprep.subr.mxu0 0.0
        %2001 = vmatpush1.msra.mxu0 0.0
        %2002 = vmatprep.subr.mxu0 0.0
        %2003 = vmatpush1.msra.mxu0 0.0
        %2004 = vmatprep.subr.mxu0 0.0
        %2005 = vmatpush1.msra.mxu0 0.0
        %2006 = vmatprep.subr.mxu0 0.0
        %2007 = vmatpush1.msra.mxu0 0.0
        %2008 = vmatprep.subr.mxu0 0.0
        %2009 = vmatpush1.msra.mxu0 %v1789
        %2010 = vmatprep.subr.mxu0 0.0
        %2011 = vmatpush2.msra.mxu0 0.0
        %2012 = vmatprep.subr.mxu0 0.0
        %2013 = vmatpush2.msra.mxu0 0.0
        %2014 = vmatprep.subr.mxu0 0.0
        %2015 = vmatpush2.msra.mxu0 0.0
        %2016 = vmatprep.subr.mxu0 0.0
        %2017 = vmatpush2.msra.mxu0 0.0
        %2018 = vmatprep.subr.mxu0 0.0
        %2019 = vmatpush2.msra.mxu0 0.0
        %2020 = vmatprep.subr.mxu0 0.0
        %2021 = vmatpush2.msra.mxu0 0.0
        %2022 = vmatprep.subr.mxu0 0.0
        %2023 = vmatpush2.msra.mxu0 0.0
        %2024 = vmatprep.subr.mxu0 0.0
        %2025 = vmatpush2.msra.mxu0 0.0
        %2026 = vmatprep.subr.mxu0 0.0
        %2027 = vmatpush2.msra.mxu0 0.0
        %2028 = vmatprep.subr.mxu0 0.0
        %2029 = vmatpush2.msra.mxu0 0.0
        %2030 = vmatprep.subr.mxu0 0.0
        %2031 = vmatpush2.msra.mxu0 0.0
        %2032 = vmatprep.subr.mxu0 0.0
        %2033 = vmatpush2.msra.mxu0 0.0
        %2034 = vmatprep.subr.mxu0 0.0
        %2035 = vmatpush2.msra.mxu0 0.0
        %2036 = vmatprep.subr.mxu0 0.0
        %2037 = vmatpush2.msra.mxu0 0.0
        %2038 = vmatprep.subr.mxu0 0.0
        %2039 = vmatpush2.msra.mxu0 0.0
        %2040 = vmatprep.subr.mxu0 0.0
        %2041 = vmatpush2.msra.mxu0 0.0
        %2042 = vmatprep.mubr.f32.mxu0 0.0
        %2043 = vmatmul.mubr.f32.gmra.mxu0 %v1970
        %v2044 = vpop.f32.mrf.mxu0
        %v2045 = vadd.f32 0.0, %v2044
        %v2046 = vpop.f32.mrf.mxu0
        %2047 = vmatprep.mubr.f32.mxu0 0.0
        %2048 = vmatmul.mubr.f32.gmra.mxu0 %v1973
        %v2049 = vpop.f32.mrf.mxu0
        %v2050 = vadd.f32 0.0, %v2049
        %v2051 = vpop.f32.mrf.mxu0
        %2052 = vmatprep.mubr.f32.mxu0 0.0
        %2053 = vmatmul.mubr.f32.gmra.mxu0 %v1976
        %v2054 = vpop.f32.mrf.mxu0
        %v2055 = vadd.f32 0.0, %v2054
        %v2056 = vpop.f32.mrf.mxu0
        %2057 = vdwg.mxu0
        %v2059 = vsel %vm917, %v1774, 0
        %v2062 = vsel %vm917, %v1779, 0
        %v2065 = vsel %vm917, %v1784, 0
        %2067 = vmatprep.subr.mxu0 0.0
        %2068 = vmatpush1.msra.mxu0 0.0
        %2069 = vmatprep.subr.mxu0 0.0
        %2070 = vmatpush1.msra.mxu0 0.0
        %2071 = vmatprep.subr.mxu0 0.0
        %2072 = vmatpush1.msra.mxu0 0.0
        %2073 = vmatprep.subr.mxu0 0.0
        %2074 = vmatpush1.msra.mxu0 0.0
        %2075 = vmatprep.subr.mxu0 0.0
        %2076 = vmatpush1.msra.mxu0 0.0
        %2077 = vmatprep.subr.mxu0 0.0
        %2078 = vmatpush1.msra.mxu0 0.0
        %2079 = vmatprep.subr.mxu0 0.0
        %2080 = vmatpush1.msra.mxu0 0.0
        %2081 = vmatprep.subr.mxu0 0.0
        %2082 = vmatpush1.msra.mxu0 0.0
        %2083 = vmatprep.subr.mxu0 0.0
        %2084 = vmatpush1.msra.mxu0 0.0
        %2085 = vmatprep.subr.mxu0 0.0
        %2086 = vmatpush1.msra.mxu0 0.0
        %2087 = vmatprep.subr.mxu0 0.0
        %2088 = vmatpush1.msra.mxu0 0.0
        %2089 = vmatprep.subr.mxu0 0.0
        %2090 = vmatpush1.msra.mxu0 0.0
        %2091 = vmatprep.subr.mxu0 0.0
        %2092 = vmatpush1.msra.mxu0 0.0
        %2093 = vmatprep.subr.mxu0 0.0
        %2094 = vmatpush1.msra.mxu0 0.0
        %2095 = vmatprep.subr.mxu0 0.0
        %2096 = vmatpush1.msra.mxu0 0.0
        %2097 = vmatprep.subr.mxu0 0.0
        %2098 = vmatpush1.msra.mxu0 %v1790
        %2099 = vmatprep.subr.mxu0 0.0
        %2100 = vmatpush2.msra.mxu0 0.0
        %2101 = vmatprep.subr.mxu0 0.0
        %2102 = vmatpush2.msra.mxu0 0.0
        %2103 = vmatprep.subr.mxu0 0.0
        %2104 = vmatpush2.msra.mxu0 0.0
        %2105 = vmatprep.subr.mxu0 0.0
        %2106 = vmatpush2.msra.mxu0 0.0
        %2107 = vmatprep.subr.mxu0 0.0
        %2108 = vmatpush2.msra.mxu0 0.0
        %2109 = vmatprep.subr.mxu0 0.0
        %2110 = vmatpush2.msra.mxu0 0.0
        %2111 = vmatprep.subr.mxu0 0.0
        %2112 = vmatpush2.msra.mxu0 0.0
        %2113 = vmatprep.subr.mxu0 0.0
        %2114 = vmatpush2.msra.mxu0 0.0
        %2115 = vmatprep.subr.mxu0 0.0
        %2116 = vmatpush2.msra.mxu0 0.0
        %2117 = vmatprep.subr.mxu0 0.0
        %2118 = vmatpush2.msra.mxu0 0.0
        %2119 = vmatprep.subr.mxu0 0.0
        %2120 = vmatpush2.msra.mxu0 0.0
        %2121 = vmatprep.subr.mxu0 0.0
        %2122 = vmatpush2.msra.mxu0 0.0
        %2123 = vmatprep.subr.mxu0 0.0
        %2124 = vmatpush2.msra.mxu0 0.0
        %2125 = vmatprep.subr.mxu0 0.0
        %2126 = vmatpush2.msra.mxu0 0.0
        %2127 = vmatprep.subr.mxu0 0.0
        %2128 = vmatpush2.msra.mxu0 0.0
        %2129 = vmatprep.subr.mxu0 0.0
        %2130 = vmatpush2.msra.mxu0 0.0
        %2131 = vmatprep.mubr.f32.mxu0 0.0
        %2132 = vmatmul.mubr.f32.gmra.mxu0 %v2059
        %v2133 = vpop.f32.mrf.mxu0
        %v2134 = vadd.f32 0.0, %v2133
        %v2135 = vpop.f32.mrf.mxu0
        %2136 = vmatprep.mubr.f32.mxu0 0.0
        %2137 = vmatmul.mubr.f32.gmra.mxu0 %v2062
        %v2138 = vpop.f32.mrf.mxu0
        %v2139 = vadd.f32 0.0, %v2138
        %v2140 = vpop.f32.mrf.mxu0
        %2141 = vmatprep.mubr.f32.mxu0 0.0
        %2142 = vmatmul.mubr.f32.gmra.mxu0 %v2065
        %v2143 = vpop.f32.mrf.mxu0
        %v2144 = vadd.f32 0.0, %v2143
        %v2145 = vpop.f32.mrf.mxu0
        %2146 = vdwg.mxu0
        %v2147 = vsel %vm656, %v1867, 0.0
        %v2148 = vsel %vm656, %v1956, 0.0
        %v2149 = vadd.f32 %v2147, %v2148
        %v2150 = vsel %vm656, %v2045, 0.0
        %v2151 = vadd.f32 %v2149, %v2150
        %v2152 = vsel %vm656, %v2134, 0.0
        %v2153 = vadd.f32 %v2151, %v2152
        %v2154 = vsel %vm656, %v1872, 0.0
        %v2155 = vsel %vm656, %v1961, 0.0
        %v2156 = vadd.f32 %v2154, %v2155
        %v2157 = vsel %vm656, %v2050, 0.0
        %v2158 = vadd.f32 %v2156, %v2157
        %v2159 = vsel %vm656, %v2139, 0.0
        %v2160 = vadd.f32 %v2158, %v2159
        %v2161 = vsel %vm656, %v1877, 0.0
        %v2162 = vsel %vm656, %v1966, 0.0
        %v2163 = vadd.f32 %v2161, %v2162
        %v2164 = vsel %vm656, %v2055, 0.0
        %v2165 = vadd.f32 %v2163, %v2164
        %v2166 = vsel %vm656, %v2144, 0.0
        %v2167 = vadd.f32 %v2165, %v2166
        %v2168 = vld [vmem:[%s8] sm:$0x1]
        %v2170 = vlaneseq
        %v2171 = vshrl.u32 %v2170, 7
        %v2172 = vsub.s32 0, %v2171
        %v2173 = vrot.slane %v2168, %v2172
        %v2175 = vadd.f32 %v2153, %v2173
        %v2176 = vadd.f32 %v2160, %v2173
        %v2177 = vadd.f32 %v2167, %v2173
        %v2178 = vadd.f32 %v637, %v2175
        %v2179 = vadd.f32 %v642, %v2176
        %v2180 = vadd.f32 %v647, %v2177
        %v2181 = vld [vmem:[%s9] sm:$0x1]
        %v2182 = vld [vmem:[%s10] sm:$0x1]
        %v2183 = vsel %vm656, %v2178, 0.0
        %2184 = vadd.xlane.f32.xlu0 %v2183
        %v2185 = vpop.xlane.xlu0 %2184
        %v2186 = vsel %vm656, %v2179, 0.0
        %2187 = vadd.xlane.f32.xlu0 %v2186
        %v2188 = vpop.xlane.xlu0 %2187
        %v2189 = vsel %vm656, %v2180, 0.0
        %2190 = vadd.xlane.f32.xlu0 %v2189
        %v2191 = vpop.xlane.xlu0 %2190
        %v2192 = vmul.f32 %v2185, %v666
        %v2193 = vmul.f32 %v2188, %v666
        %v2194 = vmul.f32 %v2191, %v666
        %v2195 = vsub.f32 %v2178, %v2192
        %v2196 = vsub.f32 %v2179, %v2193
        %v2197 = vsub.f32 %v2180, %v2194
        %v2198 = vmul.f32 %v2195, %v2195
        %v2199 = vmul.f32 %v2196, %v2196
        %v2200 = vmul.f32 %v2197, %v2197
        %v2201 = vsel %vm656, %v2198, 0.0
        %2202 = vadd.xlane.f32.xlu0 %v2201
        %v2203 = vpop.xlane.xlu0 %2202
        %v2204 = vsel %vm656, %v2199, 0.0
        %2205 = vadd.xlane.f32.xlu0 %v2204
        %v2206 = vpop.xlane.xlu0 %2205
        %v2207 = vsel %vm656, %v2200, 0.0
        %2208 = vadd.xlane.f32.xlu0 %v2207
        %v2209 = vpop.xlane.xlu0 %2208
        %v2210 = vmul.f32 %v2203, %v666
        %v2211 = vmul.f32 %v2206, %v666
        %v2212 = vmul.f32 %v2209, %v666
        %v2213 = vadd.f32 %v2210, 1e-05
        %v2214 = vadd.f32 %v2211, 1e-05
        %v2215 = vadd.f32 %v2212, 1e-05
        %v2216 = vrsqrt.pop %v2213
        %v2217 = vrsqrt.pop %v2214
        %v2218 = vrsqrt.pop %v2215
        %v2219 = vmul.f32 %v2195, %v2216
        %v2220 = vmul.f32 %v2196, %v2217
        %v2221 = vmul.f32 %v2197, %v2218
        %v2223 = vlaneseq
        %v2224 = vshrl.u32 %v2223, 7
        %v2225 = vsub.s32 0, %v2224
        %v2226 = vrot.slane %v2181, %v2225
        %v2228 = vmul.f32 %v2219, %v2226
        %v2229 = vmul.f32 %v2220, %v2226
        %v2230 = vmul.f32 %v2221, %v2226
        %v2232 = vlaneseq
        %v2233 = vshrl.u32 %v2232, 7
        %v2234 = vsub.s32 0, %v2233
        %v2235 = vrot.slane %v2182, %v2234
        %v2237 = vadd.f32 %v2228, %v2235
        %v2238 = vadd.f32 %v2229, %v2235
        %v2239 = vadd.f32 %v2230, %v2235
        %v2240 = vld [vmem:[%s11] sm:$0xff]
        %v2241 = vld [vmem:[%s11 + $0x8] sm:$0xff]
        %v2242 = vld [vmem:[%s11 + $0x10] sm:$0xff]
        %v2243 = vld [vmem:[%s11 + $0x18] sm:$0xff]
        %v2244 = vld [vmem:[%s12] sm:$0x1]
        %v2246 = vlaneseq
        %v2247 = vshrl.u32 %v2246, 7
        %v2248 = vsub.s32 0, %v2247
        %v2249 = vrot.slane %v2244, %v2248
        %v2252 = vsel %vm656, %v2237, 0
        %v2255 = vsel %vm656, %v2238, 0
        %v2258 = vsel %vm656, %v2239, 0
        %2260 = vmatprep.subr.mxu0 0.0
        %2261 = vmatpush1.msra.mxu0 0.0
        %2262 = vmatprep.subr.mxu0 0.0
        %2263 = vmatpush1.msra.mxu0 0.0
        %2264 = vmatprep.subr.mxu0 0.0
        %2265 = vmatpush1.msra.mxu0 0.0
        %2266 = vmatprep.subr.mxu0 0.0
        %2267 = vmatpush1.msra.mxu0 0.0
        %2268 = vmatprep.subr.mxu0 0.0
        %2269 = vmatpush1.msra.mxu0 0.0
        %2270 = vmatprep.subr.mxu0 0.0
        %2271 = vmatpush1.msra.mxu0 0.0
        %2272 = vmatprep.subr.mxu0 0.0
        %2273 = vmatpush1.msra.mxu0 0.0
        %2274 = vmatprep.subr.mxu0 0.0
        %2275 = vmatpush1.msra.mxu0 0.0
        %2276 = vmatprep.subr.mxu0 0.0
        %2277 = vmatpush1.msra.mxu0 0.0
        %2278 = vmatprep.subr.mxu0 0.0
        %2279 = vmatpush1.msra.mxu0 0.0
        %2280 = vmatprep.subr.mxu0 0.0
        %2281 = vmatpush1.msra.mxu0 0.0
        %2282 = vmatprep.subr.mxu0 0.0
        %2283 = vmatpush1.msra.mxu0 0.0
        %2284 = vmatprep.subr.mxu0 0.0
        %2285 = vmatpush1.msra.mxu0 %v2243
        %2286 = vmatprep.subr.mxu0 0.0
        %2287 = vmatpush1.msra.mxu0 %v2242
        %2288 = vmatprep.subr.mxu0 0.0
        %2289 = vmatpush1.msra.mxu0 %v2241
        %2290 = vmatprep.subr.mxu0 0.0
        %2291 = vmatpush1.msra.mxu0 %v2240
        %2292 = vmatprep.subr.mxu0 0.0
        %2293 = vmatpush2.msra.mxu0 0.0
        %2294 = vmatprep.subr.mxu0 0.0
        %2295 = vmatpush2.msra.mxu0 0.0
        %2296 = vmatprep.subr.mxu0 0.0
        %2297 = vmatpush2.msra.mxu0 0.0
        %2298 = vmatprep.subr.mxu0 0.0
        %2299 = vmatpush2.msra.mxu0 0.0
        %2300 = vmatprep.subr.mxu0 0.0
        %2301 = vmatpush2.msra.mxu0 0.0
        %2302 = vmatprep.subr.mxu0 0.0
        %2303 = vmatpush2.msra.mxu0 0.0
        %2304 = vmatprep.subr.mxu0 0.0
        %2305 = vmatpush2.msra.mxu0 0.0
        %2306 = vmatprep.subr.mxu0 0.0
        %2307 = vmatpush2.msra.mxu0 0.0
        %2308 = vmatprep.subr.mxu0 0.0
        %2309 = vmatpush2.msra.mxu0 0.0
        %2310 = vmatprep.subr.mxu0 0.0
        %2311 = vmatpush2.msra.mxu0 0.0
        %2312 = vmatprep.subr.mxu0 0.0
        %2313 = vmatpush2.msra.mxu0 0.0
        %2314 = vmatprep.subr.mxu0 0.0
        %2315 = vmatpush2.msra.mxu0 0.0
        %2316 = vmatprep.subr.mxu0 0.0
        %2317 = vmatpush2.msra.mxu0 0.0
        %2318 = vmatprep.subr.mxu0 0.0
        %2319 = vmatpush2.msra.mxu0 0.0
        %2320 = vmatprep.subr.mxu0 0.0
        %2321 = vmatpush2.msra.mxu0 0.0
        %2322 = vmatprep.subr.mxu0 0.0
        %2323 = vmatpush2.msra.mxu0 0.0
        %2324 = vmatprep.mubr.f32.mxu0 0.0
        %2325 = vmatmul.mubr.f32.gmra.mxu0 %v2252
        %v2326 = vpop.f32.mrf.mxu0
        %v2327 = vadd.f32 %v2249, %v2326
        %v2328 = vpop.f32.mrf.mxu0
        %2329 = vmatprep.mubr.f32.mxu0 0.0
        %2330 = vmatmul.mubr.f32.gmra.mxu0 %v2255
        %v2331 = vpop.f32.mrf.mxu0
        %v2332 = vadd.f32 %v2249, %v2331
        %v2333 = vpop.f32.mrf.mxu0
        %2334 = vmatprep.mubr.f32.mxu0 0.0
        %2335 = vmatmul.mubr.f32.gmra.mxu0 %v2258
        %v2336 = vpop.f32.mrf.mxu0
        %v2337 = vadd.f32 %v2249, %v2336
        %v2338 = vpop.f32.mrf.mxu0
        %2339 = vdwg.mxu0
        %v2340 = vmul.f32 %v2327, %v2327
        %v2341 = vmul.f32 %v2332, %v2332
        %v2342 = vmul.f32 %v2337, %v2337
        %v2343 = vmul.f32 %v2327, %v2340
        %v2344 = vmul.f32 %v2332, %v2341
        %v2345 = vmul.f32 %v2337, %v2342
        %v2346 = vmul.f32 %v2343, 0.044715
        %v2347 = vmul.f32 %v2344, 0.044715
        %v2348 = vmul.f32 %v2345, 0.044715
        %v2349 = vadd.f32 %v2327, %v2346
        %v2350 = vadd.f32 %v2332, %v2347
        %v2351 = vadd.f32 %v2337, %v2348
        %v2352 = vmul.f32 %v2349, 0.7978846
        %v2353 = vmul.f32 %v2350, 0.7978846
        %v2354 = vmul.f32 %v2351, 0.7978846
        %v2355 = vtanh.pop %v2352
        %v2356 = vtanh.pop %v2353
        %v2357 = vtanh.pop %v2354
        %v2358 = vadd.f32 %v2355, 1.0
        %v2359 = vadd.f32 %v2356, 1.0
        %v2360 = vadd.f32 %v2357, 1.0
        %v2361 = vmul.f32 %v2358, 0.5
        %v2362 = vmul.f32 %v2359, 0.5
        %v2363 = vmul.f32 %v2360, 0.5
        %v2364 = vmul.f32 %v2327, %v2361
        %v2365 = vmul.f32 %v2332, %v2362
        %v2366 = vmul.f32 %v2337, %v2363
        %v2367 = vld [vmem:[%s13] sm:$0xff]
        %v2368 = vld [vmem:[%s13 + $0x8] sm:$0xff]
        %v2369 = vld [vmem:[%s13 + $0x10] sm:$0xff]
        %v2370 = vld [vmem:[%s13 + $0x18] sm:$0xff]
        %v2371 = vld [vmem:[%s13 + $0x20] sm:$0xff]
        %v2372 = vld [vmem:[%s13 + $0x28] sm:$0xff]
        %v2373 = vld [vmem:[%s13 + $0x30] sm:$0xff]
        %v2374 = vld [vmem:[%s13 + $0x38] sm:$0xff]
        %v2375 = vld [vmem:[%s13 + $0x40] sm:$0xff]
        %v2376 = vld [vmem:[%s13 + $0x48] sm:$0xff]
        %v2377 = vld [vmem:[%s13 + $0x50] sm:$0xff]
        %v2378 = vld [vmem:[%s13 + $0x58] sm:$0xff]
        %v2379 = vld [vmem:[%s13 + $0x60] sm:$0xff]
        %v2380 = vld [vmem:[%s13 + $0x68] sm:$0xff]
        %v2381 = vld [vmem:[%s13 + $0x70] sm:$0xff]
        %v2382 = vld [vmem:[%s13 + $0x78] sm:$0xff]
        %v2383 = vld [vmem:[%s14] sm:$0x1]
        %v2385 = vlaneseq
        %v2386 = vshrl.u32 %v2385, 7
        %v2387 = vsub.s32 0, %v2386
        %v2388 = vrot.slane %v2383, %v2387
        %2390 = vmatprep.subr.mxu0 0.0
        %2391 = vmatpush1.msra.mxu0 %v2382
        %2392 = vmatprep.subr.mxu0 0.0
        %2393 = vmatpush1.msra.mxu0 %v2381
        %2394 = vmatprep.subr.mxu0 0.0
        %2395 = vmatpush1.msra.mxu0 %v2380
        %2396 = vmatprep.subr.mxu0 0.0
        %2397 = vmatpush1.msra.mxu0 %v2379
        %2398 = vmatprep.subr.mxu0 0.0
        %2399 = vmatpush1.msra.mxu0 %v2378
        %2400 = vmatprep.subr.mxu0 0.0
        %2401 = vmatpush1.msra.mxu0 %v2377
        %2402 = vmatprep.subr.mxu0 0.0
        %2403 = vmatpush1.msra.mxu0 %v2376
        %2404 = vmatprep.subr.mxu0 0.0
        %2405 = vmatpush1.msra.mxu0 %v2375
        %2406 = vmatprep.subr.mxu0 0.0
        %2407 = vmatpush1.msra.mxu0 %v2374
        %2408 = vmatprep.subr.mxu0 0.0
        %2409 = vmatpush1.msra.mxu0 %v2373
        %2410 = vmatprep.subr.mxu0 0.0
        %2411 = vmatpush1.msra.mxu0 %v2372
        %2412 = vmatprep.subr.mxu0 0.0
        %2413 = vmatpush1.msra.mxu0 %v2371
        %2414 = vmatprep.subr.mxu0 0.0
        %2415 = vmatpush1.msra.mxu0 %v2370
        %2416 = vmatprep.subr.mxu0 0.0
        %2417 = vmatpush1.msra.mxu0 %v2369
        %2418 = vmatprep.subr.mxu0 0.0
        %2419 = vmatpush1.msra.mxu0 %v2368
        %2420 = vmatprep.subr.mxu0 0.0
        %2421 = vmatpush1.msra.mxu0 %v2367
        %2422 = vmatprep.subr.mxu0 0.0
        %2423 = vmatpush2.msra.mxu0 0.0
        %2424 = vmatprep.subr.mxu0 0.0
        %2425 = vmatpush2.msra.mxu0 0.0
        %2426 = vmatprep.subr.mxu0 0.0
        %2427 = vmatpush2.msra.mxu0 0.0
        %2428 = vmatprep.subr.mxu0 0.0
        %2429 = vmatpush2.msra.mxu0 0.0
        %2430 = vmatprep.subr.mxu0 0.0
        %2431 = vmatpush2.msra.mxu0 0.0
        %2432 = vmatprep.subr.mxu0 0.0
        %2433 = vmatpush2.msra.mxu0 0.0
        %2434 = vmatprep.subr.mxu0 0.0
        %2435 = vmatpush2.msra.mxu0 0.0
        %2436 = vmatprep.subr.mxu0 0.0
        %2437 = vmatpush2.msra.mxu0 0.0
        %2438 = vmatprep.subr.mxu0 0.0
        %2439 = vmatpush2.msra.mxu0 0.0
        %2440 = vmatprep.subr.mxu0 0.0
        %2441 = vmatpush2.msra.mxu0 0.0
        %2442 = vmatprep.subr.mxu0 0.0
        %2443 = vmatpush2.msra.mxu0 0.0
        %2444 = vmatprep.subr.mxu0 0.0
        %2445 = vmatpush2.msra.mxu0 0.0
        %2446 = vmatprep.subr.mxu0 0.0
        %2447 = vmatpush2.msra.mxu0 0.0
        %2448 = vmatprep.subr.mxu0 0.0
        %2449 = vmatpush2.msra.mxu0 0.0
        %2450 = vmatprep.subr.mxu0 0.0
        %2451 = vmatpush2.msra.mxu0 0.0
        %2452 = vmatprep.subr.mxu0 0.0
        %2453 = vmatpush2.msra.mxu0 0.0
        %2454 = vmatprep.mubr.f32.mxu0 0.0
        %2455 = vmatmul.mubr.f32.gmra.mxu0 %v2364
        %v2456 = vpop.f32.mrf.mxu0
        %v2457 = vadd.f32 %v2388, %v2456
        %v2458 = vpop.f32.mrf.mxu0
        %2459 = vmatprep.mubr.f32.mxu0 0.0
        %2460 = vmatmul.mubr.f32.gmra.mxu0 %v2365
        %v2461 = vpop.f32.mrf.mxu0
        %v2462 = vadd.f32 %v2388, %v2461
        %v2463 = vpop.f32.mrf.mxu0
        %2464 = vmatprep.mubr.f32.mxu0 0.0
        %2465 = vmatmul.mubr.f32.gmra.mxu0 %v2366
        %v2466 = vpop.f32.mrf.mxu0
        %v2467 = vadd.f32 %v2388, %v2466
        %v2468 = vpop.f32.mrf.mxu0
        %2469 = vdwg.mxu0
        %v2470 = vadd.f32 %v2178, %v2457
        %v2471 = vadd.f32 %v2179, %v2462
        %v2472 = vadd.f32 %v2180, %v2467
        %s2473 = scalar_lea.vmem %s3, 1
        %v2474 = vld [vmem:[%s2473] sm:$0x1]
        %s2475 = scalar_lea.vmem %s4, 1
        %v2476 = vld [vmem:[%s2475] sm:$0x1]
        %v2477 = vsel %vm656, %v2470, 0.0
        %2478 = vadd.xlane.f32.xlu0 %v2477
        %v2479 = vpop.xlane.xlu0 %2478
        %v2480 = vsel %vm656, %v2471, 0.0
        %2481 = vadd.xlane.f32.xlu0 %v2480
        %v2482 = vpop.xlane.xlu0 %2481
        %v2483 = vsel %vm656, %v2472, 0.0
        %2484 = vadd.xlane.f32.xlu0 %v2483
        %v2485 = vpop.xlane.xlu0 %2484
        %v2486 = vmul.f32 %v2479, %v666
        %v2487 = vmul.f32 %v2482, %v666
        %v2488 = vmul.f32 %v2485, %v666
        %v2489 = vsub.f32 %v2470, %v2486
        %v2490 = vsub.f32 %v2471, %v2487
        %v2491 = vsub.f32 %v2472, %v2488
        %v2492 = vmul.f32 %v2489, %v2489
        %v2493 = vmul.f32 %v2490, %v2490
        %v2494 = vmul.f32 %v2491, %v2491
        %v2495 = vsel %vm656, %v2492, 0.0
        %2496 = vadd.xlane.f32.xlu0 %v2495
        %v2497 = vpop.xlane.xlu0 %2496
        %v2498 = vsel %vm656, %v2493, 0.0
        %2499 = vadd.xlane.f32.xlu0 %v2498
        %v2500 = vpop.xlane.xlu0 %2499
        %v2501 = vsel %vm656, %v2494, 0.0
        %2502 = vadd.xlane.f32.xlu0 %v2501
        %v2503 = vpop.xlane.xlu0 %2502
        %v2504 = vmul.f32 %v2497, %v666
        %v2505 = vmul.f32 %v2500, %v666
        %v2506 = vmul.f32 %v2503, %v666
        %v2507 = vadd.f32 %v2504, 1e-05
        %v2508 = vadd.f32 %v2505, 1e-05
        %v2509 = vadd.f32 %v2506, 1e-05
        %v2510 = vrsqrt.pop %v2507
        %v2511 = vrsqrt.pop %v2508
        %v2512 = vrsqrt.pop %v2509
        %v2513 = vmul.f32 %v2489, %v2510
        %v2514 = vmul.f32 %v2490, %v2511
        %v2515 = vmul.f32 %v2491, %v2512
        %v2517 = vlaneseq
        %v2518 = vshrl.u32 %v2517, 7
        %v2519 = vsub.s32 0, %v2518
        %v2520 = vrot.slane %v2474, %v2519
        %v2522 = vmul.f32 %v2513, %v2520
        %v2523 = vmul.f32 %v2514, %v2520
        %v2524 = vmul.f32 %v2515, %v2520
        %v2526 = vlaneseq
        %v2527 = vshrl.u32 %v2526, 7
        %v2528 = vsub.s32 0, %v2527
        %v2529 = vrot.slane %v2476, %v2528
        %v2531 = vadd.f32 %v2522, %v2529
        %v2532 = vadd.f32 %v2523, %v2529
        %v2533 = vadd.f32 %v2524, %v2529
        %s2534 = scalar_lea.vmem %s5, 32
        %v2535 = vld [vmem:[%s2534] sm:$0xff]
        %v2536 = vld [vmem:[%s2534 + $0x8] sm:$0xff]
        %v2537 = vld [vmem:[%s2534 + $0x10] sm:$0xff]
        %v2538 = vld [vmem:[%s2534 + $0x18] sm:$0xff]
        %s2539 = scalar_lea.vmem %s6, 1
        %v2540 = vld [vmem:[%s2539] sm:$0x1]
        %v2542 = vlaneseq
        %v2543 = vshrl.u32 %v2542, 7
        %v2544 = vsub.s32 0, %v2543
        %v2545 = vrot.slane %v2540, %v2544
        %v2548 = vsel %vm656, %v2531, 0
        %v2551 = vsel %vm656, %v2532, 0
        %v2554 = vsel %vm656, %v2533, 0
        %2556 = vmatprep.subr.mxu0 0.0
        %2557 = vmatpush1.msra.mxu0 0.0
        %2558 = vmatprep.subr.mxu0 0.0
        %2559 = vmatpush1.msra.mxu0 0.0
        %2560 = vmatprep.subr.mxu0 0.0
        %2561 = vmatpush1.msra.mxu0 0.0
        %2562 = vmatprep.subr.mxu0 0.0
        %2563 = vmatpush1.msra.mxu0 0.0
        %2564 = vmatprep.subr.mxu0 0.0
        %2565 = vmatpush1.msra.mxu0 0.0
        %2566 = vmatprep.subr.mxu0 0.0
        %2567 = vmatpush1.msra.mxu0 0.0
        %2568 = vmatprep.subr.mxu0 0.0
        %2569 = vmatpush1.msra.mxu0 0.0
        %2570 = vmatprep.subr.mxu0 0.0
        %2571 = vmatpush1.msra.mxu0 0.0
        %2572 = vmatprep.subr.mxu0 0.0
        %2573 = vmatpush1.msra.mxu0 0.0
        %2574 = vmatprep.subr.mxu0 0.0
        %2575 = vmatpush1.msra.mxu0 0.0
        %2576 = vmatprep.subr.mxu0 0.0
        %2577 = vmatpush1.msra.mxu0 0.0
        %2578 = vmatprep.subr.mxu0 0.0
        %2579 = vmatpush1.msra.mxu0 0.0
        %2580 = vmatprep.subr.mxu0 0.0
        %2581 = vmatpush1.msra.mxu0 %v2538
        %2582 = vmatprep.subr.mxu0 0.0
        %2583 = vmatpush1.msra.mxu0 %v2537
        %2584 = vmatprep.subr.mxu0 0.0
        %2585 = vmatpush1.msra.mxu0 %v2536
        %2586 = vmatprep.subr.mxu0 0.0
        %2587 = vmatpush1.msra.mxu0 %v2535
        %2588 = vmatprep.subr.mxu0 0.0
        %2589 = vmatpush2.msra.mxu0 0.0
        %2590 = vmatprep.subr.mxu0 0.0
        %2591 = vmatpush2.msra.mxu0 0.0
        %2592 = vmatprep.subr.mxu0 0.0
        %2593 = vmatpush2.msra.mxu0 0.0
        %2594 = vmatprep.subr.mxu0 0.0
        %2595 = vmatpush2.msra.mxu0 0.0
        %2596 = vmatprep.subr.mxu0 0.0
        %2597 = vmatpush2.msra.mxu0 0.0
        %2598 = vmatprep.subr.mxu0 0.0
        %2599 = vmatpush2.msra.mxu0 0.0
        %2600 = vmatprep.subr.mxu0 0.0
        %2601 = vmatpush2.msra.mxu0 0.0
        %2602 = vmatprep.subr.mxu0 0.0
        %2603 = vmatpush2.msra.mxu0 0.0
        %2604 = vmatprep.subr.mxu0 0.0
        %2605 = vmatpush2.msra.mxu0 0.0
        %2606 = vmatprep.subr.mxu0 0.0
        %2607 = vmatpush2.msra.mxu0 0.0
        %2608 = vmatprep.subr.mxu0 0.0
        %2609 = vmatpush2.msra.mxu0 0.0
        %2610 = vmatprep.subr.mxu0 0.0
        %2611 = vmatpush2.msra.mxu0 0.0
        %2612 = vmatprep.subr.mxu0 0.0
        %2613 = vmatpush2.msra.mxu0 0.0
        %2614 = vmatprep.subr.mxu0 0.0
        %2615 = vmatpush2.msra.mxu0 0.0
        %2616 = vmatprep.subr.mxu0 0.0
        %2617 = vmatpush2.msra.mxu0 0.0
        %2618 = vmatprep.subr.mxu0 0.0
        %2619 = vmatpush2.msra.mxu0 0.0
        %2620 = vmatprep.mubr.f32.mxu0 0.0
        %2621 = vmatmul.mubr.f32.gmra.mxu0 %v2548
        %v2622 = vpop.f32.mrf.mxu0
        %v2623 = vadd.f32 %v2545, %v2622
        %v2624 = vpop.f32.mrf.mxu0
        %2625 = vmatprep.mubr.f32.mxu0 0.0
        %2626 = vmatmul.mubr.f32.gmra.mxu0 %v2551
        %v2627 = vpop.f32.mrf.mxu0
        %v2628 = vadd.f32 %v2545, %v2627
        %v2629 = vpop.f32.mrf.mxu0
        %2630 = vmatprep.mubr.f32.mxu0 0.0
        %2631 = vmatmul.mubr.f32.gmra.mxu0 %v2554
        %v2632 = vpop.f32.mrf.mxu0
        %v2633 = vadd.f32 %v2545, %v2632
        %v2634 = vpop.f32.mrf.mxu0
        %2635 = vdwg.mxu0
        %2639 = vrot.lane.b32.xlu0 %v2623, 120
        %v2640 = vpop.permute.xlu0 %2639
        %2641 = vrot.lane.b32.xlu0 %v2628, 120
        %v2642 = vpop.permute.xlu0 %2641
        %2643 = vrot.lane.b32.xlu0 %v2633, 120
        %v2644 = vpop.permute.xlu0 %2643
        %2648 = vrot.lane.b32.xlu0 %v2623, 112
        %v2649 = vpop.permute.xlu0 %2648
        %2650 = vrot.lane.b32.xlu0 %v2628, 112
        %v2651 = vpop.permute.xlu0 %2650
        %2652 = vrot.lane.b32.xlu0 %v2633, 112
        %v2653 = vpop.permute.xlu0 %2652
        %2657 = vrot.lane.b32.xlu0 %v2623, 104
        %v2658 = vpop.permute.xlu0 %2657
        %2659 = vrot.lane.b32.xlu0 %v2628, 104
        %v2660 = vpop.permute.xlu0 %2659
        %2661 = vrot.lane.b32.xlu0 %v2633, 104
        %v2662 = vpop.permute.xlu0 %2661
        %2666 = vrot.lane.b32.xlu0 %v2623, 96
        %v2667 = vpop.permute.xlu0 %2666
        %2668 = vrot.lane.b32.xlu0 %v2628, 96
        %v2669 = vpop.permute.xlu0 %2668
        %2670 = vrot.lane.b32.xlu0 %v2633, 96
        %v2671 = vpop.permute.xlu0 %2670
        %2672 = vrot.lane.b32.xlu0 %v2623, 88
        %v2673 = vpop.permute.xlu0 %2672
        %2674 = vrot.lane.b32.xlu0 %v2628, 88
        %v2675 = vpop.permute.xlu0 %2674
        %2676 = vrot.lane.b32.xlu0 %v2633, 88
        %v2677 = vpop.permute.xlu0 %2676
        %2678 = vrot.lane.b32.xlu0 %v2623, 80
        %v2679 = vpop.permute.xlu0 %2678
        %2680 = vrot.lane.b32.xlu0 %v2628, 80
        %v2681 = vpop.permute.xlu0 %2680
        %2682 = vrot.lane.b32.xlu0 %v2633, 80
        %v2683 = vpop.permute.xlu0 %2682
        %2684 = vrot.lane.b32.xlu0 %v2623, 72
        %v2685 = vpop.permute.xlu0 %2684
        %2686 = vrot.lane.b32.xlu0 %v2628, 72
        %v2687 = vpop.permute.xlu0 %2686
        %2688 = vrot.lane.b32.xlu0 %v2633, 72
        %v2689 = vpop.permute.xlu0 %2688
        %2690 = vrot.lane.b32.xlu0 %v2623, 64
        %v2691 = vpop.permute.xlu0 %2690
        %2692 = vrot.lane.b32.xlu0 %v2628, 64
        %v2693 = vpop.permute.xlu0 %2692
        %2694 = vrot.lane.b32.xlu0 %v2633, 64
        %v2695 = vpop.permute.xlu0 %2694
        %2699 = vrot.lane.b32.xlu0 %v2623, 56
        %v2700 = vpop.permute.xlu0 %2699
        %2701 = vrot.lane.b32.xlu0 %v2628, 56
        %v2702 = vpop.permute.xlu0 %2701
        %2703 = vrot.lane.b32.xlu0 %v2633, 56
        %v2704 = vpop.permute.xlu0 %2703
        %2708 = vrot.lane.b32.xlu0 %v2623, 48
        %v2709 = vpop.permute.xlu0 %2708
        %2710 = vrot.lane.b32.xlu0 %v2628, 48
        %v2711 = vpop.permute.xlu0 %2710
        %2712 = vrot.lane.b32.xlu0 %v2633, 48
        %v2713 = vpop.permute.xlu0 %2712
        %2717 = vrot.lane.b32.xlu0 %v2623, 40
        %v2718 = vpop.permute.xlu0 %2717
        %2719 = vrot.lane.b32.xlu0 %v2628, 40
        %v2720 = vpop.permute.xlu0 %2719
        %2721 = vrot.lane.b32.xlu0 %v2633, 40
        %v2722 = vpop.permute.xlu0 %2721
        %v2726 = vmul.f32 %v2623, 0.35355338
        %v2727 = vmul.f32 %v2628, 0.35355338
        %v2728 = vmul.f32 %v2633, 0.35355338
        %v2729 = vmul.f32 %v2640, 0.35355338
        %v2730 = vmul.f32 %v2642, 0.35355338
        %v2731 = vmul.f32 %v2644, 0.35355338
        %v2732 = vmul.f32 %v2649, 0.35355338
        %v2733 = vmul.f32 %v2651, 0.35355338
        %v2734 = vmul.f32 %v2653, 0.35355338
        %v2735 = vmul.f32 %v2658, 0.35355338
        %v2736 = vmul.f32 %v2660, 0.35355338
        %v2737 = vmul.f32 %v2662, 0.35355338
        %v2739 = vsel %vm917, %v2726, 0
        %v2742 = vsel %vm917, %v2727, 0
        %v2745 = vsel %vm917, %v2728, 0
        %v2747 = vsel %vm917, %v2667, 0
        %v2749 = vsel %vm917, %v2669, 0
        %v2751 = vsel %vm917, %v2671, 0
        %2753 = vmatprep.subr.mxu0 0.0
        %2754 = vmatpush1.xpose.msra.mxu0 0.0
        %2755 = vmatprep.subr.mxu0 0.0
        %2756 = vmatpush1.xpose.msra.mxu0 0.0
        %2757 = vmatprep.subr.mxu0 0.0
        %2758 = vmatpush1.xpose.msra.mxu0 0.0
        %2759 = vmatprep.subr.mxu0 0.0
        %2760 = vmatpush1.xpose.msra.mxu0 0.0
        %2761 = vmatprep.subr.mxu0 0.0
        %2762 = vmatpush1.xpose.msra.mxu0 0.0
        %2763 = vmatprep.subr.mxu0 0.0
        %2764 = vmatpush1.xpose.msra.mxu0 0.0
        %2765 = vmatprep.subr.mxu0 0.0
        %2766 = vmatpush1.xpose.msra.mxu0 0.0
        %2767 = vmatprep.subr.mxu0 0.0
        %2768 = vmatpush1.xpose.msra.mxu0 0.0
        %2769 = vmatprep.subr.mxu0 0.0
        %2770 = vmatpush1.xpose.msra.mxu0 0.0
        %2771 = vmatprep.subr.mxu0 0.0
        %2772 = vmatpush1.xpose.msra.mxu0 0.0
        %2773 = vmatprep.subr.mxu0 0.0
        %2774 = vmatpush1.xpose.msra.mxu0 0.0
        %2775 = vmatprep.subr.mxu0 0.0
        %2776 = vmatpush1.xpose.msra.mxu0 0.0
        %2777 = vmatprep.subr.mxu0 0.0
        %2778 = vmatpush1.xpose.msra.mxu0 0.0
        %2779 = vmatprep.subr.mxu0 0.0
        %2780 = vmatpush1.xpose.msra.mxu0 %v2751
        %2781 = vmatprep.subr.mxu0 0.0
        %2782 = vmatpush1.xpose.msra.mxu0 %v2749
        %2783 = vmatprep.subr.mxu0 0.0
        %2784 = vmatpush1.xpose.msra.mxu0 %v2747
        %2785 = vmatprep.subr.mxu0 0.0
        %2786 = vmatpush2.xpose.msra.mxu0 0.0
        %2787 = vmatprep.subr.mxu0 0.0
        %2788 = vmatpush2.xpose.msra.mxu0 0.0
        %2789 = vmatprep.subr.mxu0 0.0
        %2790 = vmatpush2.xpose.msra.mxu0 0.0
        %2791 = vmatprep.subr.mxu0 0.0
        %2792 = vmatpush2.xpose.msra.mxu0 0.0
        %2793 = vmatprep.subr.mxu0 0.0
        %2794 = vmatpush2.xpose.msra.mxu0 0.0
        %2795 = vmatprep.subr.mxu0 0.0
        %2796 = vmatpush2.xpose.msra.mxu0 0.0
        %2797 = vmatprep.subr.mxu0 0.0
        %2798 = vmatpush2.xpose.msra.mxu0 0.0
        %2799 = vmatprep.subr.mxu0 0.0
        %2800 = vmatpush2.xpose.msra.mxu0 0.0
        %2801 = vmatprep.subr.mxu0 0.0
        %2802 = vmatpush2.xpose.msra.mxu0 0.0
        %2803 = vmatprep.subr.mxu0 0.0
        %2804 = vmatpush2.xpose.msra.mxu0 0.0
        %2805 = vmatprep.subr.mxu0 0.0
        %2806 = vmatpush2.xpose.msra.mxu0 0.0
        %2807 = vmatprep.subr.mxu0 0.0
        %2808 = vmatpush2.xpose.msra.mxu0 0.0
        %2809 = vmatprep.subr.mxu0 0.0
        %2810 = vmatpush2.xpose.msra.mxu0 0.0
        %2811 = vmatprep.subr.mxu0 0.0
        %2812 = vmatpush2.xpose.msra.mxu0 0.0
        %2813 = vmatprep.subr.mxu0 0.0
        %2814 = vmatpush2.xpose.msra.mxu0 0.0
        %2815 = vmatprep.subr.mxu0 0.0
        %2816 = vmatpush2.xpose.msra.mxu0 0.0
        %2817 = vmatprep.mubr.f32.mxu0 0.0
        %2818 = vmatmul.mubr.f32.gmra.mxu0 %v2739
        %v2819 = vpop.f32.mrf.mxu0
        %v2820 = vadd.f32 %v653, %v2819
        %v2821 = vpop.f32.mrf.mxu0
        %2822 = vmatprep.mubr.f32.mxu0 0.0
        %2823 = vmatmul.mubr.f32.gmra.mxu0 %v2742
        %v2824 = vpop.f32.mrf.mxu0
        %v2825 = vadd.f32 %v653, %v2824
        %v2826 = vpop.f32.mrf.mxu0
        %2827 = vmatprep.mubr.f32.mxu0 0.0
        %2828 = vmatmul.mubr.f32.gmra.mxu0 %v2745
        %v2829 = vpop.f32.mrf.mxu0
        %v2830 = vadd.f32 %v653, %v2829
        %v2831 = vpop.f32.mrf.mxu0
        %2832 = vdwg.mxu0
        %v2834 = vsel %vm917, %v2729, 0
        %v2837 = vsel %vm917, %v2730, 0
        %v2840 = vsel %vm917, %v2731, 0
        %v2842 = vsel %vm917, %v2673, 0
        %v2844 = vsel %vm917, %v2675, 0
        %v2846 = vsel %vm917, %v2677, 0
        %2848 = vmatprep.subr.mxu0 0.0
        %2849 = vmatpush1.xpose.msra.mxu0 0.0
        %2850 = vmatprep.subr.mxu0 0.0
        %2851 = vmatpush1.xpose.msra.mxu0 0.0
        %2852 = vmatprep.subr.mxu0 0.0
        %2853 = vmatpush1.xpose.msra.mxu0 0.0
        %2854 = vmatprep.subr.mxu0 0.0
        %2855 = vmatpush1.xpose.msra.mxu0 0.0
        %2856 = vmatprep.subr.mxu0 0.0
        %2857 = vmatpush1.xpose.msra.mxu0 0.0
        %2858 = vmatprep.subr.mxu0 0.0
        %2859 = vmatpush1.xpose.msra.mxu0 0.0
        %2860 = vmatprep.subr.mxu0 0.0
        %2861 = vmatpush1.xpose.msra.mxu0 0.0
        %2862 = vmatprep.subr.mxu0 0.0
        %2863 = vmatpush1.xpose.msra.mxu0 0.0
        %2864 = vmatprep.subr.mxu0 0.0
        %2865 = vmatpush1.xpose.msra.mxu0 0.0
        %2866 = vmatprep.subr.mxu0 0.0
        %2867 = vmatpush1.xpose.msra.mxu0 0.0
        %2868 = vmatprep.subr.mxu0 0.0
        %2869 = vmatpush1.xpose.msra.mxu0 0.0
        %2870 = vmatprep.subr.mxu0 0.0
        %2871 = vmatpush1.xpose.msra.mxu0 0.0
        %2872 = vmatprep.subr.mxu0 0.0
        %2873 = vmatpush1.xpose.msra.mxu0 0.0
        %2874 = vmatprep.subr.mxu0 0.0
        %2875 = vmatpush1.xpose.msra.mxu0 %v2846
        %2876 = vmatprep.subr.mxu0 0.0
        %2877 = vmatpush1.xpose.msra.mxu0 %v2844
        %2878 = vmatprep.subr.mxu0 0.0
        %2879 = vmatpush1.xpose.msra.mxu0 %v2842
        %2880 = vmatprep.subr.mxu0 0.0
        %2881 = vmatpush2.xpose.msra.mxu0 0.0
        %2882 = vmatprep.subr.mxu0 0.0
        %2883 = vmatpush2.xpose.msra.mxu0 0.0
        %2884 = vmatprep.subr.mxu0 0.0
        %2885 = vmatpush2.xpose.msra.mxu0 0.0
        %2886 = vmatprep.subr.mxu0 0.0
        %2887 = vmatpush2.xpose.msra.mxu0 0.0
        %2888 = vmatprep.subr.mxu0 0.0
        %2889 = vmatpush2.xpose.msra.mxu0 0.0
        %2890 = vmatprep.subr.mxu0 0.0
        %2891 = vmatpush2.xpose.msra.mxu0 0.0
        %2892 = vmatprep.subr.mxu0 0.0
        %2893 = vmatpush2.xpose.msra.mxu0 0.0
        %2894 = vmatprep.subr.mxu0 0.0
        %2895 = vmatpush2.xpose.msra.mxu0 0.0
        %2896 = vmatprep.subr.mxu0 0.0
        %2897 = vmatpush2.xpose.msra.mxu0 0.0
        %2898 = vmatprep.subr.mxu0 0.0
        %2899 = vmatpush2.xpose.msra.mxu0 0.0
        %2900 = vmatprep.subr.mxu0 0.0
        %2901 = vmatpush2.xpose.msra.mxu0 0.0
        %2902 = vmatprep.subr.mxu0 0.0
        %2903 = vmatpush2.xpose.msra.mxu0 0.0
        %2904 = vmatprep.subr.mxu0 0.0
        %2905 = vmatpush2.xpose.msra.mxu0 0.0
        %2906 = vmatprep.subr.mxu0 0.0
        %2907 = vmatpush2.xpose.msra.mxu0 0.0
        %2908 = vmatprep.subr.mxu0 0.0
        %2909 = vmatpush2.xpose.msra.mxu0 0.0
        %2910 = vmatprep.subr.mxu0 0.0
        %2911 = vmatpush2.xpose.msra.mxu0 0.0
        %2912 = vmatprep.mubr.f32.mxu0 0.0
        %2913 = vmatmul.mubr.f32.gmra.mxu0 %v2834
        %v2914 = vpop.f32.mrf.mxu0
        %v2915 = vadd.f32 %v653, %v2914
        %v2916 = vpop.f32.mrf.mxu0
        %2917 = vmatprep.mubr.f32.mxu0 0.0
        %2918 = vmatmul.mubr.f32.gmra.mxu0 %v2837
        %v2919 = vpop.f32.mrf.mxu0
        %v2920 = vadd.f32 %v653, %v2919
        %v2921 = vpop.f32.mrf.mxu0
        %2922 = vmatprep.mubr.f32.mxu0 0.0
        %2923 = vmatmul.mubr.f32.gmra.mxu0 %v2840
        %v2924 = vpop.f32.mrf.mxu0
        %v2925 = vadd.f32 %v653, %v2924
        %v2926 = vpop.f32.mrf.mxu0
        %2927 = vdwg.mxu0
        %v2929 = vsel %vm917, %v2732, 0
        %v2932 = vsel %vm917, %v2733, 0
        %v2935 = vsel %vm917, %v2734, 0
        %v2937 = vsel %vm917, %v2679, 0
        %v2939 = vsel %vm917, %v2681, 0
        %v2941 = vsel %vm917, %v2683, 0
        %2943 = vmatprep.subr.mxu0 0.0
        %2944 = vmatpush1.xpose.msra.mxu0 0.0
        %2945 = vmatprep.subr.mxu0 0.0
        %2946 = vmatpush1.xpose.msra.mxu0 0.0
        %2947 = vmatprep.subr.mxu0 0.0
        %2948 = vmatpush1.xpose.msra.mxu0 0.0
        %2949 = vmatprep.subr.mxu0 0.0
        %2950 = vmatpush1.xpose.msra.mxu0 0.0
        %2951 = vmatprep.subr.mxu0 0.0
        %2952 = vmatpush1.xpose.msra.mxu0 0.0
        %2953 = vmatprep.subr.mxu0 0.0
        %2954 = vmatpush1.xpose.msra.mxu0 0.0
        %2955 = vmatprep.subr.mxu0 0.0
        %2956 = vmatpush1.xpose.msra.mxu0 0.0
        %2957 = vmatprep.subr.mxu0 0.0
        %2958 = vmatpush1.xpose.msra.mxu0 0.0
        %2959 = vmatprep.subr.mxu0 0.0
        %2960 = vmatpush1.xpose.msra.mxu0 0.0
        %2961 = vmatprep.subr.mxu0 0.0
        %2962 = vmatpush1.xpose.msra.mxu0 0.0
        %2963 = vmatprep.subr.mxu0 0.0
        %2964 = vmatpush1.xpose.msra.mxu0 0.0
        %2965 = vmatprep.subr.mxu0 0.0
        %2966 = vmatpush1.xpose.msra.mxu0 0.0
        %2967 = vmatprep.subr.mxu0 0.0
        %2968 = vmatpush1.xpose.msra.mxu0 0.0
        %2969 = vmatprep.subr.mxu0 0.0
        %2970 = vmatpush1.xpose.msra.mxu0 %v2941
        %2971 = vmatprep.subr.mxu0 0.0
        %2972 = vmatpush1.xpose.msra.mxu0 %v2939
        %2973 = vmatprep.subr.mxu0 0.0
        %2974 = vmatpush1.xpose.msra.mxu0 %v2937
        %2975 = vmatprep.subr.mxu0 0.0
        %2976 = vmatpush2.xpose.msra.mxu0 0.0
        %2977 = vmatprep.subr.mxu0 0.0
        %2978 = vmatpush2.xpose.msra.mxu0 0.0
        %2979 = vmatprep.subr.mxu0 0.0
        %2980 = vmatpush2.xpose.msra.mxu0 0.0
        %2981 = vmatprep.subr.mxu0 0.0
        %2982 = vmatpush2.xpose.msra.mxu0 0.0
        %2983 = vmatprep.subr.mxu0 0.0
        %2984 = vmatpush2.xpose.msra.mxu0 0.0
        %2985 = vmatprep.subr.mxu0 0.0
        %2986 = vmatpush2.xpose.msra.mxu0 0.0
        %2987 = vmatprep.subr.mxu0 0.0
        %2988 = vmatpush2.xpose.msra.mxu0 0.0
        %2989 = vmatprep.subr.mxu0 0.0
        %2990 = vmatpush2.xpose.msra.mxu0 0.0
        %2991 = vmatprep.subr.mxu0 0.0
        %2992 = vmatpush2.xpose.msra.mxu0 0.0
        %2993 = vmatprep.subr.mxu0 0.0
        %2994 = vmatpush2.xpose.msra.mxu0 0.0
        %2995 = vmatprep.subr.mxu0 0.0
        %2996 = vmatpush2.xpose.msra.mxu0 0.0
        %2997 = vmatprep.subr.mxu0 0.0
        %2998 = vmatpush2.xpose.msra.mxu0 0.0
        %2999 = vmatprep.subr.mxu0 0.0
        %3000 = vmatpush2.xpose.msra.mxu0 0.0
        %3001 = vmatprep.subr.mxu0 0.0
        %3002 = vmatpush2.xpose.msra.mxu0 0.0
        %3003 = vmatprep.subr.mxu0 0.0
        %3004 = vmatpush2.xpose.msra.mxu0 0.0
        %3005 = vmatprep.subr.mxu0 0.0
        %3006 = vmatpush2.xpose.msra.mxu0 0.0
        %3007 = vmatprep.mubr.f32.mxu0 0.0
        %3008 = vmatmul.mubr.f32.gmra.mxu0 %v2929
        %v3009 = vpop.f32.mrf.mxu0
        %v3010 = vadd.f32 %v653, %v3009
        %v3011 = vpop.f32.mrf.mxu0
        %3012 = vmatprep.mubr.f32.mxu0 0.0
        %3013 = vmatmul.mubr.f32.gmra.mxu0 %v2932
        %v3014 = vpop.f32.mrf.mxu0
        %v3015 = vadd.f32 %v653, %v3014
        %v3016 = vpop.f32.mrf.mxu0
        %3017 = vmatprep.mubr.f32.mxu0 0.0
        %3018 = vmatmul.mubr.f32.gmra.mxu0 %v2935
        %v3019 = vpop.f32.mrf.mxu0
        %v3020 = vadd.f32 %v653, %v3019
        %v3021 = vpop.f32.mrf.mxu0
        %3022 = vdwg.mxu0
        %v3024 = vsel %vm917, %v2735, 0
        %v3027 = vsel %vm917, %v2736, 0
        %v3030 = vsel %vm917, %v2737, 0
        %v3032 = vsel %vm917, %v2685, 0
        %v3034 = vsel %vm917, %v2687, 0
        %v3036 = vsel %vm917, %v2689, 0
        %3038 = vmatprep.subr.mxu0 0.0
        %3039 = vmatpush1.xpose.msra.mxu0 0.0
        %3040 = vmatprep.subr.mxu0 0.0
        %3041 = vmatpush1.xpose.msra.mxu0 0.0
        %3042 = vmatprep.subr.mxu0 0.0
        %3043 = vmatpush1.xpose.msra.mxu0 0.0
        %3044 = vmatprep.subr.mxu0 0.0
        %3045 = vmatpush1.xpose.msra.mxu0 0.0
        %3046 = vmatprep.subr.mxu0 0.0
        %3047 = vmatpush1.xpose.msra.mxu0 0.0
        %3048 = vmatprep.subr.mxu0 0.0
        %3049 = vmatpush1.xpose.msra.mxu0 0.0
        %3050 = vmatprep.subr.mxu0 0.0
        %3051 = vmatpush1.xpose.msra.mxu0 0.0
        %3052 = vmatprep.subr.mxu0 0.0
        %3053 = vmatpush1.xpose.msra.mxu0 0.0
        %3054 = vmatprep.subr.mxu0 0.0
        %3055 = vmatpush1.xpose.msra.mxu0 0.0
        %3056 = vmatprep.subr.mxu0 0.0
        %3057 = vmatpush1.xpose.msra.mxu0 0.0
        %3058 = vmatprep.subr.mxu0 0.0
        %3059 = vmatpush1.xpose.msra.mxu0 0.0
        %3060 = vmatprep.subr.mxu0 0.0
        %3061 = vmatpush1.xpose.msra.mxu0 0.0
        %3062 = vmatprep.subr.mxu0 0.0
        %3063 = vmatpush1.xpose.msra.mxu0 0.0
        %3064 = vmatprep.subr.mxu0 0.0
        %3065 = vmatpush1.xpose.msra.mxu0 %v3036
        %3066 = vmatprep.subr.mxu0 0.0
        %3067 = vmatpush1.xpose.msra.mxu0 %v3034
        %3068 = vmatprep.subr.mxu0 0.0
        %3069 = vmatpush1.xpose.msra.mxu0 %v3032
        %3070 = vmatprep.subr.mxu0 0.0
        %3071 = vmatpush2.xpose.msra.mxu0 0.0
        %3072 = vmatprep.subr.mxu0 0.0
        %3073 = vmatpush2.xpose.msra.mxu0 0.0
        %3074 = vmatprep.subr.mxu0 0.0
        %3075 = vmatpush2.xpose.msra.mxu0 0.0
        %3076 = vmatprep.subr.mxu0 0.0
        %3077 = vmatpush2.xpose.msra.mxu0 0.0
        %3078 = vmatprep.subr.mxu0 0.0
        %3079 = vmatpush2.xpose.msra.mxu0 0.0
        %3080 = vmatprep.subr.mxu0 0.0
        %3081 = vmatpush2.xpose.msra.mxu0 0.0
        %3082 = vmatprep.subr.mxu0 0.0
        %3083 = vmatpush2.xpose.msra.mxu0 0.0
        %3084 = vmatprep.subr.mxu0 0.0
        %3085 = vmatpush2.xpose.msra.mxu0 0.0
        %3086 = vmatprep.subr.mxu0 0.0
        %3087 = vmatpush2.xpose.msra.mxu0 0.0
        %3088 = vmatprep.subr.mxu0 0.0
        %3089 = vmatpush2.xpose.msra.mxu0 0.0
        %3090 = vmatprep.subr.mxu0 0.0
        %3091 = vmatpush2.xpose.msra.mxu0 0.0
        %3092 = vmatprep.subr.mxu0 0.0
        %3093 = vmatpush2.xpose.msra.mxu0 0.0
        %3094 = vmatprep.subr.mxu0 0.0
        %3095 = vmatpush2.xpose.msra.mxu0 0.0
        %3096 = vmatprep.subr.mxu0 0.0
        %3097 = vmatpush2.xpose.msra.mxu0 0.0
        %3098 = vmatprep.subr.mxu0 0.0
        %3099 = vmatpush2.xpose.msra.mxu0 0.0
        %3100 = vmatprep.subr.mxu0 0.0
        %3101 = vmatpush2.xpose.msra.mxu0 0.0
        %3102 = vmatprep.mubr.f32.mxu0 0.0
        %3103 = vmatmul.mubr.f32.gmra.mxu0 %v3024
        %v3104 = vpop.f32.mrf.mxu0
        %v3105 = vadd.f32 %v653, %v3104
        %v3106 = vpop.f32.mrf.mxu0
        %3107 = vmatprep.mubr.f32.mxu0 0.0
        %3108 = vmatmul.mubr.f32.gmra.mxu0 %v3027
        %v3109 = vpop.f32.mrf.mxu0
        %v3110 = vadd.f32 %v653, %v3109
        %v3111 = vpop.f32.mrf.mxu0
        %3112 = vmatprep.mubr.f32.mxu0 0.0
        %3113 = vmatmul.mubr.f32.gmra.mxu0 %v3030
        %v3114 = vpop.f32.mrf.mxu0
        %v3115 = vadd.f32 %v653, %v3114
        %v3116 = vpop.f32.mrf.mxu0
        %3117 = vdwg.mxu0
        %v3118 = vsel %vm1298, %v2820, -inf
        %3119 = vmax.xlane.f32.xlu0 %v3118
        %v3120 = vpop.xlane.xlu0 %3119
        %v3121 = vsel %vm1298, %v2825, -inf
        %3122 = vmax.xlane.f32.xlu0 %v3121
        %v3123 = vpop.xlane.xlu0 %3122
        %v3124 = vsel %vm1298, %v2830, -inf
        %3125 = vmax.xlane.f32.xlu0 %v3124
        %v3126 = vpop.xlane.xlu0 %3125
        %v3127 = vsel %vm1298, %v2915, -inf
        %3128 = vmax.xlane.f32.xlu0 %v3127
        %v3129 = vpop.xlane.xlu0 %3128
        %v3130 = vsel %vm1298, %v2920, -inf
        %3131 = vmax.xlane.f32.xlu0 %v3130
        %v3132 = vpop.xlane.xlu0 %3131
        %v3133 = vsel %vm1298, %v2925, -inf
        %3134 = vmax.xlane.f32.xlu0 %v3133
        %v3135 = vpop.xlane.xlu0 %3134
        %v3136 = vsel %vm1298, %v3010, -inf
        %3137 = vmax.xlane.f32.xlu0 %v3136
        %v3138 = vpop.xlane.xlu0 %3137
        %v3139 = vsel %vm1298, %v3015, -inf
        %3140 = vmax.xlane.f32.xlu0 %v3139
        %v3141 = vpop.xlane.xlu0 %3140
        %v3142 = vsel %vm1298, %v3020, -inf
        %3143 = vmax.xlane.f32.xlu0 %v3142
        %v3144 = vpop.xlane.xlu0 %3143
        %v3145 = vsel %vm1298, %v3105, -inf
        %3146 = vmax.xlane.f32.xlu0 %v3145
        %v3147 = vpop.xlane.xlu0 %3146
        %v3148 = vsel %vm1298, %v3110, -inf
        %3149 = vmax.xlane.f32.xlu0 %v3148
        %v3150 = vpop.xlane.xlu0 %3149
        %v3151 = vsel %vm1298, %v3115, -inf
        %3152 = vmax.xlane.f32.xlu0 %v3151
        %v3153 = vpop.xlane.xlu0 %3152
        %v3154 = vsub.f32 %v2820, %v3120
        %v3155 = vsub.f32 %v2825, %v3123
        %v3156 = vsub.f32 %v2830, %v3126
        %v3157 = vsub.f32 %v2915, %v3129
        %v3158 = vsub.f32 %v2920, %v3132
        %v3159 = vsub.f32 %v2925, %v3135
        %v3160 = vsub.f32 %v3010, %v3138
        %v3161 = vsub.f32 %v3015, %v3141
        %v3162 = vsub.f32 %v3020, %v3144
        %v3163 = vsub.f32 %v3105, %v3147
        %v3164 = vsub.f32 %v3110, %v3150
        %v3165 = vsub.f32 %v3115, %v3153
        %v3166 = vmul.f32 %v3154, 1.442695
        %v3167 = vpow.pop %v3166
        %v3168 = vmul.f32 %v3155, 1.442695
        %v3169 = vpow.pop %v3168
        %v3170 = vmul.f32 %v3156, 1.442695
        %v3171 = vpow.pop %v3170
        %v3172 = vmul.f32 %v3157, 1.442695
        %v3173 = vpow.pop %v3172
        %v3174 = vmul.f32 %v3158, 1.442695
        %v3175 = vpow.pop %v3174
        %v3176 = vmul.f32 %v3159, 1.442695
        %v3177 = vpow.pop %v3176
        %v3178 = vmul.f32 %v3160, 1.442695
        %v3179 = vpow.pop %v3178
        %v3180 = vmul.f32 %v3161, 1.442695
        %v3181 = vpow.pop %v3180
        %v3182 = vmul.f32 %v3162, 1.442695
        %v3183 = vpow.pop %v3182
        %v3184 = vmul.f32 %v3163, 1.442695
        %v3185 = vpow.pop %v3184
        %v3186 = vmul.f32 %v3164, 1.442695
        %v3187 = vpow.pop %v3186
        %v3188 = vmul.f32 %v3165, 1.442695
        %v3189 = vpow.pop %v3188
        %v3190 = vsel %vm1298, %v3167, 0.0
        %3191 = vadd.xlane.f32.xlu0 %v3190
        %v3192 = vpop.xlane.xlu0 %3191
        %v3193 = vsel %vm1298, %v3169, 0.0
        %3194 = vadd.xlane.f32.xlu0 %v3193
        %v3195 = vpop.xlane.xlu0 %3194
        %v3196 = vsel %vm1298, %v3171, 0.0
        %3197 = vadd.xlane.f32.xlu0 %v3196
        %v3198 = vpop.xlane.xlu0 %3197
        %v3199 = vsel %vm1298, %v3173, 0.0
        %3200 = vadd.xlane.f32.xlu0 %v3199
        %v3201 = vpop.xlane.xlu0 %3200
        %v3202 = vsel %vm1298, %v3175, 0.0
        %3203 = vadd.xlane.f32.xlu0 %v3202
        %v3204 = vpop.xlane.xlu0 %3203
        %v3205 = vsel %vm1298, %v3177, 0.0
        %3206 = vadd.xlane.f32.xlu0 %v3205
        %v3207 = vpop.xlane.xlu0 %3206
        %v3208 = vsel %vm1298, %v3179, 0.0
        %3209 = vadd.xlane.f32.xlu0 %v3208
        %v3210 = vpop.xlane.xlu0 %3209
        %v3211 = vsel %vm1298, %v3181, 0.0
        %3212 = vadd.xlane.f32.xlu0 %v3211
        %v3213 = vpop.xlane.xlu0 %3212
        %v3214 = vsel %vm1298, %v3183, 0.0
        %3215 = vadd.xlane.f32.xlu0 %v3214
        %v3216 = vpop.xlane.xlu0 %3215
        %v3217 = vsel %vm1298, %v3185, 0.0
        %3218 = vadd.xlane.f32.xlu0 %v3217
        %v3219 = vpop.xlane.xlu0 %3218
        %v3220 = vsel %vm1298, %v3187, 0.0
        %3221 = vadd.xlane.f32.xlu0 %v3220
        %v3222 = vpop.xlane.xlu0 %3221
        %v3223 = vsel %vm1298, %v3189, 0.0
        %3224 = vadd.xlane.f32.xlu0 %v3223
        %v3225 = vpop.xlane.xlu0 %3224
        %v3226 = vrcp.pop %v3192
        %v3227 = vrcp.pop %v3195
        %v3228 = vrcp.pop %v3198
        %v3229 = vrcp.pop %v3201
        %v3230 = vrcp.pop %v3204
        %v3231 = vrcp.pop %v3207
        %v3232 = vrcp.pop %v3210
        %v3233 = vrcp.pop %v3213
        %v3234 = vrcp.pop %v3216
        %v3235 = vrcp.pop %v3219
        %v3236 = vrcp.pop %v3222
        %v3237 = vrcp.pop %v3225
        %v3238 = vmul.f32 %v3167, %v3226
        %v3239 = vmul.f32 %v3169, %v3227
        %v3240 = vmul.f32 %v3171, %v3228
        %v3241 = vmul.f32 %v3173, %v3229
        %v3242 = vmul.f32 %v3175, %v3230
        %v3243 = vmul.f32 %v3177, %v3231
        %v3244 = vmul.f32 %v3179, %v3232
        %v3245 = vmul.f32 %v3181, %v3233
        %v3246 = vmul.f32 %v3183, %v3234
        %v3247 = vmul.f32 %v3185, %v3235
        %v3248 = vmul.f32 %v3187, %v3236
        %v3249 = vmul.f32 %v3189, %v3237
        %v3251 = vsel %vm1298, %v3238, 0
        %v3254 = vsel %vm1298, %v3239, 0
        %v3257 = vsel %vm1298, %v3240, 0
        %3259 = vmatprep.subr.mxu0 0.0
        %3260 = vmatpush1.msra.mxu0 0.0
        %3261 = vmatprep.subr.mxu0 0.0
        %3262 = vmatpush1.msra.mxu0 0.0
        %3263 = vmatprep.subr.mxu0 0.0
        %3264 = vmatpush1.msra.mxu0 0.0
        %3265 = vmatprep.subr.mxu0 0.0
        %3266 = vmatpush1.msra.mxu0 0.0
        %3267 = vmatprep.subr.mxu0 0.0
        %3268 = vmatpush1.msra.mxu0 0.0
        %3269 = vmatprep.subr.mxu0 0.0
        %3270 = vmatpush1.msra.mxu0 0.0
        %3271 = vmatprep.subr.mxu0 0.0
        %3272 = vmatpush1.msra.mxu0 0.0
        %3273 = vmatprep.subr.mxu0 0.0
        %3274 = vmatpush1.msra.mxu0 0.0
        %3275 = vmatprep.subr.mxu0 0.0
        %3276 = vmatpush1.msra.mxu0 0.0
        %3277 = vmatprep.subr.mxu0 0.0
        %3278 = vmatpush1.msra.mxu0 0.0
        %3279 = vmatprep.subr.mxu0 0.0
        %3280 = vmatpush1.msra.mxu0 0.0
        %3281 = vmatprep.subr.mxu0 0.0
        %3282 = vmatpush1.msra.mxu0 0.0
        %3283 = vmatprep.subr.mxu0 0.0
        %3284 = vmatpush1.msra.mxu0 0.0
        %3285 = vmatprep.subr.mxu0 0.0
        %3286 = vmatpush1.msra.mxu0 %v2695
        %3287 = vmatprep.subr.mxu0 0.0
        %3288 = vmatpush1.msra.mxu0 %v2693
        %3289 = vmatprep.subr.mxu0 0.0
        %3290 = vmatpush1.msra.mxu0 %v2691
        %3291 = vmatprep.subr.mxu0 0.0
        %3292 = vmatpush2.msra.mxu0 0.0
        %3293 = vmatprep.subr.mxu0 0.0
        %3294 = vmatpush2.msra.mxu0 0.0
        %3295 = vmatprep.subr.mxu0 0.0
        %3296 = vmatpush2.msra.mxu0 0.0
        %3297 = vmatprep.subr.mxu0 0.0
        %3298 = vmatpush2.msra.mxu0 0.0
        %3299 = vmatprep.subr.mxu0 0.0
        %3300 = vmatpush2.msra.mxu0 0.0
        %3301 = vmatprep.subr.mxu0 0.0
        %3302 = vmatpush2.msra.mxu0 0.0
        %3303 = vmatprep.subr.mxu0 0.0
        %3304 = vmatpush2.msra.mxu0 0.0
        %3305 = vmatprep.subr.mxu0 0.0
        %3306 = vmatpush2.msra.mxu0 0.0
        %3307 = vmatprep.subr.mxu0 0.0
        %3308 = vmatpush2.msra.mxu0 0.0
        %3309 = vmatprep.subr.mxu0 0.0
        %3310 = vmatpush2.msra.mxu0 0.0
        %3311 = vmatprep.subr.mxu0 0.0
        %3312 = vmatpush2.msra.mxu0 0.0
        %3313 = vmatprep.subr.mxu0 0.0
        %3314 = vmatpush2.msra.mxu0 0.0
        %3315 = vmatprep.subr.mxu0 0.0
        %3316 = vmatpush2.msra.mxu0 0.0
        %3317 = vmatprep.subr.mxu0 0.0
        %3318 = vmatpush2.msra.mxu0 0.0
        %3319 = vmatprep.subr.mxu0 0.0
        %3320 = vmatpush2.msra.mxu0 0.0
        %3321 = vmatprep.subr.mxu0 0.0
        %3322 = vmatpush2.msra.mxu0 0.0
        %3323 = vmatprep.mubr.f32.mxu0 0.0
        %3324 = vmatmul.mubr.f32.gmra.mxu0 %v3251
        %v3325 = vpop.f32.mrf.mxu0
        %v3326 = vadd.f32 0.0, %v3325
        %v3327 = vpop.f32.mrf.mxu0
        %3328 = vmatprep.mubr.f32.mxu0 0.0
        %3329 = vmatmul.mubr.f32.gmra.mxu0 %v3254
        %v3330 = vpop.f32.mrf.mxu0
        %v3331 = vadd.f32 0.0, %v3330
        %v3332 = vpop.f32.mrf.mxu0
        %3333 = vmatprep.mubr.f32.mxu0 0.0
        %3334 = vmatmul.mubr.f32.gmra.mxu0 %v3257
        %v3335 = vpop.f32.mrf.mxu0
        %v3336 = vadd.f32 0.0, %v3335
        %v3337 = vpop.f32.mrf.mxu0
        %3338 = vdwg.mxu0
        %v3340 = vsel %vm1298, %v3241, 0
        %v3343 = vsel %vm1298, %v3242, 0
        %v3346 = vsel %vm1298, %v3243, 0
        %3348 = vmatprep.subr.mxu0 0.0
        %3349 = vmatpush1.msra.mxu0 0.0
        %3350 = vmatprep.subr.mxu0 0.0
        %3351 = vmatpush1.msra.mxu0 0.0
        %3352 = vmatprep.subr.mxu0 0.0
        %3353 = vmatpush1.msra.mxu0 0.0
        %3354 = vmatprep.subr.mxu0 0.0
        %3355 = vmatpush1.msra.mxu0 0.0
        %3356 = vmatprep.subr.mxu0 0.0
        %3357 = vmatpush1.msra.mxu0 0.0
        %3358 = vmatprep.subr.mxu0 0.0
        %3359 = vmatpush1.msra.mxu0 0.0
        %3360 = vmatprep.subr.mxu0 0.0
        %3361 = vmatpush1.msra.mxu0 0.0
        %3362 = vmatprep.subr.mxu0 0.0
        %3363 = vmatpush1.msra.mxu0 0.0
        %3364 = vmatprep.subr.mxu0 0.0
        %3365 = vmatpush1.msra.mxu0 0.0
        %3366 = vmatprep.subr.mxu0 0.0
        %3367 = vmatpush1.msra.mxu0 0.0
        %3368 = vmatprep.subr.mxu0 0.0
        %3369 = vmatpush1.msra.mxu0 0.0
        %3370 = vmatprep.subr.mxu0 0.0
        %3371 = vmatpush1.msra.mxu0 0.0
        %3372 = vmatprep.subr.mxu0 0.0
        %3373 = vmatpush1.msra.mxu0 0.0
        %3374 = vmatprep.subr.mxu0 0.0
        %3375 = vmatpush1.msra.mxu0 %v2704
        %3376 = vmatprep.subr.mxu0 0.0
        %3377 = vmatpush1.msra.mxu0 %v2702
        %3378 = vmatprep.subr.mxu0 0.0
        %3379 = vmatpush1.msra.mxu0 %v2700
        %3380 = vmatprep.subr.mxu0 0.0
        %3381 = vmatpush2.msra.mxu0 0.0
        %3382 = vmatprep.subr.mxu0 0.0
        %3383 = vmatpush2.msra.mxu0 0.0
        %3384 = vmatprep.subr.mxu0 0.0
        %3385 = vmatpush2.msra.mxu0 0.0
        %3386 = vmatprep.subr.mxu0 0.0
        %3387 = vmatpush2.msra.mxu0 0.0
        %3388 = vmatprep.subr.mxu0 0.0
        %3389 = vmatpush2.msra.mxu0 0.0
        %3390 = vmatprep.subr.mxu0 0.0
        %3391 = vmatpush2.msra.mxu0 0.0
        %3392 = vmatprep.subr.mxu0 0.0
        %3393 = vmatpush2.msra.mxu0 0.0
        %3394 = vmatprep.subr.mxu0 0.0
        %3395 = vmatpush2.msra.mxu0 0.0
        %3396 = vmatprep.subr.mxu0 0.0
        %3397 = vmatpush2.msra.mxu0 0.0
        %3398 = vmatprep.subr.mxu0 0.0
        %3399 = vmatpush2.msra.mxu0 0.0
        %3400 = vmatprep.subr.mxu0 0.0
        %3401 = vmatpush2.msra.mxu0 0.0
        %3402 = vmatprep.subr.mxu0 0.0
        %3403 = vmatpush2.msra.mxu0 0.0
        %3404 = vmatprep.subr.mxu0 0.0
        %3405 = vmatpush2.msra.mxu0 0.0
        %3406 = vmatprep.subr.mxu0 0.0
        %3407 = vmatpush2.msra.mxu0 0.0
        %3408 = vmatprep.subr.mxu0 0.0
        %3409 = vmatpush2.msra.mxu0 0.0
        %3410 = vmatprep.subr.mxu0 0.0
        %3411 = vmatpush2.msra.mxu0 0.0
        %3412 = vmatprep.mubr.f32.mxu0 0.0
        %3413 = vmatmul.mubr.f32.gmra.mxu0 %v3340
        %v3414 = vpop.f32.mrf.mxu0
        %v3415 = vadd.f32 0.0, %v3414
        %v3416 = vpop.f32.mrf.mxu0
        %3417 = vmatprep.mubr.f32.mxu0 0.0
        %3418 = vmatmul.mubr.f32.gmra.mxu0 %v3343
        %v3419 = vpop.f32.mrf.mxu0
        %v3420 = vadd.f32 0.0, %v3419
        %v3421 = vpop.f32.mrf.mxu0
        %3422 = vmatprep.mubr.f32.mxu0 0.0
        %3423 = vmatmul.mubr.f32.gmra.mxu0 %v3346
        %v3424 = vpop.f32.mrf.mxu0
        %v3425 = vadd.f32 0.0, %v3424
        %v3426 = vpop.f32.mrf.mxu0
        %3427 = vdwg.mxu0
        %v3429 = vsel %vm1298, %v3244, 0
        %v3432 = vsel %vm1298, %v3245, 0
        %v3435 = vsel %vm1298, %v3246, 0
        %3437 = vmatprep.subr.mxu0 0.0
        %3438 = vmatpush1.msra.mxu0 0.0
        %3439 = vmatprep.subr.mxu0 0.0
        %3440 = vmatpush1.msra.mxu0 0.0
        %3441 = vmatprep.subr.mxu0 0.0
        %3442 = vmatpush1.msra.mxu0 0.0
        %3443 = vmatprep.subr.mxu0 0.0
        %3444 = vmatpush1.msra.mxu0 0.0
        %3445 = vmatprep.subr.mxu0 0.0
        %3446 = vmatpush1.msra.mxu0 0.0
        %3447 = vmatprep.subr.mxu0 0.0
        %3448 = vmatpush1.msra.mxu0 0.0
        %3449 = vmatprep.subr.mxu0 0.0
        %3450 = vmatpush1.msra.mxu0 0.0
        %3451 = vmatprep.subr.mxu0 0.0
        %3452 = vmatpush1.msra.mxu0 0.0
        %3453 = vmatprep.subr.mxu0 0.0
        %3454 = vmatpush1.msra.mxu0 0.0
        %3455 = vmatprep.subr.mxu0 0.0
        %3456 = vmatpush1.msra.mxu0 0.0
        %3457 = vmatprep.subr.mxu0 0.0
        %3458 = vmatpush1.msra.mxu0 0.0
        %3459 = vmatprep.subr.mxu0 0.0
        %3460 = vmatpush1.msra.mxu0 0.0
        %3461 = vmatprep.subr.mxu0 0.0
        %3462 = vmatpush1.msra.mxu0 0.0
        %3463 = vmatprep.subr.mxu0 0.0
        %3464 = vmatpush1.msra.mxu0 %v2713
        %3465 = vmatprep.subr.mxu0 0.0
        %3466 = vmatpush1.msra.mxu0 %v2711
        %3467 = vmatprep.subr.mxu0 0.0
        %3468 = vmatpush1.msra.mxu0 %v2709
        %3469 = vmatprep.subr.mxu0 0.0
        %3470 = vmatpush2.msra.mxu0 0.0
        %3471 = vmatprep.subr.mxu0 0.0
        %3472 = vmatpush2.msra.mxu0 0.0
        %3473 = vmatprep.subr.mxu0 0.0
        %3474 = vmatpush2.msra.mxu0 0.0
        %3475 = vmatprep.subr.mxu0 0.0
        %3476 = vmatpush2.msra.mxu0 0.0
        %3477 = vmatprep.subr.mxu0 0.0
        %3478 = vmatpush2.msra.mxu0 0.0
        %3479 = vmatprep.subr.mxu0 0.0
        %3480 = vmatpush2.msra.mxu0 0.0
        %3481 = vmatprep.subr.mxu0 0.0
        %3482 = vmatpush2.msra.mxu0 0.0
        %3483 = vmatprep.subr.mxu0 0.0
        %3484 = vmatpush2.msra.mxu0 0.0
        %3485 = vmatprep.subr.mxu0 0.0
        %3486 = vmatpush2.msra.mxu0 0.0
        %3487 = vmatprep.subr.mxu0 0.0
        %3488 = vmatpush2.msra.mxu0 0.0
        %3489 = vmatprep.subr.mxu0 0.0
        %3490 = vmatpush2.msra.mxu0 0.0
        %3491 = vmatprep.subr.mxu0 0.0
        %3492 = vmatpush2.msra.mxu0 0.0
        %3493 = vmatprep.subr.mxu0 0.0
        %3494 = vmatpush2.msra.mxu0 0.0
        %3495 = vmatprep.subr.mxu0 0.0
        %3496 = vmatpush2.msra.mxu0 0.0
        %3497 = vmatprep.subr.mxu0 0.0
        %3498 = vmatpush2.msra.mxu0 0.0
        %3499 = vmatprep.subr.mxu0 0.0
        %3500 = vmatpush2.msra.mxu0 0.0
        %3501 = vmatprep.mubr.f32.mxu0 0.0
        %3502 = vmatmul.mubr.f32.gmra.mxu0 %v3429
        %v3503 = vpop.f32.mrf.mxu0
        %v3504 = vadd.f32 0.0, %v3503
        %v3505 = vpop.f32.mrf.mxu0
        %3506 = vmatprep.mubr.f32.mxu0 0.0
        %3507 = vmatmul.mubr.f32.gmra.mxu0 %v3432
        %v3508 = vpop.f32.mrf.mxu0
        %v3509 = vadd.f32 0.0, %v3508
        %v3510 = vpop.f32.mrf.mxu0
        %3511 = vmatprep.mubr.f32.mxu0 0.0
        %3512 = vmatmul.mubr.f32.gmra.mxu0 %v3435
        %v3513 = vpop.f32.mrf.mxu0
        %v3514 = vadd.f32 0.0, %v3513
        %v3515 = vpop.f32.mrf.mxu0
        %3516 = vdwg.mxu0
        %v3518 = vsel %vm1298, %v3247, 0
        %v3521 = vsel %vm1298, %v3248, 0
        %v3524 = vsel %vm1298, %v3249, 0
        %3526 = vmatprep.subr.mxu0 0.0
        %3527 = vmatpush1.msra.mxu0 0.0
        %3528 = vmatprep.subr.mxu0 0.0
        %3529 = vmatpush1.msra.mxu0 0.0
        %3530 = vmatprep.subr.mxu0 0.0
        %3531 = vmatpush1.msra.mxu0 0.0
        %3532 = vmatprep.subr.mxu0 0.0
        %3533 = vmatpush1.msra.mxu0 0.0
        %3534 = vmatprep.subr.mxu0 0.0
        %3535 = vmatpush1.msra.mxu0 0.0
        %3536 = vmatprep.subr.mxu0 0.0
        %3537 = vmatpush1.msra.mxu0 0.0
        %3538 = vmatprep.subr.mxu0 0.0
        %3539 = vmatpush1.msra.mxu0 0.0
        %3540 = vmatprep.subr.mxu0 0.0
        %3541 = vmatpush1.msra.mxu0 0.0
        %3542 = vmatprep.subr.mxu0 0.0
        %3543 = vmatpush1.msra.mxu0 0.0
        %3544 = vmatprep.subr.mxu0 0.0
        %3545 = vmatpush1.msra.mxu0 0.0
        %3546 = vmatprep.subr.mxu0 0.0
        %3547 = vmatpush1.msra.mxu0 0.0
        %3548 = vmatprep.subr.mxu0 0.0
        %3549 = vmatpush1.msra.mxu0 0.0
        %3550 = vmatprep.subr.mxu0 0.0
        %3551 = vmatpush1.msra.mxu0 0.0
        %3552 = vmatprep.subr.mxu0 0.0
        %3553 = vmatpush1.msra.mxu0 %v2722
        %3554 = vmatprep.subr.mxu0 0.0
        %3555 = vmatpush1.msra.mxu0 %v2720
        %3556 = vmatprep.subr.mxu0 0.0
        %3557 = vmatpush1.msra.mxu0 %v2718
        %3558 = vmatprep.subr.mxu0 0.0
        %3559 = vmatpush2.msra.mxu0 0.0
        %3560 = vmatprep.subr.mxu0 0.0
        %3561 = vmatpush2.msra.mxu0 0.0
        %3562 = vmatprep.subr.mxu0 0.0
        %3563 = vmatpush2.msra.mxu0 0.0
        %3564 = vmatprep.subr.mxu0 0.0
        %3565 = vmatpush2.msra.mxu0 0.0
        %3566 = vmatprep.subr.mxu0 0.0
        %3567 = vmatpush2.msra.mxu0 0.0
        %3568 = vmatprep.subr.mxu0 0.0
        %3569 = vmatpush2.msra.mxu0 0.0
        %3570 = vmatprep.subr.mxu0 0.0
        %3571 = vmatpush2.msra.mxu0 0.0
        %3572 = vmatprep.subr.mxu0 0.0
        %3573 = vmatpush2.msra.mxu0 0.0
        %3574 = vmatprep.subr.mxu0 0.0
        %3575 = vmatpush2.msra.mxu0 0.0
        %3576 = vmatprep.subr.mxu0 0.0
        %3577 = vmatpush2.msra.mxu0 0.0
        %3578 = vmatprep.subr.mxu0 0.0
        %3579 = vmatpush2.msra.mxu0 0.0
        %3580 = vmatprep.subr.mxu0 0.0
        %3581 = vmatpush2.msra.mxu0 0.0
        %3582 = vmatprep.subr.mxu0 0.0
        %3583 = vmatpush2.msra.mxu0 0.0
        %3584 = vmatprep.subr.mxu0 0.0
        %3585 = vmatpush2.msra.mxu0 0.0
        %3586 = vmatprep.subr.mxu0 0.0
        %3587 = vmatpush2.msra.mxu0 0.0
        %3588 = vmatprep.subr.mxu0 0.0
        %3589 = vmatpush2.msra.mxu0 0.0
        %3590 = vmatprep.mubr.f32.mxu0 0.0
        %3591 = vmatmul.mubr.f32.gmra.mxu0 %v3518
        %v3592 = vpop.f32.mrf.mxu0
        %v3593 = vadd.f32 0.0, %v3592
        %v3594 = vpop.f32.mrf.mxu0
        %3595 = vmatprep.mubr.f32.mxu0 0.0
        %3596 = vmatmul.mubr.f32.gmra.mxu0 %v3521
        %v3597 = vpop.f32.mrf.mxu0
        %v3598 = vadd.f32 0.0, %v3597
        %v3599 = vpop.f32.mrf.mxu0
        %3600 = vmatprep.mubr.f32.mxu0 0.0
        %3601 = vmatmul.mubr.f32.gmra.mxu0 %v3524
        %v3602 = vpop.f32.mrf.mxu0
        %v3603 = vadd.f32 0.0, %v3602
        %v3604 = vpop.f32.mrf.mxu0
        %3605 = vdwg.mxu0
        %s3606 = scalar_lea.vmem %s7, 32
        %v3607 = vld [vmem:[%s3606] sm:$0xff]
        %v3608 = vld [vmem:[%s3606 + $0x8] sm:$0xff]
        %v3609 = vld [vmem:[%s3606 + $0x10] sm:$0xff]
        %v3610 = vld [vmem:[%s3606 + $0x18] sm:$0xff]
        %v3612 = vsel %vm917, %v3326, 0
        %v3615 = vsel %vm917, %v3331, 0
        %v3618 = vsel %vm917, %v3336, 0
        %3620 = vmatprep.subr.mxu0 0.0
        %3621 = vmatpush1.msra.mxu0 0.0
        %3622 = vmatprep.subr.mxu0 0.0
        %3623 = vmatpush1.msra.mxu0 0.0
        %3624 = vmatprep.subr.mxu0 0.0
        %3625 = vmatpush1.msra.mxu0 0.0
        %3626 = vmatprep.subr.mxu0 0.0
        %3627 = vmatpush1.msra.mxu0 0.0
        %3628 = vmatprep.subr.mxu0 0.0
        %3629 = vmatpush1.msra.mxu0 0.0
        %3630 = vmatprep.subr.mxu0 0.0
        %3631 = vmatpush1.msra.mxu0 0.0
        %3632 = vmatprep.subr.mxu0 0.0
        %3633 = vmatpush1.msra.mxu0 0.0
        %3634 = vmatprep.subr.mxu0 0.0
        %3635 = vmatpush1.msra.mxu0 0.0
        %3636 = vmatprep.subr.mxu0 0.0
        %3637 = vmatpush1.msra.mxu0 0.0
        %3638 = vmatprep.subr.mxu0 0.0
        %3639 = vmatpush1.msra.mxu0 0.0
        %3640 = vmatprep.subr.mxu0 0.0
        %3641 = vmatpush1.msra.mxu0 0.0
        %3642 = vmatprep.subr.mxu0 0.0
        %3643 = vmatpush1.msra.mxu0 0.0
        %3644 = vmatprep.subr.mxu0 0.0
        %3645 = vmatpush1.msra.mxu0 0.0
        %3646 = vmatprep.subr.mxu0 0.0
        %3647 = vmatpush1.msra.mxu0 0.0
        %3648 = vmatprep.subr.mxu0 0.0
        %3649 = vmatpush1.msra.mxu0 0.0
        %3650 = vmatprep.subr.mxu0 0.0
        %3651 = vmatpush1.msra.mxu0 %v3607
        %3652 = vmatprep.subr.mxu0 0.0
        %3653 = vmatpush2.msra.mxu0 0.0
        %3654 = vmatprep.subr.mxu0 0.0
        %3655 = vmatpush2.msra.mxu0 0.0
        %3656 = vmatprep.subr.mxu0 0.0
        %3657 = vmatpush2.msra.mxu0 0.0
        %3658 = vmatprep.subr.mxu0 0.0
        %3659 = vmatpush2.msra.mxu0 0.0
        %3660 = vmatprep.subr.mxu0 0.0
        %3661 = vmatpush2.msra.mxu0 0.0
        %3662 = vmatprep.subr.mxu0 0.0
        %3663 = vmatpush2.msra.mxu0 0.0
        %3664 = vmatprep.subr.mxu0 0.0
        %3665 = vmatpush2.msra.mxu0 0.0
        %3666 = vmatprep.subr.mxu0 0.0
        %3667 = vmatpush2.msra.mxu0 0.0
        %3668 = vmatprep.subr.mxu0 0.0
        %3669 = vmatpush2.msra.mxu0 0.0
        %3670 = vmatprep.subr.mxu0 0.0
        %3671 = vmatpush2.msra.mxu0 0.0
        %3672 = vmatprep.subr.mxu0 0.0
        %3673 = vmatpush2.msra.mxu0 0.0
        %3674 = vmatprep.subr.mxu0 0.0
        %3675 = vmatpush2.msra.mxu0 0.0
        %3676 = vmatprep.subr.mxu0 0.0
        %3677 = vmatpush2.msra.mxu0 0.0
        %3678 = vmatprep.subr.mxu0 0.0
        %3679 = vmatpush2.msra.mxu0 0.0
        %3680 = vmatprep.subr.mxu0 0.0
        %3681 = vmatpush2.msra.mxu0 0.0
        %3682 = vmatprep.subr.mxu0 0.0
        %3683 = vmatpush2.msra.mxu0 0.0
        %3684 = vmatprep.mubr.f32.mxu0 0.0
        %3685 = vmatmul.mubr.f32.gmra.mxu0 %v3612
        %v3686 = vpop.f32.mrf.mxu0
        %v3687 = vadd.f32 0.0, %v3686
        %v3688 = vpop.f32.mrf.mxu0
        %3689 = vmatprep.mubr.f32.mxu0 0.0
        %3690 = vmatmul.mubr.f32.gmra.mxu0 %v3615
        %v3691 = vpop.f32.mrf.mxu0
        %v3692 = vadd.f32 0.0, %v3691
        %v3693 = vpop.f32.mrf.mxu0
        %3694 = vmatprep.mubr.f32.mxu0 0.0
        %3695 = vmatmul.mubr.f32.gmra.mxu0 %v3618
        %v3696 = vpop.f32.mrf.mxu0
        %v3697 = vadd.f32 0.0, %v3696
        %v3698 = vpop.f32.mrf.mxu0
        %3699 = vdwg.mxu0
        %v3701 = vsel %vm917, %v3415, 0
        %v3704 = vsel %vm917, %v3420, 0
        %v3707 = vsel %vm917, %v3425, 0
        %3709 = vmatprep.subr.mxu0 0.0
        %3710 = vmatpush1.msra.mxu0 0.0
        %3711 = vmatprep.subr.mxu0 0.0
        %3712 = vmatpush1.msra.mxu0 0.0
        %3713 = vmatprep.subr.mxu0 0.0
        %3714 = vmatpush1.msra.mxu0 0.0
        %3715 = vmatprep.subr.mxu0 0.0
        %3716 = vmatpush1.msra.mxu0 0.0
        %3717 = vmatprep.subr.mxu0 0.0
        %3718 = vmatpush1.msra.mxu0 0.0
        %3719 = vmatprep.subr.mxu0 0.0
        %3720 = vmatpush1.msra.mxu0 0.0
        %3721 = vmatprep.subr.mxu0 0.0
        %3722 = vmatpush1.msra.mxu0 0.0
        %3723 = vmatprep.subr.mxu0 0.0
        %3724 = vmatpush1.msra.mxu0 0.0
        %3725 = vmatprep.subr.mxu0 0.0
        %3726 = vmatpush1.msra.mxu0 0.0
        %3727 = vmatprep.subr.mxu0 0.0
        %3728 = vmatpush1.msra.mxu0 0.0
        %3729 = vmatprep.subr.mxu0 0.0
        %3730 = vmatpush1.msra.mxu0 0.0
        %3731 = vmatprep.subr.mxu0 0.0
        %3732 = vmatpush1.msra.mxu0 0.0
        %3733 = vmatprep.subr.mxu0 0.0
        %3734 = vmatpush1.msra.mxu0 0.0
        %3735 = vmatprep.subr.mxu0 0.0
        %3736 = vmatpush1.msra.mxu0 0.0
        %3737 = vmatprep.subr.mxu0 0.0
        %3738 = vmatpush1.msra.mxu0 0.0
        %3739 = vmatprep.subr.mxu0 0.0
        %3740 = vmatpush1.msra.mxu0 %v3608
        %3741 = vmatprep.subr.mxu0 0.0
        %3742 = vmatpush2.msra.mxu0 0.0
        %3743 = vmatprep.subr.mxu0 0.0
        %3744 = vmatpush2.msra.mxu0 0.0
        %3745 = vmatprep.subr.mxu0 0.0
        %3746 = vmatpush2.msra.mxu0 0.0
        %3747 = vmatprep.subr.mxu0 0.0
        %3748 = vmatpush2.msra.mxu0 0.0
        %3749 = vmatprep.subr.mxu0 0.0
        %3750 = vmatpush2.msra.mxu0 0.0
        %3751 = vmatprep.subr.mxu0 0.0
        %3752 = vmatpush2.msra.mxu0 0.0
        %3753 = vmatprep.subr.mxu0 0.0
        %3754 = vmatpush2.msra.mxu0 0.0
        %3755 = vmatprep.subr.mxu0 0.0
        %3756 = vmatpush2.msra.mxu0 0.0
        %3757 = vmatprep.subr.mxu0 0.0
        %3758 = vmatpush2.msra.mxu0 0.0
        %3759 = vmatprep.subr.mxu0 0.0
        %3760 = vmatpush2.msra.mxu0 0.0
        %3761 = vmatprep.subr.mxu0 0.0
        %3762 = vmatpush2.msra.mxu0 0.0
        %3763 = vmatprep.subr.mxu0 0.0
        %3764 = vmatpush2.msra.mxu0 0.0
        %3765 = vmatprep.subr.mxu0 0.0
        %3766 = vmatpush2.msra.mxu0 0.0
        %3767 = vmatprep.subr.mxu0 0.0
        %3768 = vmatpush2.msra.mxu0 0.0
        %3769 = vmatprep.subr.mxu0 0.0
        %3770 = vmatpush2.msra.mxu0 0.0
        %3771 = vmatprep.subr.mxu0 0.0
        %3772 = vmatpush2.msra.mxu0 0.0
        %3773 = vmatprep.mubr.f32.mxu0 0.0
        %3774 = vmatmul.mubr.f32.gmra.mxu0 %v3701
        %v3775 = vpop.f32.mrf.mxu0
        %v3776 = vadd.f32 0.0, %v3775
        %v3777 = vpop.f32.mrf.mxu0
        %3778 = vmatprep.mubr.f32.mxu0 0.0
        %3779 = vmatmul.mubr.f32.gmra.mxu0 %v3704
        %v3780 = vpop.f32.mrf.mxu0
        %v3781 = vadd.f32 0.0, %v3780
        %v3782 = vpop.f32.mrf.mxu0
        %3783 = vmatprep.mubr.f32.mxu0 0.0
        %3784 = vmatmul.mubr.f32.gmra.mxu0 %v3707
        %v3785 = vpop.f32.mrf.mxu0
        %v3786 = vadd.f32 0.0, %v3785
        %v3787 = vpop.f32.mrf.mxu0
        %3788 = vdwg.mxu0
        %v3790 = vsel %vm917, %v3504, 0
        %v3793 = vsel %vm917, %v3509, 0
        %v3796 = vsel %vm917, %v3514, 0
        %3798 = vmatprep.subr.mxu0 0.0
        %3799 = vmatpush1.msra.mxu0 0.0
        %3800 = vmatprep.subr.mxu0 0.0
        %3801 = vmatpush1.msra.mxu0 0.0
        %3802 = vmatprep.subr.mxu0 0.0
        %3803 = vmatpush1.msra.mxu0 0.0
        %3804 = vmatprep.subr.mxu0 0.0
        %3805 = vmatpush1.msra.mxu0 0.0
        %3806 = vmatprep.subr.mxu0 0.0
        %3807 = vmatpush1.msra.mxu0 0.0
        %3808 = vmatprep.subr.mxu0 0.0
        %3809 = vmatpush1.msra.mxu0 0.0
        %3810 = vmatprep.subr.mxu0 0.0
        %3811 = vmatpush1.msra.mxu0 0.0
        %3812 = vmatprep.subr.mxu0 0.0
        %3813 = vmatpush1.msra.mxu0 0.0
        %3814 = vmatprep.subr.mxu0 0.0
        %3815 = vmatpush1.msra.mxu0 0.0
        %3816 = vmatprep.subr.mxu0 0.0
        %3817 = vmatpush1.msra.mxu0 0.0
        %3818 = vmatprep.subr.mxu0 0.0
        %3819 = vmatpush1.msra.mxu0 0.0
        %3820 = vmatprep.subr.mxu0 0.0
        %3821 = vmatpush1.msra.mxu0 0.0
        %3822 = vmatprep.subr.mxu0 0.0
        %3823 = vmatpush1.msra.mxu0 0.0
        %3824 = vmatprep.subr.mxu0 0.0
        %3825 = vmatpush1.msra.mxu0 0.0
        %3826 = vmatprep.subr.mxu0 0.0
        %3827 = vmatpush1.msra.mxu0 0.0
        %3828 = vmatprep.subr.mxu0 0.0
        %3829 = vmatpush1.msra.mxu0 %v3609
        %3830 = vmatprep.subr.mxu0 0.0
        %3831 = vmatpush2.msra.mxu0 0.0
        %3832 = vmatprep.subr.mxu0 0.0
        %3833 = vmatpush2.msra.mxu0 0.0
        %3834 = vmatprep.subr.mxu0 0.0
        %3835 = vmatpush2.msra.mxu0 0.0
        %3836 = vmatprep.subr.mxu0 0.0
        %3837 = vmatpush2.msra.mxu0 0.0
        %3838 = vmatprep.subr.mxu0 0.0
        %3839 = vmatpush2.msra.mxu0 0.0
        %3840 = vmatprep.subr.mxu0 0.0
        %3841 = vmatpush2.msra.mxu0 0.0
        %3842 = vmatprep.subr.mxu0 0.0
        %3843 = vmatpush2.msra.mxu0 0.0
        %3844 = vmatprep.subr.mxu0 0.0
        %3845 = vmatpush2.msra.mxu0 0.0
        %3846 = vmatprep.subr.mxu0 0.0
        %3847 = vmatpush2.msra.mxu0 0.0
        %3848 = vmatprep.subr.mxu0 0.0
        %3849 = vmatpush2.msra.mxu0 0.0
        %3850 = vmatprep.subr.mxu0 0.0
        %3851 = vmatpush2.msra.mxu0 0.0
        %3852 = vmatprep.subr.mxu0 0.0
        %3853 = vmatpush2.msra.mxu0 0.0
        %3854 = vmatprep.subr.mxu0 0.0
        %3855 = vmatpush2.msra.mxu0 0.0
        %3856 = vmatprep.subr.mxu0 0.0
        %3857 = vmatpush2.msra.mxu0 0.0
        %3858 = vmatprep.subr.mxu0 0.0
        %3859 = vmatpush2.msra.mxu0 0.0
        %3860 = vmatprep.subr.mxu0 0.0
        %3861 = vmatpush2.msra.mxu0 0.0
        %3862 = vmatprep.mubr.f32.mxu0 0.0
        %3863 = vmatmul.mubr.f32.gmra.mxu0 %v3790
        %v3864 = vpop.f32.mrf.mxu0
        %v3865 = vadd.f32 0.0, %v3864
        %v3866 = vpop.f32.mrf.mxu0
        %3867 = vmatprep.mubr.f32.mxu0 0.0
        %3868 = vmatmul.mubr.f32.gmra.mxu0 %v3793
        %v3869 = vpop.f32.mrf.mxu0
        %v3870 = vadd.f32 0.0, %v3869
        %v3871 = vpop.f32.mrf.mxu0
        %3872 = vmatprep.mubr.f32.mxu0 0.0
        %3873 = vmatmul.mubr.f32.gmra.mxu0 %v3796
        %v3874 = vpop.f32.mrf.mxu0
        %v3875 = vadd.f32 0.0, %v3874
        %v3876 = vpop.f32.mrf.mxu0
        %3877 = vdwg.mxu0
        %v3879 = vsel %vm917, %v3593, 0
        %v3882 = vsel %vm917, %v3598, 0
        %v3885 = vsel %vm917, %v3603, 0
        %3887 = vmatprep.subr.mxu0 0.0
        %3888 = vmatpush1.msra.mxu0 0.0
        %3889 = vmatprep.subr.mxu0 0.0
        %3890 = vmatpush1.msra.mxu0 0.0
        %3891 = vmatprep.subr.mxu0 0.0
        %3892 = vmatpush1.msra.mxu0 0.0
        %3893 = vmatprep.subr.mxu0 0.0
        %3894 = vmatpush1.msra.mxu0 0.0
        %3895 = vmatprep.subr.mxu0 0.0
        %3896 = vmatpush1.msra.mxu0 0.0
        %3897 = vmatprep.subr.mxu0 0.0
        %3898 = vmatpush1.msra.mxu0 0.0
        %3899 = vmatprep.subr.mxu0 0.0
        %3900 = vmatpush1.msra.mxu0 0.0
        %3901 = vmatprep.subr.mxu0 0.0
        %3902 = vmatpush1.msra.mxu0 0.0
        %3903 = vmatprep.subr.mxu0 0.0
        %3904 = vmatpush1.msra.mxu0 0.0
        %3905 = vmatprep.subr.mxu0 0.0
        %3906 = vmatpush1.msra.mxu0 0.0
        %3907 = vmatprep.subr.mxu0 0.0
        %3908 = vmatpush1.msra.mxu0 0.0
        %3909 = vmatprep.subr.mxu0 0.0
        %3910 = vmatpush1.msra.mxu0 0.0
        %3911 = vmatprep.subr.mxu0 0.0
        %3912 = vmatpush1.msra.mxu0 0.0
        %3913 = vmatprep.subr.mxu0 0.0
        %3914 = vmatpush1.msra.mxu0 0.0
        %3915 = vmatprep.subr.mxu0 0.0
        %3916 = vmatpush1.msra.mxu0 0.0
        %3917 = vmatprep.subr.mxu0 0.0
        %3918 = vmatpush1.msra.mxu0 %v3610
        %3919 = vmatprep.subr.mxu0 0.0
        %3920 = vmatpush2.msra.mxu0 0.0
        %3921 = vmatprep.subr.mxu0 0.0
        %3922 = vmatpush2.msra.mxu0 0.0
        %3923 = vmatprep.subr.mxu0 0.0
        %3924 = vmatpush2.msra.mxu0 0.0
        %3925 = vmatprep.subr.mxu0 0.0
        %3926 = vmatpush2.msra.mxu0 0.0
        %3927 = vmatprep.subr.mxu0 0.0
        %3928 = vmatpush2.msra.mxu0 0.0
        %3929 = vmatprep.subr.mxu0 0.0
        %3930 = vmatpush2.msra.mxu0 0.0
        %3931 = vmatprep.subr.mxu0 0.0
        %3932 = vmatpush2.msra.mxu0 0.0
        %3933 = vmatprep.subr.mxu0 0.0
        %3934 = vmatpush2.msra.mxu0 0.0
        %3935 = vmatprep.subr.mxu0 0.0
        %3936 = vmatpush2.msra.mxu0 0.0
        %3937 = vmatprep.subr.mxu0 0.0
        %3938 = vmatpush2.msra.mxu0 0.0
        %3939 = vmatprep.subr.mxu0 0.0
        %3940 = vmatpush2.msra.mxu0 0.0
        %3941 = vmatprep.subr.mxu0 0.0
        %3942 = vmatpush2.msra.mxu0 0.0
        %3943 = vmatprep.subr.mxu0 0.0
        %3944 = vmatpush2.msra.mxu0 0.0
        %3945 = vmatprep.subr.mxu0 0.0
        %3946 = vmatpush2.msra.mxu0 0.0
        %3947 = vmatprep.subr.mxu0 0.0
        %3948 = vmatpush2.msra.mxu0 0.0
        %3949 = vmatprep.subr.mxu0 0.0
        %3950 = vmatpush2.msra.mxu0 0.0
        %3951 = vmatprep.mubr.f32.mxu0 0.0
        %3952 = vmatmul.mubr.f32.gmra.mxu0 %v3879
        %v3953 = vpop.f32.mrf.mxu0
        %v3954 = vadd.f32 0.0, %v3953
        %v3955 = vpop.f32.mrf.mxu0
        %3956 = vmatprep.mubr.f32.mxu0 0.0
        %3957 = vmatmul.mubr.f32.gmra.mxu0 %v3882
        %v3958 = vpop.f32.mrf.mxu0
        %v3959 = vadd.f32 0.0, %v3958
        %v3960 = vpop.f32.mrf.mxu0
        %3961 = vmatprep.mubr.f32.mxu0 0.0
        %3962 = vmatmul.mubr.f32.gmra.mxu0 %v3885
        %v3963 = vpop.f32.mrf.mxu0
        %v3964 = vadd.f32 0.0, %v3963
        %v3965 = vpop.f32.mrf.mxu0
        %3966 = vdwg.mxu0
        %v3967 = vsel %vm656, %v3687, 0.0
        %v3968 = vsel %vm656, %v3776, 0.0
        %v3969 = vadd.f32 %v3967, %v3968
        %v3970 = vsel %vm656, %v3865, 0.0
        %v3971 = vadd.f32 %v3969, %v3970
        %v3972 = vsel %vm656, %v3954, 0.0
        %v3973 = vadd.f32 %v3971, %v3972
        %v3974 = vsel %vm656, %v3692, 0.0
        %v3975 = vsel %vm656, %v3781, 0.0
        %v3976 = vadd.f32 %v3974, %v3975
        %v3977 = vsel %vm656, %v3870, 0.0
        %v3978 = vadd.f32 %v3976, %v3977
        %v3979 = vsel %vm656, %v3959, 0.0
        %v3980 = vadd.f32 %v3978, %v3979
        %v3981 = vsel %vm656, %v3697, 0.0
        %v3982 = vsel %vm656, %v3786, 0.0
        %v3983 = vadd.f32 %v3981, %v3982
        %v3984 = vsel %vm656, %v3875, 0.0
        %v3985 = vadd.f32 %v3983, %v3984
        %v3986 = vsel %vm656, %v3964, 0.0
        %v3987 = vadd.f32 %v3985, %v3986
        %s3988 = scalar_lea.vmem %s8, 1
        %v3989 = vld [vmem:[%s3988] sm:$0x1]
        %v3991 = vlaneseq
        %v3992 = vshrl.u32 %v3991, 7
        %v3993 = vsub.s32 0, %v3992
        %v3994 = vrot.slane %v3989, %v3993
        %v3996 = vadd.f32 %v3973, %v3994
        %v3997 = vadd.f32 %v3980, %v3994
        %v3998 = vadd.f32 %v3987, %v3994
        %v3999 = vadd.f32 %v2470, %v3996
        %v4000 = vadd.f32 %v2471, %v3997
        %v4001 = vadd.f32 %v2472, %v3998
        %s4002 = scalar_lea.vmem %s9, 1
        %v4003 = vld [vmem:[%s4002] sm:$0x1]
        %s4004 = scalar_lea.vmem %s10, 1
        %v4005 = vld [vmem:[%s4004] sm:$0x1]
        %v4006 = vsel %vm656, %v3999, 0.0
        %4007 = vadd.xlane.f32.xlu0 %v4006
        %v4008 = vpop.xlane.xlu0 %4007
        %v4009 = vsel %vm656, %v4000, 0.0
        %4010 = vadd.xlane.f32.xlu0 %v4009
        %v4011 = vpop.xlane.xlu0 %4010
        %v4012 = vsel %vm656, %v4001, 0.0
        %4013 = vadd.xlane.f32.xlu0 %v4012
        %v4014 = vpop.xlane.xlu0 %4013
        %v4015 = vmul.f32 %v4008, %v666
        %v4016 = vmul.f32 %v4011, %v666
        %v4017 = vmul.f32 %v4014, %v666
        %v4018 = vsub.f32 %v3999, %v4015
        %v4019 = vsub.f32 %v4000, %v4016
        %v4020 = vsub.f32 %v4001, %v4017
        %v4021 = vmul.f32 %v4018, %v4018
        %v4022 = vmul.f32 %v4019, %v4019
        %v4023 = vmul.f32 %v4020, %v4020
        %v4024 = vsel %vm656, %v4021, 0.0
        %4025 = vadd.xlane.f32.xlu0 %v4024
        %v4026 = vpop.xlane.xlu0 %4025
        %v4027 = vsel %vm656, %v4022, 0.0
        %4028 = vadd.xlane.f32.xlu0 %v4027
        %v4029 = vpop.xlane.xlu0 %4028
        %v4030 = vsel %vm656, %v4023, 0.0
        %4031 = vadd.xlane.f32.xlu0 %v4030
        %v4032 = vpop.xlane.xlu0 %4031
        %v4033 = vmul.f32 %v4026, %v666
        %v4034 = vmul.f32 %v4029, %v666
        %v4035 = vmul.f32 %v4032, %v666
        %v4036 = vadd.f32 %v4033, 1e-05
        %v4037 = vadd.f32 %v4034, 1e-05
        %v4038 = vadd.f32 %v4035, 1e-05
        %v4039 = vrsqrt.pop %v4036
        %v4040 = vrsqrt.pop %v4037
        %v4041 = vrsqrt.pop %v4038
        %v4042 = vmul.f32 %v4018, %v4039
        %v4043 = vmul.f32 %v4019, %v4040
        %v4044 = vmul.f32 %v4020, %v4041
        %v4046 = vlaneseq
        %v4047 = vshrl.u32 %v4046, 7
        %v4048 = vsub.s32 0, %v4047
        %v4049 = vrot.slane %v4003, %v4048
        %v4051 = vmul.f32 %v4042, %v4049
        %v4052 = vmul.f32 %v4043, %v4049
        %v4053 = vmul.f32 %v4044, %v4049
        %v4055 = vlaneseq
        %v4056 = vshrl.u32 %v4055, 7
        %v4057 = vsub.s32 0, %v4056
        %v4058 = vrot.slane %v4005, %v4057
        %v4060 = vadd.f32 %v4051, %v4058
        %v4061 = vadd.f32 %v4052, %v4058
        %v4062 = vadd.f32 %v4053, %v4058
        %s4063 = scalar_lea.vmem %s11, 32
        %v4064 = vld [vmem:[%s4063] sm:$0xff]
        %v4065 = vld [vmem:[%s4063 + $0x8] sm:$0xff]
        %v4066 = vld [vmem:[%s4063 + $0x10] sm:$0xff]
        %v4067 = vld [vmem:[%s4063 + $0x18] sm:$0xff]
        %s4068 = scalar_lea.vmem %s12, 1
        %v4069 = vld [vmem:[%s4068] sm:$0x1]
        %v4071 = vlaneseq
        %v4072 = vshrl.u32 %v4071, 7
        %v4073 = vsub.s32 0, %v4072
        %v4074 = vrot.slane %v4069, %v4073
        %v4077 = vsel %vm656, %v4060, 0
        %v4080 = vsel %vm656, %v4061, 0
        %v4083 = vsel %vm656, %v4062, 0
        %4085 = vmatprep.subr.mxu0 0.0
        %4086 = vmatpush1.msra.mxu0 0.0
        %4087 = vmatprep.subr.mxu0 0.0
        %4088 = vmatpush1.msra.mxu0 0.0
        %4089 = vmatprep.subr.mxu0 0.0
        %4090 = vmatpush1.msra.mxu0 0.0
        %4091 = vmatprep.subr.mxu0 0.0
        %4092 = vmatpush1.msra.mxu0 0.0
        %4093 = vmatprep.subr.mxu0 0.0
        %4094 = vmatpush1.msra.mxu0 0.0
        %4095 = vmatprep.subr.mxu0 0.0
        %4096 = vmatpush1.msra.mxu0 0.0
        %4097 = vmatprep.subr.mxu0 0.0
        %4098 = vmatpush1.msra.mxu0 0.0
        %4099 = vmatprep.subr.mxu0 0.0
        %4100 = vmatpush1.msra.mxu0 0.0
        %4101 = vmatprep.subr.mxu0 0.0
        %4102 = vmatpush1.msra.mxu0 0.0
        %4103 = vmatprep.subr.mxu0 0.0
        %4104 = vmatpush1.msra.mxu0 0.0
        %4105 = vmatprep.subr.mxu0 0.0
        %4106 = vmatpush1.msra.mxu0 0.0
        %4107 = vmatprep.subr.mxu0 0.0
        %4108 = vmatpush1.msra.mxu0 0.0
        %4109 = vmatprep.subr.mxu0 0.0
        %4110 = vmatpush1.msra.mxu0 %v4067
        %4111 = vmatprep.subr.mxu0 0.0
        %4112 = vmatpush1.msra.mxu0 %v4066
        %4113 = vmatprep.subr.mxu0 0.0
        %4114 = vmatpush1.msra.mxu0 %v4065
        %4115 = vmatprep.subr.mxu0 0.0
        %4116 = vmatpush1.msra.mxu0 %v4064
        %4117 = vmatprep.subr.mxu0 0.0
        %4118 = vmatpush2.msra.mxu0 0.0
        %4119 = vmatprep.subr.mxu0 0.0
        %4120 = vmatpush2.msra.mxu0 0.0
        %4121 = vmatprep.subr.mxu0 0.0
        %4122 = vmatpush2.msra.mxu0 0.0
        %4123 = vmatprep.subr.mxu0 0.0
        %4124 = vmatpush2.msra.mxu0 0.0
        %4125 = vmatprep.subr.mxu0 0.0
        %4126 = vmatpush2.msra.mxu0 0.0
        %4127 = vmatprep.subr.mxu0 0.0
        %4128 = vmatpush2.msra.mxu0 0.0
        %4129 = vmatprep.subr.mxu0 0.0
        %4130 = vmatpush2.msra.mxu0 0.0
        %4131 = vmatprep.subr.mxu0 0.0
        %4132 = vmatpush2.msra.mxu0 0.0
        %4133 = vmatprep.subr.mxu0 0.0
        %4134 = vmatpush2.msra.mxu0 0.0
        %4135 = vmatprep.subr.mxu0 0.0
        %4136 = vmatpush2.msra.mxu0 0.0
        %4137 = vmatprep.subr.mxu0 0.0
        %4138 = vmatpush2.msra.mxu0 0.0
        %4139 = vmatprep.subr.mxu0 0.0
        %4140 = vmatpush2.msra.mxu0 0.0
        %4141 = vmatprep.subr.mxu0 0.0
        %4142 = vmatpush2.msra.mxu0 0.0
        %4143 = vmatprep.subr.mxu0 0.0
        %4144 = vmatpush2.msra.mxu0 0.0
        %4145 = vmatprep.subr.mxu0 0.0
        %4146 = vmatpush2.msra.mxu0 0.0
        %4147 = vmatprep.subr.mxu0 0.0
        %4148 = vmatpush2.msra.mxu0 0.0
        %4149 = vmatprep.mubr.f32.mxu0 0.0
        %4150 = vmatmul.mubr.f32.gmra.mxu0 %v4077
        %v4151 = vpop.f32.mrf.mxu0
        %v4152 = vadd.f32 %v4074, %v4151
        %v4153 = vpop.f32.mrf.mxu0
        %4154 = vmatprep.mubr.f32.mxu0 0.0
        %4155 = vmatmul.mubr.f32.gmra.mxu0 %v4080
        %v4156 = vpop.f32.mrf.mxu0
        %v4157 = vadd.f32 %v4074, %v4156
        %v4158 = vpop.f32.mrf.mxu0
        %4159 = vmatprep.mubr.f32.mxu0 0.0
        %4160 = vmatmul.mubr.f32.gmra.mxu0 %v4083
        %v4161 = vpop.f32.mrf.mxu0
        %v4162 = vadd.f32 %v4074, %v4161
        %v4163 = vpop.f32.mrf.mxu0
        %4164 = vdwg.mxu0
        %v4165 = vmul.f32 %v4152, %v4152
        %v4166 = vmul.f32 %v4157, %v4157
        %v4167 = vmul.f32 %v4162, %v4162
        %v4168 = vmul.f32 %v4152, %v4165
        %v4169 = vmul.f32 %v4157, %v4166
        %v4170 = vmul.f32 %v4162, %v4167
        %v4171 = vmul.f32 %v4168, 0.044715
        %v4172 = vmul.f32 %v4169, 0.044715
        %v4173 = vmul.f32 %v4170, 0.044715
        %v4174 = vadd.f32 %v4152, %v4171
        %v4175 = vadd.f32 %v4157, %v4172
        %v4176 = vadd.f32 %v4162, %v4173
        %v4177 = vmul.f32 %v4174, 0.7978846
        %v4178 = vmul.f32 %v4175, 0.7978846
        %v4179 = vmul.f32 %v4176, 0.7978846
        %v4180 = vtanh.pop %v4177
        %v4181 = vtanh.pop %v4178
        %v4182 = vtanh.pop %v4179
        %v4183 = vadd.f32 %v4180, 1.0
        %v4184 = vadd.f32 %v4181, 1.0
        %v4185 = vadd.f32 %v4182, 1.0
        %v4186 = vmul.f32 %v4183, 0.5
        %v4187 = vmul.f32 %v4184, 0.5
        %v4188 = vmul.f32 %v4185, 0.5
        %v4189 = vmul.f32 %v4152, %v4186
        %v4190 = vmul.f32 %v4157, %v4187
        %v4191 = vmul.f32 %v4162, %v4188
        %s4192 = scalar_lea.vmem %s13, 128
        %v4193 = vld [vmem:[%s4192] sm:$0xff]
        %v4194 = vld [vmem:[%s4192 + $0x8] sm:$0xff]
        %v4195 = vld [vmem:[%s4192 + $0x10] sm:$0xff]
        %v4196 = vld [vmem:[%s4192 + $0x18] sm:$0xff]
        %v4197 = vld [vmem:[%s4192 + $0x20] sm:$0xff]
        %v4198 = vld [vmem:[%s4192 + $0x28] sm:$0xff]
        %v4199 = vld [vmem:[%s4192 + $0x30] sm:$0xff]
        %v4200 = vld [vmem:[%s4192 + $0x38] sm:$0xff]
        %v4201 = vld [vmem:[%s4192 + $0x40] sm:$0xff]
        %v4202 = vld [vmem:[%s4192 + $0x48] sm:$0xff]
        %v4203 = vld [vmem:[%s4192 + $0x50] sm:$0xff]
        %v4204 = vld [vmem:[%s4192 + $0x58] sm:$0xff]
        %v4205 = vld [vmem:[%s4192 + $0x60] sm:$0xff]
        %v4206 = vld [vmem:[%s4192 + $0x68] sm:$0xff]
        %v4207 = vld [vmem:[%s4192 + $0x70] sm:$0xff]
        %v4208 = vld [vmem:[%s4192 + $0x78] sm:$0xff]
        %s4209 = scalar_lea.vmem %s14, 1
        %v4210 = vld [vmem:[%s4209] sm:$0x1]
        %v4212 = vlaneseq
        %v4213 = vshrl.u32 %v4212, 7
        %v4214 = vsub.s32 0, %v4213
        %v4215 = vrot.slane %v4210, %v4214
        %4217 = vmatprep.subr.mxu0 0.0
        %4218 = vmatpush1.msra.mxu0 %v4208
        %4219 = vmatprep.subr.mxu0 0.0
        %4220 = vmatpush1.msra.mxu0 %v4207
        %4221 = vmatprep.subr.mxu0 0.0
        %4222 = vmatpush1.msra.mxu0 %v4206
        %4223 = vmatprep.subr.mxu0 0.0
        %4224 = vmatpush1.msra.mxu0 %v4205
        %4225 = vmatprep.subr.mxu0 0.0
        %4226 = vmatpush1.msra.mxu0 %v4204
        %4227 = vmatprep.subr.mxu0 0.0
        %4228 = vmatpush1.msra.mxu0 %v4203
        %4229 = vmatprep.subr.mxu0 0.0
        %4230 = vmatpush1.msra.mxu0 %v4202
        %4231 = vmatprep.subr.mxu0 0.0
        %4232 = vmatpush1.msra.mxu0 %v4201
        %4233 = vmatprep.subr.mxu0 0.0
        %4234 = vmatpush1.msra.mxu0 %v4200
        %4235 = vmatprep.subr.mxu0 0.0
        %4236 = vmatpush1.msra.mxu0 %v4199
        %4237 = vmatprep.subr.mxu0 0.0
        %4238 = vmatpush1.msra.mxu0 %v4198
        %4239 = vmatprep.subr.mxu0 0.0
        %4240 = vmatpush1.msra.mxu0 %v4197
        %4241 = vmatprep.subr.mxu0 0.0
        %4242 = vmatpush1.msra.mxu0 %v4196
        %4243 = vmatprep.subr.mxu0 0.0
        %4244 = vmatpush1.msra.mxu0 %v4195
        %4245 = vmatprep.subr.mxu0 0.0
        %4246 = vmatpush1.msra.mxu0 %v4194
        %4247 = vmatprep.subr.mxu0 0.0
        %4248 = vmatpush1.msra.mxu0 %v4193
        %4249 = vmatprep.subr.mxu0 0.0
        %4250 = vmatpush2.msra.mxu0 0.0
        %4251 = vmatprep.subr.mxu0 0.0
        %4252 = vmatpush2.msra.mxu0 0.0
        %4253 = vmatprep.subr.mxu0 0.0
        %4254 = vmatpush2.msra.mxu0 0.0
        %4255 = vmatprep.subr.mxu0 0.0
        %4256 = vmatpush2.msra.mxu0 0.0
        %4257 = vmatprep.subr.mxu0 0.0
        %4258 = vmatpush2.msra.mxu0 0.0
        %4259 = vmatprep.subr.mxu0 0.0
        %4260 = vmatpush2.msra.mxu0 0.0
        %4261 = vmatprep.subr.mxu0 0.0
        %4262 = vmatpush2.msra.mxu0 0.0
        %4263 = vmatprep.subr.mxu0 0.0
        %4264 = vmatpush2.msra.mxu0 0.0
        %4265 = vmatprep.subr.mxu0 0.0
        %4266 = vmatpush2.msra.mxu0 0.0
        %4267 = vmatprep.subr.mxu0 0.0
        %4268 = vmatpush2.msra.mxu0 0.0
        %4269 = vmatprep.subr.mxu0 0.0
        %4270 = vmatpush2.msra.mxu0 0.0
        %4271 = vmatprep.subr.mxu0 0.0
        %4272 = vmatpush2.msra.mxu0 0.0
        %4273 = vmatprep.subr.mxu0 0.0
        %4274 = vmatpush2.msra.mxu0 0.0
        %4275 = vmatprep.subr.mxu0 0.0
        %4276 = vmatpush2.msra.mxu0 0.0
        %4277 = vmatprep.subr.mxu0 0.0
        %4278 = vmatpush2.msra.mxu0 0.0
        %4279 = vmatprep.subr.mxu0 0.0
        %4280 = vmatpush2.msra.mxu0 0.0
        %4281 = vmatprep.mubr.f32.mxu0 0.0
        %4282 = vmatmul.mubr.f32.gmra.mxu0 %v4189
        %v4283 = vpop.f32.mrf.mxu0
        %v4284 = vadd.f32 %v4215, %v4283
        %v4285 = vpop.f32.mrf.mxu0
        %4286 = vmatprep.mubr.f32.mxu0 0.0
        %4287 = vmatmul.mubr.f32.gmra.mxu0 %v4190
        %v4288 = vpop.f32.mrf.mxu0
        %v4289 = vadd.f32 %v4215, %v4288
        %v4290 = vpop.f32.mrf.mxu0
        %4291 = vmatprep.mubr.f32.mxu0 0.0
        %4292 = vmatmul.mubr.f32.gmra.mxu0 %v4191
        %v4293 = vpop.f32.mrf.mxu0
        %v4294 = vadd.f32 %v4215, %v4293
        %v4295 = vpop.f32.mrf.mxu0
        %4296 = vdwg.mxu0
        %v4297 = vadd.f32 %v3999, %v4284
        %v4298 = vadd.f32 %v4000, %v4289
        %v4299 = vadd.f32 %v4001, %v4294
        %s4300 = scalar_lea.vmem %s3, 2
        %v4301 = vld [vmem:[%s4300] sm:$0x1]
        %s4302 = scalar_lea.vmem %s4, 2
        %v4303 = vld [vmem:[%s4302] sm:$0x1]
        %v4304 = vsel %vm656, %v4297, 0.0
        %4305 = vadd.xlane.f32.xlu0 %v4304
        %v4306 = vpop.xlane.xlu0 %4305
        %v4307 = vsel %vm656, %v4298, 0.0
        %4308 = vadd.xlane.f32.xlu0 %v4307
        %v4309 = vpop.xlane.xlu0 %4308
        %v4310 = vsel %vm656, %v4299, 0.0
        %4311 = vadd.xlane.f32.xlu0 %v4310
        %v4312 = vpop.xlane.xlu0 %4311
        %v4313 = vmul.f32 %v4306, %v666
        %v4314 = vmul.f32 %v4309, %v666
        %v4315 = vmul.f32 %v4312, %v666
        %v4316 = vsub.f32 %v4297, %v4313
        %v4317 = vsub.f32 %v4298, %v4314
        %v4318 = vsub.f32 %v4299, %v4315
        %v4319 = vmul.f32 %v4316, %v4316
        %v4320 = vmul.f32 %v4317, %v4317
        %v4321 = vmul.f32 %v4318, %v4318
        %v4322 = vsel %vm656, %v4319, 0.0
        %4323 = vadd.xlane.f32.xlu0 %v4322
        %v4324 = vpop.xlane.xlu0 %4323
        %v4325 = vsel %vm656, %v4320, 0.0
        %4326 = vadd.xlane.f32.xlu0 %v4325
        %v4327 = vpop.xlane.xlu0 %4326
        %v4328 = vsel %vm656, %v4321, 0.0
        %4329 = vadd.xlane.f32.xlu0 %v4328
        %v4330 = vpop.xlane.xlu0 %4329
        %v4331 = vmul.f32 %v4324, %v666
        %v4332 = vmul.f32 %v4327, %v666
        %v4333 = vmul.f32 %v4330, %v666
        %v4334 = vadd.f32 %v4331, 1e-05
        %v4335 = vadd.f32 %v4332, 1e-05
        %v4336 = vadd.f32 %v4333, 1e-05
        %v4337 = vrsqrt.pop %v4334
        %v4338 = vrsqrt.pop %v4335
        %v4339 = vrsqrt.pop %v4336
        %v4340 = vmul.f32 %v4316, %v4337
        %v4341 = vmul.f32 %v4317, %v4338
        %v4342 = vmul.f32 %v4318, %v4339
        %v4344 = vlaneseq
        %v4345 = vshrl.u32 %v4344, 7
        %v4346 = vsub.s32 0, %v4345
        %v4347 = vrot.slane %v4301, %v4346
        %v4349 = vmul.f32 %v4340, %v4347
        %v4350 = vmul.f32 %v4341, %v4347
        %v4351 = vmul.f32 %v4342, %v4347
        %v4353 = vlaneseq
        %v4354 = vshrl.u32 %v4353, 7
        %v4355 = vsub.s32 0, %v4354
        %v4356 = vrot.slane %v4303, %v4355
        %v4358 = vadd.f32 %v4349, %v4356
        %v4359 = vadd.f32 %v4350, %v4356
        %v4360 = vadd.f32 %v4351, %v4356
        %s4361 = scalar_lea.vmem %s5, 64
        %v4362 = vld [vmem:[%s4361] sm:$0xff]
        %v4363 = vld [vmem:[%s4361 + $0x8] sm:$0xff]
        %v4364 = vld [vmem:[%s4361 + $0x10] sm:$0xff]
        %v4365 = vld [vmem:[%s4361 + $0x18] sm:$0xff]
        %s4366 = scalar_lea.vmem %s6, 2
        %v4367 = vld [vmem:[%s4366] sm:$0x1]
        %v4369 = vlaneseq
        %v4370 = vshrl.u32 %v4369, 7
        %v4371 = vsub.s32 0, %v4370
        %v4372 = vrot.slane %v4367, %v4371
        %v4375 = vsel %vm656, %v4358, 0
        %v4378 = vsel %vm656, %v4359, 0
        %v4381 = vsel %vm656, %v4360, 0
        %4383 = vmatprep.subr.mxu0 0.0
        %4384 = vmatpush1.msra.mxu0 0.0
        %4385 = vmatprep.subr.mxu0 0.0
        %4386 = vmatpush1.msra.mxu0 0.0
        %4387 = vmatprep.subr.mxu0 0.0
        %4388 = vmatpush1.msra.mxu0 0.0
        %4389 = vmatprep.subr.mxu0 0.0
        %4390 = vmatpush1.msra.mxu0 0.0
        %4391 = vmatprep.subr.mxu0 0.0
        %4392 = vmatpush1.msra.mxu0 0.0
        %4393 = vmatprep.subr.mxu0 0.0
        %4394 = vmatpush1.msra.mxu0 0.0
        %4395 = vmatprep.subr.mxu0 0.0
        %4396 = vmatpush1.msra.mxu0 0.0
        %4397 = vmatprep.subr.mxu0 0.0
        %4398 = vmatpush1.msra.mxu0 0.0
        %4399 = vmatprep.subr.mxu0 0.0
        %4400 = vmatpush1.msra.mxu0 0.0
        %4401 = vmatprep.subr.mxu0 0.0
        %4402 = vmatpush1.msra.mxu0 0.0
        %4403 = vmatprep.subr.mxu0 0.0
        %4404 = vmatpush1.msra.mxu0 0.0
        %4405 = vmatprep.subr.mxu0 0.0
        %4406 = vmatpush1.msra.mxu0 0.0
        %4407 = vmatprep.subr.mxu0 0.0
        %4408 = vmatpush1.msra.mxu0 %v4365
        %4409 = vmatprep.subr.mxu0 0.0
        %4410 = vmatpush1.msra.mxu0 %v4364
        %4411 = vmatprep.subr.mxu0 0.0
        %4412 = vmatpush1.msra.mxu0 %v4363
        %4413 = vmatprep.subr.mxu0 0.0
        %4414 = vmatpush1.msra.mxu0 %v4362
        %4415 = vmatprep.subr.mxu0 0.0
        %4416 = vmatpush2.msra.mxu0 0.0
        %4417 = vmatprep.subr.mxu0 0.0
        %4418 = vmatpush2.msra.mxu0 0.0
        %4419 = vmatprep.subr.mxu0 0.0
        %4420 = vmatpush2.msra.mxu0 0.0
        %4421 = vmatprep.subr.mxu0 0.0
        %4422 = vmatpush2.msra.mxu0 0.0
        %4423 = vmatprep.subr.mxu0 0.0
        %4424 = vmatpush2.msra.mxu0 0.0
        %4425 = vmatprep.subr.mxu0 0.0
        %4426 = vmatpush2.msra.mxu0 0.0
        %4427 = vmatprep.subr.mxu0 0.0
        %4428 = vmatpush2.msra.mxu0 0.0
        %4429 = vmatprep.subr.mxu0 0.0
        %4430 = vmatpush2.msra.mxu0 0.0
        %4431 = vmatprep.subr.mxu0 0.0
        %4432 = vmatpush2.msra.mxu0 0.0
        %4433 = vmatprep.subr.mxu0 0.0
        %4434 = vmatpush2.msra.mxu0 0.0
        %4435 = vmatprep.subr.mxu0 0.0
        %4436 = vmatpush2.msra.mxu0 0.0
        %4437 = vmatprep.subr.mxu0 0.0
        %4438 = vmatpush2.msra.mxu0 0.0
        %4439 = vmatprep.subr.mxu0 0.0
        %4440 = vmatpush2.msra.mxu0 0.0
        %4441 = vmatprep.subr.mxu0 0.0
        %4442 = vmatpush2.msra.mxu0 0.0
        %4443 = vmatprep.subr.mxu0 0.0
        %4444 = vmatpush2.msra.mxu0 0.0
        %4445 = vmatprep.subr.mxu0 0.0
        %4446 = vmatpush2.msra.mxu0 0.0
        %4447 = vmatprep.mubr.f32.mxu0 0.0
        %4448 = vmatmul.mubr.f32.gmra.mxu0 %v4375
        %v4449 = vpop.f32.mrf.mxu0
        %v4450 = vadd.f32 %v4372, %v4449
        %v4451 = vpop.f32.mrf.mxu0
        %4452 = vmatprep.mubr.f32.mxu0 0.0
        %4453 = vmatmul.mubr.f32.gmra.mxu0 %v4378
        %v4454 = vpop.f32.mrf.mxu0
        %v4455 = vadd.f32 %v4372, %v4454
        %v4456 = vpop.f32.mrf.mxu0
        %4457 = vmatprep.mubr.f32.mxu0 0.0
        %4458 = vmatmul.mubr.f32.gmra.mxu0 %v4381
        %v4459 = vpop.f32.mrf.mxu0
        %v4460 = vadd.f32 %v4372, %v4459
        %v4461 = vpop.f32.mrf.mxu0
        %4462 = vdwg.mxu0
        %4466 = vrot.lane.b32.xlu0 %v4450, 120
        %v4467 = vpop.permute.xlu0 %4466
        %4468 = vrot.lane.b32.xlu0 %v4455, 120
        %v4469 = vpop.permute.xlu0 %4468
        %4470 = vrot.lane.b32.xlu0 %v4460, 120
        %v4471 = vpop.permute.xlu0 %4470
        %4475 = vrot.lane.b32.xlu0 %v4450, 112
        %v4476 = vpop.permute.xlu0 %4475
        %4477 = vrot.lane.b32.xlu0 %v4455, 112
        %v4478 = vpop.permute.xlu0 %4477
        %4479 = vrot.lane.b32.xlu0 %v4460, 112
        %v4480 = vpop.permute.xlu0 %4479
        %4484 = vrot.lane.b32.xlu0 %v4450, 104
        %v4485 = vpop.permute.xlu0 %4484
        %4486 = vrot.lane.b32.xlu0 %v4455, 104
        %v4487 = vpop.permute.xlu0 %4486
        %4488 = vrot.lane.b32.xlu0 %v4460, 104
        %v4489 = vpop.permute.xlu0 %4488
        %4493 = vrot.lane.b32.xlu0 %v4450, 96
        %v4494 = vpop.permute.xlu0 %4493
        %4495 = vrot.lane.b32.xlu0 %v4455, 96
        %v4496 = vpop.permute.xlu0 %4495
        %4497 = vrot.lane.b32.xlu0 %v4460, 96
        %v4498 = vpop.permute.xlu0 %4497
        %4499 = vrot.lane.b32.xlu0 %v4450, 88
        %v4500 = vpop.permute.xlu0 %4499
        %4501 = vrot.lane.b32.xlu0 %v4455, 88
        %v4502 = vpop.permute.xlu0 %4501
        %4503 = vrot.lane.b32.xlu0 %v4460, 88
        %v4504 = vpop.permute.xlu0 %4503
        %4505 = vrot.lane.b32.xlu0 %v4450, 80
        %v4506 = vpop.permute.xlu0 %4505
        %4507 = vrot.lane.b32.xlu0 %v4455, 80
        %v4508 = vpop.permute.xlu0 %4507
        %4509 = vrot.lane.b32.xlu0 %v4460, 80
        %v4510 = vpop.permute.xlu0 %4509
        %4511 = vrot.lane.b32.xlu0 %v4450, 72
        %v4512 = vpop.permute.xlu0 %4511
        %4513 = vrot.lane.b32.xlu0 %v4455, 72
        %v4514 = vpop.permute.xlu0 %4513
        %4515 = vrot.lane.b32.xlu0 %v4460, 72
        %v4516 = vpop.permute.xlu0 %4515
        %4517 = vrot.lane.b32.xlu0 %v4450, 64
        %v4518 = vpop.permute.xlu0 %4517
        %4519 = vrot.lane.b32.xlu0 %v4455, 64
        %v4520 = vpop.permute.xlu0 %4519
        %4521 = vrot.lane.b32.xlu0 %v4460, 64
        %v4522 = vpop.permute.xlu0 %4521
        %4526 = vrot.lane.b32.xlu0 %v4450, 56
        %v4527 = vpop.permute.xlu0 %4526
        %4528 = vrot.lane.b32.xlu0 %v4455, 56
        %v4529 = vpop.permute.xlu0 %4528
        %4530 = vrot.lane.b32.xlu0 %v4460, 56
        %v4531 = vpop.permute.xlu0 %4530
        %4535 = vrot.lane.b32.xlu0 %v4450, 48
        %v4536 = vpop.permute.xlu0 %4535
        %4537 = vrot.lane.b32.xlu0 %v4455, 48
        %v4538 = vpop.permute.xlu0 %4537
        %4539 = vrot.lane.b32.xlu0 %v4460, 48
        %v4540 = vpop.permute.xlu0 %4539
        %4544 = vrot.lane.b32.xlu0 %v4450, 40
        %v4545 = vpop.permute.xlu0 %4544
        %4546 = vrot.lane.b32.xlu0 %v4455, 40
        %v4547 = vpop.permute.xlu0 %4546
        %4548 = vrot.lane.b32.xlu0 %v4460, 40
        %v4549 = vpop.permute.xlu0 %4548
        %v4553 = vmul.f32 %v4450, 0.35355338
        %v4554 = vmul.f32 %v4455, 0.35355338
        %v4555 = vmul.f32 %v4460, 0.35355338
        %v4556 = vmul.f32 %v4467, 0.35355338
        %v4557 = vmul.f32 %v4469, 0.35355338
        %v4558 = vmul.f32 %v4471, 0.35355338
        %v4559 = vmul.f32 %v4476, 0.35355338
        %v4560 = vmul.f32 %v4478, 0.35355338
        %v4561 = vmul.f32 %v4480, 0.35355338
        %v4562 = vmul.f32 %v4485, 0.35355338
        %v4563 = vmul.f32 %v4487, 0.35355338
        %v4564 = vmul.f32 %v4489, 0.35355338
        %v4566 = vsel %vm917, %v4553, 0
        %v4569 = vsel %vm917, %v4554, 0
        %v4572 = vsel %vm917, %v4555, 0
        %v4574 = vsel %vm917, %v4494, 0
        %v4576 = vsel %vm917, %v4496, 0
        %v4578 = vsel %vm917, %v4498, 0
        %4580 = vmatprep.subr.mxu0 0.0
        %4581 = vmatpush1.xpose.msra.mxu0 0.0
        %4582 = vmatprep.subr.mxu0 0.0
        %4583 = vmatpush1.xpose.msra.mxu0 0.0
        %4584 = vmatprep.subr.mxu0 0.0
        %4585 = vmatpush1.xpose.msra.mxu0 0.0
        %4586 = vmatprep.subr.mxu0 0.0
        %4587 = vmatpush1.xpose.msra.mxu0 0.0
        %4588 = vmatprep.subr.mxu0 0.0
        %4589 = vmatpush1.xpose.msra.mxu0 0.0
        %4590 = vmatprep.subr.mxu0 0.0
        %4591 = vmatpush1.xpose.msra.mxu0 0.0
        %4592 = vmatprep.subr.mxu0 0.0
        %4593 = vmatpush1.xpose.msra.mxu0 0.0
        %4594 = vmatprep.subr.mxu0 0.0
        %4595 = vmatpush1.xpose.msra.mxu0 0.0
        %4596 = vmatprep.subr.mxu0 0.0
        %4597 = vmatpush1.xpose.msra.mxu0 0.0
        %4598 = vmatprep.subr.mxu0 0.0
        %4599 = vmatpush1.xpose.msra.mxu0 0.0
        %4600 = vmatprep.subr.mxu0 0.0
        %4601 = vmatpush1.xpose.msra.mxu0 0.0
        %4602 = vmatprep.subr.mxu0 0.0
        %4603 = vmatpush1.xpose.msra.mxu0 0.0
        %4604 = vmatprep.subr.mxu0 0.0
        %4605 = vmatpush1.xpose.msra.mxu0 0.0
        %4606 = vmatprep.subr.mxu0 0.0
        %4607 = vmatpush1.xpose.msra.mxu0 %v4578
        %4608 = vmatprep.subr.mxu0 0.0
        %4609 = vmatpush1.xpose.msra.mxu0 %v4576
        %4610 = vmatprep.subr.mxu0 0.0
        %4611 = vmatpush1.xpose.msra.mxu0 %v4574
        %4612 = vmatprep.subr.mxu0 0.0
        %4613 = vmatpush2.xpose.msra.mxu0 0.0
        %4614 = vmatprep.subr.mxu0 0.0
        %4615 = vmatpush2.xpose.msra.mxu0 0.0
        %4616 = vmatprep.subr.mxu0 0.0
        %4617 = vmatpush2.xpose.msra.mxu0 0.0
        %4618 = vmatprep.subr.mxu0 0.0
        %4619 = vmatpush2.xpose.msra.mxu0 0.0
        %4620 = vmatprep.subr.mxu0 0.0
        %4621 = vmatpush2.xpose.msra.mxu0 0.0
        %4622 = vmatprep.subr.mxu0 0.0
        %4623 = vmatpush2.xpose.msra.mxu0 0.0
        %4624 = vmatprep.subr.mxu0 0.0
        %4625 = vmatpush2.xpose.msra.mxu0 0.0
        %4626 = vmatprep.subr.mxu0 0.0
        %4627 = vmatpush2.xpose.msra.mxu0 0.0
        %4628 = vmatprep.subr.mxu0 0.0
        %4629 = vmatpush2.xpose.msra.mxu0 0.0
        %4630 = vmatprep.subr.mxu0 0.0
        %4631 = vmatpush2.xpose.msra.mxu0 0.0
        %4632 = vmatprep.subr.mxu0 0.0
        %4633 = vmatpush2.xpose.msra.mxu0 0.0
        %4634 = vmatprep.subr.mxu0 0.0
        %4635 = vmatpush2.xpose.msra.mxu0 0.0
        %4636 = vmatprep.subr.mxu0 0.0
        %4637 = vmatpush2.xpose.msra.mxu0 0.0
        %4638 = vmatprep.subr.mxu0 0.0
        %4639 = vmatpush2.xpose.msra.mxu0 0.0
        %4640 = vmatprep.subr.mxu0 0.0
        %4641 = vmatpush2.xpose.msra.mxu0 0.0
        %4642 = vmatprep.subr.mxu0 0.0
        %4643 = vmatpush2.xpose.msra.mxu0 0.0
        %4644 = vmatprep.mubr.f32.mxu0 0.0
        %4645 = vmatmul.mubr.f32.gmra.mxu0 %v4566
        %v4646 = vpop.f32.mrf.mxu0
        %v4647 = vadd.f32 %v653, %v4646
        %v4648 = vpop.f32.mrf.mxu0
        %4649 = vmatprep.mubr.f32.mxu0 0.0
        %4650 = vmatmul.mubr.f32.gmra.mxu0 %v4569
        %v4651 = vpop.f32.mrf.mxu0
        %v4652 = vadd.f32 %v653, %v4651
        %v4653 = vpop.f32.mrf.mxu0
        %4654 = vmatprep.mubr.f32.mxu0 0.0
        %4655 = vmatmul.mubr.f32.gmra.mxu0 %v4572
        %v4656 = vpop.f32.mrf.mxu0
        %v4657 = vadd.f32 %v653, %v4656
        %v4658 = vpop.f32.mrf.mxu0
        %4659 = vdwg.mxu0
        %v4661 = vsel %vm917, %v4556, 0
        %v4664 = vsel %vm917, %v4557, 0
        %v4667 = vsel %vm917, %v4558, 0
        %v4669 = vsel %vm917, %v4500, 0
        %v4671 = vsel %vm917, %v4502, 0
        %v4673 = vsel %vm917, %v4504, 0
        %4675 = vmatprep.subr.mxu0 0.0
        %4676 = vmatpush1.xpose.msra.mxu0 0.0
        %4677 = vmatprep.subr.mxu0 0.0
        %4678 = vmatpush1.xpose.msra.mxu0 0.0
        %4679 = vmatprep.subr.mxu0 0.0
        %4680 = vmatpush1.xpose.msra.mxu0 0.0
        %4681 = vmatprep.subr.mxu0 0.0
        %4682 = vmatpush1.xpose.msra.mxu0 0.0
        %4683 = vmatprep.subr.mxu0 0.0
        %4684 = vmatpush1.xpose.msra.mxu0 0.0
        %4685 = vmatprep.subr.mxu0 0.0
        %4686 = vmatpush1.xpose.msra.mxu0 0.0
        %4687 = vmatprep.subr.mxu0 0.0
        %4688 = vmatpush1.xpose.msra.mxu0 0.0
        %4689 = vmatprep.subr.mxu0 0.0
        %4690 = vmatpush1.xpose.msra.mxu0 0.0
        %4691 = vmatprep.subr.mxu0 0.0
        %4692 = vmatpush1.xpose.msra.mxu0 0.0
        %4693 = vmatprep.subr.mxu0 0.0
        %4694 = vmatpush1.xpose.msra.mxu0 0.0
        %4695 = vmatprep.subr.mxu0 0.0
        %4696 = vmatpush1.xpose.msra.mxu0 0.0
        %4697 = vmatprep.subr.mxu0 0.0
        %4698 = vmatpush1.xpose.msra.mxu0 0.0
        %4699 = vmatprep.subr.mxu0 0.0
        %4700 = vmatpush1.xpose.msra.mxu0 0.0
        %4701 = vmatprep.subr.mxu0 0.0
        %4702 = vmatpush1.xpose.msra.mxu0 %v4673
        %4703 = vmatprep.subr.mxu0 0.0
        %4704 = vmatpush1.xpose.msra.mxu0 %v4671
        %4705 = vmatprep.subr.mxu0 0.0
        %4706 = vmatpush1.xpose.msra.mxu0 %v4669
        %4707 = vmatprep.subr.mxu0 0.0
        %4708 = vmatpush2.xpose.msra.mxu0 0.0
        %4709 = vmatprep.subr.mxu0 0.0
        %4710 = vmatpush2.xpose.msra.mxu0 0.0
        %4711 = vmatprep.subr.mxu0 0.0
        %4712 = vmatpush2.xpose.msra.mxu0 0.0
        %4713 = vmatprep.subr.mxu0 0.0
        %4714 = vmatpush2.xpose.msra.mxu0 0.0
        %4715 = vmatprep.subr.mxu0 0.0
        %4716 = vmatpush2.xpose.msra.mxu0 0.0
        %4717 = vmatprep.subr.mxu0 0.0
        %4718 = vmatpush2.xpose.msra.mxu0 0.0
        %4719 = vmatprep.subr.mxu0 0.0
        %4720 = vmatpush2.xpose.msra.mxu0 0.0
        %4721 = vmatprep.subr.mxu0 0.0
        %4722 = vmatpush2.xpose.msra.mxu0 0.0
        %4723 = vmatprep.subr.mxu0 0.0
        %4724 = vmatpush2.xpose.msra.mxu0 0.0
        %4725 = vmatprep.subr.mxu0 0.0
        %4726 = vmatpush2.xpose.msra.mxu0 0.0
        %4727 = vmatprep.subr.mxu0 0.0
        %4728 = vmatpush2.xpose.msra.mxu0 0.0
        %4729 = vmatprep.subr.mxu0 0.0
        %4730 = vmatpush2.xpose.msra.mxu0 0.0
        %4731 = vmatprep.subr.mxu0 0.0
        %4732 = vmatpush2.xpose.msra.mxu0 0.0
        %4733 = vmatprep.subr.mxu0 0.0
        %4734 = vmatpush2.xpose.msra.mxu0 0.0
        %4735 = vmatprep.subr.mxu0 0.0
        %4736 = vmatpush2.xpose.msra.mxu0 0.0
        %4737 = vmatprep.subr.mxu0 0.0
        %4738 = vmatpush2.xpose.msra.mxu0 0.0
        %4739 = vmatprep.mubr.f32.mxu0 0.0
        %4740 = vmatmul.mubr.f32.gmra.mxu0 %v4661
        %v4741 = vpop.f32.mrf.mxu0
        %v4742 = vadd.f32 %v653, %v4741
        %v4743 = vpop.f32.mrf.mxu0
        %4744 = vmatprep.mubr.f32.mxu0 0.0
        %4745 = vmatmul.mubr.f32.gmra.mxu0 %v4664
        %v4746 = vpop.f32.mrf.mxu0
        %v4747 = vadd.f32 %v653, %v4746
        %v4748 = vpop.f32.mrf.mxu0
        %4749 = vmatprep.mubr.f32.mxu0 0.0
        %4750 = vmatmul.mubr.f32.gmra.mxu0 %v4667
        %v4751 = vpop.f32.mrf.mxu0
        %v4752 = vadd.f32 %v653, %v4751
        %v4753 = vpop.f32.mrf.mxu0
        %4754 = vdwg.mxu0
        %v4756 = vsel %vm917, %v4559, 0
        %v4759 = vsel %vm917, %v4560, 0
        %v4762 = vsel %vm917, %v4561, 0
        %v4764 = vsel %vm917, %v4506, 0
        %v4766 = vsel %vm917, %v4508, 0
        %v4768 = vsel %vm917, %v4510, 0
        %4770 = vmatprep.subr.mxu0 0.0
        %4771 = vmatpush1.xpose.msra.mxu0 0.0
        %4772 = vmatprep.subr.mxu0 0.0
        %4773 = vmatpush1.xpose.msra.mxu0 0.0
        %4774 = vmatprep.subr.mxu0 0.0
        %4775 = vmatpush1.xpose.msra.mxu0 0.0
        %4776 = vmatprep.subr.mxu0 0.0
        %4777 = vmatpush1.xpose.msra.mxu0 0.0
        %4778 = vmatprep.subr.mxu0 0.0
        %4779 = vmatpush1.xpose.msra.mxu0 0.0
        %4780 = vmatprep.subr.mxu0 0.0
        %4781 = vmatpush1.xpose.msra.mxu0 0.0
        %4782 = vmatprep.subr.mxu0 0.0
        %4783 = vmatpush1.xpose.msra.mxu0 0.0
        %4784 = vmatprep.subr.mxu0 0.0
        %4785 = vmatpush1.xpose.msra.mxu0 0.0
        %4786 = vmatprep.subr.mxu0 0.0
        %4787 = vmatpush1.xpose.msra.mxu0 0.0
        %4788 = vmatprep.subr.mxu0 0.0
        %4789 = vmatpush1.xpose.msra.mxu0 0.0
        %4790 = vmatprep.subr.mxu0 0.0
        %4791 = vmatpush1.xpose.msra.mxu0 0.0
        %4792 = vmatprep.subr.mxu0 0.0
        %4793 = vmatpush1.xpose.msra.mxu0 0.0
        %4794 = vmatprep.subr.mxu0 0.0
        %4795 = vmatpush1.xpose.msra.mxu0 0.0
        %4796 = vmatprep.subr.mxu0 0.0
        %4797 = vmatpush1.xpose.msra.mxu0 %v4768
        %4798 = vmatprep.subr.mxu0 0.0
        %4799 = vmatpush1.xpose.msra.mxu0 %v4766
        %4800 = vmatprep.subr.mxu0 0.0
        %4801 = vmatpush1.xpose.msra.mxu0 %v4764
        %4802 = vmatprep.subr.mxu0 0.0
        %4803 = vmatpush2.xpose.msra.mxu0 0.0
        %4804 = vmatprep.subr.mxu0 0.0
        %4805 = vmatpush2.xpose.msra.mxu0 0.0
        %4806 = vmatprep.subr.mxu0 0.0
        %4807 = vmatpush2.xpose.msra.mxu0 0.0
        %4808 = vmatprep.subr.mxu0 0.0
        %4809 = vmatpush2.xpose.msra.mxu0 0.0
        %4810 = vmatprep.subr.mxu0 0.0
        %4811 = vmatpush2.xpose.msra.mxu0 0.0
        %4812 = vmatprep.subr.mxu0 0.0
        %4813 = vmatpush2.xpose.msra.mxu0 0.0
        %4814 = vmatprep.subr.mxu0 0.0
        %4815 = vmatpush2.xpose.msra.mxu0 0.0
        %4816 = vmatprep.subr.mxu0 0.0
        %4817 = vmatpush2.xpose.msra.mxu0 0.0
        %4818 = vmatprep.subr.mxu0 0.0
        %4819 = vmatpush2.xpose.msra.mxu0 0.0
        %4820 = vmatprep.subr.mxu0 0.0
        %4821 = vmatpush2.xpose.msra.mxu0 0.0
        %4822 = vmatprep.subr.mxu0 0.0
        %4823 = vmatpush2.xpose.msra.mxu0 0.0
        %4824 = vmatprep.subr.mxu0 0.0
        %4825 = vmatpush2.xpose.msra.mxu0 0.0
        %4826 = vmatprep.subr.mxu0 0.0
        %4827 = vmatpush2.xpose.msra.mxu0 0.0
        %4828 = vmatprep.subr.mxu0 0.0
        %4829 = vmatpush2.xpose.msra.mxu0 0.0
        %4830 = vmatprep.subr.mxu0 0.0
        %4831 = vmatpush2.xpose.msra.mxu0 0.0
        %4832 = vmatprep.subr.mxu0 0.0
        %4833 = vmatpush2.xpose.msra.mxu0 0.0
        %4834 = vmatprep.mubr.f32.mxu0 0.0
        %4835 = vmatmul.mubr.f32.gmra.mxu0 %v4756
        %v4836 = vpop.f32.mrf.mxu0
        %v4837 = vadd.f32 %v653, %v4836
        %v4838 = vpop.f32.mrf.mxu0
        %4839 = vmatprep.mubr.f32.mxu0 0.0
        %4840 = vmatmul.mubr.f32.gmra.mxu0 %v4759
        %v4841 = vpop.f32.mrf.mxu0
        %v4842 = vadd.f32 %v653, %v4841
        %v4843 = vpop.f32.mrf.mxu0
        %4844 = vmatprep.mubr.f32.mxu0 0.0
        %4845 = vmatmul.mubr.f32.gmra.mxu0 %v4762
        %v4846 = vpop.f32.mrf.mxu0
        %v4847 = vadd.f32 %v653, %v4846
        %v4848 = vpop.f32.mrf.mxu0
        %4849 = vdwg.mxu0
        %v4851 = vsel %vm917, %v4562, 0
        %v4854 = vsel %vm917, %v4563, 0
        %v4857 = vsel %vm917, %v4564, 0
        %v4859 = vsel %vm917, %v4512, 0
        %v4861 = vsel %vm917, %v4514, 0
        %v4863 = vsel %vm917, %v4516, 0
        %4865 = vmatprep.subr.mxu0 0.0
        %4866 = vmatpush1.xpose.msra.mxu0 0.0
        %4867 = vmatprep.subr.mxu0 0.0
        %4868 = vmatpush1.xpose.msra.mxu0 0.0
        %4869 = vmatprep.subr.mxu0 0.0
        %4870 = vmatpush1.xpose.msra.mxu0 0.0
        %4871 = vmatprep.subr.mxu0 0.0
        %4872 = vmatpush1.xpose.msra.mxu0 0.0
        %4873 = vmatprep.subr.mxu0 0.0
        %4874 = vmatpush1.xpose.msra.mxu0 0.0
        %4875 = vmatprep.subr.mxu0 0.0
        %4876 = vmatpush1.xpose.msra.mxu0 0.0
        %4877 = vmatprep.subr.mxu0 0.0
        %4878 = vmatpush1.xpose.msra.mxu0 0.0
        %4879 = vmatprep.subr.mxu0 0.0
        %4880 = vmatpush1.xpose.msra.mxu0 0.0
        %4881 = vmatprep.subr.mxu0 0.0
        %4882 = vmatpush1.xpose.msra.mxu0 0.0
        %4883 = vmatprep.subr.mxu0 0.0
        %4884 = vmatpush1.xpose.msra.mxu0 0.0
        %4885 = vmatprep.subr.mxu0 0.0
        %4886 = vmatpush1.xpose.msra.mxu0 0.0
        %4887 = vmatprep.subr.mxu0 0.0
        %4888 = vmatpush1.xpose.msra.mxu0 0.0
        %4889 = vmatprep.subr.mxu0 0.0
        %4890 = vmatpush1.xpose.msra.mxu0 0.0
        %4891 = vmatprep.subr.mxu0 0.0
        %4892 = vmatpush1.xpose.msra.mxu0 %v4863
        %4893 = vmatprep.subr.mxu0 0.0
        %4894 = vmatpush1.xpose.msra.mxu0 %v4861
        %4895 = vmatprep.subr.mxu0 0.0
        %4896 = vmatpush1.xpose.msra.mxu0 %v4859
        %4897 = vmatprep.subr.mxu0 0.0
        %4898 = vmatpush2.xpose.msra.mxu0 0.0
        %4899 = vmatprep.subr.mxu0 0.0
        %4900 = vmatpush2.xpose.msra.mxu0 0.0
        %4901 = vmatprep.subr.mxu0 0.0
        %4902 = vmatpush2.xpose.msra.mxu0 0.0
        %4903 = vmatprep.subr.mxu0 0.0
        %4904 = vmatpush2.xpose.msra.mxu0 0.0
        %4905 = vmatprep.subr.mxu0 0.0
        %4906 = vmatpush2.xpose.msra.mxu0 0.0
        %4907 = vmatprep.subr.mxu0 0.0
        %4908 = vmatpush2.xpose.msra.mxu0 0.0
        %4909 = vmatprep.subr.mxu0 0.0
        %4910 = vmatpush2.xpose.msra.mxu0 0.0
        %4911 = vmatprep.subr.mxu0 0.0
        %4912 = vmatpush2.xpose.msra.mxu0 0.0
        %4913 = vmatprep.subr.mxu0 0.0
        %4914 = vmatpush2.xpose.msra.mxu0 0.0
        %4915 = vmatprep.subr.mxu0 0.0
        %4916 = vmatpush2.xpose.msra.mxu0 0.0
        %4917 = vmatprep.subr.mxu0 0.0
        %4918 = vmatpush2.xpose.msra.mxu0 0.0
        %4919 = vmatprep.subr.mxu0 0.0
        %4920 = vmatpush2.xpose.msra.mxu0 0.0
        %4921 = vmatprep.subr.mxu0 0.0
        %4922 = vmatpush2.xpose.msra.mxu0 0.0
        %4923 = vmatprep.subr.mxu0 0.0
        %4924 = vmatpush2.xpose.msra.mxu0 0.0
        %4925 = vmatprep.subr.mxu0 0.0
        %4926 = vmatpush2.xpose.msra.mxu0 0.0
        %4927 = vmatprep.subr.mxu0 0.0
        %4928 = vmatpush2.xpose.msra.mxu0 0.0
        %4929 = vmatprep.mubr.f32.mxu0 0.0
        %4930 = vmatmul.mubr.f32.gmra.mxu0 %v4851
        %v4931 = vpop.f32.mrf.mxu0
        %v4932 = vadd.f32 %v653, %v4931
        %v4933 = vpop.f32.mrf.mxu0
        %4934 = vmatprep.mubr.f32.mxu0 0.0
        %4935 = vmatmul.mubr.f32.gmra.mxu0 %v4854
        %v4936 = vpop.f32.mrf.mxu0
        %v4937 = vadd.f32 %v653, %v4936
        %v4938 = vpop.f32.mrf.mxu0
        %4939 = vmatprep.mubr.f32.mxu0 0.0
        %4940 = vmatmul.mubr.f32.gmra.mxu0 %v4857
        %v4941 = vpop.f32.mrf.mxu0
        %v4942 = vadd.f32 %v653, %v4941
        %v4943 = vpop.f32.mrf.mxu0
        %4944 = vdwg.mxu0
        %v4945 = vsel %vm1298, %v4647, -inf
        %4946 = vmax.xlane.f32.xlu0 %v4945
        %v4947 = vpop.xlane.xlu0 %4946
        %v4948 = vsel %vm1298, %v4652, -inf
        %4949 = vmax.xlane.f32.xlu0 %v4948
        %v4950 = vpop.xlane.xlu0 %4949
        %v4951 = vsel %vm1298, %v4657, -inf
        %4952 = vmax.xlane.f32.xlu0 %v4951
        %v4953 = vpop.xlane.xlu0 %4952
        %v4954 = vsel %vm1298, %v4742, -inf
        %4955 = vmax.xlane.f32.xlu0 %v4954
        %v4956 = vpop.xlane.xlu0 %4955
        %v4957 = vsel %vm1298, %v4747, -inf
        %4958 = vmax.xlane.f32.xlu0 %v4957
        %v4959 = vpop.xlane.xlu0 %4958
        %v4960 = vsel %vm1298, %v4752, -inf
        %4961 = vmax.xlane.f32.xlu0 %v4960
        %v4962 = vpop.xlane.xlu0 %4961
        %v4963 = vsel %vm1298, %v4837, -inf
        %4964 = vmax.xlane.f32.xlu0 %v4963
        %v4965 = vpop.xlane.xlu0 %4964
        %v4966 = vsel %vm1298, %v4842, -inf
        %4967 = vmax.xlane.f32.xlu0 %v4966
        %v4968 = vpop.xlane.xlu0 %4967
        %v4969 = vsel %vm1298, %v4847, -inf
        %4970 = vmax.xlane.f32.xlu0 %v4969
        %v4971 = vpop.xlane.xlu0 %4970
        %v4972 = vsel %vm1298, %v4932, -inf
        %4973 = vmax.xlane.f32.xlu0 %v4972
        %v4974 = vpop.xlane.xlu0 %4973
        %v4975 = vsel %vm1298, %v4937, -inf
        %4976 = vmax.xlane.f32.xlu0 %v4975
        %v4977 = vpop.xlane.xlu0 %4976
        %v4978 = vsel %vm1298, %v4942, -inf
        %4979 = vmax.xlane.f32.xlu0 %v4978
        %v4980 = vpop.xlane.xlu0 %4979
        %v4981 = vsub.f32 %v4647, %v4947
        %v4982 = vsub.f32 %v4652, %v4950
        %v4983 = vsub.f32 %v4657, %v4953
        %v4984 = vsub.f32 %v4742, %v4956
        %v4985 = vsub.f32 %v4747, %v4959
        %v4986 = vsub.f32 %v4752, %v4962
        %v4987 = vsub.f32 %v4837, %v4965
        %v4988 = vsub.f32 %v4842, %v4968
        %v4989 = vsub.f32 %v4847, %v4971
        %v4990 = vsub.f32 %v4932, %v4974
        %v4991 = vsub.f32 %v4937, %v4977
        %v4992 = vsub.f32 %v4942, %v4980
        %v4993 = vmul.f32 %v4981, 1.442695
        %v4994 = vpow.pop %v4993
        %v4995 = vmul.f32 %v4982, 1.442695
        %v4996 = vpow.pop %v4995
        %v4997 = vmul.f32 %v4983, 1.442695
        %v4998 = vpow.pop %v4997
        %v4999 = vmul.f32 %v4984, 1.442695
        %v5000 = vpow.pop %v4999
        %v5001 = vmul.f32 %v4985, 1.442695
        %v5002 = vpow.pop %v5001
        %v5003 = vmul.f32 %v4986, 1.442695
        %v5004 = vpow.pop %v5003
        %v5005 = vmul.f32 %v4987, 1.442695
        %v5006 = vpow.pop %v5005
        %v5007 = vmul.f32 %v4988, 1.442695
        %v5008 = vpow.pop %v5007
        %v5009 = vmul.f32 %v4989, 1.442695
        %v5010 = vpow.pop %v5009
        %v5011 = vmul.f32 %v4990, 1.442695
        %v5012 = vpow.pop %v5011
        %v5013 = vmul.f32 %v4991, 1.442695
        %v5014 = vpow.pop %v5013
        %v5015 = vmul.f32 %v4992, 1.442695
        %v5016 = vpow.pop %v5015
        %v5017 = vsel %vm1298, %v4994, 0.0
        %5018 = vadd.xlane.f32.xlu0 %v5017
        %v5019 = vpop.xlane.xlu0 %5018
        %v5020 = vsel %vm1298, %v4996, 0.0
        %5021 = vadd.xlane.f32.xlu0 %v5020
        %v5022 = vpop.xlane.xlu0 %5021
        %v5023 = vsel %vm1298, %v4998, 0.0
        %5024 = vadd.xlane.f32.xlu0 %v5023
        %v5025 = vpop.xlane.xlu0 %5024
        %v5026 = vsel %vm1298, %v5000, 0.0
        %5027 = vadd.xlane.f32.xlu0 %v5026
        %v5028 = vpop.xlane.xlu0 %5027
        %v5029 = vsel %vm1298, %v5002, 0.0
        %5030 = vadd.xlane.f32.xlu0 %v5029
        %v5031 = vpop.xlane.xlu0 %5030
        %v5032 = vsel %vm1298, %v5004, 0.0
        %5033 = vadd.xlane.f32.xlu0 %v5032
        %v5034 = vpop.xlane.xlu0 %5033
        %v5035 = vsel %vm1298, %v5006, 0.0
        %5036 = vadd.xlane.f32.xlu0 %v5035
        %v5037 = vpop.xlane.xlu0 %5036
        %v5038 = vsel %vm1298, %v5008, 0.0
        %5039 = vadd.xlane.f32.xlu0 %v5038
        %v5040 = vpop.xlane.xlu0 %5039
        %v5041 = vsel %vm1298, %v5010, 0.0
        %5042 = vadd.xlane.f32.xlu0 %v5041
        %v5043 = vpop.xlane.xlu0 %5042
        %v5044 = vsel %vm1298, %v5012, 0.0
        %5045 = vadd.xlane.f32.xlu0 %v5044
        %v5046 = vpop.xlane.xlu0 %5045
        %v5047 = vsel %vm1298, %v5014, 0.0
        %5048 = vadd.xlane.f32.xlu0 %v5047
        %v5049 = vpop.xlane.xlu0 %5048
        %v5050 = vsel %vm1298, %v5016, 0.0
        %5051 = vadd.xlane.f32.xlu0 %v5050
        %v5052 = vpop.xlane.xlu0 %5051
        %v5053 = vrcp.pop %v5019
        %v5054 = vrcp.pop %v5022
        %v5055 = vrcp.pop %v5025
        %v5056 = vrcp.pop %v5028
        %v5057 = vrcp.pop %v5031
        %v5058 = vrcp.pop %v5034
        %v5059 = vrcp.pop %v5037
        %v5060 = vrcp.pop %v5040
        %v5061 = vrcp.pop %v5043
        %v5062 = vrcp.pop %v5046
        %v5063 = vrcp.pop %v5049
        %v5064 = vrcp.pop %v5052
        %v5065 = vmul.f32 %v4994, %v5053
        %v5066 = vmul.f32 %v4996, %v5054
        %v5067 = vmul.f32 %v4998, %v5055
        %v5068 = vmul.f32 %v5000, %v5056
        %v5069 = vmul.f32 %v5002, %v5057
        %v5070 = vmul.f32 %v5004, %v5058
        %v5071 = vmul.f32 %v5006, %v5059
        %v5072 = vmul.f32 %v5008, %v5060
        %v5073 = vmul.f32 %v5010, %v5061
        %v5074 = vmul.f32 %v5012, %v5062
        %v5075 = vmul.f32 %v5014, %v5063
        %v5076 = vmul.f32 %v5016, %v5064
        %v5078 = vsel %vm1298, %v5065, 0
        %v5081 = vsel %vm1298, %v5066, 0
        %v5084 = vsel %vm1298, %v5067, 0
        %5086 = vmatprep.subr.mxu0 0.0
        %5087 = vmatpush1.msra.mxu0 0.0
        %5088 = vmatprep.subr.mxu0 0.0
        %5089 = vmatpush1.msra.mxu0 0.0
        %5090 = vmatprep.subr.mxu0 0.0
        %5091 = vmatpush1.msra.mxu0 0.0
        %5092 = vmatprep.subr.mxu0 0.0
        %5093 = vmatpush1.msra.mxu0 0.0
        %5094 = vmatprep.subr.mxu0 0.0
        %5095 = vmatpush1.msra.mxu0 0.0
        %5096 = vmatprep.subr.mxu0 0.0
        %5097 = vmatpush1.msra.mxu0 0.0
        %5098 = vmatprep.subr.mxu0 0.0
        %5099 = vmatpush1.msra.mxu0 0.0
        %5100 = vmatprep.subr.mxu0 0.0
        %5101 = vmatpush1.msra.mxu0 0.0
        %5102 = vmatprep.subr.mxu0 0.0
        %5103 = vmatpush1.msra.mxu0 0.0
        %5104 = vmatprep.subr.mxu0 0.0
        %5105 = vmatpush1.msra.mxu0 0.0
        %5106 = vmatprep.subr.mxu0 0.0
        %5107 = vmatpush1.msra.mxu0 0.0
        %5108 = vmatprep.subr.mxu0 0.0
        %5109 = vmatpush1.msra.mxu0 0.0
        %5110 = vmatprep.subr.mxu0 0.0
        %5111 = vmatpush1.msra.mxu0 0.0
        %5112 = vmatprep.subr.mxu0 0.0
        %5113 = vmatpush1.msra.mxu0 %v4522
        %5114 = vmatprep.subr.mxu0 0.0
        %5115 = vmatpush1.msra.mxu0 %v4520
        %5116 = vmatprep.subr.mxu0 0.0
        %5117 = vmatpush1.msra.mxu0 %v4518
        %5118 = vmatprep.subr.mxu0 0.0
        %5119 = vmatpush2.msra.mxu0 0.0
        %5120 = vmatprep.subr.mxu0 0.0
        %5121 = vmatpush2.msra.mxu0 0.0
        %5122 = vmatprep.subr.mxu0 0.0
        %5123 = vmatpush2.msra.mxu0 0.0
        %5124 = vmatprep.subr.mxu0 0.0
        %5125 = vmatpush2.msra.mxu0 0.0
        %5126 = vmatprep.subr.mxu0 0.0
        %5127 = vmatpush2.msra.mxu0 0.0
        %5128 = vmatprep.subr.mxu0 0.0
        %5129 = vmatpush2.msra.mxu0 0.0
        %5130 = vmatprep.subr.mxu0 0.0
        %5131 = vmatpush2.msra.mxu0 0.0
        %5132 = vmatprep.subr.mxu0 0.0
        %5133 = vmatpush2.msra.mxu0 0.0
        %5134 = vmatprep.subr.mxu0 0.0
        %5135 = vmatpush2.msra.mxu0 0.0
        %5136 = vmatprep.subr.mxu0 0.0
        %5137 = vmatpush2.msra.mxu0 0.0
        %5138 = vmatprep.subr.mxu0 0.0
        %5139 = vmatpush2.msra.mxu0 0.0
        %5140 = vmatprep.subr.mxu0 0.0
        %5141 = vmatpush2.msra.mxu0 0.0
        %5142 = vmatprep.subr.mxu0 0.0
        %5143 = vmatpush2.msra.mxu0 0.0
        %5144 = vmatprep.subr.mxu0 0.0
        %5145 = vmatpush2.msra.mxu0 0.0
        %5146 = vmatprep.subr.mxu0 0.0
        %5147 = vmatpush2.msra.mxu0 0.0
        %5148 = vmatprep.subr.mxu0 0.0
        %5149 = vmatpush2.msra.mxu0 0.0
        %5150 = vmatprep.mubr.f32.mxu0 0.0
        %5151 = vmatmul.mubr.f32.gmra.mxu0 %v5078
        %v5152 = vpop.f32.mrf.mxu0
        %v5153 = vadd.f32 0.0, %v5152
        %v5154 = vpop.f32.mrf.mxu0
        %5155 = vmatprep.mubr.f32.mxu0 0.0
        %5156 = vmatmul.mubr.f32.gmra.mxu0 %v5081
        %v5157 = vpop.f32.mrf.mxu0
        %v5158 = vadd.f32 0.0, %v5157
        %v5159 = vpop.f32.mrf.mxu0
        %5160 = vmatprep.mubr.f32.mxu0 0.0
        %5161 = vmatmul.mubr.f32.gmra.mxu0 %v5084
        %v5162 = vpop.f32.mrf.mxu0
        %v5163 = vadd.f32 0.0, %v5162
        %v5164 = vpop.f32.mrf.mxu0
        %5165 = vdwg.mxu0
        %v5167 = vsel %vm1298, %v5068, 0
        %v5170 = vsel %vm1298, %v5069, 0
        %v5173 = vsel %vm1298, %v5070, 0
        %5175 = vmatprep.subr.mxu0 0.0
        %5176 = vmatpush1.msra.mxu0 0.0
        %5177 = vmatprep.subr.mxu0 0.0
        %5178 = vmatpush1.msra.mxu0 0.0
        %5179 = vmatprep.subr.mxu0 0.0
        %5180 = vmatpush1.msra.mxu0 0.0
        %5181 = vmatprep.subr.mxu0 0.0
        %5182 = vmatpush1.msra.mxu0 0.0
        %5183 = vmatprep.subr.mxu0 0.0
        %5184 = vmatpush1.msra.mxu0 0.0
        %5185 = vmatprep.subr.mxu0 0.0
        %5186 = vmatpush1.msra.mxu0 0.0
        %5187 = vmatprep.subr.mxu0 0.0
        %5188 = vmatpush1.msra.mxu0 0.0
        %5189 = vmatprep.subr.mxu0 0.0
        %5190 = vmatpush1.msra.mxu0 0.0
        %5191 = vmatprep.subr.mxu0 0.0
        %5192 = vmatpush1.msra.mxu0 0.0
        %5193 = vmatprep.subr.mxu0 0.0
        %5194 = vmatpush1.msra.mxu0 0.0
        %5195 = vmatprep.subr.mxu0 0.0
        %5196 = vmatpush1.msra.mxu0 0.0
        %5197 = vmatprep.subr.mxu0 0.0
        %5198 = vmatpush1.msra.mxu0 0.0
        %5199 = vmatprep.subr.mxu0 0.0
        %5200 = vmatpush1.msra.mxu0 0.0
        %5201 = vmatprep.subr.mxu0 0.0
        %5202 = vmatpush1.msra.mxu0 %v4531
        %5203 = vmatprep.subr.mxu0 0.0
        %5204 = vmatpush1.msra.mxu0 %v4529
        %5205 = vmatprep.subr.mxu0 0.0
        %5206 = vmatpush1.msra.mxu0 %v4527
        %5207 = vmatprep.subr.mxu0 0.0
        %5208 = vmatpush2.msra.mxu0 0.0
        %5209 = vmatprep.subr.mxu0 0.0
        %5210 = vmatpush2.msra.mxu0 0.0
        %5211 = vmatprep.subr.mxu0 0.0
        %5212 = vmatpush2.msra.mxu0 0.0
        %5213 = vmatprep.subr.mxu0 0.0
        %5214 = vmatpush2.msra.mxu0 0.0
        %5215 = vmatprep.subr.mxu0 0.0
        %5216 = vmatpush2.msra.mxu0 0.0
        %5217 = vmatprep.subr.mxu0 0.0
        %5218 = vmatpush2.msra.mxu0 0.0
        %5219 = vmatprep.subr.mxu0 0.0
        %5220 = vmatpush2.msra.mxu0 0.0
        %5221 = vmatprep.subr.mxu0 0.0
        %5222 = vmatpush2.msra.mxu0 0.0
        %5223 = vmatprep.subr.mxu0 0.0
        %5224 = vmatpush2.msra.mxu0 0.0
        %5225 = vmatprep.subr.mxu0 0.0
        %5226 = vmatpush2.msra.mxu0 0.0
        %5227 = vmatprep.subr.mxu0 0.0
        %5228 = vmatpush2.msra.mxu0 0.0
        %5229 = vmatprep.subr.mxu0 0.0
        %5230 = vmatpush2.msra.mxu0 0.0
        %5231 = vmatprep.subr.mxu0 0.0
        %5232 = vmatpush2.msra.mxu0 0.0
        %5233 = vmatprep.subr.mxu0 0.0
        %5234 = vmatpush2.msra.mxu0 0.0
        %5235 = vmatprep.subr.mxu0 0.0
        %5236 = vmatpush2.msra.mxu0 0.0
        %5237 = vmatprep.subr.mxu0 0.0
        %5238 = vmatpush2.msra.mxu0 0.0
        %5239 = vmatprep.mubr.f32.mxu0 0.0
        %5240 = vmatmul.mubr.f32.gmra.mxu0 %v5167
        %v5241 = vpop.f32.mrf.mxu0
        %v5242 = vadd.f32 0.0, %v5241
        %v5243 = vpop.f32.mrf.mxu0
        %5244 = vmatprep.mubr.f32.mxu0 0.0
        %5245 = vmatmul.mubr.f32.gmra.mxu0 %v5170
        %v5246 = vpop.f32.mrf.mxu0
        %v5247 = vadd.f32 0.0, %v5246
        %v5248 = vpop.f32.mrf.mxu0
        %5249 = vmatprep.mubr.f32.mxu0 0.0
        %5250 = vmatmul.mubr.f32.gmra.mxu0 %v5173
        %v5251 = vpop.f32.mrf.mxu0
        %v5252 = vadd.f32 0.0, %v5251
        %v5253 = vpop.f32.mrf.mxu0
        %5254 = vdwg.mxu0
        %v5256 = vsel %vm1298, %v5071, 0
        %v5259 = vsel %vm1298, %v5072, 0
        %v5262 = vsel %vm1298, %v5073, 0
        %5264 = vmatprep.subr.mxu0 0.0
        %5265 = vmatpush1.msra.mxu0 0.0
        %5266 = vmatprep.subr.mxu0 0.0
        %5267 = vmatpush1.msra.mxu0 0.0
        %5268 = vmatprep.subr.mxu0 0.0
        %5269 = vmatpush1.msra.mxu0 0.0
        %5270 = vmatprep.subr.mxu0 0.0
        %5271 = vmatpush1.msra.mxu0 0.0
        %5272 = vmatprep.subr.mxu0 0.0
        %5273 = vmatpush1.msra.mxu0 0.0
        %5274 = vmatprep.subr.mxu0 0.0
        %5275 = vmatpush1.msra.mxu0 0.0
        %5276 = vmatprep.subr.mxu0 0.0
        %5277 = vmatpush1.msra.mxu0 0.0
        %5278 = vmatprep.subr.mxu0 0.0
        %5279 = vmatpush1.msra.mxu0 0.0
        %5280 = vmatprep.subr.mxu0 0.0
        %5281 = vmatpush1.msra.mxu0 0.0
        %5282 = vmatprep.subr.mxu0 0.0
        %5283 = vmatpush1.msra.mxu0 0.0
        %5284 = vmatprep.subr.mxu0 0.0
        %5285 = vmatpush1.msra.mxu0 0.0
        %5286 = vmatprep.subr.mxu0 0.0
        %5287 = vmatpush1.msra.mxu0 0.0
        %5288 = vmatprep.subr.mxu0 0.0
        %5289 = vmatpush1.msra.mxu0 0.0
        %5290 = vmatprep.subr.mxu0 0.0
        %5291 = vmatpush1.msra.mxu0 %v4540
        %5292 = vmatprep.subr.mxu0 0.0
        %5293 = vmatpush1.msra.mxu0 %v4538
        %5294 = vmatprep.subr.mxu0 0.0
        %5295 = vmatpush1.msra.mxu0 %v4536
        %5296 = vmatprep.subr.mxu0 0.0
        %5297 = vmatpush2.msra.mxu0 0.0
        %5298 = vmatprep.subr.mxu0 0.0
        %5299 = vmatpush2.msra.mxu0 0.0
        %5300 = vmatprep.subr.mxu0 0.0
        %5301 = vmatpush2.msra.mxu0 0.0
        %5302 = vmatprep.subr.mxu0 0.0
        %5303 = vmatpush2.msra.mxu0 0.0
        %5304 = vmatprep.subr.mxu0 0.0
        %5305 = vmatpush2.msra.mxu0 0.0
        %5306 = vmatprep.subr.mxu0 0.0
        %5307 = vmatpush2.msra.mxu0 0.0
        %5308 = vmatprep.subr.mxu0 0.0
        %5309 = vmatpush2.msra.mxu0 0.0
        %5310 = vmatprep.subr.mxu0 0.0
        %5311 = vmatpush2.msra.mxu0 0.0
        %5312 = vmatprep.subr.mxu0 0.0
        %5313 = vmatpush2.msra.mxu0 0.0
        %5314 = vmatprep.subr.mxu0 0.0
        %5315 = vmatpush2.msra.mxu0 0.0
        %5316 = vmatprep.subr.mxu0 0.0
        %5317 = vmatpush2.msra.mxu0 0.0
        %5318 = vmatprep.subr.mxu0 0.0
        %5319 = vmatpush2.msra.mxu0 0.0
        %5320 = vmatprep.subr.mxu0 0.0
        %5321 = vmatpush2.msra.mxu0 0.0
        %5322 = vmatprep.subr.mxu0 0.0
        %5323 = vmatpush2.msra.mxu0 0.0
        %5324 = vmatprep.subr.mxu0 0.0
        %5325 = vmatpush2.msra.mxu0 0.0
        %5326 = vmatprep.subr.mxu0 0.0
        %5327 = vmatpush2.msra.mxu0 0.0
        %5328 = vmatprep.mubr.f32.mxu0 0.0
        %5329 = vmatmul.mubr.f32.gmra.mxu0 %v5256
        %v5330 = vpop.f32.mrf.mxu0
        %v5331 = vadd.f32 0.0, %v5330
        %v5332 = vpop.f32.mrf.mxu0
        %5333 = vmatprep.mubr.f32.mxu0 0.0
        %5334 = vmatmul.mubr.f32.gmra.mxu0 %v5259
        %v5335 = vpop.f32.mrf.mxu0
        %v5336 = vadd.f32 0.0, %v5335
        %v5337 = vpop.f32.mrf.mxu0
        %5338 = vmatprep.mubr.f32.mxu0 0.0
        %5339 = vmatmul.mubr.f32.gmra.mxu0 %v5262
        %v5340 = vpop.f32.mrf.mxu0
        %v5341 = vadd.f32 0.0, %v5340
        %v5342 = vpop.f32.mrf.mxu0
        %5343 = vdwg.mxu0
        %v5345 = vsel %vm1298, %v5074, 0
        %v5348 = vsel %vm1298, %v5075, 0
        %v5351 = vsel %vm1298, %v5076, 0
        %5353 = vmatprep.subr.mxu0 0.0
        %5354 = vmatpush1.msra.mxu0 0.0
        %5355 = vmatprep.subr.mxu0 0.0
        %5356 = vmatpush1.msra.mxu0 0.0
        %5357 = vmatprep.subr.mxu0 0.0
        %5358 = vmatpush1.msra.mxu0 0.0
        %5359 = vmatprep.subr.mxu0 0.0
        %5360 = vmatpush1.msra.mxu0 0.0
        %5361 = vmatprep.subr.mxu0 0.0
        %5362 = vmatpush1.msra.mxu0 0.0
        %5363 = vmatprep.subr.mxu0 0.0
        %5364 = vmatpush1.msra.mxu0 0.0
        %5365 = vmatprep.subr.mxu0 0.0
        %5366 = vmatpush1.msra.mxu0 0.0
        %5367 = vmatprep.subr.mxu0 0.0
        %5368 = vmatpush1.msra.mxu0 0.0
        %5369 = vmatprep.subr.mxu0 0.0
        %5370 = vmatpush1.msra.mxu0 0.0
        %5371 = vmatprep.subr.mxu0 0.0
        %5372 = vmatpush1.msra.mxu0 0.0
        %5373 = vmatprep.subr.mxu0 0.0
        %5374 = vmatpush1.msra.mxu0 0.0
        %5375 = vmatprep.subr.mxu0 0.0
        %5376 = vmatpush1.msra.mxu0 0.0
        %5377 = vmatprep.subr.mxu0 0.0
        %5378 = vmatpush1.msra.mxu0 0.0
        %5379 = vmatprep.subr.mxu0 0.0
        %5380 = vmatpush1.msra.mxu0 %v4549
        %5381 = vmatprep.subr.mxu0 0.0
        %5382 = vmatpush1.msra.mxu0 %v4547
        %5383 = vmatprep.subr.mxu0 0.0
        %5384 = vmatpush1.msra.mxu0 %v4545
        %5385 = vmatprep.subr.mxu0 0.0
        %5386 = vmatpush2.msra.mxu0 0.0
        %5387 = vmatprep.subr.mxu0 0.0
        %5388 = vmatpush2.msra.mxu0 0.0
        %5389 = vmatprep.subr.mxu0 0.0
        %5390 = vmatpush2.msra.mxu0 0.0
        %5391 = vmatprep.subr.mxu0 0.0
        %5392 = vmatpush2.msra.mxu0 0.0
        %5393 = vmatprep.subr.mxu0 0.0
        %5394 = vmatpush2.msra.mxu0 0.0
        %5395 = vmatprep.subr.mxu0 0.0
        %5396 = vmatpush2.msra.mxu0 0.0
        %5397 = vmatprep.subr.mxu0 0.0
        %5398 = vmatpush2.msra.mxu0 0.0
        %5399 = vmatprep.subr.mxu0 0.0
        %5400 = vmatpush2.msra.mxu0 0.0
        %5401 = vmatprep.subr.mxu0 0.0
        %5402 = vmatpush2.msra.mxu0 0.0
        %5403 = vmatprep.subr.mxu0 0.0
        %5404 = vmatpush2.msra.mxu0 0.0
        %5405 = vmatprep.subr.mxu0 0.0
        %5406 = vmatpush2.msra.mxu0 0.0
        %5407 = vmatprep.subr.mxu0 0.0
        %5408 = vmatpush2.msra.mxu0 0.0
        %5409 = vmatprep.subr.mxu0 0.0
        %5410 = vmatpush2.msra.mxu0 0.0
        %5411 = vmatprep.subr.mxu0 0.0
        %5412 = vmatpush2.msra.mxu0 0.0
        %5413 = vmatprep.subr.mxu0 0.0
        %5414 = vmatpush2.msra.mxu0 0.0
        %5415 = vmatprep.subr.mxu0 0.0
        %5416 = vmatpush2.msra.mxu0 0.0
        %5417 = vmatprep.mubr.f32.mxu0 0.0
        %5418 = vmatmul.mubr.f32.gmra.mxu0 %v5345
        %v5419 = vpop.f32.mrf.mxu0
        %v5420 = vadd.f32 0.0, %v5419
        %v5421 = vpop.f32.mrf.mxu0
        %5422 = vmatprep.mubr.f32.mxu0 0.0
        %5423 = vmatmul.mubr.f32.gmra.mxu0 %v5348
        %v5424 = vpop.f32.mrf.mxu0
        %v5425 = vadd.f32 0.0, %v5424
        %v5426 = vpop.f32.mrf.mxu0
        %5427 = vmatprep.mubr.f32.mxu0 0.0
        %5428 = vmatmul.mubr.f32.gmra.mxu0 %v5351
        %v5429 = vpop.f32.mrf.mxu0
        %v5430 = vadd.f32 0.0, %v5429
        %v5431 = vpop.f32.mrf.mxu0
        %5432 = vdwg.mxu0
        %s5433 = scalar_lea.vmem %s7, 64
        %v5434 = vld [vmem:[%s5433] sm:$0xff]
        %v5435 = vld [vmem:[%s5433 + $0x8] sm:$0xff]
        %v5436 = vld [vmem:[%s5433 + $0x10] sm:$0xff]
        %v5437 = vld [vmem:[%s5433 + $0x18] sm:$0xff]
        %v5439 = vsel %vm917, %v5153, 0
        %v5442 = vsel %vm917, %v5158, 0
        %v5445 = vsel %vm917, %v5163, 0
        %5447 = vmatprep.subr.mxu0 0.0
        %5448 = vmatpush1.msra.mxu0 0.0
        %5449 = vmatprep.subr.mxu0 0.0
        %5450 = vmatpush1.msra.mxu0 0.0
        %5451 = vmatprep.subr.mxu0 0.0
        %5452 = vmatpush1.msra.mxu0 0.0
        %5453 = vmatprep.subr.mxu0 0.0
        %5454 = vmatpush1.msra.mxu0 0.0
        %5455 = vmatprep.subr.mxu0 0.0
        %5456 = vmatpush1.msra.mxu0 0.0
        %5457 = vmatprep.subr.mxu0 0.0
        %5458 = vmatpush1.msra.mxu0 0.0
        %5459 = vmatprep.subr.mxu0 0.0
        %5460 = vmatpush1.msra.mxu0 0.0
        %5461 = vmatprep.subr.mxu0 0.0
        %5462 = vmatpush1.msra.mxu0 0.0
        %5463 = vmatprep.subr.mxu0 0.0
        %5464 = vmatpush1.msra.mxu0 0.0
        %5465 = vmatprep.subr.mxu0 0.0
        %5466 = vmatpush1.msra.mxu0 0.0
        %5467 = vmatprep.subr.mxu0 0.0
        %5468 = vmatpush1.msra.mxu0 0.0
        %5469 = vmatprep.subr.mxu0 0.0
        %5470 = vmatpush1.msra.mxu0 0.0
        %5471 = vmatprep.subr.mxu0 0.0
        %5472 = vmatpush1.msra.mxu0 0.0
        %5473 = vmatprep.subr.mxu0 0.0
        %5474 = vmatpush1.msra.mxu0 0.0
        %5475 = vmatprep.subr.mxu0 0.0
        %5476 = vmatpush1.msra.mxu0 0.0
        %5477 = vmatprep.subr.mxu0 0.0
        %5478 = vmatpush1.msra.mxu0 %v5434
        %5479 = vmatprep.subr.mxu0 0.0
        %5480 = vmatpush2.msra.mxu0 0.0
        %5481 = vmatprep.subr.mxu0 0.0
        %5482 = vmatpush2.msra.mxu0 0.0
        %5483 = vmatprep.subr.mxu0 0.0
        %5484 = vmatpush2.msra.mxu0 0.0
        %5485 = vmatprep.subr.mxu0 0.0
        %5486 = vmatpush2.msra.mxu0 0.0
        %5487 = vmatprep.subr.mxu0 0.0
        %5488 = vmatpush2.msra.mxu0 0.0
        %5489 = vmatprep.subr.mxu0 0.0
        %5490 = vmatpush2.msra.mxu0 0.0
        %5491 = vmatprep.subr.mxu0 0.0
        %5492 = vmatpush2.msra.mxu0 0.0
        %5493 = vmatprep.subr.mxu0 0.0
        %5494 = vmatpush2.msra.mxu0 0.0
        %5495 = vmatprep.subr.mxu0 0.0
        %5496 = vmatpush2.msra.mxu0 0.0
        %5497 = vmatprep.subr.mxu0 0.0
        %5498 = vmatpush2.msra.mxu0 0.0
        %5499 = vmatprep.subr.mxu0 0.0
        %5500 = vmatpush2.msra.mxu0 0.0
        %5501 = vmatprep.subr.mxu0 0.0
        %5502 = vmatpush2.msra.mxu0 0.0
        %5503 = vmatprep.subr.mxu0 0.0
        %5504 = vmatpush2.msra.mxu0 0.0
        %5505 = vmatprep.subr.mxu0 0.0
        %5506 = vmatpush2.msra.mxu0 0.0
        %5507 = vmatprep.subr.mxu0 0.0
        %5508 = vmatpush2.msra.mxu0 0.0
        %5509 = vmatprep.subr.mxu0 0.0
        %5510 = vmatpush2.msra.mxu0 0.0
        %5511 = vmatprep.mubr.f32.mxu0 0.0
        %5512 = vmatmul.mubr.f32.gmra.mxu0 %v5439
        %v5513 = vpop.f32.mrf.mxu0
        %v5514 = vadd.f32 0.0, %v5513
        %v5515 = vpop.f32.mrf.mxu0
        %5516 = vmatprep.mubr.f32.mxu0 0.0
        %5517 = vmatmul.mubr.f32.gmra.mxu0 %v5442
        %v5518 = vpop.f32.mrf.mxu0
        %v5519 = vadd.f32 0.0, %v5518
        %v5520 = vpop.f32.mrf.mxu0
        %5521 = vmatprep.mubr.f32.mxu0 0.0
        %5522 = vmatmul.mubr.f32.gmra.mxu0 %v5445
        %v5523 = vpop.f32.mrf.mxu0
        %v5524 = vadd.f32 0.0, %v5523
        %v5525 = vpop.f32.mrf.mxu0
        %5526 = vdwg.mxu0
        %v5528 = vsel %vm917, %v5242, 0
        %v5531 = vsel %vm917, %v5247, 0
        %v5534 = vsel %vm917, %v5252, 0
        %5536 = vmatprep.subr.mxu0 0.0
        %5537 = vmatpush1.msra.mxu0 0.0
        %5538 = vmatprep.subr.mxu0 0.0
        %5539 = vmatpush1.msra.mxu0 0.0
        %5540 = vmatprep.subr.mxu0 0.0
        %5541 = vmatpush1.msra.mxu0 0.0
        %5542 = vmatprep.subr.mxu0 0.0
        %5543 = vmatpush1.msra.mxu0 0.0
        %5544 = vmatprep.subr.mxu0 0.0
        %5545 = vmatpush1.msra.mxu0 0.0
        %5546 = vmatprep.subr.mxu0 0.0
        %5547 = vmatpush1.msra.mxu0 0.0
        %5548 = vmatprep.subr.mxu0 0.0
        %5549 = vmatpush1.msra.mxu0 0.0
        %5550 = vmatprep.subr.mxu0 0.0
        %5551 = vmatpush1.msra.mxu0 0.0
        %5552 = vmatprep.subr.mxu0 0.0
        %5553 = vmatpush1.msra.mxu0 0.0
        %5554 = vmatprep.subr.mxu0 0.0
        %5555 = vmatpush1.msra.mxu0 0.0
        %5556 = vmatprep.subr.mxu0 0.0
        %5557 = vmatpush1.msra.mxu0 0.0
        %5558 = vmatprep.subr.mxu0 0.0
        %5559 = vmatpush1.msra.mxu0 0.0
        %5560 = vmatprep.subr.mxu0 0.0
        %5561 = vmatpush1.msra.mxu0 0.0
        %5562 = vmatprep.subr.mxu0 0.0
        %5563 = vmatpush1.msra.mxu0 0.0
        %5564 = vmatprep.subr.mxu0 0.0
        %5565 = vmatpush1.msra.mxu0 0.0
        %5566 = vmatprep.subr.mxu0 0.0
        %5567 = vmatpush1.msra.mxu0 %v5435
        %5568 = vmatprep.subr.mxu0 0.0
        %5569 = vmatpush2.msra.mxu0 0.0
        %5570 = vmatprep.subr.mxu0 0.0
        %5571 = vmatpush2.msra.mxu0 0.0
        %5572 = vmatprep.subr.mxu0 0.0
        %5573 = vmatpush2.msra.mxu0 0.0
        %5574 = vmatprep.subr.mxu0 0.0
        %5575 = vmatpush2.msra.mxu0 0.0
        %5576 = vmatprep.subr.mxu0 0.0
        %5577 = vmatpush2.msra.mxu0 0.0
        %5578 = vmatprep.subr.mxu0 0.0
        %5579 = vmatpush2.msra.mxu0 0.0
        %5580 = vmatprep.subr.mxu0 0.0
        %5581 = vmatpush2.msra.mxu0 0.0
        %5582 = vmatprep.subr.mxu0 0.0
        %5583 = vmatpush2.msra.mxu0 0.0
        %5584 = vmatprep.subr.mxu0 0.0
        %5585 = vmatpush2.msra.mxu0 0.0
        %5586 = vmatprep.subr.mxu0 0.0
        %5587 = vmatpush2.msra.mxu0 0.0
        %5588 = vmatprep.subr.mxu0 0.0
        %5589 = vmatpush2.msra.mxu0 0.0
        %5590 = vmatprep.subr.mxu0 0.0
        %5591 = vmatpush2.msra.mxu0 0.0
        %5592 = vmatprep.subr.mxu0 0.0
        %5593 = vmatpush2.msra.mxu0 0.0
        %5594 = vmatprep.subr.mxu0 0.0
        %5595 = vmatpush2.msra.mxu0 0.0
        %5596 = vmatprep.subr.mxu0 0.0
        %5597 = vmatpush2.msra.mxu0 0.0
        %5598 = vmatprep.subr.mxu0 0.0
        %5599 = vmatpush2.msra.mxu0 0.0
        %5600 = vmatprep.mubr.f32.mxu0 0.0
        %5601 = vmatmul.mubr.f32.gmra.mxu0 %v5528
        %v5602 = vpop.f32.mrf.mxu0
        %v5603 = vadd.f32 0.0, %v5602
        %v5604 = vpop.f32.mrf.mxu0
        %5605 = vmatprep.mubr.f32.mxu0 0.0
        %5606 = vmatmul.mubr.f32.gmra.mxu0 %v5531
        %v5607 = vpop.f32.mrf.mxu0
        %v5608 = vadd.f32 0.0, %v5607
        %v5609 = vpop.f32.mrf.mxu0
        %5610 = vmatprep.mubr.f32.mxu0 0.0
        %5611 = vmatmul.mubr.f32.gmra.mxu0 %v5534
        %v5612 = vpop.f32.mrf.mxu0
        %v5613 = vadd.f32 0.0, %v5612
        %v5614 = vpop.f32.mrf.mxu0
        %5615 = vdwg.mxu0
        %v5617 = vsel %vm917, %v5331, 0
        %v5620 = vsel %vm917, %v5336, 0
        %v5623 = vsel %vm917, %v5341, 0
        %5625 = vmatprep.subr.mxu0 0.0
        %5626 = vmatpush1.msra.mxu0 0.0
        %5627 = vmatprep.subr.mxu0 0.0
        %5628 = vmatpush1.msra.mxu0 0.0
        %5629 = vmatprep.subr.mxu0 0.0
        %5630 = vmatpush1.msra.mxu0 0.0
        %5631 = vmatprep.subr.mxu0 0.0
        %5632 = vmatpush1.msra.mxu0 0.0
        %5633 = vmatprep.subr.mxu0 0.0
        %5634 = vmatpush1.msra.mxu0 0.0
        %5635 = vmatprep.subr.mxu0 0.0
        %5636 = vmatpush1.msra.mxu0 0.0
        %5637 = vmatprep.subr.mxu0 0.0
        %5638 = vmatpush1.msra.mxu0 0.0
        %5639 = vmatprep.subr.mxu0 0.0
        %5640 = vmatpush1.msra.mxu0 0.0
        %5641 = vmatprep.subr.mxu0 0.0
        %5642 = vmatpush1.msra.mxu0 0.0
        %5643 = vmatprep.subr.mxu0 0.0
        %5644 = vmatpush1.msra.mxu0 0.0
        %5645 = vmatprep.subr.mxu0 0.0
        %5646 = vmatpush1.msra.mxu0 0.0
        %5647 = vmatprep.subr.mxu0 0.0
        %5648 = vmatpush1.msra.mxu0 0.0
        %5649 = vmatprep.subr.mxu0 0.0
        %5650 = vmatpush1.msra.mxu0 0.0
        %5651 = vmatprep.subr.mxu0 0.0
        %5652 = vmatpush1.msra.mxu0 0.0
        %5653 = vmatprep.subr.mxu0 0.0
        %5654 = vmatpush1.msra.mxu0 0.0
        %5655 = vmatprep.subr.mxu0 0.0
        %5656 = vmatpush1.msra.mxu0 %v5436
        %5657 = vmatprep.subr.mxu0 0.0
        %5658 = vmatpush2.msra.mxu0 0.0
        %5659 = vmatprep.subr.mxu0 0.0
        %5660 = vmatpush2.msra.mxu0 0.0
        %5661 = vmatprep.subr.mxu0 0.0
        %5662 = vmatpush2.msra.mxu0 0.0
        %5663 = vmatprep.subr.mxu0 0.0
        %5664 = vmatpush2.msra.mxu0 0.0
        %5665 = vmatprep.subr.mxu0 0.0
        %5666 = vmatpush2.msra.mxu0 0.0
        %5667 = vmatprep.subr.mxu0 0.0
        %5668 = vmatpush2.msra.mxu0 0.0
        %5669 = vmatprep.subr.mxu0 0.0
        %5670 = vmatpush2.msra.mxu0 0.0
        %5671 = vmatprep.subr.mxu0 0.0
        %5672 = vmatpush2.msra.mxu0 0.0
        %5673 = vmatprep.subr.mxu0 0.0
        %5674 = vmatpush2.msra.mxu0 0.0
        %5675 = vmatprep.subr.mxu0 0.0
        %5676 = vmatpush2.msra.mxu0 0.0
        %5677 = vmatprep.subr.mxu0 0.0
        %5678 = vmatpush2.msra.mxu0 0.0
        %5679 = vmatprep.subr.mxu0 0.0
        %5680 = vmatpush2.msra.mxu0 0.0
        %5681 = vmatprep.subr.mxu0 0.0
        %5682 = vmatpush2.msra.mxu0 0.0
        %5683 = vmatprep.subr.mxu0 0.0
        %5684 = vmatpush2.msra.mxu0 0.0
        %5685 = vmatprep.subr.mxu0 0.0
        %5686 = vmatpush2.msra.mxu0 0.0
        %5687 = vmatprep.subr.mxu0 0.0
        %5688 = vmatpush2.msra.mxu0 0.0
        %5689 = vmatprep.mubr.f32.mxu0 0.0
        %5690 = vmatmul.mubr.f32.gmra.mxu0 %v5617
        %v5691 = vpop.f32.mrf.mxu0
        %v5692 = vadd.f32 0.0, %v5691
        %v5693 = vpop.f32.mrf.mxu0
        %5694 = vmatprep.mubr.f32.mxu0 0.0
        %5695 = vmatmul.mubr.f32.gmra.mxu0 %v5620
        %v5696 = vpop.f32.mrf.mxu0
        %v5697 = vadd.f32 0.0, %v5696
        %v5698 = vpop.f32.mrf.mxu0
        %5699 = vmatprep.mubr.f32.mxu0 0.0
        %5700 = vmatmul.mubr.f32.gmra.mxu0 %v5623
        %v5701 = vpop.f32.mrf.mxu0
        %v5702 = vadd.f32 0.0, %v5701
        %v5703 = vpop.f32.mrf.mxu0
        %5704 = vdwg.mxu0
        %v5706 = vsel %vm917, %v5420, 0
        %v5709 = vsel %vm917, %v5425, 0
        %v5712 = vsel %vm917, %v5430, 0
        %5714 = vmatprep.subr.mxu0 0.0
        %5715 = vmatpush1.msra.mxu0 0.0
        %5716 = vmatprep.subr.mxu0 0.0
        %5717 = vmatpush1.msra.mxu0 0.0
        %5718 = vmatprep.subr.mxu0 0.0
        %5719 = vmatpush1.msra.mxu0 0.0
        %5720 = vmatprep.subr.mxu0 0.0
        %5721 = vmatpush1.msra.mxu0 0.0
        %5722 = vmatprep.subr.mxu0 0.0
        %5723 = vmatpush1.msra.mxu0 0.0
        %5724 = vmatprep.subr.mxu0 0.0
        %5725 = vmatpush1.msra.mxu0 0.0
        %5726 = vmatprep.subr.mxu0 0.0
        %5727 = vmatpush1.msra.mxu0 0.0
        %5728 = vmatprep.subr.mxu0 0.0
        %5729 = vmatpush1.msra.mxu0 0.0
        %5730 = vmatprep.subr.mxu0 0.0
        %5731 = vmatpush1.msra.mxu0 0.0
        %5732 = vmatprep.subr.mxu0 0.0
        %5733 = vmatpush1.msra.mxu0 0.0
        %5734 = vmatprep.subr.mxu0 0.0
        %5735 = vmatpush1.msra.mxu0 0.0
        %5736 = vmatprep.subr.mxu0 0.0
        %5737 = vmatpush1.msra.mxu0 0.0
        %5738 = vmatprep.subr.mxu0 0.0
        %5739 = vmatpush1.msra.mxu0 0.0
        %5740 = vmatprep.subr.mxu0 0.0
        %5741 = vmatpush1.msra.mxu0 0.0
        %5742 = vmatprep.subr.mxu0 0.0
        %5743 = vmatpush1.msra.mxu0 0.0
        %5744 = vmatprep.subr.mxu0 0.0
        %5745 = vmatpush1.msra.mxu0 %v5437
        %5746 = vmatprep.subr.mxu0 0.0
        %5747 = vmatpush2.msra.mxu0 0.0
        %5748 = vmatprep.subr.mxu0 0.0
        %5749 = vmatpush2.msra.mxu0 0.0
        %5750 = vmatprep.subr.mxu0 0.0
        %5751 = vmatpush2.msra.mxu0 0.0
        %5752 = vmatprep.subr.mxu0 0.0
        %5753 = vmatpush2.msra.mxu0 0.0
        %5754 = vmatprep.subr.mxu0 0.0
        %5755 = vmatpush2.msra.mxu0 0.0
        %5756 = vmatprep.subr.mxu0 0.0
        %5757 = vmatpush2.msra.mxu0 0.0
        %5758 = vmatprep.subr.mxu0 0.0
        %5759 = vmatpush2.msra.mxu0 0.0
        %5760 = vmatprep.subr.mxu0 0.0
        %5761 = vmatpush2.msra.mxu0 0.0
        %5762 = vmatprep.subr.mxu0 0.0
        %5763 = vmatpush2.msra.mxu0 0.0
        %5764 = vmatprep.subr.mxu0 0.0
        %5765 = vmatpush2.msra.mxu0 0.0
        %5766 = vmatprep.subr.mxu0 0.0
        %5767 = vmatpush2.msra.mxu0 0.0
        %5768 = vmatprep.subr.mxu0 0.0
        %5769 = vmatpush2.msra.mxu0 0.0
        %5770 = vmatprep.subr.mxu0 0.0
        %5771 = vmatpush2.msra.mxu0 0.0
        %5772 = vmatprep.subr.mxu0 0.0
        %5773 = vmatpush2.msra.mxu0 0.0
        %5774 = vmatprep.subr.mxu0 0.0
        %5775 = vmatpush2.msra.mxu0 0.0
        %5776 = vmatprep.subr.mxu0 0.0
        %5777 = vmatpush2.msra.mxu0 0.0
        %5778 = vmatprep.mubr.f32.mxu0 0.0
        %5779 = vmatmul.mubr.f32.gmra.mxu0 %v5706
        %v5780 = vpop.f32.mrf.mxu0
        %v5781 = vadd.f32 0.0, %v5780
        %v5782 = vpop.f32.mrf.mxu0
        %5783 = vmatprep.mubr.f32.mxu0 0.0
        %5784 = vmatmul.mubr.f32.gmra.mxu0 %v5709
        %v5785 = vpop.f32.mrf.mxu0
        %v5786 = vadd.f32 0.0, %v5785
        %v5787 = vpop.f32.mrf.mxu0
        %5788 = vmatprep.mubr.f32.mxu0 0.0
        %5789 = vmatmul.mubr.f32.gmra.mxu0 %v5712
        %v5790 = vpop.f32.mrf.mxu0
        %v5791 = vadd.f32 0.0, %v5790
        %v5792 = vpop.f32.mrf.mxu0
        %5793 = vdwg.mxu0
        %v5794 = vsel %vm656, %v5514, 0.0
        %v5795 = vsel %vm656, %v5603, 0.0
        %v5796 = vadd.f32 %v5794, %v5795
        %v5797 = vsel %vm656, %v5692, 0.0
        %v5798 = vadd.f32 %v5796, %v5797
        %v5799 = vsel %vm656, %v5781, 0.0
        %v5800 = vadd.f32 %v5798, %v5799
        %v5801 = vsel %vm656, %v5519, 0.0
        %v5802 = vsel %vm656, %v5608, 0.0
        %v5803 = vadd.f32 %v5801, %v5802
        %v5804 = vsel %vm656, %v5697, 0.0
        %v5805 = vadd.f32 %v5803, %v5804
        %v5806 = vsel %vm656, %v5786, 0.0
        %v5807 = vadd.f32 %v5805, %v5806
        %v5808 = vsel %vm656, %v5524, 0.0
        %v5809 = vsel %vm656, %v5613, 0.0
        %v5810 = vadd.f32 %v5808, %v5809
        %v5811 = vsel %vm656, %v5702, 0.0
        %v5812 = vadd.f32 %v5810, %v5811
        %v5813 = vsel %vm656, %v5791, 0.0
        %v5814 = vadd.f32 %v5812, %v5813
        %s5815 = scalar_lea.vmem %s8, 2
        %v5816 = vld [vmem:[%s5815] sm:$0x1]
        %v5818 = vlaneseq
        %v5819 = vshrl.u32 %v5818, 7
        %v5820 = vsub.s32 0, %v5819
        %v5821 = vrot.slane %v5816, %v5820
        %v5823 = vadd.f32 %v5800, %v5821
        %v5824 = vadd.f32 %v5807, %v5821
        %v5825 = vadd.f32 %v5814, %v5821
        %v5826 = vadd.f32 %v4297, %v5823
        %v5827 = vadd.f32 %v4298, %v5824
        %v5828 = vadd.f32 %v4299, %v5825
        %s5829 = scalar_lea.vmem %s9, 2
        %v5830 = vld [vmem:[%s5829] sm:$0x1]
        %s5831 = scalar_lea.vmem %s10, 2
        %v5832 = vld [vmem:[%s5831] sm:$0x1]
        %v5833 = vsel %vm656, %v5826, 0.0
        %5834 = vadd.xlane.f32.xlu0 %v5833
        %v5835 = vpop.xlane.xlu0 %5834
        %v5836 = vsel %vm656, %v5827, 0.0
        %5837 = vadd.xlane.f32.xlu0 %v5836
        %v5838 = vpop.xlane.xlu0 %5837
        %v5839 = vsel %vm656, %v5828, 0.0
        %5840 = vadd.xlane.f32.xlu0 %v5839
        %v5841 = vpop.xlane.xlu0 %5840
        %v5842 = vmul.f32 %v5835, %v666
        %v5843 = vmul.f32 %v5838, %v666
        %v5844 = vmul.f32 %v5841, %v666
        %v5845 = vsub.f32 %v5826, %v5842
        %v5846 = vsub.f32 %v5827, %v5843
        %v5847 = vsub.f32 %v5828, %v5844
        %v5848 = vmul.f32 %v5845, %v5845
        %v5849 = vmul.f32 %v5846, %v5846
        %v5850 = vmul.f32 %v5847, %v5847
        %v5851 = vsel %vm656, %v5848, 0.0
        %5852 = vadd.xlane.f32.xlu0 %v5851
        %v5853 = vpop.xlane.xlu0 %5852
        %v5854 = vsel %vm656, %v5849, 0.0
        %5855 = vadd.xlane.f32.xlu0 %v5854
        %v5856 = vpop.xlane.xlu0 %5855
        %v5857 = vsel %vm656, %v5850, 0.0
        %5858 = vadd.xlane.f32.xlu0 %v5857
        %v5859 = vpop.xlane.xlu0 %5858
        %v5860 = vmul.f32 %v5853, %v666
        %v5861 = vmul.f32 %v5856, %v666
        %v5862 = vmul.f32 %v5859, %v666
        %v5863 = vadd.f32 %v5860, 1e-05
        %v5864 = vadd.f32 %v5861, 1e-05
        %v5865 = vadd.f32 %v5862, 1e-05
        %v5866 = vrsqrt.pop %v5863
        %v5867 = vrsqrt.pop %v5864
        %v5868 = vrsqrt.pop %v5865
        %v5869 = vmul.f32 %v5845, %v5866
        %v5870 = vmul.f32 %v5846, %v5867
        %v5871 = vmul.f32 %v5847, %v5868
        %v5873 = vlaneseq
        %v5874 = vshrl.u32 %v5873, 7
        %v5875 = vsub.s32 0, %v5874
        %v5876 = vrot.slane %v5830, %v5875
        %v5878 = vmul.f32 %v5869, %v5876
        %v5879 = vmul.f32 %v5870, %v5876
        %v5880 = vmul.f32 %v5871, %v5876
        %v5882 = vlaneseq
        %v5883 = vshrl.u32 %v5882, 7
        %v5884 = vsub.s32 0, %v5883
        %v5885 = vrot.slane %v5832, %v5884
        %v5887 = vadd.f32 %v5878, %v5885
        %v5888 = vadd.f32 %v5879, %v5885
        %v5889 = vadd.f32 %v5880, %v5885
        %s5890 = scalar_lea.vmem %s11, 64
        %v5891 = vld [vmem:[%s5890] sm:$0xff]
        %v5892 = vld [vmem:[%s5890 + $0x8] sm:$0xff]
        %v5893 = vld [vmem:[%s5890 + $0x10] sm:$0xff]
        %v5894 = vld [vmem:[%s5890 + $0x18] sm:$0xff]
        %s5895 = scalar_lea.vmem %s12, 2
        %v5896 = vld [vmem:[%s5895] sm:$0x1]
        %v5898 = vlaneseq
        %v5899 = vshrl.u32 %v5898, 7
        %v5900 = vsub.s32 0, %v5899
        %v5901 = vrot.slane %v5896, %v5900
        %v5904 = vsel %vm656, %v5887, 0
        %v5907 = vsel %vm656, %v5888, 0
        %v5910 = vsel %vm656, %v5889, 0
        %5912 = vmatprep.subr.mxu0 0.0
        %5913 = vmatpush1.msra.mxu0 0.0
        %5914 = vmatprep.subr.mxu0 0.0
        %5915 = vmatpush1.msra.mxu0 0.0
        %5916 = vmatprep.subr.mxu0 0.0
        %5917 = vmatpush1.msra.mxu0 0.0
        %5918 = vmatprep.subr.mxu0 0.0
        %5919 = vmatpush1.msra.mxu0 0.0
        %5920 = vmatprep.subr.mxu0 0.0
        %5921 = vmatpush1.msra.mxu0 0.0
        %5922 = vmatprep.subr.mxu0 0.0
        %5923 = vmatpush1.msra.mxu0 0.0
        %5924 = vmatprep.subr.mxu0 0.0
        %5925 = vmatpush1.msra.mxu0 0.0
        %5926 = vmatprep.subr.mxu0 0.0
        %5927 = vmatpush1.msra.mxu0 0.0
        %5928 = vmatprep.subr.mxu0 0.0
        %5929 = vmatpush1.msra.mxu0 0.0
        %5930 = vmatprep.subr.mxu0 0.0
        %5931 = vmatpush1.msra.mxu0 0.0
        %5932 = vmatprep.subr.mxu0 0.0
        %5933 = vmatpush1.msra.mxu0 0.0
        %5934 = vmatprep.subr.mxu0 0.0
        %5935 = vmatpush1.msra.mxu0 0.0
        %5936 = vmatprep.subr.mxu0 0.0
        %5937 = vmatpush1.msra.mxu0 %v5894
        %5938 = vmatprep.subr.mxu0 0.0
        %5939 = vmatpush1.msra.mxu0 %v5893
        %5940 = vmatprep.subr.mxu0 0.0
        %5941 = vmatpush1.msra.mxu0 %v5892
        %5942 = vmatprep.subr.mxu0 0.0
        %5943 = vmatpush1.msra.mxu0 %v5891
        %5944 = vmatprep.subr.mxu0 0.0
        %5945 = vmatpush2.msra.mxu0 0.0
        %5946 = vmatprep.subr.mxu0 0.0
        %5947 = vmatpush2.msra.mxu0 0.0
        %5948 = vmatprep.subr.mxu0 0.0
        %5949 = vmatpush2.msra.mxu0 0.0
        %5950 = vmatprep.subr.mxu0 0.0
        %5951 = vmatpush2.msra.mxu0 0.0
        %5952 = vmatprep.subr.mxu0 0.0
        %5953 = vmatpush2.msra.mxu0 0.0
        %5954 = vmatprep.subr.mxu0 0.0
        %5955 = vmatpush2.msra.mxu0 0.0
        %5956 = vmatprep.subr.mxu0 0.0
        %5957 = vmatpush2.msra.mxu0 0.0
        %5958 = vmatprep.subr.mxu0 0.0
        %5959 = vmatpush2.msra.mxu0 0.0
        %5960 = vmatprep.subr.mxu0 0.0
        %5961 = vmatpush2.msra.mxu0 0.0
        %5962 = vmatprep.subr.mxu0 0.0
        %5963 = vmatpush2.msra.mxu0 0.0
        %5964 = vmatprep.subr.mxu0 0.0
        %5965 = vmatpush2.msra.mxu0 0.0
        %5966 = vmatprep.subr.mxu0 0.0
        %5967 = vmatpush2.msra.mxu0 0.0
        %5968 = vmatprep.subr.mxu0 0.0
        %5969 = vmatpush2.msra.mxu0 0.0
        %5970 = vmatprep.subr.mxu0 0.0
        %5971 = vmatpush2.msra.mxu0 0.0
        %5972 = vmatprep.subr.mxu0 0.0
        %5973 = vmatpush2.msra.mxu0 0.0
        %5974 = vmatprep.subr.mxu0 0.0
        %5975 = vmatpush2.msra.mxu0 0.0
        %5976 = vmatprep.mubr.f32.mxu0 0.0
        %5977 = vmatmul.mubr.f32.gmra.mxu0 %v5904
        %v5978 = vpop.f32.mrf.mxu0
        %v5979 = vadd.f32 %v5901, %v5978
        %v5980 = vpop.f32.mrf.mxu0
        %5981 = vmatprep.mubr.f32.mxu0 0.0
        %5982 = vmatmul.mubr.f32.gmra.mxu0 %v5907
        %v5983 = vpop.f32.mrf.mxu0
        %v5984 = vadd.f32 %v5901, %v5983
        %v5985 = vpop.f32.mrf.mxu0
        %5986 = vmatprep.mubr.f32.mxu0 0.0
        %5987 = vmatmul.mubr.f32.gmra.mxu0 %v5910
        %v5988 = vpop.f32.mrf.mxu0
        %v5989 = vadd.f32 %v5901, %v5988
        %v5990 = vpop.f32.mrf.mxu0
        %5991 = vdwg.mxu0
        %v5992 = vmul.f32 %v5979, %v5979
        %v5993 = vmul.f32 %v5984, %v5984
        %v5994 = vmul.f32 %v5989, %v5989
        %v5995 = vmul.f32 %v5979, %v5992
        %v5996 = vmul.f32 %v5984, %v5993
        %v5997 = vmul.f32 %v5989, %v5994
        %v5998 = vmul.f32 %v5995, 0.044715
        %v5999 = vmul.f32 %v5996, 0.044715
        %v6000 = vmul.f32 %v5997, 0.044715
        %v6001 = vadd.f32 %v5979, %v5998
        %v6002 = vadd.f32 %v5984, %v5999
        %v6003 = vadd.f32 %v5989, %v6000
        %v6004 = vmul.f32 %v6001, 0.7978846
        %v6005 = vmul.f32 %v6002, 0.7978846
        %v6006 = vmul.f32 %v6003, 0.7978846
        %v6007 = vtanh.pop %v6004
        %v6008 = vtanh.pop %v6005
        %v6009 = vtanh.pop %v6006
        %v6010 = vadd.f32 %v6007, 1.0
        %v6011 = vadd.f32 %v6008, 1.0
        %v6012 = vadd.f32 %v6009, 1.0
        %v6013 = vmul.f32 %v6010, 0.5
        %v6014 = vmul.f32 %v6011, 0.5
        %v6015 = vmul.f32 %v6012, 0.5
        %v6016 = vmul.f32 %v5979, %v6013
        %v6017 = vmul.f32 %v5984, %v6014
        %v6018 = vmul.f32 %v5989, %v6015
        %s6019 = scalar_lea.vmem %s13, 256
        %v6020 = vld [vmem:[%s6019] sm:$0xff]
        %v6021 = vld [vmem:[%s6019 + $0x8] sm:$0xff]
        %v6022 = vld [vmem:[%s6019 + $0x10] sm:$0xff]
        %v6023 = vld [vmem:[%s6019 + $0x18] sm:$0xff]
        %v6024 = vld [vmem:[%s6019 + $0x20] sm:$0xff]
        %v6025 = vld [vmem:[%s6019 + $0x28] sm:$0xff]
        %v6026 = vld [vmem:[%s6019 + $0x30] sm:$0xff]
        %v6027 = vld [vmem:[%s6019 + $0x38] sm:$0xff]
        %v6028 = vld [vmem:[%s6019 + $0x40] sm:$0xff]
        %v6029 = vld [vmem:[%s6019 + $0x48] sm:$0xff]
        %v6030 = vld [vmem:[%s6019 + $0x50] sm:$0xff]
        %v6031 = vld [vmem:[%s6019 + $0x58] sm:$0xff]
        %v6032 = vld [vmem:[%s6019 + $0x60] sm:$0xff]
        %v6033 = vld [vmem:[%s6019 + $0x68] sm:$0xff]
        %v6034 = vld [vmem:[%s6019 + $0x70] sm:$0xff]
        %v6035 = vld [vmem:[%s6019 + $0x78] sm:$0xff]
        %s6036 = scalar_lea.vmem %s14, 2
        %v6037 = vld [vmem:[%s6036] sm:$0x1]
        %v6039 = vlaneseq
        %v6040 = vshrl.u32 %v6039, 7
        %v6041 = vsub.s32 0, %v6040
        %v6042 = vrot.slane %v6037, %v6041
        %6044 = vmatprep.subr.mxu0 0.0
        %6045 = vmatpush1.msra.mxu0 %v6035
        %6046 = vmatprep.subr.mxu0 0.0
        %6047 = vmatpush1.msra.mxu0 %v6034
        %6048 = vmatprep.subr.mxu0 0.0
        %6049 = vmatpush1.msra.mxu0 %v6033
        %6050 = vmatprep.subr.mxu0 0.0
        %6051 = vmatpush1.msra.mxu0 %v6032
        %6052 = vmatprep.subr.mxu0 0.0
        %6053 = vmatpush1.msra.mxu0 %v6031
        %6054 = vmatprep.subr.mxu0 0.0
        %6055 = vmatpush1.msra.mxu0 %v6030
        %6056 = vmatprep.subr.mxu0 0.0
        %6057 = vmatpush1.msra.mxu0 %v6029
        %6058 = vmatprep.subr.mxu0 0.0
        %6059 = vmatpush1.msra.mxu0 %v6028
        %6060 = vmatprep.subr.mxu0 0.0
        %6061 = vmatpush1.msra.mxu0 %v6027
        %6062 = vmatprep.subr.mxu0 0.0
        %6063 = vmatpush1.msra.mxu0 %v6026
        %6064 = vmatprep.subr.mxu0 0.0
        %6065 = vmatpush1.msra.mxu0 %v6025
        %6066 = vmatprep.subr.mxu0 0.0
        %6067 = vmatpush1.msra.mxu0 %v6024
        %6068 = vmatprep.subr.mxu0 0.0
        %6069 = vmatpush1.msra.mxu0 %v6023
        %6070 = vmatprep.subr.mxu0 0.0
        %6071 = vmatpush1.msra.mxu0 %v6022
        %6072 = vmatprep.subr.mxu0 0.0
        %6073 = vmatpush1.msra.mxu0 %v6021
        %6074 = vmatprep.subr.mxu0 0.0
        %6075 = vmatpush1.msra.mxu0 %v6020
        %6076 = vmatprep.subr.mxu0 0.0
        %6077 = vmatpush2.msra.mxu0 0.0
        %6078 = vmatprep.subr.mxu0 0.0
        %6079 = vmatpush2.msra.mxu0 0.0
        %6080 = vmatprep.subr.mxu0 0.0
        %6081 = vmatpush2.msra.mxu0 0.0
        %6082 = vmatprep.subr.mxu0 0.0
        %6083 = vmatpush2.msra.mxu0 0.0
        %6084 = vmatprep.subr.mxu0 0.0
        %6085 = vmatpush2.msra.mxu0 0.0
        %6086 = vmatprep.subr.mxu0 0.0
        %6087 = vmatpush2.msra.mxu0 0.0
        %6088 = vmatprep.subr.mxu0 0.0
        %6089 = vmatpush2.msra.mxu0 0.0
        %6090 = vmatprep.subr.mxu0 0.0
        %6091 = vmatpush2.msra.mxu0 0.0
        %6092 = vmatprep.subr.mxu0 0.0
        %6093 = vmatpush2.msra.mxu0 0.0
        %6094 = vmatprep.subr.mxu0 0.0
        %6095 = vmatpush2.msra.mxu0 0.0
        %6096 = vmatprep.subr.mxu0 0.0
        %6097 = vmatpush2.msra.mxu0 0.0
        %6098 = vmatprep.subr.mxu0 0.0
        %6099 = vmatpush2.msra.mxu0 0.0
        %6100 = vmatprep.subr.mxu0 0.0
        %6101 = vmatpush2.msra.mxu0 0.0
        %6102 = vmatprep.subr.mxu0 0.0
        %6103 = vmatpush2.msra.mxu0 0.0
        %6104 = vmatprep.subr.mxu0 0.0
        %6105 = vmatpush2.msra.mxu0 0.0
        %6106 = vmatprep.subr.mxu0 0.0
        %6107 = vmatpush2.msra.mxu0 0.0
        %6108 = vmatprep.mubr.f32.mxu0 0.0
        %6109 = vmatmul.mubr.f32.gmra.mxu0 %v6016
        %v6110 = vpop.f32.mrf.mxu0
        %v6111 = vadd.f32 %v6042, %v6110
        %v6112 = vpop.f32.mrf.mxu0
        %6113 = vmatprep.mubr.f32.mxu0 0.0
        %6114 = vmatmul.mubr.f32.gmra.mxu0 %v6017
        %v6115 = vpop.f32.mrf.mxu0
        %v6116 = vpop.f32.mrf.mxu0
        %6117 = vmatprep.mubr.f32.mxu0 0.0
        %6118 = vmatmul.mubr.f32.gmra.mxu0 %v6018
        %v6119 = vpop.f32.mrf.mxu0
        %v6120 = vpop.f32.mrf.mxu0
        %6121 = vdwg.mxu0
        %v6122 = vadd.f32 %v5826, %v6111
        %v6123 = vld [vmem:[%s15] sm:$0xff]
        %v6124 = vld [vmem:[%s15 + $0x8] sm:$0xff]
        %v6125 = vld [vmem:[%s15 + $0x10] sm:$0xff]
        %v6126 = vld [vmem:[%s15 + $0x18] sm:$0xff]
        %v6127 = vld [vmem:[%s16] sm:$0x1]
        %v6129 = vsel %vm656, %v6122, 0
        %6131 = vmatprep.subr.mxu0 0.0
        %6132 = vmatpush1.msra.mxu0 0.0
        %6133 = vmatprep.subr.mxu0 0.0
        %6134 = vmatpush1.msra.mxu0 0.0
        %6135 = vmatprep.subr.mxu0 0.0
        %6136 = vmatpush1.msra.mxu0 0.0
        %6137 = vmatprep.subr.mxu0 0.0
        %6138 = vmatpush1.msra.mxu0 0.0
        %6139 = vmatprep.subr.mxu0 0.0
        %6140 = vmatpush1.msra.mxu0 0.0
        %6141 = vmatprep.subr.mxu0 0.0
        %6142 = vmatpush1.msra.mxu0 0.0
        %6143 = vmatprep.subr.mxu0 0.0
        %6144 = vmatpush1.msra.mxu0 0.0
        %6145 = vmatprep.subr.mxu0 0.0
        %6146 = vmatpush1.msra.mxu0 0.0
        %6147 = vmatprep.subr.mxu0 0.0
        %6148 = vmatpush1.msra.mxu0 0.0
        %6149 = vmatprep.subr.mxu0 0.0
        %6150 = vmatpush1.msra.mxu0 0.0
        %6151 = vmatprep.subr.mxu0 0.0
        %6152 = vmatpush1.msra.mxu0 0.0
        %6153 = vmatprep.subr.mxu0 0.0
        %6154 = vmatpush1.msra.mxu0 0.0
        %6155 = vmatprep.subr.mxu0 0.0
        %6156 = vmatpush1.msra.mxu0 %v6126
        %6157 = vmatprep.subr.mxu0 0.0
        %6158 = vmatpush1.msra.mxu0 %v6125
        %6159 = vmatprep.subr.mxu0 0.0
        %6160 = vmatpush1.msra.mxu0 %v6124
        %6161 = vmatprep.subr.mxu0 0.0
        %6162 = vmatpush1.msra.mxu0 %v6123
        %6163 = vmatprep.subr.mxu0 0.0
        %6164 = vmatpush2.msra.mxu0 0.0
        %6165 = vmatprep.subr.mxu0 0.0
        %6166 = vmatpush2.msra.mxu0 0.0
        %6167 = vmatprep.subr.mxu0 0.0
        %6168 = vmatpush2.msra.mxu0 0.0
        %6169 = vmatprep.subr.mxu0 0.0
        %6170 = vmatpush2.msra.mxu0 0.0
        %6171 = vmatprep.subr.mxu0 0.0
        %6172 = vmatpush2.msra.mxu0 0.0
        %6173 = vmatprep.subr.mxu0 0.0
        %6174 = vmatpush2.msra.mxu0 0.0
        %6175 = vmatprep.subr.mxu0 0.0
        %6176 = vmatpush2.msra.mxu0 0.0
        %6177 = vmatprep.subr.mxu0 0.0
        %6178 = vmatpush2.msra.mxu0 0.0
        %6179 = vmatprep.subr.mxu0 0.0
        %6180 = vmatpush2.msra.mxu0 0.0
        %6181 = vmatprep.subr.mxu0 0.0
        %6182 = vmatpush2.msra.mxu0 0.0
        %6183 = vmatprep.subr.mxu0 0.0
        %6184 = vmatpush2.msra.mxu0 0.0
        %6185 = vmatprep.subr.mxu0 0.0
        %6186 = vmatpush2.msra.mxu0 0.0
        %6187 = vmatprep.subr.mxu0 0.0
        %6188 = vmatpush2.msra.mxu0 0.0
        %6189 = vmatprep.subr.mxu0 0.0
        %6190 = vmatpush2.msra.mxu0 0.0
        %6191 = vmatprep.subr.mxu0 0.0
        %6192 = vmatpush2.msra.mxu0 0.0
        %6193 = vmatprep.subr.mxu0 0.0
        %6194 = vmatpush2.msra.mxu0 0.0
        %6195 = vmatprep.mubr.f32.mxu0 0.0
        %6196 = vmatmul.mubr.f32.gmra.mxu0 %v6129
        %v6197 = vpop.f32.mrf.mxu0
        %v6198 = vadd.f32 %v6127, %v6197
        %v6199 = vpop.f32.mrf.mxu0
        %6200 = vdwg.mxu0
        %vm6201 = vcmask 73728
        %6202 = vst.msk [vmem:[%s540] sm:$0x1] %vm6201, %v6198
        %s6203 = sand.u32 %s401, 1
        %s6204 = scalar_lea.sflag [#allocation3], %s6203
        %s6205 = sand.u32 %s401, 1
        %s6206 = scalar_lea.vmem [#allocation2], %s6205
        // Predicated region
        $region89: #{vit_forward.1} parent=87 // pred_check
          %p6207 = pneg %p411
        $region90: #{vit_forward.1} parent=87 // pred_check_branch
          %6209 = sbr.rel (%p6207) target = $region92
        $region91: #{vit_forward.1} parent=87 // pred_region
          %s6211 = ssub.s32 16, 16
          %6212 = vsyncadd %s6204, %s6211
          %s6213 = smul.addr %s31, 16
          %s6214 = scalar_lea.hbm %s17, %s6213
          %s6216 = sshll.u32 %s6206, 4
          %s6217 = int_to_ptr.vmem [resolvable:$true] %s6216
          %6219 = dma.vmem_to_hbm [thread:$0]  %s6217, 16, %s6214, %s6204
        $region92: #{vit_forward.1} parent=87 // pred_fallthru
          _
      $region88: #{vit_forward.1} parent=5 // pred_fallthru
        _
      %p6220 = scmp.le.s32.totalorder 2, %s26
      // Predicated region
      $region93: #{vit_forward.1} parent=5 // pred_check
        %p6221 = pneg %p6220
      $region94: #{vit_forward.1} parent=5 // pred_check_branch
        %6223 = sbr.rel (%p6221) target = $region96
      $region95: #{vit_forward.1} parent=5 // pred_region
        %s6224 = ssub.s32 %s26, 2
        // Predicated region
        $region97: #{vit_forward.1} parent=95 // pred_check
          %p6225 = pneg %p417
        $region98: #{vit_forward.1} parent=95 // pred_check_branch
          %6227 = sbr.rel (%p6225) target = $region100
        $region99: #{vit_forward.1} parent=95 // pred_region
          %s6228 = sand.u32 %s402, 1
          %s6229 = scalar_lea.sflag [#allocation3], %s6228
          %s6230 = sand.u32 %s402, 1
          %s6231 = scalar_lea.vmem [#allocation2], %s6230
          %6232 = dma.done %s6229, 16
        $region100: #{vit_forward.1} parent=95 // pred_fallthru
          _
      $region96: #{vit_forward.1} parent=5 // pred_fallthru
        _
    $region6: #{vit_forward.1} parent=1 // loop_footer
      %s30 = sadd.s32 1, %s26
    $region7: #{vit_forward.1} parent=1 // loop_footer_branch
      %25 = sbr.rel target = $region3
    $region8: #{vit_forward.1} parent=1 // loop_exit
      _
    %6233 = vsyncpa [#allocation3], 1
    %s6234 = scalar_lea.sflag [#allocation3], 1
    %6235 = vsyncpa %s6234, 1

</llo_original>
